<compile_context>
chip_gen: v7x
topology: tpu7x:2x2x1
jax: 0.10.0
libtpu: 0.0.40
codegen_flags: <defaults>
</compile_context>

<pallas_src>
import functools
import math

import jax
import jax.numpy as jnp
from jax.experimental import pallas as pl
from jax.experimental.pallas import tpu as pltpu


def _layernorm(x, gamma, beta, eps=1e-5):
    # Fused statistics: both reductions are independent XLU work off the same load;
    # var = E[x^2] - mu^2 avoids a second serialized elementwise pass over x.
    mu = jnp.mean(x, axis=-1, keepdims=True)
    ms = jnp.mean(x * x, axis=-1, keepdims=True)
    var = ms - mu * mu
    return (x - mu) * jax.lax.rsqrt(var + eps) * gamma + beta


def transformer_block_kernel(
    x_ref,                      # (M, D)   f32, M = bt * N
    wqkv_ref,                   # (D, 3D)  bf16 (packed Wq*scale | Wk | Wv)
    wo_ref,                     # (D, D)   bf16
    w1_ref,                     # (D, H)   bf16
    w2_ref,                     # (H, D)   bf16
    vecd_ref,                   # (6, D)   f32: ln1_g, ln1_b, bo, ln2_g, ln2_b, b2
    bqkv_ref,                   # (1, 3D)  f32 (packed bq*scale | bk | bv)
    b1_ref,                     # (1, H)   f32
    o_ref,                      # (M, D)
    *, num_heads, head_dim, seq_len, bt, batched_heads,
):
    D = num_heads * head_dim
    M = bt * seq_len

    x = x_ref[...].astype(jnp.float32)                       # (M, D)

    vec = vecd_ref[...]                                      # (6, D)
    ln1_g, ln1_b = vec[0:1, :], vec[1:2, :]
    bo = vec[2:3, :]
    ln2_g, ln2_b = vec[3:4, :], vec[4:5, :]
    b2 = vec[5:6, :]

    # ---- LayerNorm 1 (f32 elementwise) ----
    xn = _layernorm(x, ln1_g, ln1_b)

    # ---- fused Q/K/V projection: one (M,D)x(D,3D) MXU matmul, bf16 in / f32 acc ----
    qkv = jnp.dot(xn.astype(jnp.bfloat16), wqkv_ref[...],
                  preferred_element_type=jnp.float32) + bqkv_ref[...]   # (M, 3D)

    # ---- multi-head self-attention (scale already folded into Wq host-side) ----
    if batched_heads:
        # Single batched dot_general pair over (sequence, head); 128-lane aligned
        # slices only (0 / D / 2D), contiguous (M, D) output reshape.
        q = qkv[:, :D].reshape(bt, seq_len, num_heads, head_dim).astype(jnp.bfloat16)
        k = qkv[:, D:2 * D].reshape(bt, seq_len, num_heads, head_dim).astype(jnp.bfloat16)
        v = qkv[:, 2 * D:].reshape(bt, seq_len, num_heads, head_dim).astype(jnp.bfloat16)

        s = jnp.einsum('bqhd,bkhd->bhqk', q, k,
                       preferred_element_type=jnp.float32)              # (bt, H, N, N)
        s = s - jnp.max(s, axis=-1, keepdims=True)
        p = jnp.exp(s)
        p = p * pl.reciprocal(jnp.sum(p, axis=-1, keepdims=True), approx=True)

        ctx = jnp.einsum('bhqk,bkhd->bqhd', p.astype(jnp.bfloat16), v,
                         preferred_element_type=jnp.float32)            # (bt, N, H, hd)
        attn = ctx.reshape(M, D)
    else:
        # Fallback path (proven lowering): per-head loop, still bf16 MXU operands.
        head_outs = []
        for h in range(num_heads):          # static unroll; num_heads is small
            lo = h * head_dim
            qh = qkv[:, lo:lo + head_dim].reshape(bt, seq_len, head_dim)
            kh = qkv[:, D + lo:D + lo + head_dim].reshape(bt, seq_len, head_dim)
            vh = qkv[:, 2 * D + lo:2 * D + lo + head_dim].reshape(bt, seq_len, head_dim)

            s = jnp.einsum('bqd,bkd->bqk', qh.astype(jnp.bfloat16),
                           kh.astype(jnp.bfloat16),
                           preferred_element_type=jnp.float32)          # (bt, N, N)
            s = s - jnp.max(s, axis=-1, keepdims=True)
            p = jnp.exp(s)
            p = p * pl.reciprocal(jnp.sum(p, axis=-1, keepdims=True), approx=True)

            oh = jnp.einsum('bqk,bkd->bqd', p.astype(jnp.bfloat16),
                            vh.astype(jnp.bfloat16),
                            preferred_element_type=jnp.float32)         # (bt, N, hd)
            head_outs.append(oh.reshape(M, head_dim))
        attn = jnp.concatenate(head_outs, axis=-1)                      # (M, D)

    # ---- output projection + residual ----
    attn = jnp.dot(attn.astype(jnp.bfloat16), wo_ref[...],
                   preferred_element_type=jnp.float32) + bo
    x1 = x + attn

    # ---- LayerNorm 2 + MLP (Linear -> SiLU -> Linear) + residual ----
    x2n = _layernorm(x1, ln2_g, ln2_b)
    h1 = jnp.dot(x2n.astype(jnp.bfloat16), w1_ref[...],
                 preferred_element_type=jnp.float32) + b1_ref[...]
    h1 = h1 * jax.nn.sigmoid(h1)                                        # SiLU
    mlp = jnp.dot(h1.astype(jnp.bfloat16), w2_ref[...],
                  preferred_element_type=jnp.float32) + b2

    o_ref[...] = (x1 + mlp).astype(o_ref.dtype)


def transformer_block(x, params, *, num_heads, batch_tile=None):
    B, N, D = x.shape
    head_dim = D // num_heads
    hidden = params["w1"].shape[1]

    if batch_tile is None:
        # grid=1 on single-TC chips (v5e/v6e); split into 2 "parallel" tiles only
        # when each tile still presents >= 256 rows to the MXU (v7x, 2 TCs).
        # TODO(synk): at large D/H also shrink bt so M*(8D+2H)*4B of live f32
        # intermediates fits the per-generation VMEM budget (v7x: 64 MiB).
        batch_tile = B // 2 if (B % 2 == 0 and (B // 2) * N >= 256) else B
    bt = batch_tile
    assert B % bt == 0, "batch must be divisible by the batch tile"
    M = bt * N

    # Host-side packing (free in XLA): fold the attention scale into Wq/bq, fuse the
    # QKV weight/bias, stack the small per-channel vectors, cast big weights to bf16.
    scale = 1.0 / math.sqrt(head_dim)
    wqkv = jnp.concatenate([params["wq"] * scale, params["wk"], params["wv"]],
                           axis=1).astype(jnp.bfloat16)                 # (D, 3D)
    bqkv = jnp.concatenate([params["bq"] * scale, params["bk"], params["bv"]],
                           axis=1)                                      # (1, 3D)
    vecd = jnp.concatenate([params["ln1_g"], params["ln1_b"], params["bo"],
                            params["ln2_g"], params["ln2_b"], params["b2"]],
                           axis=0)                                      # (6, D)
    wo = params["wo"].astype(jnp.bfloat16)
    w1 = params["w1"].astype(jnp.bfloat16)
    w2 = params["w2"].astype(jnp.bfloat16)
    b1 = params["b1"]

    x2d = x.reshape(B * N, D)   # token-major flatten; attention regrouped in-kernel

    # --- explicit VMEM budget: weights (resident once) + double-buffered I/O tiles
    #     + live f32 intermediates; capped below v7x's 64 MiB physical VMEM. ---
    weight_bytes = 2 * (wqkv.size + wo.size + w1.size + w2.size)        # bf16
    io_bytes = 2 * 2 * (M * D * 4)                                      # in + out, x2 buffers
    interm_bytes = M * (8 * D + 2 * hidden) * 4
    vmem_limit = int(min(max(2 * weight_bytes + io_bytes + interm_bytes + (4 << 20),
                             32 << 20), 56 << 20))

    # --- advisory cost estimate so XLA schedules surrounding ops around the call ---
    steps = B // bt
    flops = steps * (2 * M * D * 3 * D                                  # QKV proj
                     + 4 * bt * num_heads * N * N * head_dim            # scores + ctx
                     + 2 * M * D * D                                    # out proj
                     + 4 * M * D * hidden)                              # MLP
    transcend = steps * (bt * num_heads * N * N + M * hidden)           # exp + sigmoid
    bytes_acc = (2 * B * N * D * 4 + weight_bytes
                 + 4 * (vecd.size + bqkv.size + b1.size))
    cost = pl.CostEstimate(flops=int(flops), transcendentals=int(transcend),
                           bytes_accessed=int(bytes_acc))

    def build(batched_heads, single_buffer_weights):
        kernel = functools.partial(transformer_block_kernel, num_heads=num_heads,
                                   head_dim=head_dim, seq_len=N, bt=bt,
                                   batched_heads=batched_heads)

        def const(shape):
            # constant block index => weights stay resident across grid steps;
            # single-buffer them so they occupy VMEM once, not twice.
            if single_buffer_weights:
                return pl.BlockSpec(shape, lambda b: (0, 0),
                                    pipeline_mode=pl.Buffered(1))
            return pl.BlockSpec(shape, lambda b: (0, 0))

        return pl.pallas_call(
            kernel,
            out_shape=jax.ShapeDtypeStruct((B * N, D), x.dtype),
            grid_spec=pltpu.PrefetchScalarGridSpec(
                num_scalar_prefetch=0,
                grid=(B // bt,),
                in_specs=[
                    pl.BlockSpec((M, D), lambda b: (b, 0)),   # x tile: bt sequences
                    const((D, 3 * D)),                        # fused Wqkv (bf16)
                    const((D, D)),                            # Wo (bf16)
                    const((D, hidden)),                       # W1 (bf16)
                    const((hidden, D)),                       # W2 (bf16)
                    const((6, D)),                            # stacked LN / bias vectors
                    const((1, 3 * D)),                        # fused qkv bias
                    const((1, hidden)),                       # b1
                ],
                out_specs=pl.BlockSpec((M, D), lambda b: (b, 0)),
            ),
            compiler_params=pltpu.CompilerParams(
                dimension_semantics=("parallel",),
                vmem_limit_bytes=vmem_limit),
            cost_estimate=cost,
        )

    args = (x2d, wqkv, wo, w1, w2, vecd, bqkv, b1)
    try:
        # Preferred: batched-over-heads attention + single-buffered resident weights.
        out2d = build(batched_heads=True, single_buffer_weights=True)(*args)
    except Exception:
        # Conservative fallback (lowering path proven on previous runs): per-head
        # 3-D einsums (bf16 operands) and default double-buffered weight windows.
        out2d = build(batched_heads=False, single_buffer_weights=False)(*args)

    return out2d.reshape(B, N, D)


def reference_block(x, p, *, num_heads):
    # Pure-JAX f32 reference mirroring the PyTorch forward exactly.
    B, N, D = x.shape
    hd = D // num_heads
    xf = x.astype(jnp.float32)

    def ln(t, g, b):
        mu = jnp.mean(t, -1, keepdims=True)
        var = jnp.mean((t - mu) ** 2, -1, keepdims=True)
        return (t - mu) / jnp.sqrt(var + 1e-5) * g + b

    xn = ln(xf, p["ln1_g"], p["ln1_b"])
    q = xn @ p["wq"] + p["bq"]
    k = xn @ p["wk"] + p["bk"]
    v = xn @ p["wv"] + p["bv"]
    q = q.reshape(B, N, num_heads, hd).transpose(0, 2, 1, 3)
    k = k.reshape(B, N, num_heads, hd).transpose(0, 2, 1, 3)
    v = v.reshape(B, N, num_heads, hd).transpose(0, 2, 1, 3)
    s = jnp.einsum("bhqd,bhkd->bhqk", q, k) / jnp.sqrt(jnp.float32(hd))
    p_attn = jax.nn.softmax(s, axis=-1)
    o = jnp.einsum("bhqk,bhkd->bhqd", p_attn, v)
    o = o.transpose(0, 2, 1, 3).reshape(B, N, D)
    o = o @ p["wo"] + p["bo"]
    x1 = xf + o
    x2n = ln(x1, p["ln2_g"], p["ln2_b"])
    h1 = x2n @ p["w1"] + p["b1"]
    h1 = h1 * jax.nn.sigmoid(h1)
    return x1 + (h1 @ p["w2"] + p["b2"])


def init_params(key, embed_dim, hidden_dim):
    keys = jax.random.split(key, 12)
    s = 0.02
    D, H = embed_dim, hidden_dim
    return {
        "ln1_g": jnp.ones((1, D), jnp.float32),
        "ln1_b": jnp.zeros((1, D), jnp.float32),
        # Linear weights stored already as (in, out), i.e. PyTorch W.T
        "wq": s * jax.random.normal(keys[0], (D, D), jnp.float32),
        "bq": s * jax.random.normal(keys[1], (1, D), jnp.float32),
        "wk": s * jax.random.normal(keys[2], (D, D), jnp.float32),
        "bk": s * jax.random.normal(keys[3], (1, D), jnp.float32),
        "wv": s * jax.random.normal(keys[4], (D, D), jnp.float32),
        "bv": s * jax.random.normal(keys[5], (1, D), jnp.float32),
        "wo": s * jax.random.normal(keys[6], (D, D), jnp.float32),
        "bo": s * jax.random.normal(keys[7], (1, D), jnp.float32),
        "ln2_g": jnp.ones((1, D), jnp.float32),
        "ln2_b": jnp.zeros((1, D), jnp.float32),
        "w1": s * jax.random.normal(keys[8], (D, H), jnp.float32),
        "b1": s * jax.random.normal(keys[9], (1, H), jnp.float32),
        "w2": s * jax.random.normal(keys[10], (H, D), jnp.float32),
        "b2": s * jax.random.normal(keys[11], (1, D), jnp.float32),
    }


if __name__ == "__main__":
    # Small but TPU-friendly shapes: D multiple of 128, N multiple of 8.
    # The bt heuristic picks grid=1 here (B*N = 128 rows per step, MXU-filling).
    B, N, D = 8, 16, 128
    num_heads = 4
    mlp_ratio = 4
    hidden_dim = D * mlp_ratio

    key = jax.random.PRNGKey(0)
    kx, kp = jax.random.split(key)
    x = jax.random.normal(kx, (B, N, D), jnp.float32)
    params = init_params(kp, D, hidden_dim)

    out = transformer_block(x, params, num_heads=num_heads)
    out = jax.block_until_ready(out)

    ref = reference_block(x, params, num_heads=num_heads)
    assert out.shape == (B, N, D)
    # bf16 MXU operands + approx reciprocal -> relaxed tolerance vs. pure-f32 reference.
    assert jnp.allclose(out, ref, atol=2e-2, rtol=2e-2), "mismatch vs reference"

    print("KERNEL_OK")
</pallas_src>

<mosaic_0001>
module attributes {stable_mosaic.version = 11 : i64} {
  func.func @transformer_block_kernel(%arg0: i32, %arg1: memref<128x128xf32, #tpu.memory_space<vmem>>, %arg2: memref<128x384xbf16, #tpu.memory_space<vmem>>, %arg3: memref<128x128xbf16, #tpu.memory_space<vmem>>, %arg4: memref<128x512xbf16, #tpu.memory_space<vmem>>, %arg5: memref<512x128xbf16, #tpu.memory_space<vmem>>, %arg6: memref<6x128xf32, #tpu.memory_space<vmem>>, %arg7: memref<1x384xf32, #tpu.memory_space<vmem>>, %arg8: memref<1x512xf32, #tpu.memory_space<vmem>>, %arg9: memref<128x128xf32, #tpu.memory_space<vmem>>) attributes {dimension_semantics = [#tpu.dimension_semantics<parallel>], iteration_bounds = array<i64: 1>, scalar_prefetch = 0 : i64, scratch_operands = 0 : i64, tpu.core_type = #tpu.core_type<tc>, window_params = [{transform_indices = @transform_0, window_bounds = array<i64: 128, 128>}, {pipeline_mode = #tpu.pipeline_mode<synchronous>, transform_indices = @transform_1, window_bounds = array<i64: 128, 384>}, {pipeline_mode = #tpu.pipeline_mode<synchronous>, transform_indices = @transform_2, window_bounds = array<i64: 128, 128>}, {pipeline_mode = #tpu.pipeline_mode<synchronous>, transform_indices = @transform_3, window_bounds = array<i64: 128, 512>}, {pipeline_mode = #tpu.pipeline_mode<synchronous>, transform_indices = @transform_4, window_bounds = array<i64: 512, 128>}, {pipeline_mode = #tpu.pipeline_mode<synchronous>, transform_indices = @transform_5, window_bounds = array<i64: 6, 128>}, {pipeline_mode = #tpu.pipeline_mode<synchronous>, transform_indices = @transform_6, window_bounds = array<i64: 1, 384>}, {pipeline_mode = #tpu.pipeline_mode<synchronous>, transform_indices = @transform_7, window_bounds = array<i64: 1, 512>}, {transform_indices = @transform_8, window_bounds = array<i64: 128, 128>}]} {
    %c0 = arith.constant 0 : index
    %c0_0 = arith.constant 0 : index
    %0 = vector.load %arg1[%c0, %c0_0] : memref<128x128xf32, #tpu.memory_space<vmem>>, vector<128x128xf32>
    %c0_1 = arith.constant 0 : index
    %c0_2 = arith.constant 0 : index
    %1 = vector.load %arg6[%c0_1, %c0_2] : memref<6x128xf32, #tpu.memory_space<vmem>>, vector<6x128xf32>
    %2 = vector.extract_strided_slice %1 {offsets = [0, 0], sizes = [1, 128], strides = [1, 1]} : vector<6x128xf32> to vector<1x128xf32>
    %3 = vector.extract_strided_slice %1 {offsets = [1, 0], sizes = [1, 128], strides = [1, 1]} : vector<6x128xf32> to vector<1x128xf32>
    %4 = vector.extract_strided_slice %1 {offsets = [2, 0], sizes = [1, 128], strides = [1, 1]} : vector<6x128xf32> to vector<1x128xf32>
    %5 = vector.extract_strided_slice %1 {offsets = [3, 0], sizes = [1, 128], strides = [1, 1]} : vector<6x128xf32> to vector<1x128xf32>
    %6 = vector.extract_strided_slice %1 {offsets = [4, 0], sizes = [1, 128], strides = [1, 1]} : vector<6x128xf32> to vector<1x128xf32>
    %7 = vector.extract_strided_slice %1 {offsets = [5, 0], sizes = [1, 128], strides = [1, 1]} : vector<6x128xf32> to vector<1x128xf32>
    %cst = arith.constant dense<0.000000e+00> : vector<128xf32>
    %8 = vector.multi_reduction <add>, %0, %cst [1] : vector<128x128xf32> to vector<128xf32>
    %9 = vector.shape_cast %8 : vector<128xf32> to vector<128x1xf32>
    %cst_3 = arith.constant 1.280000e+02 : f32
    %10 = vector.broadcast %cst_3 : f32 to vector<128x1xf32>
    %11 = arith.divf %9, %10 : vector<128x1xf32>
    %12 = arith.mulf %0, %0 : vector<128x128xf32>
    %cst_4 = arith.constant dense<0.000000e+00> : vector<128xf32>
    %13 = vector.multi_reduction <add>, %12, %cst_4 [1] : vector<128x128xf32> to vector<128xf32>
    %14 = vector.shape_cast %13 : vector<128xf32> to vector<128x1xf32>
    %cst_5 = arith.constant 1.280000e+02 : f32
    %15 = vector.broadcast %cst_5 : f32 to vector<128x1xf32>
    %16 = arith.divf %14, %15 : vector<128x1xf32>
    %17 = arith.mulf %11, %11 : vector<128x1xf32>
    %18 = arith.subf %16, %17 : vector<128x1xf32>
    %19 = vector.broadcast %11 : vector<128x1xf32> to vector<128x128xf32>
    %20 = arith.subf %0, %19 : vector<128x128xf32>
    %cst_6 = arith.constant 9.99999974E-6 : f32
    %21 = vector.broadcast %cst_6 : f32 to vector<128x1xf32>
    %22 = arith.addf %18, %21 : vector<128x1xf32>
    %23 = math.rsqrt %22 : vector<128x1xf32>
    %24 = vector.broadcast %23 : vector<128x1xf32> to vector<128x128xf32>
    %25 = arith.mulf %20, %24 : vector<128x128xf32>
    %26 = vector.broadcast %2 : vector<1x128xf32> to vector<128x128xf32>
    %27 = arith.mulf %25, %26 : vector<128x128xf32>
    %28 = vector.broadcast %3 : vector<1x128xf32> to vector<128x128xf32>
    %29 = arith.addf %27, %28 : vector<128x128xf32>
    %30 = arith.truncf %29 : vector<128x128xf32> to vector<128x128xbf16>
    %c0_7 = arith.constant 0 : index
    %c0_8 = arith.constant 0 : index
    %31 = vector.load %arg2[%c0_7, %c0_8] : memref<128x384xbf16, #tpu.memory_space<vmem>>, vector<128x384xbf16>
    %cst_9 = arith.constant dense<0.000000e+00> : vector<128x384xf32>
    %32 = tpu.matmul %30, %31, %cst_9 {dimension_numbers = #tpu.dot_dimension_numbers<[1], [0], [0], [1], [0, 0, 1, 1], [], []>} : vector<128x128xbf16>, vector<128x384xbf16>, vector<128x384xf32> -> vector<128x384xf32>
    %c0_10 = arith.constant 0 : index
    %c0_11 = arith.constant 0 : index
    %33 = vector.load %arg7[%c0_10, %c0_11] : memref<1x384xf32, #tpu.memory_space<vmem>>, vector<1x384xf32>
    %34 = vector.broadcast %33 : vector<1x384xf32> to vector<128x384xf32>
    %35 = arith.addf %32, %34 : vector<128x384xf32>
    %36 = vector.extract_strided_slice %35 {offsets = [0, 0], sizes = [128, 32], strides = [1, 1]} : vector<128x384xf32> to vector<128x32xf32>
    %37 = vector.shape_cast %36 : vector<128x32xf32> to vector<8x16x32xf32>
    %38 = vector.extract_strided_slice %35 {offsets = [0, 128], sizes = [128, 32], strides = [1, 1]} : vector<128x384xf32> to vector<128x32xf32>
    %39 = vector.shape_cast %38 : vector<128x32xf32> to vector<8x16x32xf32>
    %40 = vector.extract_strided_slice %35 {offsets = [0, 256], sizes = [128, 32], strides = [1, 1]} : vector<128x384xf32> to vector<128x32xf32>
    %41 = vector.shape_cast %40 : vector<128x32xf32> to vector<8x16x32xf32>
    %42 = arith.truncf %37 : vector<8x16x32xf32> to vector<8x16x32xbf16>
    %43 = arith.truncf %39 : vector<8x16x32xf32> to vector<8x16x32xbf16>
    "tpu.trace_start"() <{level = 10 : i32, message = "bqd,bkd->bqk"}> : () -> ()
    %cst_12 = arith.constant dense<0.000000e+00> : vector<8x16x16xf32>
    %44 = tpu.matmul %42, %43, %cst_12 {dimension_numbers = #tpu.dot_dimension_numbers<[2], [2], [1], [1], [0, 0, 0, 1, 1, 1], [0], [0]>} : vector<8x16x32xbf16>, vector<8x16x32xbf16>, vector<8x16x16xf32> -> vector<8x16x16xf32>
    "tpu.trace_stop"() : () -> ()
    %cst_13 = arith.constant dense<0xFF800000> : vector<8x16xf32>
    %45 = vector.multi_reduction <maximumf>, %44, %cst_13 [2] : vector<8x16x16xf32> to vector<8x16xf32>
    %46 = vector.shape_cast %45 : vector<8x16xf32> to vector<8x16x1xf32>
    %47 = vector.broadcast %46 : vector<8x16x1xf32> to vector<8x16x16xf32>
    %48 = arith.subf %44, %47 : vector<8x16x16xf32>
    %49 = math.exp %48 : vector<8x16x16xf32>
    %cst_14 = arith.constant dense<0.000000e+00> : vector<8x16xf32>
    %50 = vector.multi_reduction <add>, %49, %cst_14 [2] : vector<8x16x16xf32> to vector<8x16xf32>
    %51 = vector.shape_cast %50 : vector<8x16xf32> to vector<8x16x1xf32>
    %52 = tpu.reciprocal %51 {approx = true} : vector<8x16x1xf32> -> vector<8x16x1xf32>
    %53 = vector.broadcast %52 : vector<8x16x1xf32> to vector<8x16x16xf32>
    %54 = arith.mulf %49, %53 : vector<8x16x16xf32>
    %55 = arith.truncf %54 : vector<8x16x16xf32> to vector<8x16x16xbf16>
    %56 = arith.truncf %41 : vector<8x16x32xf32> to vector<8x16x32xbf16>
    "tpu.trace_start"() <{level = 10 : i32, message = "bqk,bkd->bqd"}> : () -> ()
    %cst_15 = arith.constant dense<0.000000e+00> : vector<8x16x32xf32>
    %57 = tpu.matmul %55, %56, %cst_15 {dimension_numbers = #tpu.dot_dimension_numbers<[2], [1], [1], [2], [0, 0, 0, 1, 1, 2], [0], [0]>} : vector<8x16x16xbf16>, vector<8x16x32xbf16>, vector<8x16x32xf32> -> vector<8x16x32xf32>
    "tpu.trace_stop"() : () -> ()
    %58 = vector.shape_cast %57 : vector<8x16x32xf32> to vector<128x32xf32>
    %59 = vector.extract_strided_slice %35 {offsets = [0, 32], sizes = [128, 32], strides = [1, 1]} : vector<128x384xf32> to vector<128x32xf32>
    %60 = vector.shape_cast %59 : vector<128x32xf32> to vector<8x16x32xf32>
    %61 = vector.extract_strided_slice %35 {offsets = [0, 160], sizes = [128, 32], strides = [1, 1]} : vector<128x384xf32> to vector<128x32xf32>
    %62 = vector.shape_cast %61 : vector<128x32xf32> to vector<8x16x32xf32>
    %63 = vector.extract_strided_slice %35 {offsets = [0, 288], sizes = [128, 32], strides = [1, 1]} : vector<128x384xf32> to vector<128x32xf32>
    %64 = vector.shape_cast %63 : vector<128x32xf32> to vector<8x16x32xf32>
    %65 = arith.truncf %60 : vector<8x16x32xf32> to vector<8x16x32xbf16>
    %66 = arith.truncf %62 : vector<8x16x32xf32> to vector<8x16x32xbf16>
    "tpu.trace_start"() <{level = 10 : i32, message = "bqd,bkd->bqk"}> : () -> ()
    %cst_16 = arith.constant dense<0.000000e+00> : vector<8x16x16xf32>
    %67 = tpu.matmul %65, %66, %cst_16 {dimension_numbers = #tpu.dot_dimension_numbers<[2], [2], [1], [1], [0, 0, 0, 1, 1, 1], [0], [0]>} : vector<8x16x32xbf16>, vector<8x16x32xbf16>, vector<8x16x16xf32> -> vector<8x16x16xf32>
    "tpu.trace_stop"() : () -> ()
    %cst_17 = arith.constant dense<0xFF800000> : vector<8x16xf32>
    %68 = vector.multi_reduction <maximumf>, %67, %cst_17 [2] : vector<8x16x16xf32> to vector<8x16xf32>
    %69 = vector.shape_cast %68 : vector<8x16xf32> to vector<8x16x1xf32>
    %70 = vector.broadcast %69 : vector<8x16x1xf32> to vector<8x16x16xf32>
    %71 = arith.subf %67, %70 : vector<8x16x16xf32>
    %72 = math.exp %71 : vector<8x16x16xf32>
    %cst_18 = arith.constant dense<0.000000e+00> : vector<8x16xf32>
    %73 = vector.multi_reduction <add>, %72, %cst_18 [2] : vector<8x16x16xf32> to vector<8x16xf32>
    %74 = vector.shape_cast %73 : vector<8x16xf32> to vector<8x16x1xf32>
    %75 = tpu.reciprocal %74 {approx = true} : vector<8x16x1xf32> -> vector<8x16x1xf32>
    %76 = vector.broadcast %75 : vector<8x16x1xf32> to vector<8x16x16xf32>
    %77 = arith.mulf %72, %76 : vector<8x16x16xf32>
    %78 = arith.truncf %77 : vector<8x16x16xf32> to vector<8x16x16xbf16>
    %79 = arith.truncf %64 : vector<8x16x32xf32> to vector<8x16x32xbf16>
    "tpu.trace_start"() <{level = 10 : i32, message = "bqk,bkd->bqd"}> : () -> ()
    %cst_19 = arith.constant dense<0.000000e+00> : vector<8x16x32xf32>
    %80 = tpu.matmul %78, %79, %cst_19 {dimension_numbers = #tpu.dot_dimension_numbers<[2], [1], [1], [2], [0, 0, 0, 1, 1, 2], [0], [0]>} : vector<8x16x16xbf16>, vector<8x16x32xbf16>, vector<8x16x32xf32> -> vector<8x16x32xf32>
    "tpu.trace_stop"() : () -> ()
    %81 = vector.shape_cast %80 : vector<8x16x32xf32> to vector<128x32xf32>
    %82 = vector.extract_strided_slice %35 {offsets = [0, 64], sizes = [128, 32], strides = [1, 1]} : vector<128x384xf32> to vector<128x32xf32>
    %83 = vector.shape_cast %82 : vector<128x32xf32> to vector<8x16x32xf32>
    %84 = vector.extract_strided_slice %35 {offsets = [0, 192], sizes = [128, 32], strides = [1, 1]} : vector<128x384xf32> to vector<128x32xf32>
    %85 = vector.shape_cast %84 : vector<128x32xf32> to vector<8x16x32xf32>
    %86 = vector.extract_strided_slice %35 {offsets = [0, 320], sizes = [128, 32], strides = [1, 1]} : vector<128x384xf32> to vector<128x32xf32>
    %87 = vector.shape_cast %86 : vector<128x32xf32> to vector<8x16x32xf32>
    %88 = arith.truncf %83 : vector<8x16x32xf32> to vector<8x16x32xbf16>
    %89 = arith.truncf %85 : vector<8x16x32xf32> to vector<8x16x32xbf16>
    "tpu.trace_start"() <{level = 10 : i32, message = "bqd,bkd->bqk"}> : () -> ()
    %cst_20 = arith.constant dense<0.000000e+00> : vector<8x16x16xf32>
    %90 = tpu.matmul %88, %89, %cst_20 {dimension_numbers = #tpu.dot_dimension_numbers<[2], [2], [1], [1], [0, 0, 0, 1, 1, 1], [0], [0]>} : vector<8x16x32xbf16>, vector<8x16x32xbf16>, vector<8x16x16xf32> -> vector<8x16x16xf32>
    "tpu.trace_stop"() : () -> ()
    %cst_21 = arith.constant dense<0xFF800000> : vector<8x16xf32>
    %91 = vector.multi_reduction <maximumf>, %90, %cst_21 [2] : vector<8x16x16xf32> to vector<8x16xf32>
    %92 = vector.shape_cast %91 : vector<8x16xf32> to vector<8x16x1xf32>
    %93 = vector.broadcast %92 : vector<8x16x1xf32> to vector<8x16x16xf32>
    %94 = arith.subf %90, %93 : vector<8x16x16xf32>
    %95 = math.exp %94 : vector<8x16x16xf32>
    %cst_22 = arith.constant dense<0.000000e+00> : vector<8x16xf32>
    %96 = vector.multi_reduction <add>, %95, %cst_22 [2] : vector<8x16x16xf32> to vector<8x16xf32>
    %97 = vector.shape_cast %96 : vector<8x16xf32> to vector<8x16x1xf32>
    %98 = tpu.reciprocal %97 {approx = true} : vector<8x16x1xf32> -> vector<8x16x1xf32>
    %99 = vector.broadcast %98 : vector<8x16x1xf32> to vector<8x16x16xf32>
    %100 = arith.mulf %95, %99 : vector<8x16x16xf32>
    %101 = arith.truncf %100 : vector<8x16x16xf32> to vector<8x16x16xbf16>
    %102 = arith.truncf %87 : vector<8x16x32xf32> to vector<8x16x32xbf16>
    "tpu.trace_start"() <{level = 10 : i32, message = "bqk,bkd->bqd"}> : () -> ()
    %cst_23 = arith.constant dense<0.000000e+00> : vector<8x16x32xf32>
    %103 = tpu.matmul %101, %102, %cst_23 {dimension_numbers = #tpu.dot_dimension_numbers<[2], [1], [1], [2], [0, 0, 0, 1, 1, 2], [0], [0]>} : vector<8x16x16xbf16>, vector<8x16x32xbf16>, vector<8x16x32xf32> -> vector<8x16x32xf32>
    "tpu.trace_stop"() : () -> ()
    %104 = vector.shape_cast %103 : vector<8x16x32xf32> to vector<128x32xf32>
    %105 = vector.extract_strided_slice %35 {offsets = [0, 96], sizes = [128, 32], strides = [1, 1]} : vector<128x384xf32> to vector<128x32xf32>
    %106 = vector.shape_cast %105 : vector<128x32xf32> to vector<8x16x32xf32>
    %107 = vector.extract_strided_slice %35 {offsets = [0, 224], sizes = [128, 32], strides = [1, 1]} : vector<128x384xf32> to vector<128x32xf32>
    %108 = vector.shape_cast %107 : vector<128x32xf32> to vector<8x16x32xf32>
    %109 = vector.extract_strided_slice %35 {offsets = [0, 352], sizes = [128, 32], strides = [1, 1]} : vector<128x384xf32> to vector<128x32xf32>
    %110 = vector.shape_cast %109 : vector<128x32xf32> to vector<8x16x32xf32>
    %111 = arith.truncf %106 : vector<8x16x32xf32> to vector<8x16x32xbf16>
    %112 = arith.truncf %108 : vector<8x16x32xf32> to vector<8x16x32xbf16>
    "tpu.trace_start"() <{level = 10 : i32, message = "bqd,bkd->bqk"}> : () -> ()
    %cst_24 = arith.constant dense<0.000000e+00> : vector<8x16x16xf32>
    %113 = tpu.matmul %111, %112, %cst_24 {dimension_numbers = #tpu.dot_dimension_numbers<[2], [2], [1], [1], [0, 0, 0, 1, 1, 1], [0], [0]>} : vector<8x16x32xbf16>, vector<8x16x32xbf16>, vector<8x16x16xf32> -> vector<8x16x16xf32>
    "tpu.trace_stop"() : () -> ()
    %cst_25 = arith.constant dense<0xFF800000> : vector<8x16xf32>
    %114 = vector.multi_reduction <maximumf>, %113, %cst_25 [2] : vector<8x16x16xf32> to vector<8x16xf32>
    %115 = vector.shape_cast %114 : vector<8x16xf32> to vector<8x16x1xf32>
    %116 = vector.broadcast %115 : vector<8x16x1xf32> to vector<8x16x16xf32>
    %117 = arith.subf %113, %116 : vector<8x16x16xf32>
    %118 = math.exp %117 : vector<8x16x16xf32>
    %cst_26 = arith.constant dense<0.000000e+00> : vector<8x16xf32>
    %119 = vector.multi_reduction <add>, %118, %cst_26 [2] : vector<8x16x16xf32> to vector<8x16xf32>
    %120 = vector.shape_cast %119 : vector<8x16xf32> to vector<8x16x1xf32>
    %121 = tpu.reciprocal %120 {approx = true} : vector<8x16x1xf32> -> vector<8x16x1xf32>
    %122 = vector.broadcast %121 : vector<8x16x1xf32> to vector<8x16x16xf32>
    %123 = arith.mulf %118, %122 : vector<8x16x16xf32>
    %124 = arith.truncf %123 : vector<8x16x16xf32> to vector<8x16x16xbf16>
    %125 = arith.truncf %110 : vector<8x16x32xf32> to vector<8x16x32xbf16>
    "tpu.trace_start"() <{level = 10 : i32, message = "bqk,bkd->bqd"}> : () -> ()
    %cst_27 = arith.constant dense<0.000000e+00> : vector<8x16x32xf32>
    %126 = tpu.matmul %124, %125, %cst_27 {dimension_numbers = #tpu.dot_dimension_numbers<[2], [1], [1], [2], [0, 0, 0, 1, 1, 2], [0], [0]>} : vector<8x16x16xbf16>, vector<8x16x32xbf16>, vector<8x16x32xf32> -> vector<8x16x32xf32>
    "tpu.trace_stop"() : () -> ()
    %127 = vector.shape_cast %126 : vector<8x16x32xf32> to vector<128x32xf32>
    %128 = tpu.concatenate %58, %81, %104, %127 in 1 : vector<128x32xf32>, vector<128x32xf32>, vector<128x32xf32>, vector<128x32xf32> -> vector<128x128xf32>
    %129 = arith.truncf %128 : vector<128x128xf32> to vector<128x128xbf16>
    %c0_28 = arith.constant 0 : index
    %c0_29 = arith.constant 0 : index
    %130 = vector.load %arg3[%c0_28, %c0_29] : memref<128x128xbf16, #tpu.memory_space<vmem>>, vector<128x128xbf16>
    %cst_30 = arith.constant dense<0.000000e+00> : vector<128x128xf32>
    %131 = tpu.matmul %129, %130, %cst_30 {dimension_numbers = #tpu.dot_dimension_numbers<[1], [0], [0], [1], [0, 0, 1, 1], [], []>} : vector<128x128xbf16>, vector<128x128xbf16>, vector<128x128xf32> -> vector<128x128xf32>
    %132 = vector.broadcast %4 : vector<1x128xf32> to vector<128x128xf32>
    %133 = arith.addf %131, %132 : vector<128x128xf32>
    %134 = arith.addf %0, %133 : vector<128x128xf32>
    %cst_31 = arith.constant dense<0.000000e+00> : vector<128xf32>
    %135 = vector.multi_reduction <add>, %134, %cst_31 [1] : vector<128x128xf32> to vector<128xf32>
    %136 = vector.shape_cast %135 : vector<128xf32> to vector<128x1xf32>
    %cst_32 = arith.constant 1.280000e+02 : f32
    %137 = vector.broadcast %cst_32 : f32 to vector<128x1xf32>
    %138 = arith.divf %136, %137 : vector<128x1xf32>
    %139 = arith.mulf %134, %134 : vector<128x128xf32>
    %cst_33 = arith.constant dense<0.000000e+00> : vector<128xf32>
    %140 = vector.multi_reduction <add>, %139, %cst_33 [1] : vector<128x128xf32> to vector<128xf32>
    %141 = vector.shape_cast %140 : vector<128xf32> to vector<128x1xf32>
    %cst_34 = arith.constant 1.280000e+02 : f32
    %142 = vector.broadcast %cst_34 : f32 to vector<128x1xf32>
    %143 = arith.divf %141, %142 : vector<128x1xf32>
    %144 = arith.mulf %138, %138 : vector<128x1xf32>
    %145 = arith.subf %143, %144 : vector<128x1xf32>
    %146 = vector.broadcast %138 : vector<128x1xf32> to vector<128x128xf32>
    %147 = arith.subf %134, %146 : vector<128x128xf32>
    %cst_35 = arith.constant 9.99999974E-6 : f32
    %148 = vector.broadcast %cst_35 : f32 to vector<128x1xf32>
    %149 = arith.addf %145, %148 : vector<128x1xf32>
    %150 = math.rsqrt %149 : vector<128x1xf32>
    %151 = vector.broadcast %150 : vector<128x1xf32> to vector<128x128xf32>
    %152 = arith.mulf %147, %151 : vector<128x128xf32>
    %153 = vector.broadcast %5 : vector<1x128xf32> to vector<128x128xf32>
    %154 = arith.mulf %152, %153 : vector<128x128xf32>
    %155 = vector.broadcast %6 : vector<1x128xf32> to vector<128x128xf32>
    %156 = arith.addf %154, %155 : vector<128x128xf32>
    %157 = arith.truncf %156 : vector<128x128xf32> to vector<128x128xbf16>
    %c0_36 = arith.constant 0 : index
    %c0_37 = arith.constant 0 : index
    %158 = vector.load %arg4[%c0_36, %c0_37] : memref<128x512xbf16, #tpu.memory_space<vmem>>, vector<128x512xbf16>
    %cst_38 = arith.constant dense<0.000000e+00> : vector<128x512xf32>
    %159 = tpu.matmul %157, %158, %cst_38 {dimension_numbers = #tpu.dot_dimension_numbers<[1], [0], [0], [1], [0, 0, 1, 1], [], []>} : vector<128x128xbf16>, vector<128x512xbf16>, vector<128x512xf32> -> vector<128x512xf32>
    %c0_39 = arith.constant 0 : index
    %c0_40 = arith.constant 0 : index
    %160 = vector.load %arg8[%c0_39, %c0_40] : memref<1x512xf32, #tpu.memory_space<vmem>>, vector<1x512xf32>
    %161 = vector.broadcast %160 : vector<1x512xf32> to vector<128x512xf32>
    %162 = arith.addf %159, %161 : vector<128x512xf32>
    %163 = arith.negf %162 : vector<128x512xf32>
    %164 = math.exp %163 : vector<128x512xf32>
    %cst_41 = arith.constant 1.000000e+00 : f32
    %165 = vector.broadcast %cst_41 : f32 to vector<128x512xf32>
    %166 = arith.addf %165, %164 : vector<128x512xf32>
    %167 = arith.divf %165, %166 : vector<128x512xf32>
    %168 = arith.mulf %162, %167 : vector<128x512xf32>
    %169 = arith.truncf %168 : vector<128x512xf32> to vector<128x512xbf16>
    %c0_42 = arith.constant 0 : index
    %c0_43 = arith.constant 0 : index
    %170 = vector.load %arg5[%c0_42, %c0_43] : memref<512x128xbf16, #tpu.memory_space<vmem>>, vector<512x128xbf16>
    %cst_44 = arith.constant dense<0.000000e+00> : vector<128x128xf32>
    %171 = tpu.matmul %169, %170, %cst_44 {dimension_numbers = #tpu.dot_dimension_numbers<[1], [0], [0], [1], [0, 0, 1, 1], [], []>} : vector<128x512xbf16>, vector<512x128xbf16>, vector<128x128xf32> -> vector<128x128xf32>
    %172 = vector.broadcast %7 : vector<1x128xf32> to vector<128x128xf32>
    %173 = arith.addf %171, %172 : vector<128x128xf32>
    %174 = arith.addf %134, %173 : vector<128x128xf32>
    %c0_45 = arith.constant 0 : index
    %c0_46 = arith.constant 0 : index
    %175 = vector.load %arg9[%c0_45, %c0_46] : memref<128x128xf32, #tpu.memory_space<vmem>>, vector<128x128xf32>
    tpu.vector_store %arg9[%c0_45, %c0_46], %174 {strides = array<i32>} : memref<128x128xf32, #tpu.memory_space<vmem>>, vector<128x128xf32>,
    return
  }
  func.func @transform_0(%arg0: i32) -> (i32, i32) {
    %c0_i32 = arith.constant 0 : i32
    %c0_i32_0 = arith.constant 0 : i32
    return %arg0, %c0_i32 : i32, i32
  }
  func.func @transform_1(%arg0: i32) -> (i32, i32) {
    %c0_i32 = arith.constant 0 : i32
    %c0_i32_0 = arith.constant 0 : i32
    %c0_i32_1 = arith.constant 0 : i32
    return %c0_i32, %c0_i32_0 : i32, i32
  }
  func.func @transform_2(%arg0: i32) -> (i32, i32) {
    %c0_i32 = arith.constant 0 : i32
    %c0_i32_0 = arith.constant 0 : i32
    %c0_i32_1 = arith.constant 0 : i32
    return %c0_i32, %c0_i32_0 : i32, i32
  }
  func.func @transform_3(%arg0: i32) -> (i32, i32) {
    %c0_i32 = arith.constant 0 : i32
    %c0_i32_0 = arith.constant 0 : i32
    %c0_i32_1 = arith.constant 0 : i32
    return %c0_i32, %c0_i32_0 : i32, i32
  }
  func.func @transform_4(%arg0: i32) -> (i32, i32) {
    %c0_i32 = arith.constant 0 : i32
    %c0_i32_0 = arith.constant 0 : i32
    %c0_i32_1 = arith.constant 0 : i32
    return %c0_i32, %c0_i32_0 : i32, i32
  }
  func.func @transform_5(%arg0: i32) -> (i32, i32) {
    %c0_i32 = arith.constant 0 : i32
    %c0_i32_0 = arith.constant 0 : i32
    %c0_i32_1 = arith.constant 0 : i32
    return %c0_i32, %c0_i32_0 : i32, i32
  }
  func.func @transform_6(%arg0: i32) -> (i32, i32) {
    %c0_i32 = arith.constant 0 : i32
    %c0_i32_0 = arith.constant 0 : i32
    %c0_i32_1 = arith.constant 0 : i32
    return %c0_i32, %c0_i32_0 : i32, i32
  }
  func.func @transform_7(%arg0: i32) -> (i32, i32) {
    %c0_i32 = arith.constant 0 : i32
    %c0_i32_0 = arith.constant 0 : i32
    %c0_i32_1 = arith.constant 0 : i32
    return %c0_i32, %c0_i32_0 : i32, i32
  }
  func.func @transform_8(%arg0: i32) -> (i32, i32) {
    %c0_i32 = arith.constant 0 : i32
    %c0_i32_0 = arith.constant 0 : i32
    return %arg0, %c0_i32 : i32, i32
  }
}

</mosaic_0001>

<llo_original>
// kernel: tpu_custom_call.1
$region0: #{tpu_custom_call.1}
  #allocation0 [shape = 'u32[]', space=smem, size = 0x4, offset = 0x4, fixed_abs, tag = 'smem constant byte address 0x4 - core index']
  #allocation1 [shape = 'u32[144,128]{1,0:T(1,128)}', space=vmem, size = 0x12000, scoped, tag = 'internal scratch']
  %s0 = inlined_call_operand.hbm [shape: f32[128,128], index: 0, kind: input, shape index: {}]
  %s1 = inlined_call_operand.hbm [shape: bf16[128,384], index: 1, kind: input, shape index: {}]
  %s2 = inlined_call_operand.hbm [shape: bf16[128,128], index: 2, kind: input, shape index: {}]
  %s3 = inlined_call_operand.hbm [shape: bf16[128,512], index: 3, kind: input, shape index: {}]
  %s4 = inlined_call_operand.hbm [shape: bf16[512,128], index: 4, kind: input, shape index: {}]
  %s5 = inlined_call_operand.vmem [shape: f32[6,128], index: 5, kind: input, shape index: {}]
  %s6 = inlined_call_operand.vmem [shape: f32[1,384], index: 6, kind: input, shape index: {}]
  %s7 = inlined_call_operand.vmem [shape: f32[1,512], index: 7, kind: input, shape index: {}]
  %s8 = inlined_call_operand.hbm [shape: f32[128,128], index: 8, kind: output, shape index: {}]
  %s9 = sld [smem:[#allocation0]]
  $region62: #{tpu_custom_call.1} parent=0
    _
  %s11 = ssub.s32 1, %s9
  %s12 = scalar_select 0, %s11, %s9
  $region1: #{tpu_custom_call.1} parent=0
    #allocation2 [shape = 'u8[65536]{0}', space=vmem, size = 0x10000, scoped, tag = 'input window, operand 0, single buffered']
    #allocation3 [shape = 's32[1]{0}', space=sflag, size = 0x4, scoped, tag = 'scoped memory for tpu_custom_call.1']
    #allocation4 [shape = 's32[1]{0}', space=sflag, size = 0x4, scoped, tag = 'scoped memory for tpu_custom_call.1']
    #allocation5 [shape = 'u8[98304]{0}', space=vmem, size = 0x18000, scoped, tag = 'input window, operand 1, single buffered']
    #allocation6 [shape = 's32[1]{0}', space=sflag, size = 0x4, scoped, tag = 'scoped memory for tpu_custom_call.1']
    #allocation7 [shape = 'u8[32768]{0}', space=vmem, size = 0x8000, scoped, tag = 'input window, operand 2, single buffered']
    #allocation8 [shape = 'u8[131072]{0}', space=vmem, size = 0x20000, scoped, tag = 'input window, operand 3, single buffered']
    #allocation9 [shape = 's32[1]{0}', space=sflag, size = 0x4, scoped, tag = 'scoped memory for tpu_custom_call.1']
    #allocation10 [shape = 'u8[131072]{0}', space=vmem, size = 0x20000, scoped, tag = 'input window, operand 4, single buffered']
    #allocation11 [shape = 'u8[65536]{0}', space=vmem, size = 0x10000, scoped, tag = 'output window, operand 0, single buffered']
    %13 = vsyncpa [#allocation3], 0
    %14 = vsyncpa [#allocation6], 0
    %15 = vsyncpa [#allocation9], 0
    %16 = vsyncpa [#allocation4], 0
    // Predicated region
    $region2: #{tpu_custom_call.1} parent=1 // pred_check
      _
    $region3: #{tpu_custom_call.1} parent=1 // pred_check_branch
      %18 = sbr.rel (0) target = $region5
    $region4: #{tpu_custom_call.1} parent=1 // pred_region
      %s20 = ssub.s32 2048, 2048
      %21 = vsyncadd [#allocation3], %s20
      %s22 = sshll.u32 [#allocation2], 4
      %s23 = int_to_ptr.vmem [resolvable:$true] %s22
      %28 = dma.hbm_to_vmem [thread:$0]  %s0, 2048, %s23, [#allocation3], 128, 128, 8
    $region5: #{tpu_custom_call.1} parent=1 // pred_fallthru
      _
    // Predicated region
    $region6: #{tpu_custom_call.1} parent=1 // pred_check
      _
    $region7: #{tpu_custom_call.1} parent=1 // pred_check_branch
      %30 = sbr.rel (0) target = $region9
    $region8: #{tpu_custom_call.1} parent=1 // pred_region
      %s32 = ssub.s32 3072, 3072
      %33 = vsyncadd [#allocation6], %s32
      %s34 = sshll.u32 [#allocation5], 4
      %s35 = int_to_ptr.vmem [resolvable:$true] %s34
      %40 = dma.hbm_to_vmem [thread:$0]  %s1, 3072, %s35, [#allocation6], 192, 192, 12
    $region9: #{tpu_custom_call.1} parent=1 // pred_fallthru
      _
    // Predicated region
    $region10: #{tpu_custom_call.1} parent=1 // pred_check
      _
    $region11: #{tpu_custom_call.1} parent=1 // pred_check_branch
      %42 = sbr.rel (0) target = $region13
    $region12: #{tpu_custom_call.1} parent=1 // pred_region
      %s44 = ssub.s32 1024, 1024
      %45 = vsyncadd [#allocation6], %s44
      %s46 = sshll.u32 [#allocation7], 4
      %s47 = int_to_ptr.vmem [resolvable:$true] %s46
      %52 = dma.hbm_to_vmem [thread:$0]  %s2, 1024, %s47, [#allocation6], 64, 64, 4
    $region13: #{tpu_custom_call.1} parent=1 // pred_fallthru
      _
    // Predicated region
    $region14: #{tpu_custom_call.1} parent=1 // pred_check
      _
    $region15: #{tpu_custom_call.1} parent=1 // pred_check_branch
      %54 = sbr.rel (0) target = $region17
    $region16: #{tpu_custom_call.1} parent=1 // pred_region
      %s56 = ssub.s32 4096, 4096
      %57 = vsyncadd [#allocation9], %s56
      %s58 = sshll.u32 [#allocation8], 4
      %s59 = int_to_ptr.vmem [resolvable:$true] %s58
      %64 = dma.hbm_to_vmem [thread:$0]  %s3, 4096, %s59, [#allocation9], 256, 256, 16
    $region17: #{tpu_custom_call.1} parent=1 // pred_fallthru
      _
    // Predicated region
    $region18: #{tpu_custom_call.1} parent=1 // pred_check
      _
    $region19: #{tpu_custom_call.1} parent=1 // pred_check_branch
      %66 = sbr.rel (0) target = $region21
    $region20: #{tpu_custom_call.1} parent=1 // pred_region
      %s68 = ssub.s32 4096, 4096
      %69 = vsyncadd [#allocation9], %s68
      %s70 = sshll.u32 [#allocation10], 4
      %s71 = int_to_ptr.vmem [resolvable:$true] %s70
      %76 = dma.hbm_to_vmem [thread:$0]  %s4, 4096, %s71, [#allocation9], 64, 64, 4
    $region21: #{tpu_custom_call.1} parent=1 // pred_fallthru
      _
    // Predicated region
    $region22: #{tpu_custom_call.1} parent=1 // pred_check
      _
    $region23: #{tpu_custom_call.1} parent=1 // pred_check_branch
      %78 = sbr.rel (0) target = $region25
    $region24: #{tpu_custom_call.1} parent=1 // pred_region
      _
    $region25: #{tpu_custom_call.1} parent=1 // pred_fallthru
      _
    // Predicated region
    $region26: #{tpu_custom_call.1} parent=1 // pred_check
      _
    $region27: #{tpu_custom_call.1} parent=1 // pred_check_branch
      %80 = sbr.rel (0) target = $region29
    $region28: #{tpu_custom_call.1} parent=1 // pred_region
      _
    $region29: #{tpu_custom_call.1} parent=1 // pred_fallthru
      _
    // Predicated region
    $region30: #{tpu_custom_call.1} parent=1 // pred_check
      _
    $region31: #{tpu_custom_call.1} parent=1 // pred_check_branch
      %82 = sbr.rel (0) target = $region33
    $region32: #{tpu_custom_call.1} parent=1 // pred_region
      _
    $region33: #{tpu_custom_call.1} parent=1 // pred_fallthru
      _
    // Predicated region
    $region34: #{tpu_custom_call.1} parent=1 // pred_check
      _
    $region35: #{tpu_custom_call.1} parent=1 // pred_check_branch
      %84 = sbr.rel (0) target = $region37
    $region36: #{tpu_custom_call.1} parent=1 // pred_region
      %85 = dma.done [#allocation3], 2048
    $region37: #{tpu_custom_call.1} parent=1 // pred_fallthru
      _
    // Predicated region
    $region38: #{tpu_custom_call.1} parent=1 // pred_check
      _
    $region39: #{tpu_custom_call.1} parent=1 // pred_check_branch
      %87 = sbr.rel (0) target = $region41
    $region40: #{tpu_custom_call.1} parent=1 // pred_region
      %88 = dma.done [#allocation6], 3072
    $region41: #{tpu_custom_call.1} parent=1 // pred_fallthru
      _
    // Predicated region
    $region42: #{tpu_custom_call.1} parent=1 // pred_check
      _
    $region43: #{tpu_custom_call.1} parent=1 // pred_check_branch
      %90 = sbr.rel (0) target = $region45
    $region44: #{tpu_custom_call.1} parent=1 // pred_region
      %91 = dma.done [#allocation6], 1024
    $region45: #{tpu_custom_call.1} parent=1 // pred_fallthru
      _
    // Predicated region
    $region46: #{tpu_custom_call.1} parent=1 // pred_check
      _
    $region47: #{tpu_custom_call.1} parent=1 // pred_check_branch
      %93 = sbr.rel (0) target = $region49
    $region48: #{tpu_custom_call.1} parent=1 // pred_region
      %94 = dma.done [#allocation9], 4096
    $region49: #{tpu_custom_call.1} parent=1 // pred_fallthru
      _
    // Predicated region
    $region50: #{tpu_custom_call.1} parent=1 // pred_check
      _
    $region51: #{tpu_custom_call.1} parent=1 // pred_check_branch
      %96 = sbr.rel (0) target = $region53
    $region52: #{tpu_custom_call.1} parent=1 // pred_region
      %97 = dma.done [#allocation9], 4096
    $region53: #{tpu_custom_call.1} parent=1 // pred_fallthru
      _
    %v99 = vld [vmem:[#allocation2] sm:$0xff]
    %v100 = vld [vmem:[#allocation2 + $0x8] sm:$0xff]
    %v101 = vld [vmem:[#allocation2 + $0x10] sm:$0xff]
    %v102 = vld [vmem:[#allocation2 + $0x18] sm:$0xff]
    %v103 = vld [vmem:[#allocation2 + $0x20] sm:$0xff]
    %v104 = vld [vmem:[#allocation2 + $0x28] sm:$0xff]
    %v105 = vld [vmem:[#allocation2 + $0x30] sm:$0xff]
    %v106 = vld [vmem:[#allocation2 + $0x38] sm:$0xff]
    %v107 = vld [vmem:[#allocation2 + $0x40] sm:$0xff]
    %v108 = vld [vmem:[#allocation2 + $0x48] sm:$0xff]
    %v109 = vld [vmem:[#allocation2 + $0x50] sm:$0xff]
    %v110 = vld [vmem:[#allocation2 + $0x58] sm:$0xff]
    %v111 = vld [vmem:[#allocation2 + $0x60] sm:$0xff]
    %v112 = vld [vmem:[#allocation2 + $0x68] sm:$0xff]
    %v113 = vld [vmem:[#allocation2 + $0x70] sm:$0xff]
    %v114 = vld [vmem:[#allocation2 + $0x78] sm:$0xff]
    %v115 = vld [vmem:[%s5] sm:$0x3f]
    %116 = vadd.xlane.f32.xlu0 %v99
    %v117 = vpop.xlane.xlu0 %116
    %118 = vadd.xlane.f32.xlu0 %v100
    %v119 = vpop.xlane.xlu0 %118
    %120 = vadd.xlane.f32.xlu0 %v101
    %v121 = vpop.xlane.xlu0 %120
    %122 = vadd.xlane.f32.xlu0 %v102
    %v123 = vpop.xlane.xlu0 %122
    %124 = vadd.xlane.f32.xlu0 %v103
    %v125 = vpop.xlane.xlu0 %124
    %126 = vadd.xlane.f32.xlu0 %v104
    %v127 = vpop.xlane.xlu0 %126
    %128 = vadd.xlane.f32.xlu0 %v105
    %v129 = vpop.xlane.xlu0 %128
    %130 = vadd.xlane.f32.xlu0 %v106
    %v131 = vpop.xlane.xlu0 %130
    %132 = vadd.xlane.f32.xlu0 %v107
    %v133 = vpop.xlane.xlu0 %132
    %134 = vadd.xlane.f32.xlu0 %v108
    %v135 = vpop.xlane.xlu0 %134
    %136 = vadd.xlane.f32.xlu0 %v109
    %v137 = vpop.xlane.xlu0 %136
    %138 = vadd.xlane.f32.xlu0 %v110
    %v139 = vpop.xlane.xlu0 %138
    %140 = vadd.xlane.f32.xlu0 %v111
    %v141 = vpop.xlane.xlu0 %140
    %142 = vadd.xlane.f32.xlu0 %v112
    %v143 = vpop.xlane.xlu0 %142
    %144 = vadd.xlane.f32.xlu0 %v113
    %v145 = vpop.xlane.xlu0 %144
    %146 = vadd.xlane.f32.xlu0 %v114
    %v147 = vpop.xlane.xlu0 %146
    %v148 = vrcp.pop 128.0
    %v149 = vmul.f32 %v117, %v148
    %v150 = vmul.f32 %v119, %v148
    %v151 = vmul.f32 %v121, %v148
    %v152 = vmul.f32 %v123, %v148
    %v153 = vmul.f32 %v125, %v148
    %v154 = vmul.f32 %v127, %v148
    %v155 = vmul.f32 %v129, %v148
    %v156 = vmul.f32 %v131, %v148
    %v157 = vmul.f32 %v133, %v148
    %v158 = vmul.f32 %v135, %v148
    %v159 = vmul.f32 %v137, %v148
    %v160 = vmul.f32 %v139, %v148
    %v161 = vmul.f32 %v141, %v148
    %v162 = vmul.f32 %v143, %v148
    %v163 = vmul.f32 %v145, %v148
    %v164 = vmul.f32 %v147, %v148
    %v165 = vmul.f32 %v99, %v99
    %v166 = vmul.f32 %v100, %v100
    %v167 = vmul.f32 %v101, %v101
    %v168 = vmul.f32 %v102, %v102
    %v169 = vmul.f32 %v103, %v103
    %v170 = vmul.f32 %v104, %v104
    %v171 = vmul.f32 %v105, %v105
    %v172 = vmul.f32 %v106, %v106
    %v173 = vmul.f32 %v107, %v107
    %v174 = vmul.f32 %v108, %v108
    %v175 = vmul.f32 %v109, %v109
    %v176 = vmul.f32 %v110, %v110
    %v177 = vmul.f32 %v111, %v111
    %v178 = vmul.f32 %v112, %v112
    %v179 = vmul.f32 %v113, %v113
    %v180 = vmul.f32 %v114, %v114
    %181 = vadd.xlane.f32.xlu0 %v165
    %v182 = vpop.xlane.xlu0 %181
    %183 = vadd.xlane.f32.xlu0 %v166
    %v184 = vpop.xlane.xlu0 %183
    %185 = vadd.xlane.f32.xlu0 %v167
    %v186 = vpop.xlane.xlu0 %185
    %187 = vadd.xlane.f32.xlu0 %v168
    %v188 = vpop.xlane.xlu0 %187
    %189 = vadd.xlane.f32.xlu0 %v169
    %v190 = vpop.xlane.xlu0 %189
    %191 = vadd.xlane.f32.xlu0 %v170
    %v192 = vpop.xlane.xlu0 %191
    %193 = vadd.xlane.f32.xlu0 %v171
    %v194 = vpop.xlane.xlu0 %193
    %195 = vadd.xlane.f32.xlu0 %v172
    %v196 = vpop.xlane.xlu0 %195
    %197 = vadd.xlane.f32.xlu0 %v173
    %v198 = vpop.xlane.xlu0 %197
    %199 = vadd.xlane.f32.xlu0 %v174
    %v200 = vpop.xlane.xlu0 %199
    %201 = vadd.xlane.f32.xlu0 %v175
    %v202 = vpop.xlane.xlu0 %201
    %203 = vadd.xlane.f32.xlu0 %v176
    %v204 = vpop.xlane.xlu0 %203
    %205 = vadd.xlane.f32.xlu0 %v177
    %v206 = vpop.xlane.xlu0 %205
    %207 = vadd.xlane.f32.xlu0 %v178
    %v208 = vpop.xlane.xlu0 %207
    %209 = vadd.xlane.f32.xlu0 %v179
    %v210 = vpop.xlane.xlu0 %209
    %211 = vadd.xlane.f32.xlu0 %v180
    %v212 = vpop.xlane.xlu0 %211
    %v213 = vmul.f32 %v182, %v148
    %v214 = vmul.f32 %v184, %v148
    %v215 = vmul.f32 %v186, %v148
    %v216 = vmul.f32 %v188, %v148
    %v217 = vmul.f32 %v190, %v148
    %v218 = vmul.f32 %v192, %v148
    %v219 = vmul.f32 %v194, %v148
    %v220 = vmul.f32 %v196, %v148
    %v221 = vmul.f32 %v198, %v148
    %v222 = vmul.f32 %v200, %v148
    %v223 = vmul.f32 %v202, %v148
    %v224 = vmul.f32 %v204, %v148
    %v225 = vmul.f32 %v206, %v148
    %v226 = vmul.f32 %v208, %v148
    %v227 = vmul.f32 %v210, %v148
    %v228 = vmul.f32 %v212, %v148
    %v229 = vmul.f32 %v149, %v149
    %v230 = vmul.f32 %v150, %v150
    %v231 = vmul.f32 %v151, %v151
    %v232 = vmul.f32 %v152, %v152
    %v233 = vmul.f32 %v153, %v153
    %v234 = vmul.f32 %v154, %v154
    %v235 = vmul.f32 %v155, %v155
    %v236 = vmul.f32 %v156, %v156
    %v237 = vmul.f32 %v157, %v157
    %v238 = vmul.f32 %v158, %v158
    %v239 = vmul.f32 %v159, %v159
    %v240 = vmul.f32 %v160, %v160
    %v241 = vmul.f32 %v161, %v161
    %v242 = vmul.f32 %v162, %v162
    %v243 = vmul.f32 %v163, %v163
    %v244 = vmul.f32 %v164, %v164
    %v245 = vsub.f32 %v213, %v229
    %v246 = vsub.f32 %v214, %v230
    %v247 = vsub.f32 %v215, %v231
    %v248 = vsub.f32 %v216, %v232
    %v249 = vsub.f32 %v217, %v233
    %v250 = vsub.f32 %v218, %v234
    %v251 = vsub.f32 %v219, %v235
    %v252 = vsub.f32 %v220, %v236
    %v253 = vsub.f32 %v221, %v237
    %v254 = vsub.f32 %v222, %v238
    %v255 = vsub.f32 %v223, %v239
    %v256 = vsub.f32 %v224, %v240
    %v257 = vsub.f32 %v225, %v241
    %v258 = vsub.f32 %v226, %v242
    %v259 = vsub.f32 %v227, %v243
    %v260 = vsub.f32 %v228, %v244
    %v261 = vsub.f32 %v99, %v149
    %v262 = vsub.f32 %v100, %v150
    %v263 = vsub.f32 %v101, %v151
    %v264 = vsub.f32 %v102, %v152
    %v265 = vsub.f32 %v103, %v153
    %v266 = vsub.f32 %v104, %v154
    %v267 = vsub.f32 %v105, %v155
    %v268 = vsub.f32 %v106, %v156
    %v269 = vsub.f32 %v107, %v157
    %v270 = vsub.f32 %v108, %v158
    %v271 = vsub.f32 %v109, %v159
    %v272 = vsub.f32 %v110, %v160
    %v273 = vsub.f32 %v111, %v161
    %v274 = vsub.f32 %v112, %v162
    %v275 = vsub.f32 %v113, %v163
    %v276 = vsub.f32 %v114, %v164
    %v277 = vadd.f32 %v245, 1e-05
    %v278 = vadd.f32 %v246, 1e-05
    %v279 = vadd.f32 %v247, 1e-05
    %v280 = vadd.f32 %v248, 1e-05
    %v281 = vadd.f32 %v249, 1e-05
    %v282 = vadd.f32 %v250, 1e-05
    %v283 = vadd.f32 %v251, 1e-05
    %v284 = vadd.f32 %v252, 1e-05
    %v285 = vadd.f32 %v253, 1e-05
    %v286 = vadd.f32 %v254, 1e-05
    %v287 = vadd.f32 %v255, 1e-05
    %v288 = vadd.f32 %v256, 1e-05
    %v289 = vadd.f32 %v257, 1e-05
    %v290 = vadd.f32 %v258, 1e-05
    %v291 = vadd.f32 %v259, 1e-05
    %v292 = vadd.f32 %v260, 1e-05
    %v293 = vrsqrt.pop %v277
    %v294 = vrsqrt.pop %v278
    %v295 = vrsqrt.pop %v279
    %v296 = vrsqrt.pop %v280
    %v297 = vrsqrt.pop %v281
    %v298 = vrsqrt.pop %v282
    %v299 = vrsqrt.pop %v283
    %v300 = vrsqrt.pop %v284
    %v301 = vrsqrt.pop %v285
    %v302 = vrsqrt.pop %v286
    %v303 = vrsqrt.pop %v287
    %v304 = vrsqrt.pop %v288
    %v305 = vrsqrt.pop %v289
    %v306 = vrsqrt.pop %v290
    %v307 = vrsqrt.pop %v291
    %v308 = vrsqrt.pop %v292
    %v309 = vmul.f32 %v261, %v293
    %v310 = vmul.f32 %v262, %v294
    %v311 = vmul.f32 %v263, %v295
    %v312 = vmul.f32 %v264, %v296
    %v313 = vmul.f32 %v265, %v297
    %v314 = vmul.f32 %v266, %v298
    %v315 = vmul.f32 %v267, %v299
    %v316 = vmul.f32 %v268, %v300
    %v317 = vmul.f32 %v269, %v301
    %v318 = vmul.f32 %v270, %v302
    %v319 = vmul.f32 %v271, %v303
    %v320 = vmul.f32 %v272, %v304
    %v321 = vmul.f32 %v273, %v305
    %v322 = vmul.f32 %v274, %v306
    %v323 = vmul.f32 %v275, %v307
    %v324 = vmul.f32 %v276, %v308
    %v325 = vlaneseq
    %v326 = vshrl.u32 %v325, 7
    %v327 = vsub.s32 0, %v326
    %v328 = vrot.slane %v115, %v327
    %v329 = vmul.f32 %v309, %v328
    %v330 = vmul.f32 %v310, %v328
    %v331 = vmul.f32 %v311, %v328
    %v332 = vmul.f32 %v312, %v328
    %v333 = vmul.f32 %v313, %v328
    %v334 = vmul.f32 %v314, %v328
    %v335 = vmul.f32 %v315, %v328
    %v336 = vmul.f32 %v316, %v328
    %v337 = vmul.f32 %v317, %v328
    %v338 = vmul.f32 %v318, %v328
    %v339 = vmul.f32 %v319, %v328
    %v340 = vmul.f32 %v320, %v328
    %v341 = vmul.f32 %v321, %v328
    %v342 = vmul.f32 %v322, %v328
    %v343 = vmul.f32 %v323, %v328
    %v344 = vmul.f32 %v324, %v328
    %v345 = vlaneseq
    %v346 = vshrl.u32 %v345, 7
    %v347 = vsub.s32 1, %v346
    %v348 = vrot.slane %v115, %v347
    %v349 = vadd.f32 %v329, %v348
    %v350 = vadd.f32 %v330, %v348
    %v351 = vadd.f32 %v331, %v348
    %v352 = vadd.f32 %v332, %v348
    %v353 = vadd.f32 %v333, %v348
    %v354 = vadd.f32 %v334, %v348
    %v355 = vadd.f32 %v335, %v348
    %v356 = vadd.f32 %v336, %v348
    %v357 = vadd.f32 %v337, %v348
    %v358 = vadd.f32 %v338, %v348
    %v359 = vadd.f32 %v339, %v348
    %v360 = vadd.f32 %v340, %v348
    %v361 = vadd.f32 %v341, %v348
    %v362 = vadd.f32 %v342, %v348
    %v363 = vadd.f32 %v343, %v348
    %v364 = vadd.f32 %v344, %v348
    %v365 = vpack.c.bf16 %v350, %v349
    %v366 = vpack.c.bf16 %v352, %v351
    %v367 = vpack.c.bf16 %v354, %v353
    %v368 = vpack.c.bf16 %v356, %v355
    %v369 = vpack.c.bf16 %v358, %v357
    %v370 = vpack.c.bf16 %v360, %v359
    %v371 = vpack.c.bf16 %v362, %v361
    %v372 = vpack.c.bf16 %v364, %v363
    %v373 = vld [vmem:[#allocation5] sm:$0xff]
    %v374 = vld [vmem:[#allocation5 + $0x8] sm:$0xf]
    %v375 = vld [vmem:[#allocation5 + $0xc] sm:$0xff]
    %v376 = vld [vmem:[#allocation5 + $0x14] sm:$0xf]
    %v377 = vld [vmem:[#allocation5 + $0x18] sm:$0xff]
    %v378 = vld [vmem:[#allocation5 + $0x20] sm:$0xf]
    %v379 = vld [vmem:[#allocation5 + $0x24] sm:$0xff]
    %v380 = vld [vmem:[#allocation5 + $0x2c] sm:$0xf]
    %v381 = vld [vmem:[#allocation5 + $0x30] sm:$0xff]
    %v382 = vld [vmem:[#allocation5 + $0x38] sm:$0xf]
    %v383 = vld [vmem:[#allocation5 + $0x3c] sm:$0xff]
    %v384 = vld [vmem:[#allocation5 + $0x44] sm:$0xf]
    %v385 = vld [vmem:[#allocation5 + $0x48] sm:$0xff]
    %v386 = vld [vmem:[#allocation5 + $0x50] sm:$0xf]
    %v387 = vld [vmem:[#allocation5 + $0x54] sm:$0xff]
    %v388 = vld [vmem:[#allocation5 + $0x5c] sm:$0xf]
    %v389 = vld [vmem:[#allocation5 + $0x60] sm:$0xff]
    %v390 = vld [vmem:[#allocation5 + $0x68] sm:$0xf]
    %v391 = vld [vmem:[#allocation5 + $0x6c] sm:$0xff]
    %v392 = vld [vmem:[#allocation5 + $0x74] sm:$0xf]
    %v393 = vld [vmem:[#allocation5 + $0x78] sm:$0xff]
    %v394 = vld [vmem:[#allocation5 + $0x80] sm:$0xf]
    %v395 = vld [vmem:[#allocation5 + $0x84] sm:$0xff]
    %v396 = vld [vmem:[#allocation5 + $0x8c] sm:$0xf]
    %v397 = vld [vmem:[#allocation5 + $0x90] sm:$0xff]
    %v398 = vld [vmem:[#allocation5 + $0x98] sm:$0xf]
    %v399 = vld [vmem:[#allocation5 + $0x9c] sm:$0xff]
    %v400 = vld [vmem:[#allocation5 + $0xa4] sm:$0xf]
    %v401 = vld [vmem:[#allocation5 + $0xa8] sm:$0xff]
    %v402 = vld [vmem:[#allocation5 + $0xb0] sm:$0xf]
    %v403 = vld [vmem:[#allocation5 + $0xb4] sm:$0xff]
    %v404 = vld [vmem:[#allocation5 + $0xbc] sm:$0xf]
    %v405 = vld [vmem:[%s6] sm:$0x7]
    %v407 = vlaneseq
    %v408 = vshrl.u32 %v407, 7
    %v409 = vsub.s32 0, %v408
    %v410 = vrot.slane %v405, %v409
    %v411 = vlaneseq
    %v412 = vshrl.u32 %v411, 7
    %v413 = vsub.s32 1, %v412
    %v414 = vrot.slane %v405, %v413
    %v415 = vlaneseq
    %v416 = vshrl.u32 %v415, 7
    %v417 = vsub.s32 2, %v416
    %v418 = vrot.slane %v405, %v417
    %v454 = vunpack.c.l.b16 %v373
    %v455 = vunpack.c.h.b16 %v373
    %v456 = vunpack.c.l.b16 %v374
    %v457 = vunpack.c.l.b16 %v375
    %v458 = vunpack.c.h.b16 %v375
    %v459 = vunpack.c.l.b16 %v376
    %v460 = vunpack.c.l.b16 %v377
    %v461 = vunpack.c.h.b16 %v377
    %v462 = vunpack.c.l.b16 %v378
    %v463 = vunpack.c.l.b16 %v379
    %v464 = vunpack.c.h.b16 %v379
    %v465 = vunpack.c.l.b16 %v380
    %v466 = vunpack.c.l.b16 %v381
    %v467 = vunpack.c.h.b16 %v381
    %v468 = vunpack.c.l.b16 %v382
    %v469 = vunpack.c.l.b16 %v383
    %v470 = vunpack.c.h.b16 %v383
    %v471 = vunpack.c.l.b16 %v384
    %v472 = vunpack.c.l.b16 %v385
    %v473 = vunpack.c.h.b16 %v385
    %v474 = vunpack.c.l.b16 %v386
    %v475 = vunpack.c.l.b16 %v387
    %v476 = vunpack.c.h.b16 %v387
    %v477 = vunpack.c.l.b16 %v388
    %v478 = vunpack.c.l.b16 %v389
    %v479 = vunpack.c.h.b16 %v389
    %v480 = vunpack.c.l.b16 %v390
    %v481 = vunpack.c.l.b16 %v391
    %v482 = vunpack.c.h.b16 %v391
    %v483 = vunpack.c.l.b16 %v392
    %v484 = vunpack.c.l.b16 %v393
    %v485 = vunpack.c.h.b16 %v393
    %v486 = vunpack.c.l.b16 %v394
    %v487 = vunpack.c.l.b16 %v395
    %v488 = vunpack.c.h.b16 %v395
    %v489 = vunpack.c.l.b16 %v396
    %v490 = vunpack.c.l.b16 %v397
    %v491 = vunpack.c.h.b16 %v397
    %v492 = vunpack.c.l.b16 %v398
    %v493 = vunpack.c.l.b16 %v399
    %v494 = vunpack.c.h.b16 %v399
    %v495 = vunpack.c.l.b16 %v400
    %v496 = vunpack.c.l.b16 %v401
    %v497 = vunpack.c.h.b16 %v401
    %v498 = vunpack.c.l.b16 %v402
    %v499 = vunpack.c.l.b16 %v403
    %v500 = vunpack.c.h.b16 %v403
    %v501 = vunpack.c.l.b16 %v404
    %v502 = vpack.c.b16 %v457, %v454
    %v503 = vpack.c.b16 %v458, %v455
    %v504 = vpack.c.b16 %v459, %v456
    %v505 = vpack.c.b16 %v463, %v460
    %v506 = vpack.c.b16 %v464, %v461
    %v507 = vpack.c.b16 %v465, %v462
    %v508 = vpack.c.b16 %v469, %v466
    %v509 = vpack.c.b16 %v470, %v467
    %v510 = vpack.c.b16 %v471, %v468
    %v511 = vpack.c.b16 %v475, %v472
    %v512 = vpack.c.b16 %v476, %v473
    %v513 = vpack.c.b16 %v477, %v474
    %v514 = vpack.c.b16 %v481, %v478
    %v515 = vpack.c.b16 %v482, %v479
    %v516 = vpack.c.b16 %v483, %v480
    %v517 = vpack.c.b16 %v487, %v484
    %v518 = vpack.c.b16 %v488, %v485
    %v519 = vpack.c.b16 %v489, %v486
    %v520 = vpack.c.b16 %v493, %v490
    %v521 = vpack.c.b16 %v494, %v491
    %v522 = vpack.c.b16 %v495, %v492
    %v523 = vpack.c.b16 %v499, %v496
    %v524 = vpack.c.b16 %v500, %v497
    %v525 = vpack.c.b16 %v501, %v498
    %550 = vmatprep.subr.bf16.mxu0 %v503
    %551 = vmatpush1.bf16.msra.mxu0 %v502
    %552 = vmatprep.subr.bf16.mxu0 %v506
    %553 = vmatpush1.bf16.msra.mxu0 %v505
    %554 = vmatprep.subr.bf16.mxu0 %v509
    %555 = vmatpush1.bf16.msra.mxu0 %v508
    %556 = vmatprep.subr.bf16.mxu0 %v512
    %557 = vmatpush1.bf16.msra.mxu0 %v511
    %558 = vmatprep.subr.bf16.mxu0 %v515
    %559 = vmatpush1.bf16.msra.mxu0 %v514
    %560 = vmatprep.subr.bf16.mxu0 %v518
    %561 = vmatpush1.bf16.msra.mxu0 %v517
    %562 = vmatprep.subr.bf16.mxu0 %v521
    %563 = vmatpush1.bf16.msra.mxu0 %v520
    %564 = vmatprep.subr.bf16.mxu0 %v524
    %565 = vmatpush1.bf16.msra.mxu0 %v523
    %566 = vmatprep.subr.bf16.mxu0 0
    %567 = vmatpush1.bf16.msra.mxu0 0
    %568 = vmatprep.subr.bf16.mxu0 0
    %569 = vmatpush1.bf16.msra.mxu0 0
    %570 = vmatprep.subr.bf16.mxu0 0
    %571 = vmatpush1.bf16.msra.mxu0 0
    %572 = vmatprep.subr.bf16.mxu0 0
    %573 = vmatpush1.bf16.msra.mxu0 0
    %574 = vmatprep.subr.bf16.mxu0 0
    %575 = vmatpush1.bf16.msra.mxu0 0
    %576 = vmatprep.subr.bf16.mxu0 0
    %577 = vmatpush1.bf16.msra.mxu0 0
    %578 = vmatprep.subr.bf16.mxu0 0
    %579 = vmatpush1.bf16.msra.mxu0 0
    %580 = vmatprep.subr.bf16.mxu0 0
    %581 = vmatpush1.bf16.msra.mxu0 0
    %582 = vmatprep.mubr.bf16.mxu0 0
    %583 = vmatmul.mubr.bf16.gmra.mrb[0].mxu0 %v365
    %v584 = vpop.f32.mrb[0].mxu0
    %v585 = vadd.f32 %v410, %v584
    %v586 = vpop.f32.mrb[0].mxu0
    %v587 = vadd.f32 %v414, %v586
    %v588 = vpop.f32.mrb[0].mxu0
    %v589 = vadd.f32 %v410, %v588
    %v590 = vpop.f32.mrb[0].mxu0
    %v591 = vadd.f32 %v414, %v590
    %592 = vmatprep.mubr.bf16.mxu0 0
    %593 = vmatmul.mubr.bf16.gmra.mrb[0].mxu0 %v366
    %v594 = vpop.f32.mrb[0].mxu0
    %v595 = vadd.f32 %v410, %v594
    %v596 = vpop.f32.mrb[0].mxu0
    %v597 = vadd.f32 %v414, %v596
    %v598 = vpop.f32.mrb[0].mxu0
    %v599 = vadd.f32 %v410, %v598
    %v600 = vpop.f32.mrb[0].mxu0
    %v601 = vadd.f32 %v414, %v600
    %602 = vmatprep.mubr.bf16.mxu0 0
    %603 = vmatmul.mubr.bf16.gmra.mrb[0].mxu0 %v367
    %v604 = vpop.f32.mrb[0].mxu0
    %v605 = vadd.f32 %v410, %v604
    %v606 = vpop.f32.mrb[0].mxu0
    %v607 = vadd.f32 %v414, %v606
    %v608 = vpop.f32.mrb[0].mxu0
    %v609 = vadd.f32 %v410, %v608
    %v610 = vpop.f32.mrb[0].mxu0
    %v611 = vadd.f32 %v414, %v610
    %612 = vmatprep.mubr.bf16.mxu0 0
    %613 = vmatmul.mubr.bf16.gmra.mrb[0].mxu0 %v368
    %v614 = vpop.f32.mrb[0].mxu0
    %v615 = vadd.f32 %v410, %v614
    %v616 = vpop.f32.mrb[0].mxu0
    %v617 = vadd.f32 %v414, %v616
    %v618 = vpop.f32.mrb[0].mxu0
    %v619 = vadd.f32 %v410, %v618
    %v620 = vpop.f32.mrb[0].mxu0
    %v621 = vadd.f32 %v414, %v620
    %622 = vmatprep.mubr.bf16.mxu0 0
    %623 = vmatmul.mubr.bf16.gmra.mrb[0].mxu0 %v369
    %v624 = vpop.f32.mrb[0].mxu0
    %v625 = vadd.f32 %v410, %v624
    %v626 = vpop.f32.mrb[0].mxu0
    %v627 = vadd.f32 %v414, %v626
    %v628 = vpop.f32.mrb[0].mxu0
    %v629 = vadd.f32 %v410, %v628
    %v630 = vpop.f32.mrb[0].mxu0
    %v631 = vadd.f32 %v414, %v630
    %632 = vmatprep.mubr.bf16.mxu0 0
    %633 = vmatmul.mubr.bf16.gmra.mrb[0].mxu0 %v370
    %v634 = vpop.f32.mrb[0].mxu0
    %v635 = vadd.f32 %v410, %v634
    %v636 = vpop.f32.mrb[0].mxu0
    %v637 = vadd.f32 %v414, %v636
    %v638 = vpop.f32.mrb[0].mxu0
    %v639 = vadd.f32 %v410, %v638
    %v640 = vpop.f32.mrb[0].mxu0
    %v641 = vadd.f32 %v414, %v640
    %642 = vmatprep.mubr.bf16.mxu0 0
    %643 = vmatmul.mubr.bf16.gmra.mrb[0].mxu0 %v371
    %v644 = vpop.f32.mrb[0].mxu0
    %v645 = vadd.f32 %v410, %v644
    %v646 = vpop.f32.mrb[0].mxu0
    %v647 = vadd.f32 %v414, %v646
    %v648 = vpop.f32.mrb[0].mxu0
    %v649 = vadd.f32 %v410, %v648
    %v650 = vpop.f32.mrb[0].mxu0
    %v651 = vadd.f32 %v414, %v650
    %652 = vmatprep.mubr.bf16.mxu0 0
    %653 = vmatmul.mubr.bf16.gmra.mrb[0].mxu0 %v372
    %v654 = vpop.f32.mrb[0].mxu0
    %v655 = vadd.f32 %v410, %v654
    %v656 = vpop.f32.mrb[0].mxu0
    %v657 = vadd.f32 %v414, %v656
    %v658 = vpop.f32.mrb[0].mxu0
    %v659 = vadd.f32 %v410, %v658
    %v660 = vpop.f32.mrb[0].mxu0
    %v661 = vadd.f32 %v414, %v660
    %662 = vdwg.mxu0
    %663 = vmatprep.subr.bf16.mxu0 0
    %664 = vmatpush1.bf16.msra.mxu0 %v504
    %665 = vmatprep.subr.bf16.mxu0 0
    %666 = vmatpush1.bf16.msra.mxu0 %v507
    %667 = vmatprep.subr.bf16.mxu0 0
    %668 = vmatpush1.bf16.msra.mxu0 %v510
    %669 = vmatprep.subr.bf16.mxu0 0
    %670 = vmatpush1.bf16.msra.mxu0 %v513
    %671 = vmatprep.subr.bf16.mxu0 0
    %672 = vmatpush1.bf16.msra.mxu0 %v516
    %673 = vmatprep.subr.bf16.mxu0 0
    %674 = vmatpush1.bf16.msra.mxu0 %v519
    %675 = vmatprep.subr.bf16.mxu0 0
    %676 = vmatpush1.bf16.msra.mxu0 %v522
    %677 = vmatprep.subr.bf16.mxu0 0
    %678 = vmatpush1.bf16.msra.mxu0 %v525
    %679 = vmatprep.subr.bf16.mxu0 0
    %680 = vmatpush1.bf16.msra.mxu0 0
    %681 = vmatprep.subr.bf16.mxu0 0
    %682 = vmatpush1.bf16.msra.mxu0 0
    %683 = vmatprep.subr.bf16.mxu0 0
    %684 = vmatpush1.bf16.msra.mxu0 0
    %685 = vmatprep.subr.bf16.mxu0 0
    %686 = vmatpush1.bf16.msra.mxu0 0
    %687 = vmatprep.subr.bf16.mxu0 0
    %688 = vmatpush1.bf16.msra.mxu0 0
    %689 = vmatprep.subr.bf16.mxu0 0
    %690 = vmatpush1.bf16.msra.mxu0 0
    %691 = vmatprep.subr.bf16.mxu0 0
    %692 = vmatpush1.bf16.msra.mxu0 0
    %693 = vmatprep.subr.bf16.mxu0 0
    %694 = vmatpush1.bf16.msra.mxu0 0
    %695 = vmatprep.mubr.bf16.mxu0 0
    %696 = vmatmul.mubr.bf16.gmra.mrb[0].mxu0 %v365
    %v697 = vpop.f32.mrb[0].mxu0
    %v698 = vadd.f32 %v418, %v697
    %v699 = vpop.f32.mrb[0].mxu0
    %v700 = vpop.f32.mrb[0].mxu0
    %v701 = vadd.f32 %v418, %v700
    %v702 = vpop.f32.mrb[0].mxu0
    %703 = vmatprep.mubr.bf16.mxu0 0
    %704 = vmatmul.mubr.bf16.gmra.mrb[0].mxu0 %v366
    %v705 = vpop.f32.mrb[0].mxu0
    %v706 = vadd.f32 %v418, %v705
    %v707 = vpop.f32.mrb[0].mxu0
    %v708 = vpop.f32.mrb[0].mxu0
    %v709 = vadd.f32 %v418, %v708
    %v710 = vpop.f32.mrb[0].mxu0
    %711 = vmatprep.mubr.bf16.mxu0 0
    %712 = vmatmul.mubr.bf16.gmra.mrb[0].mxu0 %v367
    %v713 = vpop.f32.mrb[0].mxu0
    %v714 = vadd.f32 %v418, %v713
    %v715 = vpop.f32.mrb[0].mxu0
    %v716 = vpop.f32.mrb[0].mxu0
    %v717 = vadd.f32 %v418, %v716
    %v718 = vpop.f32.mrb[0].mxu0
    %719 = vmatprep.mubr.bf16.mxu0 0
    %720 = vmatmul.mubr.bf16.gmra.mrb[0].mxu0 %v368
    %v721 = vpop.f32.mrb[0].mxu0
    %v722 = vadd.f32 %v418, %v721
    %v723 = vpop.f32.mrb[0].mxu0
    %v724 = vpop.f32.mrb[0].mxu0
    %v725 = vadd.f32 %v418, %v724
    %v726 = vpop.f32.mrb[0].mxu0
    %727 = vmatprep.mubr.bf16.mxu0 0
    %728 = vmatmul.mubr.bf16.gmra.mrb[0].mxu0 %v369
    %v729 = vpop.f32.mrb[0].mxu0
    %v730 = vadd.f32 %v418, %v729
    %v731 = vpop.f32.mrb[0].mxu0
    %v732 = vpop.f32.mrb[0].mxu0
    %v733 = vadd.f32 %v418, %v732
    %v734 = vpop.f32.mrb[0].mxu0
    %735 = vmatprep.mubr.bf16.mxu0 0
    %736 = vmatmul.mubr.bf16.gmra.mrb[0].mxu0 %v370
    %v737 = vpop.f32.mrb[0].mxu0
    %v738 = vadd.f32 %v418, %v737
    %v739 = vpop.f32.mrb[0].mxu0
    %v740 = vpop.f32.mrb[0].mxu0
    %v741 = vadd.f32 %v418, %v740
    %v742 = vpop.f32.mrb[0].mxu0
    %743 = vmatprep.mubr.bf16.mxu0 0
    %744 = vmatmul.mubr.bf16.gmra.mrb[0].mxu0 %v371
    %v745 = vpop.f32.mrb[0].mxu0
    %v746 = vadd.f32 %v418, %v745
    %v747 = vpop.f32.mrb[0].mxu0
    %v748 = vpop.f32.mrb[0].mxu0
    %v749 = vadd.f32 %v418, %v748
    %v750 = vpop.f32.mrb[0].mxu0
    %751 = vmatprep.mubr.bf16.mxu0 0
    %752 = vmatmul.mubr.bf16.gmra.mrb[0].mxu0 %v372
    %v753 = vpop.f32.mrb[0].mxu0
    %v754 = vadd.f32 %v418, %v753
    %v755 = vpop.f32.mrb[0].mxu0
    %v756 = vpop.f32.mrb[0].mxu0
    %v757 = vadd.f32 %v418, %v756
    %v758 = vpop.f32.mrb[0].mxu0
    %759 = vdwg.mxu0
    %v760 = vpack.c.bf16 %v589, %v585
    %v761 = vpack.c.bf16 %v599, %v595
    %v762 = vpack.c.bf16 %v609, %v605
    %v763 = vpack.c.bf16 %v619, %v615
    %v764 = vpack.c.bf16 %v629, %v625
    %v765 = vpack.c.bf16 %v639, %v635
    %v766 = vpack.c.bf16 %v649, %v645
    %v767 = vpack.c.bf16 %v659, %v655
    %v768 = vpack.c.bf16 %v591, %v587
    %v769 = vpack.c.bf16 %v601, %v597
    %v770 = vpack.c.bf16 %v611, %v607
    %v771 = vpack.c.bf16 %v621, %v617
    %v772 = vpack.c.bf16 %v631, %v627
    %v773 = vpack.c.bf16 %v641, %v637
    %v774 = vpack.c.bf16 %v651, %v647
    %v775 = vpack.c.bf16 %v661, %v657
    %vm776 = vcmask 261120
    %v778 = vsel %vm776, %v760, 0
    %v781 = vsel %vm776, %v768, 0
    %783 = vmatprep.subr.bf16.mxu0 0
    %784 = vmatpush1.bf16.xpose.msra.mxu0 %v781
    %785 = vmatprep.subr.bf16.mxu0 0
    %786 = vmatpush1.bf16.xpose.msra.mxu0 0
    %787 = vmatprep.subr.bf16.mxu0 0
    %788 = vmatpush1.bf16.xpose.msra.mxu0 0
    %789 = vmatprep.subr.bf16.mxu0 0
    %790 = vmatpush1.bf16.xpose.msra.mxu0 0
    %791 = vmatprep.subr.bf16.mxu0 0
    %792 = vmatpush1.bf16.xpose.msra.mxu0 0
    %793 = vmatprep.subr.bf16.mxu0 0
    %794 = vmatpush1.bf16.xpose.msra.mxu0 0
    %795 = vmatprep.subr.bf16.mxu0 0
    %796 = vmatpush1.bf16.xpose.msra.mxu0 0
    %797 = vmatprep.subr.bf16.mxu0 0
    %798 = vmatpush1.bf16.xpose.msra.mxu0 0
    %799 = vmatprep.subr.bf16.mxu0 0
    %800 = vmatpush1.bf16.xpose.msra.mxu0 0
    %801 = vmatprep.subr.bf16.mxu0 0
    %802 = vmatpush1.bf16.xpose.msra.mxu0 0
    %803 = vmatprep.subr.bf16.mxu0 0
    %804 = vmatpush1.bf16.xpose.msra.mxu0 0
    %805 = vmatprep.subr.bf16.mxu0 0
    %806 = vmatpush1.bf16.xpose.msra.mxu0 0
    %807 = vmatprep.subr.bf16.mxu0 0
    %808 = vmatpush1.bf16.xpose.msra.mxu0 0
    %809 = vmatprep.subr.bf16.mxu0 0
    %810 = vmatpush1.bf16.xpose.msra.mxu0 0
    %811 = vmatprep.subr.bf16.mxu0 0
    %812 = vmatpush1.bf16.xpose.msra.mxu0 0
    %813 = vmatprep.subr.bf16.mxu0 0
    %814 = vmatpush1.bf16.xpose.msra.mxu0 0
    %815 = vmatprep.mubr.bf16.mxu0 0
    %816 = vmatmul.mubr.bf16.gmra.mrb[0].mxu0 %v778
    %v817 = vpop.f32.mrb[0].mxu0
    %v818 = vadd.f32 0.0, %v817
    %v819 = vpop.f32.mrb[0].mxu0
    %v820 = vpop.f32.mrb[0].mxu0
    %v821 = vadd.f32 0.0, %v820
    %v822 = vpop.f32.mrb[0].mxu0
    %823 = vdwg.mxu0
    %v825 = vsel %vm776, %v761, 0
    %v828 = vsel %vm776, %v769, 0
    %830 = vmatprep.subr.bf16.mxu0 0
    %831 = vmatpush1.bf16.xpose.msra.mxu0 %v828
    %832 = vmatprep.subr.bf16.mxu0 0
    %833 = vmatpush1.bf16.xpose.msra.mxu0 0
    %834 = vmatprep.subr.bf16.mxu0 0
    %835 = vmatpush1.bf16.xpose.msra.mxu0 0
    %836 = vmatprep.subr.bf16.mxu0 0
    %837 = vmatpush1.bf16.xpose.msra.mxu0 0
    %838 = vmatprep.subr.bf16.mxu0 0
    %839 = vmatpush1.bf16.xpose.msra.mxu0 0
    %840 = vmatprep.subr.bf16.mxu0 0
    %841 = vmatpush1.bf16.xpose.msra.mxu0 0
    %842 = vmatprep.subr.bf16.mxu0 0
    %843 = vmatpush1.bf16.xpose.msra.mxu0 0
    %844 = vmatprep.subr.bf16.mxu0 0
    %845 = vmatpush1.bf16.xpose.msra.mxu0 0
    %846 = vmatprep.subr.bf16.mxu0 0
    %847 = vmatpush1.bf16.xpose.msra.mxu0 0
    %848 = vmatprep.subr.bf16.mxu0 0
    %849 = vmatpush1.bf16.xpose.msra.mxu0 0
    %850 = vmatprep.subr.bf16.mxu0 0
    %851 = vmatpush1.bf16.xpose.msra.mxu0 0
    %852 = vmatprep.subr.bf16.mxu0 0
    %853 = vmatpush1.bf16.xpose.msra.mxu0 0
    %854 = vmatprep.subr.bf16.mxu0 0
    %855 = vmatpush1.bf16.xpose.msra.mxu0 0
    %856 = vmatprep.subr.bf16.mxu0 0
    %857 = vmatpush1.bf16.xpose.msra.mxu0 0
    %858 = vmatprep.subr.bf16.mxu0 0
    %859 = vmatpush1.bf16.xpose.msra.mxu0 0
    %860 = vmatprep.subr.bf16.mxu0 0
    %861 = vmatpush1.bf16.xpose.msra.mxu0 0
    %862 = vmatprep.mubr.bf16.mxu0 0
    %863 = vmatmul.mubr.bf16.gmra.mrb[0].mxu0 %v825
    %v864 = vpop.f32.mrb[0].mxu0
    %v865 = vadd.f32 0.0, %v864
    %v866 = vpop.f32.mrb[0].mxu0
    %v867 = vpop.f32.mrb[0].mxu0
    %v868 = vadd.f32 0.0, %v867
    %v869 = vpop.f32.mrb[0].mxu0
    %870 = vdwg.mxu0
    %v872 = vsel %vm776, %v762, 0
    %v875 = vsel %vm776, %v770, 0
    %877 = vmatprep.subr.bf16.mxu0 0
    %878 = vmatpush1.bf16.xpose.msra.mxu0 %v875
    %879 = vmatprep.subr.bf16.mxu0 0
    %880 = vmatpush1.bf16.xpose.msra.mxu0 0
    %881 = vmatprep.subr.bf16.mxu0 0
    %882 = vmatpush1.bf16.xpose.msra.mxu0 0
    %883 = vmatprep.subr.bf16.mxu0 0
    %884 = vmatpush1.bf16.xpose.msra.mxu0 0
    %885 = vmatprep.subr.bf16.mxu0 0
    %886 = vmatpush1.bf16.xpose.msra.mxu0 0
    %887 = vmatprep.subr.bf16.mxu0 0
    %888 = vmatpush1.bf16.xpose.msra.mxu0 0
    %889 = vmatprep.subr.bf16.mxu0 0
    %890 = vmatpush1.bf16.xpose.msra.mxu0 0
    %891 = vmatprep.subr.bf16.mxu0 0
    %892 = vmatpush1.bf16.xpose.msra.mxu0 0
    %893 = vmatprep.subr.bf16.mxu0 0
    %894 = vmatpush1.bf16.xpose.msra.mxu0 0
    %895 = vmatprep.subr.bf16.mxu0 0
    %896 = vmatpush1.bf16.xpose.msra.mxu0 0
    %897 = vmatprep.subr.bf16.mxu0 0
    %898 = vmatpush1.bf16.xpose.msra.mxu0 0
    %899 = vmatprep.subr.bf16.mxu0 0
    %900 = vmatpush1.bf16.xpose.msra.mxu0 0
    %901 = vmatprep.subr.bf16.mxu0 0
    %902 = vmatpush1.bf16.xpose.msra.mxu0 0
    %903 = vmatprep.subr.bf16.mxu0 0
    %904 = vmatpush1.bf16.xpose.msra.mxu0 0
    %905 = vmatprep.subr.bf16.mxu0 0
    %906 = vmatpush1.bf16.xpose.msra.mxu0 0
    %907 = vmatprep.subr.bf16.mxu0 0
    %908 = vmatpush1.bf16.xpose.msra.mxu0 0
    %909 = vmatprep.mubr.bf16.mxu0 0
    %910 = vmatmul.mubr.bf16.gmra.mrb[0].mxu0 %v872
    %v911 = vpop.f32.mrb[0].mxu0
    %v912 = vadd.f32 0.0, %v911
    %v913 = vpop.f32.mrb[0].mxu0
    %v914 = vpop.f32.mrb[0].mxu0
    %v915 = vadd.f32 0.0, %v914
    %v916 = vpop.f32.mrb[0].mxu0
    %917 = vdwg.mxu0
    %v919 = vsel %vm776, %v763, 0
    %v922 = vsel %vm776, %v771, 0
    %924 = vmatprep.subr.bf16.mxu0 0
    %925 = vmatpush1.bf16.xpose.msra.mxu0 %v922
    %926 = vmatprep.subr.bf16.mxu0 0
    %927 = vmatpush1.bf16.xpose.msra.mxu0 0
    %928 = vmatprep.subr.bf16.mxu0 0
    %929 = vmatpush1.bf16.xpose.msra.mxu0 0
    %930 = vmatprep.subr.bf16.mxu0 0
    %931 = vmatpush1.bf16.xpose.msra.mxu0 0
    %932 = vmatprep.subr.bf16.mxu0 0
    %933 = vmatpush1.bf16.xpose.msra.mxu0 0
    %934 = vmatprep.subr.bf16.mxu0 0
    %935 = vmatpush1.bf16.xpose.msra.mxu0 0
    %936 = vmatprep.subr.bf16.mxu0 0
    %937 = vmatpush1.bf16.xpose.msra.mxu0 0
    %938 = vmatprep.subr.bf16.mxu0 0
    %939 = vmatpush1.bf16.xpose.msra.mxu0 0
    %940 = vmatprep.subr.bf16.mxu0 0
    %941 = vmatpush1.bf16.xpose.msra.mxu0 0
    %942 = vmatprep.subr.bf16.mxu0 0
    %943 = vmatpush1.bf16.xpose.msra.mxu0 0
    %944 = vmatprep.subr.bf16.mxu0 0
    %945 = vmatpush1.bf16.xpose.msra.mxu0 0
    %946 = vmatprep.subr.bf16.mxu0 0
    %947 = vmatpush1.bf16.xpose.msra.mxu0 0
    %948 = vmatprep.subr.bf16.mxu0 0
    %949 = vmatpush1.bf16.xpose.msra.mxu0 0
    %950 = vmatprep.subr.bf16.mxu0 0
    %951 = vmatpush1.bf16.xpose.msra.mxu0 0
    %952 = vmatprep.subr.bf16.mxu0 0
    %953 = vmatpush1.bf16.xpose.msra.mxu0 0
    %954 = vmatprep.subr.bf16.mxu0 0
    %955 = vmatpush1.bf16.xpose.msra.mxu0 0
    %956 = vmatprep.mubr.bf16.mxu0 0
    %957 = vmatmul.mubr.bf16.gmra.mrb[0].mxu0 %v919
    %v958 = vpop.f32.mrb[0].mxu0
    %v959 = vadd.f32 0.0, %v958
    %v960 = vpop.f32.mrb[0].mxu0
    %v961 = vpop.f32.mrb[0].mxu0
    %v962 = vadd.f32 0.0, %v961
    %v963 = vpop.f32.mrb[0].mxu0
    %964 = vdwg.mxu0
    %v966 = vsel %vm776, %v764, 0
    %v969 = vsel %vm776, %v772, 0
    %971 = vmatprep.subr.bf16.mxu0 0
    %972 = vmatpush1.bf16.xpose.msra.mxu0 %v969
    %973 = vmatprep.subr.bf16.mxu0 0
    %974 = vmatpush1.bf16.xpose.msra.mxu0 0
    %975 = vmatprep.subr.bf16.mxu0 0
    %976 = vmatpush1.bf16.xpose.msra.mxu0 0
    %977 = vmatprep.subr.bf16.mxu0 0
    %978 = vmatpush1.bf16.xpose.msra.mxu0 0
    %979 = vmatprep.subr.bf16.mxu0 0
    %980 = vmatpush1.bf16.xpose.msra.mxu0 0
    %981 = vmatprep.subr.bf16.mxu0 0
    %982 = vmatpush1.bf16.xpose.msra.mxu0 0
    %983 = vmatprep.subr.bf16.mxu0 0
    %984 = vmatpush1.bf16.xpose.msra.mxu0 0
    %985 = vmatprep.subr.bf16.mxu0 0
    %986 = vmatpush1.bf16.xpose.msra.mxu0 0
    %987 = vmatprep.subr.bf16.mxu0 0
    %988 = vmatpush1.bf16.xpose.msra.mxu0 0
    %989 = vmatprep.subr.bf16.mxu0 0
    %990 = vmatpush1.bf16.xpose.msra.mxu0 0
    %991 = vmatprep.subr.bf16.mxu0 0
    %992 = vmatpush1.bf16.xpose.msra.mxu0 0
    %993 = vmatprep.subr.bf16.mxu0 0
    %994 = vmatpush1.bf16.xpose.msra.mxu0 0
    %995 = vmatprep.subr.bf16.mxu0 0
    %996 = vmatpush1.bf16.xpose.msra.mxu0 0
    %997 = vmatprep.subr.bf16.mxu0 0
    %998 = vmatpush1.bf16.xpose.msra.mxu0 0
    %999 = vmatprep.subr.bf16.mxu0 0
    %1000 = vmatpush1.bf16.xpose.msra.mxu0 0
    %1001 = vmatprep.subr.bf16.mxu0 0
    %1002 = vmatpush1.bf16.xpose.msra.mxu0 0
    %1003 = vmatprep.mubr.bf16.mxu0 0
    %1004 = vmatmul.mubr.bf16.gmra.mrb[0].mxu0 %v966
    %v1005 = vpop.f32.mrb[0].mxu0
    %v1006 = vadd.f32 0.0, %v1005
    %v1007 = vpop.f32.mrb[0].mxu0
    %v1008 = vpop.f32.mrb[0].mxu0
    %v1009 = vadd.f32 0.0, %v1008
    %v1010 = vpop.f32.mrb[0].mxu0
    %1011 = vdwg.mxu0
    %v1013 = vsel %vm776, %v765, 0
    %v1016 = vsel %vm776, %v773, 0
    %1018 = vmatprep.subr.bf16.mxu0 0
    %1019 = vmatpush1.bf16.xpose.msra.mxu0 %v1016
    %1020 = vmatprep.subr.bf16.mxu0 0
    %1021 = vmatpush1.bf16.xpose.msra.mxu0 0
    %1022 = vmatprep.subr.bf16.mxu0 0
    %1023 = vmatpush1.bf16.xpose.msra.mxu0 0
    %1024 = vmatprep.subr.bf16.mxu0 0
    %1025 = vmatpush1.bf16.xpose.msra.mxu0 0
    %1026 = vmatprep.subr.bf16.mxu0 0
    %1027 = vmatpush1.bf16.xpose.msra.mxu0 0
    %1028 = vmatprep.subr.bf16.mxu0 0
    %1029 = vmatpush1.bf16.xpose.msra.mxu0 0
    %1030 = vmatprep.subr.bf16.mxu0 0
    %1031 = vmatpush1.bf16.xpose.msra.mxu0 0
    %1032 = vmatprep.subr.bf16.mxu0 0
    %1033 = vmatpush1.bf16.xpose.msra.mxu0 0
    %1034 = vmatprep.subr.bf16.mxu0 0
    %1035 = vmatpush1.bf16.xpose.msra.mxu0 0
    %1036 = vmatprep.subr.bf16.mxu0 0
    %1037 = vmatpush1.bf16.xpose.msra.mxu0 0
    %1038 = vmatprep.subr.bf16.mxu0 0
    %1039 = vmatpush1.bf16.xpose.msra.mxu0 0
    %1040 = vmatprep.subr.bf16.mxu0 0
    %1041 = vmatpush1.bf16.xpose.msra.mxu0 0
    %1042 = vmatprep.subr.bf16.mxu0 0
    %1043 = vmatpush1.bf16.xpose.msra.mxu0 0
    %1044 = vmatprep.subr.bf16.mxu0 0
    %1045 = vmatpush1.bf16.xpose.msra.mxu0 0
    %1046 = vmatprep.subr.bf16.mxu0 0
    %1047 = vmatpush1.bf16.xpose.msra.mxu0 0
    %1048 = vmatprep.subr.bf16.mxu0 0
    %1049 = vmatpush1.bf16.xpose.msra.mxu0 0
    %1050 = vmatprep.mubr.bf16.mxu0 0
    %1051 = vmatmul.mubr.bf16.gmra.mrb[0].mxu0 %v1013
    %v1052 = vpop.f32.mrb[0].mxu0
    %v1053 = vadd.f32 0.0, %v1052
    %v1054 = vpop.f32.mrb[0].mxu0
    %v1055 = vpop.f32.mrb[0].mxu0
    %v1056 = vadd.f32 0.0, %v1055
    %v1057 = vpop.f32.mrb[0].mxu0
    %1058 = vdwg.mxu0
    %v1060 = vsel %vm776, %v766, 0
    %v1063 = vsel %vm776, %v774, 0
    %1065 = vmatprep.subr.bf16.mxu0 0
    %1066 = vmatpush1.bf16.xpose.msra.mxu0 %v1063
    %1067 = vmatprep.subr.bf16.mxu0 0
    %1068 = vmatpush1.bf16.xpose.msra.mxu0 0
    %1069 = vmatprep.subr.bf16.mxu0 0
    %1070 = vmatpush1.bf16.xpose.msra.mxu0 0
    %1071 = vmatprep.subr.bf16.mxu0 0
    %1072 = vmatpush1.bf16.xpose.msra.mxu0 0
    %1073 = vmatprep.subr.bf16.mxu0 0
    %1074 = vmatpush1.bf16.xpose.msra.mxu0 0
    %1075 = vmatprep.subr.bf16.mxu0 0
    %1076 = vmatpush1.bf16.xpose.msra.mxu0 0
    %1077 = vmatprep.subr.bf16.mxu0 0
    %1078 = vmatpush1.bf16.xpose.msra.mxu0 0
    %1079 = vmatprep.subr.bf16.mxu0 0
    %1080 = vmatpush1.bf16.xpose.msra.mxu0 0
    %1081 = vmatprep.subr.bf16.mxu0 0
    %1082 = vmatpush1.bf16.xpose.msra.mxu0 0
    %1083 = vmatprep.subr.bf16.mxu0 0
    %1084 = vmatpush1.bf16.xpose.msra.mxu0 0
    %1085 = vmatprep.subr.bf16.mxu0 0
    %1086 = vmatpush1.bf16.xpose.msra.mxu0 0
    %1087 = vmatprep.subr.bf16.mxu0 0
    %1088 = vmatpush1.bf16.xpose.msra.mxu0 0
    %1089 = vmatprep.subr.bf16.mxu0 0
    %1090 = vmatpush1.bf16.xpose.msra.mxu0 0
    %1091 = vmatprep.subr.bf16.mxu0 0
    %1092 = vmatpush1.bf16.xpose.msra.mxu0 0
    %1093 = vmatprep.subr.bf16.mxu0 0
    %1094 = vmatpush1.bf16.xpose.msra.mxu0 0
    %1095 = vmatprep.subr.bf16.mxu0 0
    %1096 = vmatpush1.bf16.xpose.msra.mxu0 0
    %1097 = vmatprep.mubr.bf16.mxu0 0
    %1098 = vmatmul.mubr.bf16.gmra.mrb[0].mxu0 %v1060
    %v1099 = vpop.f32.mrb[0].mxu0
    %v1100 = vadd.f32 0.0, %v1099
    %v1101 = vpop.f32.mrb[0].mxu0
    %v1102 = vpop.f32.mrb[0].mxu0
    %v1103 = vadd.f32 0.0, %v1102
    %v1104 = vpop.f32.mrb[0].mxu0
    %1105 = vdwg.mxu0
    %v1107 = vsel %vm776, %v767, 0
    %v1110 = vsel %vm776, %v775, 0
    %1112 = vmatprep.subr.bf16.mxu0 0
    %1113 = vmatpush1.bf16.xpose.msra.mxu0 %v1110
    %1114 = vmatprep.subr.bf16.mxu0 0
    %1115 = vmatpush1.bf16.xpose.msra.mxu0 0
    %1116 = vmatprep.subr.bf16.mxu0 0
    %1117 = vmatpush1.bf16.xpose.msra.mxu0 0
    %1118 = vmatprep.subr.bf16.mxu0 0
    %1119 = vmatpush1.bf16.xpose.msra.mxu0 0
    %1120 = vmatprep.subr.bf16.mxu0 0
    %1121 = vmatpush1.bf16.xpose.msra.mxu0 0
    %1122 = vmatprep.subr.bf16.mxu0 0
    %1123 = vmatpush1.bf16.xpose.msra.mxu0 0
    %1124 = vmatprep.subr.bf16.mxu0 0
    %1125 = vmatpush1.bf16.xpose.msra.mxu0 0
    %1126 = vmatprep.subr.bf16.mxu0 0
    %1127 = vmatpush1.bf16.xpose.msra.mxu0 0
    %1128 = vmatprep.subr.bf16.mxu0 0
    %1129 = vmatpush1.bf16.xpose.msra.mxu0 0
    %1130 = vmatprep.subr.bf16.mxu0 0
    %1131 = vmatpush1.bf16.xpose.msra.mxu0 0
    %1132 = vmatprep.subr.bf16.mxu0 0
    %1133 = vmatpush1.bf16.xpose.msra.mxu0 0
    %1134 = vmatprep.subr.bf16.mxu0 0
    %1135 = vmatpush1.bf16.xpose.msra.mxu0 0
    %1136 = vmatprep.subr.bf16.mxu0 0
    %1137 = vmatpush1.bf16.xpose.msra.mxu0 0
    %1138 = vmatprep.subr.bf16.mxu0 0
    %1139 = vmatpush1.bf16.xpose.msra.mxu0 0
    %1140 = vmatprep.subr.bf16.mxu0 0
    %1141 = vmatpush1.bf16.xpose.msra.mxu0 0
    %1142 = vmatprep.subr.bf16.mxu0 0
    %1143 = vmatpush1.bf16.xpose.msra.mxu0 0
    %1144 = vmatprep.mubr.bf16.mxu0 0
    %1145 = vmatmul.mubr.bf16.gmra.mrb[0].mxu0 %v1107
    %v1146 = vpop.f32.mrb[0].mxu0
    %v1147 = vadd.f32 0.0, %v1146
    %v1148 = vpop.f32.mrb[0].mxu0
    %v1149 = vpop.f32.mrb[0].mxu0
    %v1150 = vadd.f32 0.0, %v1149
    %v1151 = vpop.f32.mrb[0].mxu0
    %1152 = vdwg.mxu0
    %vm1153 = vcmask 130048
    %v1154 = vsel %vm1153, %v818, -inf
    %1155 = vmax.xlane.f32.xlu0 %v1154
    %v1156 = vpop.xlane.xlu0 %1155
    %v1157 = vsel %vm1153, %v821, -inf
    %1158 = vmax.xlane.f32.xlu0 %v1157
    %v1159 = vpop.xlane.xlu0 %1158
    %v1160 = vsel %vm1153, %v865, -inf
    %1161 = vmax.xlane.f32.xlu0 %v1160
    %v1162 = vpop.xlane.xlu0 %1161
    %v1163 = vsel %vm1153, %v868, -inf
    %1164 = vmax.xlane.f32.xlu0 %v1163
    %v1165 = vpop.xlane.xlu0 %1164
    %v1166 = vsel %vm1153, %v912, -inf
    %1167 = vmax.xlane.f32.xlu0 %v1166
    %v1168 = vpop.xlane.xlu0 %1167
    %v1169 = vsel %vm1153, %v915, -inf
    %1170 = vmax.xlane.f32.xlu0 %v1169
    %v1171 = vpop.xlane.xlu0 %1170
    %v1172 = vsel %vm1153, %v959, -inf
    %1173 = vmax.xlane.f32.xlu0 %v1172
    %v1174 = vpop.xlane.xlu0 %1173
    %v1175 = vsel %vm1153, %v962, -inf
    %1176 = vmax.xlane.f32.xlu0 %v1175
    %v1177 = vpop.xlane.xlu0 %1176
    %v1178 = vsel %vm1153, %v1006, -inf
    %1179 = vmax.xlane.f32.xlu0 %v1178
    %v1180 = vpop.xlane.xlu0 %1179
    %v1181 = vsel %vm1153, %v1009, -inf
    %1182 = vmax.xlane.f32.xlu0 %v1181
    %v1183 = vpop.xlane.xlu0 %1182
    %v1184 = vsel %vm1153, %v1053, -inf
    %1185 = vmax.xlane.f32.xlu0 %v1184
    %v1186 = vpop.xlane.xlu0 %1185
    %v1187 = vsel %vm1153, %v1056, -inf
    %1188 = vmax.xlane.f32.xlu0 %v1187
    %v1189 = vpop.xlane.xlu0 %1188
    %v1190 = vsel %vm1153, %v1100, -inf
    %1191 = vmax.xlane.f32.xlu0 %v1190
    %v1192 = vpop.xlane.xlu0 %1191
    %v1193 = vsel %vm1153, %v1103, -inf
    %1194 = vmax.xlane.f32.xlu0 %v1193
    %v1195 = vpop.xlane.xlu0 %1194
    %v1196 = vsel %vm1153, %v1147, -inf
    %1197 = vmax.xlane.f32.xlu0 %v1196
    %v1198 = vpop.xlane.xlu0 %1197
    %v1199 = vsel %vm1153, %v1150, -inf
    %1200 = vmax.xlane.f32.xlu0 %v1199
    %v1201 = vpop.xlane.xlu0 %1200
    %v1202 = vsub.f32 %v818, %v1156
    %v1203 = vsub.f32 %v821, %v1159
    %v1204 = vsub.f32 %v865, %v1162
    %v1205 = vsub.f32 %v868, %v1165
    %v1206 = vsub.f32 %v912, %v1168
    %v1207 = vsub.f32 %v915, %v1171
    %v1208 = vsub.f32 %v959, %v1174
    %v1209 = vsub.f32 %v962, %v1177
    %v1210 = vsub.f32 %v1006, %v1180
    %v1211 = vsub.f32 %v1009, %v1183
    %v1212 = vsub.f32 %v1053, %v1186
    %v1213 = vsub.f32 %v1056, %v1189
    %v1214 = vsub.f32 %v1100, %v1192
    %v1215 = vsub.f32 %v1103, %v1195
    %v1216 = vsub.f32 %v1147, %v1198
    %v1217 = vsub.f32 %v1150, %v1201
    %v1218 = vmul.f32 %v1202, 1.442695
    %v1219 = vpow.pop %v1218
    %v1220 = vmul.f32 %v1203, 1.442695
    %v1221 = vpow.pop %v1220
    %v1222 = vmul.f32 %v1204, 1.442695
    %v1223 = vpow.pop %v1222
    %v1224 = vmul.f32 %v1205, 1.442695
    %v1225 = vpow.pop %v1224
    %v1226 = vmul.f32 %v1206, 1.442695
    %v1227 = vpow.pop %v1226
    %v1228 = vmul.f32 %v1207, 1.442695
    %v1229 = vpow.pop %v1228
    %v1230 = vmul.f32 %v1208, 1.442695
    %v1231 = vpow.pop %v1230
    %v1232 = vmul.f32 %v1209, 1.442695
    %v1233 = vpow.pop %v1232
    %v1234 = vmul.f32 %v1210, 1.442695
    %v1235 = vpow.pop %v1234
    %v1236 = vmul.f32 %v1211, 1.442695
    %v1237 = vpow.pop %v1236
    %v1238 = vmul.f32 %v1212, 1.442695
    %v1239 = vpow.pop %v1238
    %v1240 = vmul.f32 %v1213, 1.442695
    %v1241 = vpow.pop %v1240
    %v1242 = vmul.f32 %v1214, 1.442695
    %v1243 = vpow.pop %v1242
    %v1244 = vmul.f32 %v1215, 1.442695
    %v1245 = vpow.pop %v1244
    %v1246 = vmul.f32 %v1216, 1.442695
    %v1247 = vpow.pop %v1246
    %v1248 = vmul.f32 %v1217, 1.442695
    %v1249 = vpow.pop %v1248
    %v1250 = vsel %vm1153, %v1219, 0.0
    %1251 = vadd.xlane.f32.xlu0 %v1250
    %v1252 = vpop.xlane.xlu0 %1251
    %v1253 = vsel %vm1153, %v1221, 0.0
    %1254 = vadd.xlane.f32.xlu0 %v1253
    %v1255 = vpop.xlane.xlu0 %1254
    %v1256 = vsel %vm1153, %v1223, 0.0
    %1257 = vadd.xlane.f32.xlu0 %v1256
    %v1258 = vpop.xlane.xlu0 %1257
    %v1259 = vsel %vm1153, %v1225, 0.0
    %1260 = vadd.xlane.f32.xlu0 %v1259
    %v1261 = vpop.xlane.xlu0 %1260
    %v1262 = vsel %vm1153, %v1227, 0.0
    %1263 = vadd.xlane.f32.xlu0 %v1262
    %v1264 = vpop.xlane.xlu0 %1263
    %v1265 = vsel %vm1153, %v1229, 0.0
    %1266 = vadd.xlane.f32.xlu0 %v1265
    %v1267 = vpop.xlane.xlu0 %1266
    %v1268 = vsel %vm1153, %v1231, 0.0
    %1269 = vadd.xlane.f32.xlu0 %v1268
    %v1270 = vpop.xlane.xlu0 %1269
    %v1271 = vsel %vm1153, %v1233, 0.0
    %1272 = vadd.xlane.f32.xlu0 %v1271
    %v1273 = vpop.xlane.xlu0 %1272
    %v1274 = vsel %vm1153, %v1235, 0.0
    %1275 = vadd.xlane.f32.xlu0 %v1274
    %v1276 = vpop.xlane.xlu0 %1275
    %v1277 = vsel %vm1153, %v1237, 0.0
    %1278 = vadd.xlane.f32.xlu0 %v1277
    %v1279 = vpop.xlane.xlu0 %1278
    %v1280 = vsel %vm1153, %v1239, 0.0
    %1281 = vadd.xlane.f32.xlu0 %v1280
    %v1282 = vpop.xlane.xlu0 %1281
    %v1283 = vsel %vm1153, %v1241, 0.0
    %1284 = vadd.xlane.f32.xlu0 %v1283
    %v1285 = vpop.xlane.xlu0 %1284
    %v1286 = vsel %vm1153, %v1243, 0.0
    %1287 = vadd.xlane.f32.xlu0 %v1286
    %v1288 = vpop.xlane.xlu0 %1287
    %v1289 = vsel %vm1153, %v1245, 0.0
    %1290 = vadd.xlane.f32.xlu0 %v1289
    %v1291 = vpop.xlane.xlu0 %1290
    %v1292 = vsel %vm1153, %v1247, 0.0
    %1293 = vadd.xlane.f32.xlu0 %v1292
    %v1294 = vpop.xlane.xlu0 %1293
    %v1295 = vsel %vm1153, %v1249, 0.0
    %1296 = vadd.xlane.f32.xlu0 %v1295
    %v1297 = vpop.xlane.xlu0 %1296
    %v1298 = vrcp.pop %v1252
    %v1299 = vrcp.pop %v1255
    %v1300 = vrcp.pop %v1258
    %v1301 = vrcp.pop %v1261
    %v1302 = vrcp.pop %v1264
    %v1303 = vrcp.pop %v1267
    %v1304 = vrcp.pop %v1270
    %v1305 = vrcp.pop %v1273
    %v1306 = vrcp.pop %v1276
    %v1307 = vrcp.pop %v1279
    %v1308 = vrcp.pop %v1282
    %v1309 = vrcp.pop %v1285
    %v1310 = vrcp.pop %v1288
    %v1311 = vrcp.pop %v1291
    %v1312 = vrcp.pop %v1294
    %v1313 = vrcp.pop %v1297
    %v1314 = vmul.f32 %v1219, %v1298
    %v1315 = vmul.f32 %v1221, %v1299
    %v1316 = vmul.f32 %v1223, %v1300
    %v1317 = vmul.f32 %v1225, %v1301
    %v1318 = vmul.f32 %v1227, %v1302
    %v1319 = vmul.f32 %v1229, %v1303
    %v1320 = vmul.f32 %v1231, %v1304
    %v1321 = vmul.f32 %v1233, %v1305
    %v1322 = vmul.f32 %v1235, %v1306
    %v1323 = vmul.f32 %v1237, %v1307
    %v1324 = vmul.f32 %v1239, %v1308
    %v1325 = vmul.f32 %v1241, %v1309
    %v1326 = vmul.f32 %v1243, %v1310
    %v1327 = vmul.f32 %v1245, %v1311
    %v1328 = vmul.f32 %v1247, %v1312
    %v1329 = vmul.f32 %v1249, %v1313
    %v1330 = vpack.c.bf16 %v1315, %v1314
    %v1331 = vpack.c.bf16 %v1317, %v1316
    %v1332 = vpack.c.bf16 %v1319, %v1318
    %v1333 = vpack.c.bf16 %v1321, %v1320
    %v1334 = vpack.c.bf16 %v1323, %v1322
    %v1335 = vpack.c.bf16 %v1325, %v1324
    %v1336 = vpack.c.bf16 %v1327, %v1326
    %v1337 = vpack.c.bf16 %v1329, %v1328
    %v1338 = vpack.c.bf16 %v701, %v698
    %v1339 = vpack.c.bf16 %v709, %v706
    %v1340 = vpack.c.bf16 %v717, %v714
    %v1341 = vpack.c.bf16 %v725, %v722
    %v1342 = vpack.c.bf16 %v733, %v730
    %v1343 = vpack.c.bf16 %v741, %v738
    %v1344 = vpack.c.bf16 %v749, %v746
    %v1345 = vpack.c.bf16 %v757, %v754
    %v1347 = vsel %vm1153, %v1330, 0
    %1349 = vmatprep.subr.bf16.mxu0 0
    %1350 = vmatpush1.bf16.msra.mxu0 %v1338
    %1351 = vmatprep.subr.bf16.mxu0 0
    %1352 = vmatpush1.bf16.msra.mxu0 0
    %1353 = vmatprep.subr.bf16.mxu0 0
    %1354 = vmatpush1.bf16.msra.mxu0 0
    %1355 = vmatprep.subr.bf16.mxu0 0
    %1356 = vmatpush1.bf16.msra.mxu0 0
    %1357 = vmatprep.subr.bf16.mxu0 0
    %1358 = vmatpush1.bf16.msra.mxu0 0
    %1359 = vmatprep.subr.bf16.mxu0 0
    %1360 = vmatpush1.bf16.msra.mxu0 0
    %1361 = vmatprep.subr.bf16.mxu0 0
    %1362 = vmatpush1.bf16.msra.mxu0 0
    %1363 = vmatprep.subr.bf16.mxu0 0
    %1364 = vmatpush1.bf16.msra.mxu0 0
    %1365 = vmatprep.subr.bf16.mxu0 0
    %1366 = vmatpush1.bf16.msra.mxu0 0
    %1367 = vmatprep.subr.bf16.mxu0 0
    %1368 = vmatpush1.bf16.msra.mxu0 0
    %1369 = vmatprep.subr.bf16.mxu0 0
    %1370 = vmatpush1.bf16.msra.mxu0 0
    %1371 = vmatprep.subr.bf16.mxu0 0
    %1372 = vmatpush1.bf16.msra.mxu0 0
    %1373 = vmatprep.subr.bf16.mxu0 0
    %1374 = vmatpush1.bf16.msra.mxu0 0
    %1375 = vmatprep.subr.bf16.mxu0 0
    %1376 = vmatpush1.bf16.msra.mxu0 0
    %1377 = vmatprep.subr.bf16.mxu0 0
    %1378 = vmatpush1.bf16.msra.mxu0 0
    %1379 = vmatprep.subr.bf16.mxu0 0
    %1380 = vmatpush1.bf16.msra.mxu0 0
    %1381 = vmatprep.mubr.bf16.mxu0 0
    %1382 = vmatmul.mubr.bf16.gmra.mrb[0].mxu0 %v1347
    %v1383 = vpop.f32.mrb[0].mxu0
    %v1384 = vadd.f32 0.0, %v1383
    %v1385 = vpop.f32.mrb[0].mxu0
    %v1386 = vpop.f32.mrb[0].mxu0
    %v1387 = vadd.f32 0.0, %v1386
    %v1388 = vpop.f32.mrb[0].mxu0
    %1389 = vdwg.mxu0
    %v1391 = vsel %vm1153, %v1331, 0
    %1393 = vmatprep.subr.bf16.mxu0 0
    %1394 = vmatpush1.bf16.msra.mxu0 %v1339
    %1395 = vmatprep.subr.bf16.mxu0 0
    %1396 = vmatpush1.bf16.msra.mxu0 0
    %1397 = vmatprep.subr.bf16.mxu0 0
    %1398 = vmatpush1.bf16.msra.mxu0 0
    %1399 = vmatprep.subr.bf16.mxu0 0
    %1400 = vmatpush1.bf16.msra.mxu0 0
    %1401 = vmatprep.subr.bf16.mxu0 0
    %1402 = vmatpush1.bf16.msra.mxu0 0
    %1403 = vmatprep.subr.bf16.mxu0 0
    %1404 = vmatpush1.bf16.msra.mxu0 0
    %1405 = vmatprep.subr.bf16.mxu0 0
    %1406 = vmatpush1.bf16.msra.mxu0 0
    %1407 = vmatprep.subr.bf16.mxu0 0
    %1408 = vmatpush1.bf16.msra.mxu0 0
    %1409 = vmatprep.subr.bf16.mxu0 0
    %1410 = vmatpush1.bf16.msra.mxu0 0
    %1411 = vmatprep.subr.bf16.mxu0 0
    %1412 = vmatpush1.bf16.msra.mxu0 0
    %1413 = vmatprep.subr.bf16.mxu0 0
    %1414 = vmatpush1.bf16.msra.mxu0 0
    %1415 = vmatprep.subr.bf16.mxu0 0
    %1416 = vmatpush1.bf16.msra.mxu0 0
    %1417 = vmatprep.subr.bf16.mxu0 0
    %1418 = vmatpush1.bf16.msra.mxu0 0
    %1419 = vmatprep.subr.bf16.mxu0 0
    %1420 = vmatpush1.bf16.msra.mxu0 0
    %1421 = vmatprep.subr.bf16.mxu0 0
    %1422 = vmatpush1.bf16.msra.mxu0 0
    %1423 = vmatprep.subr.bf16.mxu0 0
    %1424 = vmatpush1.bf16.msra.mxu0 0
    %1425 = vmatprep.mubr.bf16.mxu0 0
    %1426 = vmatmul.mubr.bf16.gmra.mrb[0].mxu0 %v1391
    %v1427 = vpop.f32.mrb[0].mxu0
    %v1428 = vadd.f32 0.0, %v1427
    %v1429 = vpop.f32.mrb[0].mxu0
    %v1430 = vpop.f32.mrb[0].mxu0
    %v1431 = vadd.f32 0.0, %v1430
    %v1432 = vpop.f32.mrb[0].mxu0
    %1433 = vdwg.mxu0
    %v1435 = vsel %vm1153, %v1332, 0
    %1437 = vmatprep.subr.bf16.mxu0 0
    %1438 = vmatpush1.bf16.msra.mxu0 %v1340
    %1439 = vmatprep.subr.bf16.mxu0 0
    %1440 = vmatpush1.bf16.msra.mxu0 0
    %1441 = vmatprep.subr.bf16.mxu0 0
    %1442 = vmatpush1.bf16.msra.mxu0 0
    %1443 = vmatprep.subr.bf16.mxu0 0
    %1444 = vmatpush1.bf16.msra.mxu0 0
    %1445 = vmatprep.subr.bf16.mxu0 0
    %1446 = vmatpush1.bf16.msra.mxu0 0
    %1447 = vmatprep.subr.bf16.mxu0 0
    %1448 = vmatpush1.bf16.msra.mxu0 0
    %1449 = vmatprep.subr.bf16.mxu0 0
    %1450 = vmatpush1.bf16.msra.mxu0 0
    %1451 = vmatprep.subr.bf16.mxu0 0
    %1452 = vmatpush1.bf16.msra.mxu0 0
    %1453 = vmatprep.subr.bf16.mxu0 0
    %1454 = vmatpush1.bf16.msra.mxu0 0
    %1455 = vmatprep.subr.bf16.mxu0 0
    %1456 = vmatpush1.bf16.msra.mxu0 0
    %1457 = vmatprep.subr.bf16.mxu0 0
    %1458 = vmatpush1.bf16.msra.mxu0 0
    %1459 = vmatprep.subr.bf16.mxu0 0
    %1460 = vmatpush1.bf16.msra.mxu0 0
    %1461 = vmatprep.subr.bf16.mxu0 0
    %1462 = vmatpush1.bf16.msra.mxu0 0
    %1463 = vmatprep.subr.bf16.mxu0 0
    %1464 = vmatpush1.bf16.msra.mxu0 0
    %1465 = vmatprep.subr.bf16.mxu0 0
    %1466 = vmatpush1.bf16.msra.mxu0 0
    %1467 = vmatprep.subr.bf16.mxu0 0
    %1468 = vmatpush1.bf16.msra.mxu0 0
    %1469 = vmatprep.mubr.bf16.mxu0 0
    %1470 = vmatmul.mubr.bf16.gmra.mrb[0].mxu0 %v1435
    %v1471 = vpop.f32.mrb[0].mxu0
    %v1472 = vadd.f32 0.0, %v1471
    %v1473 = vpop.f32.mrb[0].mxu0
    %v1474 = vpop.f32.mrb[0].mxu0
    %v1475 = vadd.f32 0.0, %v1474
    %v1476 = vpop.f32.mrb[0].mxu0
    %1477 = vdwg.mxu0
    %v1479 = vsel %vm1153, %v1333, 0
    %1481 = vmatprep.subr.bf16.mxu0 0
    %1482 = vmatpush1.bf16.msra.mxu0 %v1341
    %1483 = vmatprep.subr.bf16.mxu0 0
    %1484 = vmatpush1.bf16.msra.mxu0 0
    %1485 = vmatprep.subr.bf16.mxu0 0
    %1486 = vmatpush1.bf16.msra.mxu0 0
    %1487 = vmatprep.subr.bf16.mxu0 0
    %1488 = vmatpush1.bf16.msra.mxu0 0
    %1489 = vmatprep.subr.bf16.mxu0 0
    %1490 = vmatpush1.bf16.msra.mxu0 0
    %1491 = vmatprep.subr.bf16.mxu0 0
    %1492 = vmatpush1.bf16.msra.mxu0 0
    %1493 = vmatprep.subr.bf16.mxu0 0
    %1494 = vmatpush1.bf16.msra.mxu0 0
    %1495 = vmatprep.subr.bf16.mxu0 0
    %1496 = vmatpush1.bf16.msra.mxu0 0
    %1497 = vmatprep.subr.bf16.mxu0 0
    %1498 = vmatpush1.bf16.msra.mxu0 0
    %1499 = vmatprep.subr.bf16.mxu0 0
    %1500 = vmatpush1.bf16.msra.mxu0 0
    %1501 = vmatprep.subr.bf16.mxu0 0
    %1502 = vmatpush1.bf16.msra.mxu0 0
    %1503 = vmatprep.subr.bf16.mxu0 0
    %1504 = vmatpush1.bf16.msra.mxu0 0
    %1505 = vmatprep.subr.bf16.mxu0 0
    %1506 = vmatpush1.bf16.msra.mxu0 0
    %1507 = vmatprep.subr.bf16.mxu0 0
    %1508 = vmatpush1.bf16.msra.mxu0 0
    %1509 = vmatprep.subr.bf16.mxu0 0
    %1510 = vmatpush1.bf16.msra.mxu0 0
    %1511 = vmatprep.subr.bf16.mxu0 0
    %1512 = vmatpush1.bf16.msra.mxu0 0
    %1513 = vmatprep.mubr.bf16.mxu0 0
    %1514 = vmatmul.mubr.bf16.gmra.mrb[0].mxu0 %v1479
    %v1515 = vpop.f32.mrb[0].mxu0
    %v1516 = vadd.f32 0.0, %v1515
    %v1517 = vpop.f32.mrb[0].mxu0
    %v1518 = vpop.f32.mrb[0].mxu0
    %v1519 = vadd.f32 0.0, %v1518
    %v1520 = vpop.f32.mrb[0].mxu0
    %1521 = vdwg.mxu0
    %v1523 = vsel %vm1153, %v1334, 0
    %1525 = vmatprep.subr.bf16.mxu0 0
    %1526 = vmatpush1.bf16.msra.mxu0 %v1342
    %1527 = vmatprep.subr.bf16.mxu0 0
    %1528 = vmatpush1.bf16.msra.mxu0 0
    %1529 = vmatprep.subr.bf16.mxu0 0
    %1530 = vmatpush1.bf16.msra.mxu0 0
    %1531 = vmatprep.subr.bf16.mxu0 0
    %1532 = vmatpush1.bf16.msra.mxu0 0
    %1533 = vmatprep.subr.bf16.mxu0 0
    %1534 = vmatpush1.bf16.msra.mxu0 0
    %1535 = vmatprep.subr.bf16.mxu0 0
    %1536 = vmatpush1.bf16.msra.mxu0 0
    %1537 = vmatprep.subr.bf16.mxu0 0
    %1538 = vmatpush1.bf16.msra.mxu0 0
    %1539 = vmatprep.subr.bf16.mxu0 0
    %1540 = vmatpush1.bf16.msra.mxu0 0
    %1541 = vmatprep.subr.bf16.mxu0 0
    %1542 = vmatpush1.bf16.msra.mxu0 0
    %1543 = vmatprep.subr.bf16.mxu0 0
    %1544 = vmatpush1.bf16.msra.mxu0 0
    %1545 = vmatprep.subr.bf16.mxu0 0
    %1546 = vmatpush1.bf16.msra.mxu0 0
    %1547 = vmatprep.subr.bf16.mxu0 0
    %1548 = vmatpush1.bf16.msra.mxu0 0
    %1549 = vmatprep.subr.bf16.mxu0 0
    %1550 = vmatpush1.bf16.msra.mxu0 0
    %1551 = vmatprep.subr.bf16.mxu0 0
    %1552 = vmatpush1.bf16.msra.mxu0 0
    %1553 = vmatprep.subr.bf16.mxu0 0
    %1554 = vmatpush1.bf16.msra.mxu0 0
    %1555 = vmatprep.subr.bf16.mxu0 0
    %1556 = vmatpush1.bf16.msra.mxu0 0
    %1557 = vmatprep.mubr.bf16.mxu0 0
    %1558 = vmatmul.mubr.bf16.gmra.mrb[0].mxu0 %v1523
    %v1559 = vpop.f32.mrb[0].mxu0
    %v1560 = vadd.f32 0.0, %v1559
    %v1561 = vpop.f32.mrb[0].mxu0
    %v1562 = vpop.f32.mrb[0].mxu0
    %v1563 = vadd.f32 0.0, %v1562
    %v1564 = vpop.f32.mrb[0].mxu0
    %1565 = vdwg.mxu0
    %v1567 = vsel %vm1153, %v1335, 0
    %1569 = vmatprep.subr.bf16.mxu0 0
    %1570 = vmatpush1.bf16.msra.mxu0 %v1343
    %1571 = vmatprep.subr.bf16.mxu0 0
    %1572 = vmatpush1.bf16.msra.mxu0 0
    %1573 = vmatprep.subr.bf16.mxu0 0
    %1574 = vmatpush1.bf16.msra.mxu0 0
    %1575 = vmatprep.subr.bf16.mxu0 0
    %1576 = vmatpush1.bf16.msra.mxu0 0
    %1577 = vmatprep.subr.bf16.mxu0 0
    %1578 = vmatpush1.bf16.msra.mxu0 0
    %1579 = vmatprep.subr.bf16.mxu0 0
    %1580 = vmatpush1.bf16.msra.mxu0 0
    %1581 = vmatprep.subr.bf16.mxu0 0
    %1582 = vmatpush1.bf16.msra.mxu0 0
    %1583 = vmatprep.subr.bf16.mxu0 0
    %1584 = vmatpush1.bf16.msra.mxu0 0
    %1585 = vmatprep.subr.bf16.mxu0 0
    %1586 = vmatpush1.bf16.msra.mxu0 0
    %1587 = vmatprep.subr.bf16.mxu0 0
    %1588 = vmatpush1.bf16.msra.mxu0 0
    %1589 = vmatprep.subr.bf16.mxu0 0
    %1590 = vmatpush1.bf16.msra.mxu0 0
    %1591 = vmatprep.subr.bf16.mxu0 0
    %1592 = vmatpush1.bf16.msra.mxu0 0
    %1593 = vmatprep.subr.bf16.mxu0 0
    %1594 = vmatpush1.bf16.msra.mxu0 0
    %1595 = vmatprep.subr.bf16.mxu0 0
    %1596 = vmatpush1.bf16.msra.mxu0 0
    %1597 = vmatprep.subr.bf16.mxu0 0
    %1598 = vmatpush1.bf16.msra.mxu0 0
    %1599 = vmatprep.subr.bf16.mxu0 0
    %1600 = vmatpush1.bf16.msra.mxu0 0
    %1601 = vmatprep.mubr.bf16.mxu0 0
    %1602 = vmatmul.mubr.bf16.gmra.mrb[0].mxu0 %v1567
    %v1603 = vpop.f32.mrb[0].mxu0
    %v1604 = vadd.f32 0.0, %v1603
    %v1605 = vpop.f32.mrb[0].mxu0
    %v1606 = vpop.f32.mrb[0].mxu0
    %v1607 = vadd.f32 0.0, %v1606
    %v1608 = vpop.f32.mrb[0].mxu0
    %1609 = vdwg.mxu0
    %v1611 = vsel %vm1153, %v1336, 0
    %1613 = vmatprep.subr.bf16.mxu0 0
    %1614 = vmatpush1.bf16.msra.mxu0 %v1344
    %1615 = vmatprep.subr.bf16.mxu0 0
    %1616 = vmatpush1.bf16.msra.mxu0 0
    %1617 = vmatprep.subr.bf16.mxu0 0
    %1618 = vmatpush1.bf16.msra.mxu0 0
    %1619 = vmatprep.subr.bf16.mxu0 0
    %1620 = vmatpush1.bf16.msra.mxu0 0
    %1621 = vmatprep.subr.bf16.mxu0 0
    %1622 = vmatpush1.bf16.msra.mxu0 0
    %1623 = vmatprep.subr.bf16.mxu0 0
    %1624 = vmatpush1.bf16.msra.mxu0 0
    %1625 = vmatprep.subr.bf16.mxu0 0
    %1626 = vmatpush1.bf16.msra.mxu0 0
    %1627 = vmatprep.subr.bf16.mxu0 0
    %1628 = vmatpush1.bf16.msra.mxu0 0
    %1629 = vmatprep.subr.bf16.mxu0 0
    %1630 = vmatpush1.bf16.msra.mxu0 0
    %1631 = vmatprep.subr.bf16.mxu0 0
    %1632 = vmatpush1.bf16.msra.mxu0 0
    %1633 = vmatprep.subr.bf16.mxu0 0
    %1634 = vmatpush1.bf16.msra.mxu0 0
    %1635 = vmatprep.subr.bf16.mxu0 0
    %1636 = vmatpush1.bf16.msra.mxu0 0
    %1637 = vmatprep.subr.bf16.mxu0 0
    %1638 = vmatpush1.bf16.msra.mxu0 0
    %1639 = vmatprep.subr.bf16.mxu0 0
    %1640 = vmatpush1.bf16.msra.mxu0 0
    %1641 = vmatprep.subr.bf16.mxu0 0
    %1642 = vmatpush1.bf16.msra.mxu0 0
    %1643 = vmatprep.subr.bf16.mxu0 0
    %1644 = vmatpush1.bf16.msra.mxu0 0
    %1645 = vmatprep.mubr.bf16.mxu0 0
    %1646 = vmatmul.mubr.bf16.gmra.mrb[0].mxu0 %v1611
    %v1647 = vpop.f32.mrb[0].mxu0
    %v1648 = vadd.f32 0.0, %v1647
    %v1649 = vpop.f32.mrb[0].mxu0
    %v1650 = vpop.f32.mrb[0].mxu0
    %v1651 = vadd.f32 0.0, %v1650
    %v1652 = vpop.f32.mrb[0].mxu0
    %1653 = vdwg.mxu0
    %v1655 = vsel %vm1153, %v1337, 0
    %1657 = vmatprep.subr.bf16.mxu0 0
    %1658 = vmatpush1.bf16.msra.mxu0 %v1345
    %1659 = vmatprep.subr.bf16.mxu0 0
    %1660 = vmatpush1.bf16.msra.mxu0 0
    %1661 = vmatprep.subr.bf16.mxu0 0
    %1662 = vmatpush1.bf16.msra.mxu0 0
    %1663 = vmatprep.subr.bf16.mxu0 0
    %1664 = vmatpush1.bf16.msra.mxu0 0
    %1665 = vmatprep.subr.bf16.mxu0 0
    %1666 = vmatpush1.bf16.msra.mxu0 0
    %1667 = vmatprep.subr.bf16.mxu0 0
    %1668 = vmatpush1.bf16.msra.mxu0 0
    %1669 = vmatprep.subr.bf16.mxu0 0
    %1670 = vmatpush1.bf16.msra.mxu0 0
    %1671 = vmatprep.subr.bf16.mxu0 0
    %1672 = vmatpush1.bf16.msra.mxu0 0
    %1673 = vmatprep.subr.bf16.mxu0 0
    %1674 = vmatpush1.bf16.msra.mxu0 0
    %1675 = vmatprep.subr.bf16.mxu0 0
    %1676 = vmatpush1.bf16.msra.mxu0 0
    %1677 = vmatprep.subr.bf16.mxu0 0
    %1678 = vmatpush1.bf16.msra.mxu0 0
    %1679 = vmatprep.subr.bf16.mxu0 0
    %1680 = vmatpush1.bf16.msra.mxu0 0
    %1681 = vmatprep.subr.bf16.mxu0 0
    %1682 = vmatpush1.bf16.msra.mxu0 0
    %1683 = vmatprep.subr.bf16.mxu0 0
    %1684 = vmatpush1.bf16.msra.mxu0 0
    %1685 = vmatprep.subr.bf16.mxu0 0
    %1686 = vmatpush1.bf16.msra.mxu0 0
    %1687 = vmatprep.subr.bf16.mxu0 0
    %1688 = vmatpush1.bf16.msra.mxu0 0
    %1689 = vmatprep.mubr.bf16.mxu0 0
    %1690 = vmatmul.mubr.bf16.gmra.mrb[0].mxu0 %v1655
    %v1691 = vpop.f32.mrb[0].mxu0
    %v1692 = vadd.f32 0.0, %v1691
    %v1693 = vpop.f32.mrb[0].mxu0
    %v1694 = vpop.f32.mrb[0].mxu0
    %v1695 = vadd.f32 0.0, %v1694
    %v1696 = vpop.f32.mrb[0].mxu0
    %1697 = vdwg.mxu0
    %1699 = vrot.lane.b32.xlu0 %v760, 96
    %v1700 = vpop.permute.xlu0 %1699
    %1702 = vrot.lane.b32.xlu0 %v768, 96
    %v1703 = vpop.permute.xlu0 %1702
    %v1705 = vsel %vm776, %v1700, 0
    %v1708 = vsel %vm776, %v1703, 0
    %1710 = vmatprep.subr.bf16.mxu0 0
    %1711 = vmatpush1.bf16.xpose.msra.mxu0 %v1708
    %1712 = vmatprep.subr.bf16.mxu0 0
    %1713 = vmatpush1.bf16.xpose.msra.mxu0 0
    %1714 = vmatprep.subr.bf16.mxu0 0
    %1715 = vmatpush1.bf16.xpose.msra.mxu0 0
    %1716 = vmatprep.subr.bf16.mxu0 0
    %1717 = vmatpush1.bf16.xpose.msra.mxu0 0
    %1718 = vmatprep.subr.bf16.mxu0 0
    %1719 = vmatpush1.bf16.xpose.msra.mxu0 0
    %1720 = vmatprep.subr.bf16.mxu0 0
    %1721 = vmatpush1.bf16.xpose.msra.mxu0 0
    %1722 = vmatprep.subr.bf16.mxu0 0
    %1723 = vmatpush1.bf16.xpose.msra.mxu0 0
    %1724 = vmatprep.subr.bf16.mxu0 0
    %1725 = vmatpush1.bf16.xpose.msra.mxu0 0
    %1726 = vmatprep.subr.bf16.mxu0 0
    %1727 = vmatpush1.bf16.xpose.msra.mxu0 0
    %1728 = vmatprep.subr.bf16.mxu0 0
    %1729 = vmatpush1.bf16.xpose.msra.mxu0 0
    %1730 = vmatprep.subr.bf16.mxu0 0
    %1731 = vmatpush1.bf16.xpose.msra.mxu0 0
    %1732 = vmatprep.subr.bf16.mxu0 0
    %1733 = vmatpush1.bf16.xpose.msra.mxu0 0
    %1734 = vmatprep.subr.bf16.mxu0 0
    %1735 = vmatpush1.bf16.xpose.msra.mxu0 0
    %1736 = vmatprep.subr.bf16.mxu0 0
    %1737 = vmatpush1.bf16.xpose.msra.mxu0 0
    %1738 = vmatprep.subr.bf16.mxu0 0
    %1739 = vmatpush1.bf16.xpose.msra.mxu0 0
    %1740 = vmatprep.subr.bf16.mxu0 0
    %1741 = vmatpush1.bf16.xpose.msra.mxu0 0
    %1742 = vmatprep.mubr.bf16.mxu0 0
    %1743 = vmatmul.mubr.bf16.gmra.mrb[0].mxu0 %v1705
    %v1744 = vpop.f32.mrb[0].mxu0
    %v1745 = vadd.f32 0.0, %v1744
    %v1746 = vpop.f32.mrb[0].mxu0
    %v1747 = vpop.f32.mrb[0].mxu0
    %v1748 = vadd.f32 0.0, %v1747
    %v1749 = vpop.f32.mrb[0].mxu0
    %1750 = vdwg.mxu0
    %1752 = vrot.lane.b32.xlu0 %v761, 96
    %v1753 = vpop.permute.xlu0 %1752
    %1755 = vrot.lane.b32.xlu0 %v769, 96
    %v1756 = vpop.permute.xlu0 %1755
    %v1758 = vsel %vm776, %v1753, 0
    %v1761 = vsel %vm776, %v1756, 0
    %1763 = vmatprep.subr.bf16.mxu0 0
    %1764 = vmatpush1.bf16.xpose.msra.mxu0 %v1761
    %1765 = vmatprep.subr.bf16.mxu0 0
    %1766 = vmatpush1.bf16.xpose.msra.mxu0 0
    %1767 = vmatprep.subr.bf16.mxu0 0
    %1768 = vmatpush1.bf16.xpose.msra.mxu0 0
    %1769 = vmatprep.subr.bf16.mxu0 0
    %1770 = vmatpush1.bf16.xpose.msra.mxu0 0
    %1771 = vmatprep.subr.bf16.mxu0 0
    %1772 = vmatpush1.bf16.xpose.msra.mxu0 0
    %1773 = vmatprep.subr.bf16.mxu0 0
    %1774 = vmatpush1.bf16.xpose.msra.mxu0 0
    %1775 = vmatprep.subr.bf16.mxu0 0
    %1776 = vmatpush1.bf16.xpose.msra.mxu0 0
    %1777 = vmatprep.subr.bf16.mxu0 0
    %1778 = vmatpush1.bf16.xpose.msra.mxu0 0
    %1779 = vmatprep.subr.bf16.mxu0 0
    %1780 = vmatpush1.bf16.xpose.msra.mxu0 0
    %1781 = vmatprep.subr.bf16.mxu0 0
    %1782 = vmatpush1.bf16.xpose.msra.mxu0 0
    %1783 = vmatprep.subr.bf16.mxu0 0
    %1784 = vmatpush1.bf16.xpose.msra.mxu0 0
    %1785 = vmatprep.subr.bf16.mxu0 0
    %1786 = vmatpush1.bf16.xpose.msra.mxu0 0
    %1787 = vmatprep.subr.bf16.mxu0 0
    %1788 = vmatpush1.bf16.xpose.msra.mxu0 0
    %1789 = vmatprep.subr.bf16.mxu0 0
    %1790 = vmatpush1.bf16.xpose.msra.mxu0 0
    %1791 = vmatprep.subr.bf16.mxu0 0
    %1792 = vmatpush1.bf16.xpose.msra.mxu0 0
    %1793 = vmatprep.subr.bf16.mxu0 0
    %1794 = vmatpush1.bf16.xpose.msra.mxu0 0
    %1795 = vmatprep.mubr.bf16.mxu0 0
    %1796 = vmatmul.mubr.bf16.gmra.mrb[0].mxu0 %v1758
    %v1797 = vpop.f32.mrb[0].mxu0
    %v1798 = vadd.f32 0.0, %v1797
    %v1799 = vpop.f32.mrb[0].mxu0
    %v1800 = vpop.f32.mrb[0].mxu0
    %v1801 = vadd.f32 0.0, %v1800
    %v1802 = vpop.f32.mrb[0].mxu0
    %1803 = vdwg.mxu0
    %1805 = vrot.lane.b32.xlu0 %v762, 96
    %v1806 = vpop.permute.xlu0 %1805
    %1808 = vrot.lane.b32.xlu0 %v770, 96
    %v1809 = vpop.permute.xlu0 %1808
    %v1811 = vsel %vm776, %v1806, 0
    %v1814 = vsel %vm776, %v1809, 0
    %1816 = vmatprep.subr.bf16.mxu0 0
    %1817 = vmatpush1.bf16.xpose.msra.mxu0 %v1814
    %1818 = vmatprep.subr.bf16.mxu0 0
    %1819 = vmatpush1.bf16.xpose.msra.mxu0 0
    %1820 = vmatprep.subr.bf16.mxu0 0
    %1821 = vmatpush1.bf16.xpose.msra.mxu0 0
    %1822 = vmatprep.subr.bf16.mxu0 0
    %1823 = vmatpush1.bf16.xpose.msra.mxu0 0
    %1824 = vmatprep.subr.bf16.mxu0 0
    %1825 = vmatpush1.bf16.xpose.msra.mxu0 0
    %1826 = vmatprep.subr.bf16.mxu0 0
    %1827 = vmatpush1.bf16.xpose.msra.mxu0 0
    %1828 = vmatprep.subr.bf16.mxu0 0
    %1829 = vmatpush1.bf16.xpose.msra.mxu0 0
    %1830 = vmatprep.subr.bf16.mxu0 0
    %1831 = vmatpush1.bf16.xpose.msra.mxu0 0
    %1832 = vmatprep.subr.bf16.mxu0 0
    %1833 = vmatpush1.bf16.xpose.msra.mxu0 0
    %1834 = vmatprep.subr.bf16.mxu0 0
    %1835 = vmatpush1.bf16.xpose.msra.mxu0 0
    %1836 = vmatprep.subr.bf16.mxu0 0
    %1837 = vmatpush1.bf16.xpose.msra.mxu0 0
    %1838 = vmatprep.subr.bf16.mxu0 0
    %1839 = vmatpush1.bf16.xpose.msra.mxu0 0
    %1840 = vmatprep.subr.bf16.mxu0 0
    %1841 = vmatpush1.bf16.xpose.msra.mxu0 0
    %1842 = vmatprep.subr.bf16.mxu0 0
    %1843 = vmatpush1.bf16.xpose.msra.mxu0 0
    %1844 = vmatprep.subr.bf16.mxu0 0
    %1845 = vmatpush1.bf16.xpose.msra.mxu0 0
    %1846 = vmatprep.subr.bf16.mxu0 0
    %1847 = vmatpush1.bf16.xpose.msra.mxu0 0
    %1848 = vmatprep.mubr.bf16.mxu0 0
    %1849 = vmatmul.mubr.bf16.gmra.mrb[0].mxu0 %v1811
    %v1850 = vpop.f32.mrb[0].mxu0
    %v1851 = vadd.f32 0.0, %v1850
    %v1852 = vpop.f32.mrb[0].mxu0
    %v1853 = vpop.f32.mrb[0].mxu0
    %v1854 = vadd.f32 0.0, %v1853
    %v1855 = vpop.f32.mrb[0].mxu0
    %1856 = vdwg.mxu0
    %1858 = vrot.lane.b32.xlu0 %v763, 96
    %v1859 = vpop.permute.xlu0 %1858
    %1861 = vrot.lane.b32.xlu0 %v771, 96
    %v1862 = vpop.permute.xlu0 %1861
    %v1864 = vsel %vm776, %v1859, 0
    %v1867 = vsel %vm776, %v1862, 0
    %1869 = vmatprep.subr.bf16.mxu0 0
    %1870 = vmatpush1.bf16.xpose.msra.mxu0 %v1867
    %1871 = vmatprep.subr.bf16.mxu0 0
    %1872 = vmatpush1.bf16.xpose.msra.mxu0 0
    %1873 = vmatprep.subr.bf16.mxu0 0
    %1874 = vmatpush1.bf16.xpose.msra.mxu0 0
    %1875 = vmatprep.subr.bf16.mxu0 0
    %1876 = vmatpush1.bf16.xpose.msra.mxu0 0
    %1877 = vmatprep.subr.bf16.mxu0 0
    %1878 = vmatpush1.bf16.xpose.msra.mxu0 0
    %1879 = vmatprep.subr.bf16.mxu0 0
    %1880 = vmatpush1.bf16.xpose.msra.mxu0 0
    %1881 = vmatprep.subr.bf16.mxu0 0
    %1882 = vmatpush1.bf16.xpose.msra.mxu0 0
    %1883 = vmatprep.subr.bf16.mxu0 0
    %1884 = vmatpush1.bf16.xpose.msra.mxu0 0
    %1885 = vmatprep.subr.bf16.mxu0 0
    %1886 = vmatpush1.bf16.xpose.msra.mxu0 0
    %1887 = vmatprep.subr.bf16.mxu0 0
    %1888 = vmatpush1.bf16.xpose.msra.mxu0 0
    %1889 = vmatprep.subr.bf16.mxu0 0
    %1890 = vmatpush1.bf16.xpose.msra.mxu0 0
    %1891 = vmatprep.subr.bf16.mxu0 0
    %1892 = vmatpush1.bf16.xpose.msra.mxu0 0
    %1893 = vmatprep.subr.bf16.mxu0 0
    %1894 = vmatpush1.bf16.xpose.msra.mxu0 0
    %1895 = vmatprep.subr.bf16.mxu0 0
    %1896 = vmatpush1.bf16.xpose.msra.mxu0 0
    %1897 = vmatprep.subr.bf16.mxu0 0
    %1898 = vmatpush1.bf16.xpose.msra.mxu0 0
    %1899 = vmatprep.subr.bf16.mxu0 0
    %1900 = vmatpush1.bf16.xpose.msra.mxu0 0
    %1901 = vmatprep.mubr.bf16.mxu0 0
    %1902 = vmatmul.mubr.bf16.gmra.mrb[0].mxu0 %v1864
    %v1903 = vpop.f32.mrb[0].mxu0
    %v1904 = vadd.f32 0.0, %v1903
    %v1905 = vpop.f32.mrb[0].mxu0
    %v1906 = vpop.f32.mrb[0].mxu0
    %v1907 = vadd.f32 0.0, %v1906
    %v1908 = vpop.f32.mrb[0].mxu0
    %1909 = vdwg.mxu0
    %1911 = vrot.lane.b32.xlu0 %v764, 96
    %v1912 = vpop.permute.xlu0 %1911
    %1914 = vrot.lane.b32.xlu0 %v772, 96
    %v1915 = vpop.permute.xlu0 %1914
    %v1917 = vsel %vm776, %v1912, 0
    %v1920 = vsel %vm776, %v1915, 0
    %1922 = vmatprep.subr.bf16.mxu0 0
    %1923 = vmatpush1.bf16.xpose.msra.mxu0 %v1920
    %1924 = vmatprep.subr.bf16.mxu0 0
    %1925 = vmatpush1.bf16.xpose.msra.mxu0 0
    %1926 = vmatprep.subr.bf16.mxu0 0
    %1927 = vmatpush1.bf16.xpose.msra.mxu0 0
    %1928 = vmatprep.subr.bf16.mxu0 0
    %1929 = vmatpush1.bf16.xpose.msra.mxu0 0
    %1930 = vmatprep.subr.bf16.mxu0 0
    %1931 = vmatpush1.bf16.xpose.msra.mxu0 0
    %1932 = vmatprep.subr.bf16.mxu0 0
    %1933 = vmatpush1.bf16.xpose.msra.mxu0 0
    %1934 = vmatprep.subr.bf16.mxu0 0
    %1935 = vmatpush1.bf16.xpose.msra.mxu0 0
    %1936 = vmatprep.subr.bf16.mxu0 0
    %1937 = vmatpush1.bf16.xpose.msra.mxu0 0
    %1938 = vmatprep.subr.bf16.mxu0 0
    %1939 = vmatpush1.bf16.xpose.msra.mxu0 0
    %1940 = vmatprep.subr.bf16.mxu0 0
    %1941 = vmatpush1.bf16.xpose.msra.mxu0 0
    %1942 = vmatprep.subr.bf16.mxu0 0
    %1943 = vmatpush1.bf16.xpose.msra.mxu0 0
    %1944 = vmatprep.subr.bf16.mxu0 0
    %1945 = vmatpush1.bf16.xpose.msra.mxu0 0
    %1946 = vmatprep.subr.bf16.mxu0 0
    %1947 = vmatpush1.bf16.xpose.msra.mxu0 0
    %1948 = vmatprep.subr.bf16.mxu0 0
    %1949 = vmatpush1.bf16.xpose.msra.mxu0 0
    %1950 = vmatprep.subr.bf16.mxu0 0
    %1951 = vmatpush1.bf16.xpose.msra.mxu0 0
    %1952 = vmatprep.subr.bf16.mxu0 0
    %1953 = vmatpush1.bf16.xpose.msra.mxu0 0
    %1954 = vmatprep.mubr.bf16.mxu0 0
    %1955 = vmatmul.mubr.bf16.gmra.mrb[0].mxu0 %v1917
    %v1956 = vpop.f32.mrb[0].mxu0
    %v1957 = vadd.f32 0.0, %v1956
    %v1958 = vpop.f32.mrb[0].mxu0
    %v1959 = vpop.f32.mrb[0].mxu0
    %v1960 = vadd.f32 0.0, %v1959
    %v1961 = vpop.f32.mrb[0].mxu0
    %1962 = vdwg.mxu0
    %1964 = vrot.lane.b32.xlu0 %v765, 96
    %v1965 = vpop.permute.xlu0 %1964
    %1967 = vrot.lane.b32.xlu0 %v773, 96
    %v1968 = vpop.permute.xlu0 %1967
    %v1970 = vsel %vm776, %v1965, 0
    %v1973 = vsel %vm776, %v1968, 0
    %1975 = vmatprep.subr.bf16.mxu0 0
    %1976 = vmatpush1.bf16.xpose.msra.mxu0 %v1973
    %1977 = vmatprep.subr.bf16.mxu0 0
    %1978 = vmatpush1.bf16.xpose.msra.mxu0 0
    %1979 = vmatprep.subr.bf16.mxu0 0
    %1980 = vmatpush1.bf16.xpose.msra.mxu0 0
    %1981 = vmatprep.subr.bf16.mxu0 0
    %1982 = vmatpush1.bf16.xpose.msra.mxu0 0
    %1983 = vmatprep.subr.bf16.mxu0 0
    %1984 = vmatpush1.bf16.xpose.msra.mxu0 0
    %1985 = vmatprep.subr.bf16.mxu0 0
    %1986 = vmatpush1.bf16.xpose.msra.mxu0 0
    %1987 = vmatprep.subr.bf16.mxu0 0
    %1988 = vmatpush1.bf16.xpose.msra.mxu0 0
    %1989 = vmatprep.subr.bf16.mxu0 0
    %1990 = vmatpush1.bf16.xpose.msra.mxu0 0
    %1991 = vmatprep.subr.bf16.mxu0 0
    %1992 = vmatpush1.bf16.xpose.msra.mxu0 0
    %1993 = vmatprep.subr.bf16.mxu0 0
    %1994 = vmatpush1.bf16.xpose.msra.mxu0 0
    %1995 = vmatprep.subr.bf16.mxu0 0
    %1996 = vmatpush1.bf16.xpose.msra.mxu0 0
    %1997 = vmatprep.subr.bf16.mxu0 0
    %1998 = vmatpush1.bf16.xpose.msra.mxu0 0
    %1999 = vmatprep.subr.bf16.mxu0 0
    %2000 = vmatpush1.bf16.xpose.msra.mxu0 0
    %2001 = vmatprep.subr.bf16.mxu0 0
    %2002 = vmatpush1.bf16.xpose.msra.mxu0 0
    %2003 = vmatprep.subr.bf16.mxu0 0
    %2004 = vmatpush1.bf16.xpose.msra.mxu0 0
    %2005 = vmatprep.subr.bf16.mxu0 0
    %2006 = vmatpush1.bf16.xpose.msra.mxu0 0
    %2007 = vmatprep.mubr.bf16.mxu0 0
    %2008 = vmatmul.mubr.bf16.gmra.mrb[0].mxu0 %v1970
    %v2009 = vpop.f32.mrb[0].mxu0
    %v2010 = vadd.f32 0.0, %v2009
    %v2011 = vpop.f32.mrb[0].mxu0
    %v2012 = vpop.f32.mrb[0].mxu0
    %v2013 = vadd.f32 0.0, %v2012
    %v2014 = vpop.f32.mrb[0].mxu0
    %2015 = vdwg.mxu0
    %2017 = vrot.lane.b32.xlu0 %v766, 96
    %v2018 = vpop.permute.xlu0 %2017
    %2020 = vrot.lane.b32.xlu0 %v774, 96
    %v2021 = vpop.permute.xlu0 %2020
    %v2023 = vsel %vm776, %v2018, 0
    %v2026 = vsel %vm776, %v2021, 0
    %2028 = vmatprep.subr.bf16.mxu0 0
    %2029 = vmatpush1.bf16.xpose.msra.mxu0 %v2026
    %2030 = vmatprep.subr.bf16.mxu0 0
    %2031 = vmatpush1.bf16.xpose.msra.mxu0 0
    %2032 = vmatprep.subr.bf16.mxu0 0
    %2033 = vmatpush1.bf16.xpose.msra.mxu0 0
    %2034 = vmatprep.subr.bf16.mxu0 0
    %2035 = vmatpush1.bf16.xpose.msra.mxu0 0
    %2036 = vmatprep.subr.bf16.mxu0 0
    %2037 = vmatpush1.bf16.xpose.msra.mxu0 0
    %2038 = vmatprep.subr.bf16.mxu0 0
    %2039 = vmatpush1.bf16.xpose.msra.mxu0 0
    %2040 = vmatprep.subr.bf16.mxu0 0
    %2041 = vmatpush1.bf16.xpose.msra.mxu0 0
    %2042 = vmatprep.subr.bf16.mxu0 0
    %2043 = vmatpush1.bf16.xpose.msra.mxu0 0
    %2044 = vmatprep.subr.bf16.mxu0 0
    %2045 = vmatpush1.bf16.xpose.msra.mxu0 0
    %2046 = vmatprep.subr.bf16.mxu0 0
    %2047 = vmatpush1.bf16.xpose.msra.mxu0 0
    %2048 = vmatprep.subr.bf16.mxu0 0
    %2049 = vmatpush1.bf16.xpose.msra.mxu0 0
    %2050 = vmatprep.subr.bf16.mxu0 0
    %2051 = vmatpush1.bf16.xpose.msra.mxu0 0
    %2052 = vmatprep.subr.bf16.mxu0 0
    %2053 = vmatpush1.bf16.xpose.msra.mxu0 0
    %2054 = vmatprep.subr.bf16.mxu0 0
    %2055 = vmatpush1.bf16.xpose.msra.mxu0 0
    %2056 = vmatprep.subr.bf16.mxu0 0
    %2057 = vmatpush1.bf16.xpose.msra.mxu0 0
    %2058 = vmatprep.subr.bf16.mxu0 0
    %2059 = vmatpush1.bf16.xpose.msra.mxu0 0
    %2060 = vmatprep.mubr.bf16.mxu0 0
    %2061 = vmatmul.mubr.bf16.gmra.mrb[0].mxu0 %v2023
    %v2062 = vpop.f32.mrb[0].mxu0
    %v2063 = vadd.f32 0.0, %v2062
    %v2064 = vpop.f32.mrb[0].mxu0
    %v2065 = vpop.f32.mrb[0].mxu0
    %v2066 = vadd.f32 0.0, %v2065
    %v2067 = vpop.f32.mrb[0].mxu0
    %2068 = vdwg.mxu0
    %2070 = vrot.lane.b32.xlu0 %v767, 96
    %v2071 = vpop.permute.xlu0 %2070
    %2073 = vrot.lane.b32.xlu0 %v775, 96
    %v2074 = vpop.permute.xlu0 %2073
    %v2076 = vsel %vm776, %v2071, 0
    %v2079 = vsel %vm776, %v2074, 0
    %2081 = vmatprep.subr.bf16.mxu0 0
    %2082 = vmatpush1.bf16.xpose.msra.mxu0 %v2079
    %2083 = vmatprep.subr.bf16.mxu0 0
    %2084 = vmatpush1.bf16.xpose.msra.mxu0 0
    %2085 = vmatprep.subr.bf16.mxu0 0
    %2086 = vmatpush1.bf16.xpose.msra.mxu0 0
    %2087 = vmatprep.subr.bf16.mxu0 0
    %2088 = vmatpush1.bf16.xpose.msra.mxu0 0
    %2089 = vmatprep.subr.bf16.mxu0 0
    %2090 = vmatpush1.bf16.xpose.msra.mxu0 0
    %2091 = vmatprep.subr.bf16.mxu0 0
    %2092 = vmatpush1.bf16.xpose.msra.mxu0 0
    %2093 = vmatprep.subr.bf16.mxu0 0
    %2094 = vmatpush1.bf16.xpose.msra.mxu0 0
    %2095 = vmatprep.subr.bf16.mxu0 0
    %2096 = vmatpush1.bf16.xpose.msra.mxu0 0
    %2097 = vmatprep.subr.bf16.mxu0 0
    %2098 = vmatpush1.bf16.xpose.msra.mxu0 0
    %2099 = vmatprep.subr.bf16.mxu0 0
    %2100 = vmatpush1.bf16.xpose.msra.mxu0 0
    %2101 = vmatprep.subr.bf16.mxu0 0
    %2102 = vmatpush1.bf16.xpose.msra.mxu0 0
    %2103 = vmatprep.subr.bf16.mxu0 0
    %2104 = vmatpush1.bf16.xpose.msra.mxu0 0
    %2105 = vmatprep.subr.bf16.mxu0 0
    %2106 = vmatpush1.bf16.xpose.msra.mxu0 0
    %2107 = vmatprep.subr.bf16.mxu0 0
    %2108 = vmatpush1.bf16.xpose.msra.mxu0 0
    %2109 = vmatprep.subr.bf16.mxu0 0
    %2110 = vmatpush1.bf16.xpose.msra.mxu0 0
    %2111 = vmatprep.subr.bf16.mxu0 0
    %2112 = vmatpush1.bf16.xpose.msra.mxu0 0
    %2113 = vmatprep.mubr.bf16.mxu0 0
    %2114 = vmatmul.mubr.bf16.gmra.mrb[0].mxu0 %v2076
    %v2115 = vpop.f32.mrb[0].mxu0
    %v2116 = vadd.f32 0.0, %v2115
    %v2117 = vpop.f32.mrb[0].mxu0
    %v2118 = vpop.f32.mrb[0].mxu0
    %v2119 = vadd.f32 0.0, %v2118
    %v2120 = vpop.f32.mrb[0].mxu0
    %2121 = vdwg.mxu0
    %v2122 = vsel %vm1153, %v1745, -inf
    %2123 = vmax.xlane.f32.xlu0 %v2122
    %v2124 = vpop.xlane.xlu0 %2123
    %v2125 = vsel %vm1153, %v1748, -inf
    %2126 = vmax.xlane.f32.xlu0 %v2125
    %v2127 = vpop.xlane.xlu0 %2126
    %v2128 = vsel %vm1153, %v1798, -inf
    %2129 = vmax.xlane.f32.xlu0 %v2128
    %v2130 = vpop.xlane.xlu0 %2129
    %v2131 = vsel %vm1153, %v1801, -inf
    %2132 = vmax.xlane.f32.xlu0 %v2131
    %v2133 = vpop.xlane.xlu0 %2132
    %v2134 = vsel %vm1153, %v1851, -inf
    %2135 = vmax.xlane.f32.xlu0 %v2134
    %v2136 = vpop.xlane.xlu0 %2135
    %v2137 = vsel %vm1153, %v1854, -inf
    %2138 = vmax.xlane.f32.xlu0 %v2137
    %v2139 = vpop.xlane.xlu0 %2138
    %v2140 = vsel %vm1153, %v1904, -inf
    %2141 = vmax.xlane.f32.xlu0 %v2140
    %v2142 = vpop.xlane.xlu0 %2141
    %v2143 = vsel %vm1153, %v1907, -inf
    %2144 = vmax.xlane.f32.xlu0 %v2143
    %v2145 = vpop.xlane.xlu0 %2144
    %v2146 = vsel %vm1153, %v1957, -inf
    %2147 = vmax.xlane.f32.xlu0 %v2146
    %v2148 = vpop.xlane.xlu0 %2147
    %v2149 = vsel %vm1153, %v1960, -inf
    %2150 = vmax.xlane.f32.xlu0 %v2149
    %v2151 = vpop.xlane.xlu0 %2150
    %v2152 = vsel %vm1153, %v2010, -inf
    %2153 = vmax.xlane.f32.xlu0 %v2152
    %v2154 = vpop.xlane.xlu0 %2153
    %v2155 = vsel %vm1153, %v2013, -inf
    %2156 = vmax.xlane.f32.xlu0 %v2155
    %v2157 = vpop.xlane.xlu0 %2156
    %v2158 = vsel %vm1153, %v2063, -inf
    %2159 = vmax.xlane.f32.xlu0 %v2158
    %v2160 = vpop.xlane.xlu0 %2159
    %v2161 = vsel %vm1153, %v2066, -inf
    %2162 = vmax.xlane.f32.xlu0 %v2161
    %v2163 = vpop.xlane.xlu0 %2162
    %v2164 = vsel %vm1153, %v2116, -inf
    %2165 = vmax.xlane.f32.xlu0 %v2164
    %v2166 = vpop.xlane.xlu0 %2165
    %v2167 = vsel %vm1153, %v2119, -inf
    %2168 = vmax.xlane.f32.xlu0 %v2167
    %v2169 = vpop.xlane.xlu0 %2168
    %v2170 = vsub.f32 %v1745, %v2124
    %v2171 = vsub.f32 %v1748, %v2127
    %v2172 = vsub.f32 %v1798, %v2130
    %v2173 = vsub.f32 %v1801, %v2133
    %v2174 = vsub.f32 %v1851, %v2136
    %v2175 = vsub.f32 %v1854, %v2139
    %v2176 = vsub.f32 %v1904, %v2142
    %v2177 = vsub.f32 %v1907, %v2145
    %v2178 = vsub.f32 %v1957, %v2148
    %v2179 = vsub.f32 %v1960, %v2151
    %v2180 = vsub.f32 %v2010, %v2154
    %v2181 = vsub.f32 %v2013, %v2157
    %v2182 = vsub.f32 %v2063, %v2160
    %v2183 = vsub.f32 %v2066, %v2163
    %v2184 = vsub.f32 %v2116, %v2166
    %v2185 = vsub.f32 %v2119, %v2169
    %v2186 = vmul.f32 %v2170, 1.442695
    %v2187 = vpow.pop %v2186
    %v2188 = vmul.f32 %v2171, 1.442695
    %v2189 = vpow.pop %v2188
    %v2190 = vmul.f32 %v2172, 1.442695
    %v2191 = vpow.pop %v2190
    %v2192 = vmul.f32 %v2173, 1.442695
    %v2193 = vpow.pop %v2192
    %v2194 = vmul.f32 %v2174, 1.442695
    %v2195 = vpow.pop %v2194
    %v2196 = vmul.f32 %v2175, 1.442695
    %v2197 = vpow.pop %v2196
    %v2198 = vmul.f32 %v2176, 1.442695
    %v2199 = vpow.pop %v2198
    %v2200 = vmul.f32 %v2177, 1.442695
    %v2201 = vpow.pop %v2200
    %v2202 = vmul.f32 %v2178, 1.442695
    %v2203 = vpow.pop %v2202
    %v2204 = vmul.f32 %v2179, 1.442695
    %v2205 = vpow.pop %v2204
    %v2206 = vmul.f32 %v2180, 1.442695
    %v2207 = vpow.pop %v2206
    %v2208 = vmul.f32 %v2181, 1.442695
    %v2209 = vpow.pop %v2208
    %v2210 = vmul.f32 %v2182, 1.442695
    %v2211 = vpow.pop %v2210
    %v2212 = vmul.f32 %v2183, 1.442695
    %v2213 = vpow.pop %v2212
    %v2214 = vmul.f32 %v2184, 1.442695
    %v2215 = vpow.pop %v2214
    %v2216 = vmul.f32 %v2185, 1.442695
    %v2217 = vpow.pop %v2216
    %v2218 = vsel %vm1153, %v2187, 0.0
    %2219 = vadd.xlane.f32.xlu0 %v2218
    %v2220 = vpop.xlane.xlu0 %2219
    %v2221 = vsel %vm1153, %v2189, 0.0
    %2222 = vadd.xlane.f32.xlu0 %v2221
    %v2223 = vpop.xlane.xlu0 %2222
    %v2224 = vsel %vm1153, %v2191, 0.0
    %2225 = vadd.xlane.f32.xlu0 %v2224
    %v2226 = vpop.xlane.xlu0 %2225
    %v2227 = vsel %vm1153, %v2193, 0.0
    %2228 = vadd.xlane.f32.xlu0 %v2227
    %v2229 = vpop.xlane.xlu0 %2228
    %v2230 = vsel %vm1153, %v2195, 0.0
    %2231 = vadd.xlane.f32.xlu0 %v2230
    %v2232 = vpop.xlane.xlu0 %2231
    %v2233 = vsel %vm1153, %v2197, 0.0
    %2234 = vadd.xlane.f32.xlu0 %v2233
    %v2235 = vpop.xlane.xlu0 %2234
    %v2236 = vsel %vm1153, %v2199, 0.0
    %2237 = vadd.xlane.f32.xlu0 %v2236
    %v2238 = vpop.xlane.xlu0 %2237
    %v2239 = vsel %vm1153, %v2201, 0.0
    %2240 = vadd.xlane.f32.xlu0 %v2239
    %v2241 = vpop.xlane.xlu0 %2240
    %v2242 = vsel %vm1153, %v2203, 0.0
    %2243 = vadd.xlane.f32.xlu0 %v2242
    %v2244 = vpop.xlane.xlu0 %2243
    %v2245 = vsel %vm1153, %v2205, 0.0
    %2246 = vadd.xlane.f32.xlu0 %v2245
    %v2247 = vpop.xlane.xlu0 %2246
    %v2248 = vsel %vm1153, %v2207, 0.0
    %2249 = vadd.xlane.f32.xlu0 %v2248
    %v2250 = vpop.xlane.xlu0 %2249
    %v2251 = vsel %vm1153, %v2209, 0.0
    %2252 = vadd.xlane.f32.xlu0 %v2251
    %v2253 = vpop.xlane.xlu0 %2252
    %v2254 = vsel %vm1153, %v2211, 0.0
    %2255 = vadd.xlane.f32.xlu0 %v2254
    %v2256 = vpop.xlane.xlu0 %2255
    %v2257 = vsel %vm1153, %v2213, 0.0
    %2258 = vadd.xlane.f32.xlu0 %v2257
    %v2259 = vpop.xlane.xlu0 %2258
    %v2260 = vsel %vm1153, %v2215, 0.0
    %2261 = vadd.xlane.f32.xlu0 %v2260
    %v2262 = vpop.xlane.xlu0 %2261
    %v2263 = vsel %vm1153, %v2217, 0.0
    %2264 = vadd.xlane.f32.xlu0 %v2263
    %v2265 = vpop.xlane.xlu0 %2264
    %v2266 = vrcp.pop %v2220
    %v2267 = vrcp.pop %v2223
    %v2268 = vrcp.pop %v2226
    %v2269 = vrcp.pop %v2229
    %v2270 = vrcp.pop %v2232
    %v2271 = vrcp.pop %v2235
    %v2272 = vrcp.pop %v2238
    %v2273 = vrcp.pop %v2241
    %v2274 = vrcp.pop %v2244
    %v2275 = vrcp.pop %v2247
    %v2276 = vrcp.pop %v2250
    %v2277 = vrcp.pop %v2253
    %v2278 = vrcp.pop %v2256
    %v2279 = vrcp.pop %v2259
    %v2280 = vrcp.pop %v2262
    %v2281 = vrcp.pop %v2265
    %v2282 = vmul.f32 %v2187, %v2266
    %v2283 = vmul.f32 %v2189, %v2267
    %v2284 = vmul.f32 %v2191, %v2268
    %v2285 = vmul.f32 %v2193, %v2269
    %v2286 = vmul.f32 %v2195, %v2270
    %v2287 = vmul.f32 %v2197, %v2271
    %v2288 = vmul.f32 %v2199, %v2272
    %v2289 = vmul.f32 %v2201, %v2273
    %v2290 = vmul.f32 %v2203, %v2274
    %v2291 = vmul.f32 %v2205, %v2275
    %v2292 = vmul.f32 %v2207, %v2276
    %v2293 = vmul.f32 %v2209, %v2277
    %v2294 = vmul.f32 %v2211, %v2278
    %v2295 = vmul.f32 %v2213, %v2279
    %v2296 = vmul.f32 %v2215, %v2280
    %v2297 = vmul.f32 %v2217, %v2281
    %v2298 = vpack.c.bf16 %v2283, %v2282
    %v2299 = vpack.c.bf16 %v2285, %v2284
    %v2300 = vpack.c.bf16 %v2287, %v2286
    %v2301 = vpack.c.bf16 %v2289, %v2288
    %v2302 = vpack.c.bf16 %v2291, %v2290
    %v2303 = vpack.c.bf16 %v2293, %v2292
    %v2304 = vpack.c.bf16 %v2295, %v2294
    %v2305 = vpack.c.bf16 %v2297, %v2296
    %2307 = vrot.lane.b32.xlu0 %v1338, 96
    %v2308 = vpop.permute.xlu0 %2307
    %v2311 = vsel %vm1153, %v2298, 0
    %2313 = vmatprep.subr.bf16.mxu0 0
    %2314 = vmatpush1.bf16.msra.mxu0 %v2308
    %2315 = vmatprep.subr.bf16.mxu0 0
    %2316 = vmatpush1.bf16.msra.mxu0 0
    %2317 = vmatprep.subr.bf16.mxu0 0
    %2318 = vmatpush1.bf16.msra.mxu0 0
    %2319 = vmatprep.subr.bf16.mxu0 0
    %2320 = vmatpush1.bf16.msra.mxu0 0
    %2321 = vmatprep.subr.bf16.mxu0 0
    %2322 = vmatpush1.bf16.msra.mxu0 0
    %2323 = vmatprep.subr.bf16.mxu0 0
    %2324 = vmatpush1.bf16.msra.mxu0 0
    %2325 = vmatprep.subr.bf16.mxu0 0
    %2326 = vmatpush1.bf16.msra.mxu0 0
    %2327 = vmatprep.subr.bf16.mxu0 0
    %2328 = vmatpush1.bf16.msra.mxu0 0
    %2329 = vmatprep.subr.bf16.mxu0 0
    %2330 = vmatpush1.bf16.msra.mxu0 0
    %2331 = vmatprep.subr.bf16.mxu0 0
    %2332 = vmatpush1.bf16.msra.mxu0 0
    %2333 = vmatprep.subr.bf16.mxu0 0
    %2334 = vmatpush1.bf16.msra.mxu0 0
    %2335 = vmatprep.subr.bf16.mxu0 0
    %2336 = vmatpush1.bf16.msra.mxu0 0
    %2337 = vmatprep.subr.bf16.mxu0 0
    %2338 = vmatpush1.bf16.msra.mxu0 0
    %2339 = vmatprep.subr.bf16.mxu0 0
    %2340 = vmatpush1.bf16.msra.mxu0 0
    %2341 = vmatprep.subr.bf16.mxu0 0
    %2342 = vmatpush1.bf16.msra.mxu0 0
    %2343 = vmatprep.subr.bf16.mxu0 0
    %2344 = vmatpush1.bf16.msra.mxu0 0
    %2345 = vmatprep.mubr.bf16.mxu0 0
    %2346 = vmatmul.mubr.bf16.gmra.mrb[0].mxu0 %v2311
    %v2347 = vpop.f32.mrb[0].mxu0
    %v2348 = vadd.f32 0.0, %v2347
    %v2349 = vpop.f32.mrb[0].mxu0
    %v2350 = vpop.f32.mrb[0].mxu0
    %v2351 = vadd.f32 0.0, %v2350
    %v2352 = vpop.f32.mrb[0].mxu0
    %2353 = vdwg.mxu0
    %2355 = vrot.lane.b32.xlu0 %v1339, 96
    %v2356 = vpop.permute.xlu0 %2355
    %v2359 = vsel %vm1153, %v2299, 0
    %2361 = vmatprep.subr.bf16.mxu0 0
    %2362 = vmatpush1.bf16.msra.mxu0 %v2356
    %2363 = vmatprep.subr.bf16.mxu0 0
    %2364 = vmatpush1.bf16.msra.mxu0 0
    %2365 = vmatprep.subr.bf16.mxu0 0
    %2366 = vmatpush1.bf16.msra.mxu0 0
    %2367 = vmatprep.subr.bf16.mxu0 0
    %2368 = vmatpush1.bf16.msra.mxu0 0
    %2369 = vmatprep.subr.bf16.mxu0 0
    %2370 = vmatpush1.bf16.msra.mxu0 0
    %2371 = vmatprep.subr.bf16.mxu0 0
    %2372 = vmatpush1.bf16.msra.mxu0 0
    %2373 = vmatprep.subr.bf16.mxu0 0
    %2374 = vmatpush1.bf16.msra.mxu0 0
    %2375 = vmatprep.subr.bf16.mxu0 0
    %2376 = vmatpush1.bf16.msra.mxu0 0
    %2377 = vmatprep.subr.bf16.mxu0 0
    %2378 = vmatpush1.bf16.msra.mxu0 0
    %2379 = vmatprep.subr.bf16.mxu0 0
    %2380 = vmatpush1.bf16.msra.mxu0 0
    %2381 = vmatprep.subr.bf16.mxu0 0
    %2382 = vmatpush1.bf16.msra.mxu0 0
    %2383 = vmatprep.subr.bf16.mxu0 0
    %2384 = vmatpush1.bf16.msra.mxu0 0
    %2385 = vmatprep.subr.bf16.mxu0 0
    %2386 = vmatpush1.bf16.msra.mxu0 0
    %2387 = vmatprep.subr.bf16.mxu0 0
    %2388 = vmatpush1.bf16.msra.mxu0 0
    %2389 = vmatprep.subr.bf16.mxu0 0
    %2390 = vmatpush1.bf16.msra.mxu0 0
    %2391 = vmatprep.subr.bf16.mxu0 0
    %2392 = vmatpush1.bf16.msra.mxu0 0
    %2393 = vmatprep.mubr.bf16.mxu0 0
    %2394 = vmatmul.mubr.bf16.gmra.mrb[0].mxu0 %v2359
    %v2395 = vpop.f32.mrb[0].mxu0
    %v2396 = vadd.f32 0.0, %v2395
    %v2397 = vpop.f32.mrb[0].mxu0
    %v2398 = vpop.f32.mrb[0].mxu0
    %v2399 = vadd.f32 0.0, %v2398
    %v2400 = vpop.f32.mrb[0].mxu0
    %2401 = vdwg.mxu0
    %2403 = vrot.lane.b32.xlu0 %v1340, 96
    %v2404 = vpop.permute.xlu0 %2403
    %v2407 = vsel %vm1153, %v2300, 0
    %2409 = vmatprep.subr.bf16.mxu0 0
    %2410 = vmatpush1.bf16.msra.mxu0 %v2404
    %2411 = vmatprep.subr.bf16.mxu0 0
    %2412 = vmatpush1.bf16.msra.mxu0 0
    %2413 = vmatprep.subr.bf16.mxu0 0
    %2414 = vmatpush1.bf16.msra.mxu0 0
    %2415 = vmatprep.subr.bf16.mxu0 0
    %2416 = vmatpush1.bf16.msra.mxu0 0
    %2417 = vmatprep.subr.bf16.mxu0 0
    %2418 = vmatpush1.bf16.msra.mxu0 0
    %2419 = vmatprep.subr.bf16.mxu0 0
    %2420 = vmatpush1.bf16.msra.mxu0 0
    %2421 = vmatprep.subr.bf16.mxu0 0
    %2422 = vmatpush1.bf16.msra.mxu0 0
    %2423 = vmatprep.subr.bf16.mxu0 0
    %2424 = vmatpush1.bf16.msra.mxu0 0
    %2425 = vmatprep.subr.bf16.mxu0 0
    %2426 = vmatpush1.bf16.msra.mxu0 0
    %2427 = vmatprep.subr.bf16.mxu0 0
    %2428 = vmatpush1.bf16.msra.mxu0 0
    %2429 = vmatprep.subr.bf16.mxu0 0
    %2430 = vmatpush1.bf16.msra.mxu0 0
    %2431 = vmatprep.subr.bf16.mxu0 0
    %2432 = vmatpush1.bf16.msra.mxu0 0
    %2433 = vmatprep.subr.bf16.mxu0 0
    %2434 = vmatpush1.bf16.msra.mxu0 0
    %2435 = vmatprep.subr.bf16.mxu0 0
    %2436 = vmatpush1.bf16.msra.mxu0 0
    %2437 = vmatprep.subr.bf16.mxu0 0
    %2438 = vmatpush1.bf16.msra.mxu0 0
    %2439 = vmatprep.subr.bf16.mxu0 0
    %2440 = vmatpush1.bf16.msra.mxu0 0
    %2441 = vmatprep.mubr.bf16.mxu0 0
    %2442 = vmatmul.mubr.bf16.gmra.mrb[0].mxu0 %v2407
    %v2443 = vpop.f32.mrb[0].mxu0
    %v2444 = vadd.f32 0.0, %v2443
    %v2445 = vpop.f32.mrb[0].mxu0
    %v2446 = vpop.f32.mrb[0].mxu0
    %v2447 = vadd.f32 0.0, %v2446
    %v2448 = vpop.f32.mrb[0].mxu0
    %2449 = vdwg.mxu0
    %2451 = vrot.lane.b32.xlu0 %v1341, 96
    %v2452 = vpop.permute.xlu0 %2451
    %v2455 = vsel %vm1153, %v2301, 0
    %2457 = vmatprep.subr.bf16.mxu0 0
    %2458 = vmatpush1.bf16.msra.mxu0 %v2452
    %2459 = vmatprep.subr.bf16.mxu0 0
    %2460 = vmatpush1.bf16.msra.mxu0 0
    %2461 = vmatprep.subr.bf16.mxu0 0
    %2462 = vmatpush1.bf16.msra.mxu0 0
    %2463 = vmatprep.subr.bf16.mxu0 0
    %2464 = vmatpush1.bf16.msra.mxu0 0
    %2465 = vmatprep.subr.bf16.mxu0 0
    %2466 = vmatpush1.bf16.msra.mxu0 0
    %2467 = vmatprep.subr.bf16.mxu0 0
    %2468 = vmatpush1.bf16.msra.mxu0 0
    %2469 = vmatprep.subr.bf16.mxu0 0
    %2470 = vmatpush1.bf16.msra.mxu0 0
    %2471 = vmatprep.subr.bf16.mxu0 0
    %2472 = vmatpush1.bf16.msra.mxu0 0
    %2473 = vmatprep.subr.bf16.mxu0 0
    %2474 = vmatpush1.bf16.msra.mxu0 0
    %2475 = vmatprep.subr.bf16.mxu0 0
    %2476 = vmatpush1.bf16.msra.mxu0 0
    %2477 = vmatprep.subr.bf16.mxu0 0
    %2478 = vmatpush1.bf16.msra.mxu0 0
    %2479 = vmatprep.subr.bf16.mxu0 0
    %2480 = vmatpush1.bf16.msra.mxu0 0
    %2481 = vmatprep.subr.bf16.mxu0 0
    %2482 = vmatpush1.bf16.msra.mxu0 0
    %2483 = vmatprep.subr.bf16.mxu0 0
    %2484 = vmatpush1.bf16.msra.mxu0 0
    %2485 = vmatprep.subr.bf16.mxu0 0
    %2486 = vmatpush1.bf16.msra.mxu0 0
    %2487 = vmatprep.subr.bf16.mxu0 0
    %2488 = vmatpush1.bf16.msra.mxu0 0
    %2489 = vmatprep.mubr.bf16.mxu0 0
    %2490 = vmatmul.mubr.bf16.gmra.mrb[0].mxu0 %v2455
    %v2491 = vpop.f32.mrb[0].mxu0
    %v2492 = vadd.f32 0.0, %v2491
    %v2493 = vpop.f32.mrb[0].mxu0
    %v2494 = vpop.f32.mrb[0].mxu0
    %v2495 = vadd.f32 0.0, %v2494
    %v2496 = vpop.f32.mrb[0].mxu0
    %2497 = vdwg.mxu0
    %2499 = vrot.lane.b32.xlu0 %v1342, 96
    %v2500 = vpop.permute.xlu0 %2499
    %v2503 = vsel %vm1153, %v2302, 0
    %2505 = vmatprep.subr.bf16.mxu0 0
    %2506 = vmatpush1.bf16.msra.mxu0 %v2500
    %2507 = vmatprep.subr.bf16.mxu0 0
    %2508 = vmatpush1.bf16.msra.mxu0 0
    %2509 = vmatprep.subr.bf16.mxu0 0
    %2510 = vmatpush1.bf16.msra.mxu0 0
    %2511 = vmatprep.subr.bf16.mxu0 0
    %2512 = vmatpush1.bf16.msra.mxu0 0
    %2513 = vmatprep.subr.bf16.mxu0 0
    %2514 = vmatpush1.bf16.msra.mxu0 0
    %2515 = vmatprep.subr.bf16.mxu0 0
    %2516 = vmatpush1.bf16.msra.mxu0 0
    %2517 = vmatprep.subr.bf16.mxu0 0
    %2518 = vmatpush1.bf16.msra.mxu0 0
    %2519 = vmatprep.subr.bf16.mxu0 0
    %2520 = vmatpush1.bf16.msra.mxu0 0
    %2521 = vmatprep.subr.bf16.mxu0 0
    %2522 = vmatpush1.bf16.msra.mxu0 0
    %2523 = vmatprep.subr.bf16.mxu0 0
    %2524 = vmatpush1.bf16.msra.mxu0 0
    %2525 = vmatprep.subr.bf16.mxu0 0
    %2526 = vmatpush1.bf16.msra.mxu0 0
    %2527 = vmatprep.subr.bf16.mxu0 0
    %2528 = vmatpush1.bf16.msra.mxu0 0
    %2529 = vmatprep.subr.bf16.mxu0 0
    %2530 = vmatpush1.bf16.msra.mxu0 0
    %2531 = vmatprep.subr.bf16.mxu0 0
    %2532 = vmatpush1.bf16.msra.mxu0 0
    %2533 = vmatprep.subr.bf16.mxu0 0
    %2534 = vmatpush1.bf16.msra.mxu0 0
    %2535 = vmatprep.subr.bf16.mxu0 0
    %2536 = vmatpush1.bf16.msra.mxu0 0
    %2537 = vmatprep.mubr.bf16.mxu0 0
    %2538 = vmatmul.mubr.bf16.gmra.mrb[0].mxu0 %v2503
    %v2539 = vpop.f32.mrb[0].mxu0
    %v2540 = vadd.f32 0.0, %v2539
    %v2541 = vpop.f32.mrb[0].mxu0
    %v2542 = vpop.f32.mrb[0].mxu0
    %v2543 = vadd.f32 0.0, %v2542
    %v2544 = vpop.f32.mrb[0].mxu0
    %2545 = vdwg.mxu0
    %2547 = vrot.lane.b32.xlu0 %v1343, 96
    %v2548 = vpop.permute.xlu0 %2547
    %v2551 = vsel %vm1153, %v2303, 0
    %2553 = vmatprep.subr.bf16.mxu0 0
    %2554 = vmatpush1.bf16.msra.mxu0 %v2548
    %2555 = vmatprep.subr.bf16.mxu0 0
    %2556 = vmatpush1.bf16.msra.mxu0 0
    %2557 = vmatprep.subr.bf16.mxu0 0
    %2558 = vmatpush1.bf16.msra.mxu0 0
    %2559 = vmatprep.subr.bf16.mxu0 0
    %2560 = vmatpush1.bf16.msra.mxu0 0
    %2561 = vmatprep.subr.bf16.mxu0 0
    %2562 = vmatpush1.bf16.msra.mxu0 0
    %2563 = vmatprep.subr.bf16.mxu0 0
    %2564 = vmatpush1.bf16.msra.mxu0 0
    %2565 = vmatprep.subr.bf16.mxu0 0
    %2566 = vmatpush1.bf16.msra.mxu0 0
    %2567 = vmatprep.subr.bf16.mxu0 0
    %2568 = vmatpush1.bf16.msra.mxu0 0
    %2569 = vmatprep.subr.bf16.mxu0 0
    %2570 = vmatpush1.bf16.msra.mxu0 0
    %2571 = vmatprep.subr.bf16.mxu0 0
    %2572 = vmatpush1.bf16.msra.mxu0 0
    %2573 = vmatprep.subr.bf16.mxu0 0
    %2574 = vmatpush1.bf16.msra.mxu0 0
    %2575 = vmatprep.subr.bf16.mxu0 0
    %2576 = vmatpush1.bf16.msra.mxu0 0
    %2577 = vmatprep.subr.bf16.mxu0 0
    %2578 = vmatpush1.bf16.msra.mxu0 0
    %2579 = vmatprep.subr.bf16.mxu0 0
    %2580 = vmatpush1.bf16.msra.mxu0 0
    %2581 = vmatprep.subr.bf16.mxu0 0
    %2582 = vmatpush1.bf16.msra.mxu0 0
    %2583 = vmatprep.subr.bf16.mxu0 0
    %2584 = vmatpush1.bf16.msra.mxu0 0
    %2585 = vmatprep.mubr.bf16.mxu0 0
    %2586 = vmatmul.mubr.bf16.gmra.mrb[0].mxu0 %v2551
    %v2587 = vpop.f32.mrb[0].mxu0
    %v2588 = vadd.f32 0.0, %v2587
    %v2589 = vpop.f32.mrb[0].mxu0
    %v2590 = vpop.f32.mrb[0].mxu0
    %v2591 = vadd.f32 0.0, %v2590
    %v2592 = vpop.f32.mrb[0].mxu0
    %2593 = vdwg.mxu0
    %2595 = vrot.lane.b32.xlu0 %v1344, 96
    %v2596 = vpop.permute.xlu0 %2595
    %v2599 = vsel %vm1153, %v2304, 0
    %2601 = vmatprep.subr.bf16.mxu0 0
    %2602 = vmatpush1.bf16.msra.mxu0 %v2596
    %2603 = vmatprep.subr.bf16.mxu0 0
    %2604 = vmatpush1.bf16.msra.mxu0 0
    %2605 = vmatprep.subr.bf16.mxu0 0
    %2606 = vmatpush1.bf16.msra.mxu0 0
    %2607 = vmatprep.subr.bf16.mxu0 0
    %2608 = vmatpush1.bf16.msra.mxu0 0
    %2609 = vmatprep.subr.bf16.mxu0 0
    %2610 = vmatpush1.bf16.msra.mxu0 0
    %2611 = vmatprep.subr.bf16.mxu0 0
    %2612 = vmatpush1.bf16.msra.mxu0 0
    %2613 = vmatprep.subr.bf16.mxu0 0
    %2614 = vmatpush1.bf16.msra.mxu0 0
    %2615 = vmatprep.subr.bf16.mxu0 0
    %2616 = vmatpush1.bf16.msra.mxu0 0
    %2617 = vmatprep.subr.bf16.mxu0 0
    %2618 = vmatpush1.bf16.msra.mxu0 0
    %2619 = vmatprep.subr.bf16.mxu0 0
    %2620 = vmatpush1.bf16.msra.mxu0 0
    %2621 = vmatprep.subr.bf16.mxu0 0
    %2622 = vmatpush1.bf16.msra.mxu0 0
    %2623 = vmatprep.subr.bf16.mxu0 0
    %2624 = vmatpush1.bf16.msra.mxu0 0
    %2625 = vmatprep.subr.bf16.mxu0 0
    %2626 = vmatpush1.bf16.msra.mxu0 0
    %2627 = vmatprep.subr.bf16.mxu0 0
    %2628 = vmatpush1.bf16.msra.mxu0 0
    %2629 = vmatprep.subr.bf16.mxu0 0
    %2630 = vmatpush1.bf16.msra.mxu0 0
    %2631 = vmatprep.subr.bf16.mxu0 0
    %2632 = vmatpush1.bf16.msra.mxu0 0
    %2633 = vmatprep.mubr.bf16.mxu0 0
    %2634 = vmatmul.mubr.bf16.gmra.mrb[0].mxu0 %v2599
    %v2635 = vpop.f32.mrb[0].mxu0
    %v2636 = vadd.f32 0.0, %v2635
    %v2637 = vpop.f32.mrb[0].mxu0
    %v2638 = vpop.f32.mrb[0].mxu0
    %v2639 = vadd.f32 0.0, %v2638
    %v2640 = vpop.f32.mrb[0].mxu0
    %2641 = vdwg.mxu0
    %2643 = vrot.lane.b32.xlu0 %v1345, 96
    %v2644 = vpop.permute.xlu0 %2643
    %v2647 = vsel %vm1153, %v2305, 0
    %2649 = vmatprep.subr.bf16.mxu0 0
    %2650 = vmatpush1.bf16.msra.mxu0 %v2644
    %2651 = vmatprep.subr.bf16.mxu0 0
    %2652 = vmatpush1.bf16.msra.mxu0 0
    %2653 = vmatprep.subr.bf16.mxu0 0
    %2654 = vmatpush1.bf16.msra.mxu0 0
    %2655 = vmatprep.subr.bf16.mxu0 0
    %2656 = vmatpush1.bf16.msra.mxu0 0
    %2657 = vmatprep.subr.bf16.mxu0 0
    %2658 = vmatpush1.bf16.msra.mxu0 0
    %2659 = vmatprep.subr.bf16.mxu0 0
    %2660 = vmatpush1.bf16.msra.mxu0 0
    %2661 = vmatprep.subr.bf16.mxu0 0
    %2662 = vmatpush1.bf16.msra.mxu0 0
    %2663 = vmatprep.subr.bf16.mxu0 0
    %2664 = vmatpush1.bf16.msra.mxu0 0
    %2665 = vmatprep.subr.bf16.mxu0 0
    %2666 = vmatpush1.bf16.msra.mxu0 0
    %2667 = vmatprep.subr.bf16.mxu0 0
    %2668 = vmatpush1.bf16.msra.mxu0 0
    %2669 = vmatprep.subr.bf16.mxu0 0
    %2670 = vmatpush1.bf16.msra.mxu0 0
    %2671 = vmatprep.subr.bf16.mxu0 0
    %2672 = vmatpush1.bf16.msra.mxu0 0
    %2673 = vmatprep.subr.bf16.mxu0 0
    %2674 = vmatpush1.bf16.msra.mxu0 0
    %2675 = vmatprep.subr.bf16.mxu0 0
    %2676 = vmatpush1.bf16.msra.mxu0 0
    %2677 = vmatprep.subr.bf16.mxu0 0
    %2678 = vmatpush1.bf16.msra.mxu0 0
    %2679 = vmatprep.subr.bf16.mxu0 0
    %2680 = vmatpush1.bf16.msra.mxu0 0
    %2681 = vmatprep.mubr.bf16.mxu0 0
    %2682 = vmatmul.mubr.bf16.gmra.mrb[0].mxu0 %v2647
    %v2683 = vpop.f32.mrb[0].mxu0
    %v2684 = vadd.f32 0.0, %v2683
    %v2685 = vpop.f32.mrb[0].mxu0
    %v2686 = vpop.f32.mrb[0].mxu0
    %v2687 = vadd.f32 0.0, %v2686
    %v2688 = vpop.f32.mrb[0].mxu0
    %2689 = vdwg.mxu0
    %2690 = vrot.lane.b32.xlu0 %v760, 64
    %v2691 = vpop.permute.xlu0 %2690
    %2692 = vrot.lane.b32.xlu0 %v768, 64
    %v2693 = vpop.permute.xlu0 %2692
    %v2695 = vsel %vm776, %v2691, 0
    %v2698 = vsel %vm776, %v2693, 0
    %2700 = vmatprep.subr.bf16.mxu0 0
    %2701 = vmatpush1.bf16.xpose.msra.mxu0 %v2698
    %2702 = vmatprep.subr.bf16.mxu0 0
    %2703 = vmatpush1.bf16.xpose.msra.mxu0 0
    %2704 = vmatprep.subr.bf16.mxu0 0
    %2705 = vmatpush1.bf16.xpose.msra.mxu0 0
    %2706 = vmatprep.subr.bf16.mxu0 0
    %2707 = vmatpush1.bf16.xpose.msra.mxu0 0
    %2708 = vmatprep.subr.bf16.mxu0 0
    %2709 = vmatpush1.bf16.xpose.msra.mxu0 0
    %2710 = vmatprep.subr.bf16.mxu0 0
    %2711 = vmatpush1.bf16.xpose.msra.mxu0 0
    %2712 = vmatprep.subr.bf16.mxu0 0
    %2713 = vmatpush1.bf16.xpose.msra.mxu0 0
    %2714 = vmatprep.subr.bf16.mxu0 0
    %2715 = vmatpush1.bf16.xpose.msra.mxu0 0
    %2716 = vmatprep.subr.bf16.mxu0 0
    %2717 = vmatpush1.bf16.xpose.msra.mxu0 0
    %2718 = vmatprep.subr.bf16.mxu0 0
    %2719 = vmatpush1.bf16.xpose.msra.mxu0 0
    %2720 = vmatprep.subr.bf16.mxu0 0
    %2721 = vmatpush1.bf16.xpose.msra.mxu0 0
    %2722 = vmatprep.subr.bf16.mxu0 0
    %2723 = vmatpush1.bf16.xpose.msra.mxu0 0
    %2724 = vmatprep.subr.bf16.mxu0 0
    %2725 = vmatpush1.bf16.xpose.msra.mxu0 0
    %2726 = vmatprep.subr.bf16.mxu0 0
    %2727 = vmatpush1.bf16.xpose.msra.mxu0 0
    %2728 = vmatprep.subr.bf16.mxu0 0
    %2729 = vmatpush1.bf16.xpose.msra.mxu0 0
    %2730 = vmatprep.subr.bf16.mxu0 0
    %2731 = vmatpush1.bf16.xpose.msra.mxu0 0
    %2732 = vmatprep.mubr.bf16.mxu0 0
    %2733 = vmatmul.mubr.bf16.gmra.mrb[0].mxu0 %v2695
    %v2734 = vpop.f32.mrb[0].mxu0
    %v2735 = vadd.f32 0.0, %v2734
    %v2736 = vpop.f32.mrb[0].mxu0
    %v2737 = vpop.f32.mrb[0].mxu0
    %v2738 = vadd.f32 0.0, %v2737
    %v2739 = vpop.f32.mrb[0].mxu0
    %2740 = vdwg.mxu0
    %2741 = vrot.lane.b32.xlu0 %v761, 64
    %v2742 = vpop.permute.xlu0 %2741
    %2743 = vrot.lane.b32.xlu0 %v769, 64
    %v2744 = vpop.permute.xlu0 %2743
    %v2746 = vsel %vm776, %v2742, 0
    %v2749 = vsel %vm776, %v2744, 0
    %2751 = vmatprep.subr.bf16.mxu0 0
    %2752 = vmatpush1.bf16.xpose.msra.mxu0 %v2749
    %2753 = vmatprep.subr.bf16.mxu0 0
    %2754 = vmatpush1.bf16.xpose.msra.mxu0 0
    %2755 = vmatprep.subr.bf16.mxu0 0
    %2756 = vmatpush1.bf16.xpose.msra.mxu0 0
    %2757 = vmatprep.subr.bf16.mxu0 0
    %2758 = vmatpush1.bf16.xpose.msra.mxu0 0
    %2759 = vmatprep.subr.bf16.mxu0 0
    %2760 = vmatpush1.bf16.xpose.msra.mxu0 0
    %2761 = vmatprep.subr.bf16.mxu0 0
    %2762 = vmatpush1.bf16.xpose.msra.mxu0 0
    %2763 = vmatprep.subr.bf16.mxu0 0
    %2764 = vmatpush1.bf16.xpose.msra.mxu0 0
    %2765 = vmatprep.subr.bf16.mxu0 0
    %2766 = vmatpush1.bf16.xpose.msra.mxu0 0
    %2767 = vmatprep.subr.bf16.mxu0 0
    %2768 = vmatpush1.bf16.xpose.msra.mxu0 0
    %2769 = vmatprep.subr.bf16.mxu0 0
    %2770 = vmatpush1.bf16.xpose.msra.mxu0 0
    %2771 = vmatprep.subr.bf16.mxu0 0
    %2772 = vmatpush1.bf16.xpose.msra.mxu0 0
    %2773 = vmatprep.subr.bf16.mxu0 0
    %2774 = vmatpush1.bf16.xpose.msra.mxu0 0
    %2775 = vmatprep.subr.bf16.mxu0 0
    %2776 = vmatpush1.bf16.xpose.msra.mxu0 0
    %2777 = vmatprep.subr.bf16.mxu0 0
    %2778 = vmatpush1.bf16.xpose.msra.mxu0 0
    %2779 = vmatprep.subr.bf16.mxu0 0
    %2780 = vmatpush1.bf16.xpose.msra.mxu0 0
    %2781 = vmatprep.subr.bf16.mxu0 0
    %2782 = vmatpush1.bf16.xpose.msra.mxu0 0
    %2783 = vmatprep.mubr.bf16.mxu0 0
    %2784 = vmatmul.mubr.bf16.gmra.mrb[0].mxu0 %v2746
    %v2785 = vpop.f32.mrb[0].mxu0
    %v2786 = vadd.f32 0.0, %v2785
    %v2787 = vpop.f32.mrb[0].mxu0
    %v2788 = vpop.f32.mrb[0].mxu0
    %v2789 = vadd.f32 0.0, %v2788
    %v2790 = vpop.f32.mrb[0].mxu0
    %2791 = vdwg.mxu0
    %2792 = vrot.lane.b32.xlu0 %v762, 64
    %v2793 = vpop.permute.xlu0 %2792
    %2794 = vrot.lane.b32.xlu0 %v770, 64
    %v2795 = vpop.permute.xlu0 %2794
    %v2797 = vsel %vm776, %v2793, 0
    %v2800 = vsel %vm776, %v2795, 0
    %2802 = vmatprep.subr.bf16.mxu0 0
    %2803 = vmatpush1.bf16.xpose.msra.mxu0 %v2800
    %2804 = vmatprep.subr.bf16.mxu0 0
    %2805 = vmatpush1.bf16.xpose.msra.mxu0 0
    %2806 = vmatprep.subr.bf16.mxu0 0
    %2807 = vmatpush1.bf16.xpose.msra.mxu0 0
    %2808 = vmatprep.subr.bf16.mxu0 0
    %2809 = vmatpush1.bf16.xpose.msra.mxu0 0
    %2810 = vmatprep.subr.bf16.mxu0 0
    %2811 = vmatpush1.bf16.xpose.msra.mxu0 0
    %2812 = vmatprep.subr.bf16.mxu0 0
    %2813 = vmatpush1.bf16.xpose.msra.mxu0 0
    %2814 = vmatprep.subr.bf16.mxu0 0
    %2815 = vmatpush1.bf16.xpose.msra.mxu0 0
    %2816 = vmatprep.subr.bf16.mxu0 0
    %2817 = vmatpush1.bf16.xpose.msra.mxu0 0
    %2818 = vmatprep.subr.bf16.mxu0 0
    %2819 = vmatpush1.bf16.xpose.msra.mxu0 0
    %2820 = vmatprep.subr.bf16.mxu0 0
    %2821 = vmatpush1.bf16.xpose.msra.mxu0 0
    %2822 = vmatprep.subr.bf16.mxu0 0
    %2823 = vmatpush1.bf16.xpose.msra.mxu0 0
    %2824 = vmatprep.subr.bf16.mxu0 0
    %2825 = vmatpush1.bf16.xpose.msra.mxu0 0
    %2826 = vmatprep.subr.bf16.mxu0 0
    %2827 = vmatpush1.bf16.xpose.msra.mxu0 0
    %2828 = vmatprep.subr.bf16.mxu0 0
    %2829 = vmatpush1.bf16.xpose.msra.mxu0 0
    %2830 = vmatprep.subr.bf16.mxu0 0
    %2831 = vmatpush1.bf16.xpose.msra.mxu0 0
    %2832 = vmatprep.subr.bf16.mxu0 0
    %2833 = vmatpush1.bf16.xpose.msra.mxu0 0
    %2834 = vmatprep.mubr.bf16.mxu0 0
    %2835 = vmatmul.mubr.bf16.gmra.mrb[0].mxu0 %v2797
    %v2836 = vpop.f32.mrb[0].mxu0
    %v2837 = vadd.f32 0.0, %v2836
    %v2838 = vpop.f32.mrb[0].mxu0
    %v2839 = vpop.f32.mrb[0].mxu0
    %v2840 = vadd.f32 0.0, %v2839
    %v2841 = vpop.f32.mrb[0].mxu0
    %2842 = vdwg.mxu0
    %2843 = vrot.lane.b32.xlu0 %v763, 64
    %v2844 = vpop.permute.xlu0 %2843
    %2845 = vrot.lane.b32.xlu0 %v771, 64
    %v2846 = vpop.permute.xlu0 %2845
    %v2848 = vsel %vm776, %v2844, 0
    %v2851 = vsel %vm776, %v2846, 0
    %2853 = vmatprep.subr.bf16.mxu0 0
    %2854 = vmatpush1.bf16.xpose.msra.mxu0 %v2851
    %2855 = vmatprep.subr.bf16.mxu0 0
    %2856 = vmatpush1.bf16.xpose.msra.mxu0 0
    %2857 = vmatprep.subr.bf16.mxu0 0
    %2858 = vmatpush1.bf16.xpose.msra.mxu0 0
    %2859 = vmatprep.subr.bf16.mxu0 0
    %2860 = vmatpush1.bf16.xpose.msra.mxu0 0
    %2861 = vmatprep.subr.bf16.mxu0 0
    %2862 = vmatpush1.bf16.xpose.msra.mxu0 0
    %2863 = vmatprep.subr.bf16.mxu0 0
    %2864 = vmatpush1.bf16.xpose.msra.mxu0 0
    %2865 = vmatprep.subr.bf16.mxu0 0
    %2866 = vmatpush1.bf16.xpose.msra.mxu0 0
    %2867 = vmatprep.subr.bf16.mxu0 0
    %2868 = vmatpush1.bf16.xpose.msra.mxu0 0
    %2869 = vmatprep.subr.bf16.mxu0 0
    %2870 = vmatpush1.bf16.xpose.msra.mxu0 0
    %2871 = vmatprep.subr.bf16.mxu0 0
    %2872 = vmatpush1.bf16.xpose.msra.mxu0 0
    %2873 = vmatprep.subr.bf16.mxu0 0
    %2874 = vmatpush1.bf16.xpose.msra.mxu0 0
    %2875 = vmatprep.subr.bf16.mxu0 0
    %2876 = vmatpush1.bf16.xpose.msra.mxu0 0
    %2877 = vmatprep.subr.bf16.mxu0 0
    %2878 = vmatpush1.bf16.xpose.msra.mxu0 0
    %2879 = vmatprep.subr.bf16.mxu0 0
    %2880 = vmatpush1.bf16.xpose.msra.mxu0 0
    %2881 = vmatprep.subr.bf16.mxu0 0
    %2882 = vmatpush1.bf16.xpose.msra.mxu0 0
    %2883 = vmatprep.subr.bf16.mxu0 0
    %2884 = vmatpush1.bf16.xpose.msra.mxu0 0
    %2885 = vmatprep.mubr.bf16.mxu0 0
    %2886 = vmatmul.mubr.bf16.gmra.mrb[0].mxu0 %v2848
    %v2887 = vpop.f32.mrb[0].mxu0
    %v2888 = vadd.f32 0.0, %v2887
    %v2889 = vpop.f32.mrb[0].mxu0
    %v2890 = vpop.f32.mrb[0].mxu0
    %v2891 = vadd.f32 0.0, %v2890
    %v2892 = vpop.f32.mrb[0].mxu0
    %2893 = vdwg.mxu0
    %2894 = vrot.lane.b32.xlu0 %v764, 64
    %v2895 = vpop.permute.xlu0 %2894
    %2896 = vrot.lane.b32.xlu0 %v772, 64
    %v2897 = vpop.permute.xlu0 %2896
    %v2899 = vsel %vm776, %v2895, 0
    %v2902 = vsel %vm776, %v2897, 0
    %2904 = vmatprep.subr.bf16.mxu0 0
    %2905 = vmatpush1.bf16.xpose.msra.mxu0 %v2902
    %2906 = vmatprep.subr.bf16.mxu0 0
    %2907 = vmatpush1.bf16.xpose.msra.mxu0 0
    %2908 = vmatprep.subr.bf16.mxu0 0
    %2909 = vmatpush1.bf16.xpose.msra.mxu0 0
    %2910 = vmatprep.subr.bf16.mxu0 0
    %2911 = vmatpush1.bf16.xpose.msra.mxu0 0
    %2912 = vmatprep.subr.bf16.mxu0 0
    %2913 = vmatpush1.bf16.xpose.msra.mxu0 0
    %2914 = vmatprep.subr.bf16.mxu0 0
    %2915 = vmatpush1.bf16.xpose.msra.mxu0 0
    %2916 = vmatprep.subr.bf16.mxu0 0
    %2917 = vmatpush1.bf16.xpose.msra.mxu0 0
    %2918 = vmatprep.subr.bf16.mxu0 0
    %2919 = vmatpush1.bf16.xpose.msra.mxu0 0
    %2920 = vmatprep.subr.bf16.mxu0 0
    %2921 = vmatpush1.bf16.xpose.msra.mxu0 0
    %2922 = vmatprep.subr.bf16.mxu0 0
    %2923 = vmatpush1.bf16.xpose.msra.mxu0 0
    %2924 = vmatprep.subr.bf16.mxu0 0
    %2925 = vmatpush1.bf16.xpose.msra.mxu0 0
    %2926 = vmatprep.subr.bf16.mxu0 0
    %2927 = vmatpush1.bf16.xpose.msra.mxu0 0
    %2928 = vmatprep.subr.bf16.mxu0 0
    %2929 = vmatpush1.bf16.xpose.msra.mxu0 0
    %2930 = vmatprep.subr.bf16.mxu0 0
    %2931 = vmatpush1.bf16.xpose.msra.mxu0 0
    %2932 = vmatprep.subr.bf16.mxu0 0
    %2933 = vmatpush1.bf16.xpose.msra.mxu0 0
    %2934 = vmatprep.subr.bf16.mxu0 0
    %2935 = vmatpush1.bf16.xpose.msra.mxu0 0
    %2936 = vmatprep.mubr.bf16.mxu0 0
    %2937 = vmatmul.mubr.bf16.gmra.mrb[0].mxu0 %v2899
    %v2938 = vpop.f32.mrb[0].mxu0
    %v2939 = vadd.f32 0.0, %v2938
    %v2940 = vpop.f32.mrb[0].mxu0
    %v2941 = vpop.f32.mrb[0].mxu0
    %v2942 = vadd.f32 0.0, %v2941
    %v2943 = vpop.f32.mrb[0].mxu0
    %2944 = vdwg.mxu0
    %2945 = vrot.lane.b32.xlu0 %v765, 64
    %v2946 = vpop.permute.xlu0 %2945
    %2947 = vrot.lane.b32.xlu0 %v773, 64
    %v2948 = vpop.permute.xlu0 %2947
    %v2950 = vsel %vm776, %v2946, 0
    %v2953 = vsel %vm776, %v2948, 0
    %2955 = vmatprep.subr.bf16.mxu0 0
    %2956 = vmatpush1.bf16.xpose.msra.mxu0 %v2953
    %2957 = vmatprep.subr.bf16.mxu0 0
    %2958 = vmatpush1.bf16.xpose.msra.mxu0 0
    %2959 = vmatprep.subr.bf16.mxu0 0
    %2960 = vmatpush1.bf16.xpose.msra.mxu0 0
    %2961 = vmatprep.subr.bf16.mxu0 0
    %2962 = vmatpush1.bf16.xpose.msra.mxu0 0
    %2963 = vmatprep.subr.bf16.mxu0 0
    %2964 = vmatpush1.bf16.xpose.msra.mxu0 0
    %2965 = vmatprep.subr.bf16.mxu0 0
    %2966 = vmatpush1.bf16.xpose.msra.mxu0 0
    %2967 = vmatprep.subr.bf16.mxu0 0
    %2968 = vmatpush1.bf16.xpose.msra.mxu0 0
    %2969 = vmatprep.subr.bf16.mxu0 0
    %2970 = vmatpush1.bf16.xpose.msra.mxu0 0
    %2971 = vmatprep.subr.bf16.mxu0 0
    %2972 = vmatpush1.bf16.xpose.msra.mxu0 0
    %2973 = vmatprep.subr.bf16.mxu0 0
    %2974 = vmatpush1.bf16.xpose.msra.mxu0 0
    %2975 = vmatprep.subr.bf16.mxu0 0
    %2976 = vmatpush1.bf16.xpose.msra.mxu0 0
    %2977 = vmatprep.subr.bf16.mxu0 0
    %2978 = vmatpush1.bf16.xpose.msra.mxu0 0
    %2979 = vmatprep.subr.bf16.mxu0 0
    %2980 = vmatpush1.bf16.xpose.msra.mxu0 0
    %2981 = vmatprep.subr.bf16.mxu0 0
    %2982 = vmatpush1.bf16.xpose.msra.mxu0 0
    %2983 = vmatprep.subr.bf16.mxu0 0
    %2984 = vmatpush1.bf16.xpose.msra.mxu0 0
    %2985 = vmatprep.subr.bf16.mxu0 0
    %2986 = vmatpush1.bf16.xpose.msra.mxu0 0
    %2987 = vmatprep.mubr.bf16.mxu0 0
    %2988 = vmatmul.mubr.bf16.gmra.mrb[0].mxu0 %v2950
    %v2989 = vpop.f32.mrb[0].mxu0
    %v2990 = vadd.f32 0.0, %v2989
    %v2991 = vpop.f32.mrb[0].mxu0
    %v2992 = vpop.f32.mrb[0].mxu0
    %v2993 = vadd.f32 0.0, %v2992
    %v2994 = vpop.f32.mrb[0].mxu0
    %2995 = vdwg.mxu0
    %2996 = vrot.lane.b32.xlu0 %v766, 64
    %v2997 = vpop.permute.xlu0 %2996
    %2998 = vrot.lane.b32.xlu0 %v774, 64
    %v2999 = vpop.permute.xlu0 %2998
    %v3001 = vsel %vm776, %v2997, 0
    %v3004 = vsel %vm776, %v2999, 0
    %3006 = vmatprep.subr.bf16.mxu0 0
    %3007 = vmatpush1.bf16.xpose.msra.mxu0 %v3004
    %3008 = vmatprep.subr.bf16.mxu0 0
    %3009 = vmatpush1.bf16.xpose.msra.mxu0 0
    %3010 = vmatprep.subr.bf16.mxu0 0
    %3011 = vmatpush1.bf16.xpose.msra.mxu0 0
    %3012 = vmatprep.subr.bf16.mxu0 0
    %3013 = vmatpush1.bf16.xpose.msra.mxu0 0
    %3014 = vmatprep.subr.bf16.mxu0 0
    %3015 = vmatpush1.bf16.xpose.msra.mxu0 0
    %3016 = vmatprep.subr.bf16.mxu0 0
    %3017 = vmatpush1.bf16.xpose.msra.mxu0 0
    %3018 = vmatprep.subr.bf16.mxu0 0
    %3019 = vmatpush1.bf16.xpose.msra.mxu0 0
    %3020 = vmatprep.subr.bf16.mxu0 0
    %3021 = vmatpush1.bf16.xpose.msra.mxu0 0
    %3022 = vmatprep.subr.bf16.mxu0 0
    %3023 = vmatpush1.bf16.xpose.msra.mxu0 0
    %3024 = vmatprep.subr.bf16.mxu0 0
    %3025 = vmatpush1.bf16.xpose.msra.mxu0 0
    %3026 = vmatprep.subr.bf16.mxu0 0
    %3027 = vmatpush1.bf16.xpose.msra.mxu0 0
    %3028 = vmatprep.subr.bf16.mxu0 0
    %3029 = vmatpush1.bf16.xpose.msra.mxu0 0
    %3030 = vmatprep.subr.bf16.mxu0 0
    %3031 = vmatpush1.bf16.xpose.msra.mxu0 0
    %3032 = vmatprep.subr.bf16.mxu0 0
    %3033 = vmatpush1.bf16.xpose.msra.mxu0 0
    %3034 = vmatprep.subr.bf16.mxu0 0
    %3035 = vmatpush1.bf16.xpose.msra.mxu0 0
    %3036 = vmatprep.subr.bf16.mxu0 0
    %3037 = vmatpush1.bf16.xpose.msra.mxu0 0
    %3038 = vmatprep.mubr.bf16.mxu0 0
    %3039 = vmatmul.mubr.bf16.gmra.mrb[0].mxu0 %v3001
    %v3040 = vpop.f32.mrb[0].mxu0
    %v3041 = vadd.f32 0.0, %v3040
    %v3042 = vpop.f32.mrb[0].mxu0
    %v3043 = vpop.f32.mrb[0].mxu0
    %v3044 = vadd.f32 0.0, %v3043
    %v3045 = vpop.f32.mrb[0].mxu0
    %3046 = vdwg.mxu0
    %3047 = vrot.lane.b32.xlu0 %v767, 64
    %v3048 = vpop.permute.xlu0 %3047
    %3049 = vrot.lane.b32.xlu0 %v775, 64
    %v3050 = vpop.permute.xlu0 %3049
    %v3052 = vsel %vm776, %v3048, 0
    %v3055 = vsel %vm776, %v3050, 0
    %3057 = vmatprep.subr.bf16.mxu0 0
    %3058 = vmatpush1.bf16.xpose.msra.mxu0 %v3055
    %3059 = vmatprep.subr.bf16.mxu0 0
    %3060 = vmatpush1.bf16.xpose.msra.mxu0 0
    %3061 = vmatprep.subr.bf16.mxu0 0
    %3062 = vmatpush1.bf16.xpose.msra.mxu0 0
    %3063 = vmatprep.subr.bf16.mxu0 0
    %3064 = vmatpush1.bf16.xpose.msra.mxu0 0
    %3065 = vmatprep.subr.bf16.mxu0 0
    %3066 = vmatpush1.bf16.xpose.msra.mxu0 0
    %3067 = vmatprep.subr.bf16.mxu0 0
    %3068 = vmatpush1.bf16.xpose.msra.mxu0 0
    %3069 = vmatprep.subr.bf16.mxu0 0
    %3070 = vmatpush1.bf16.xpose.msra.mxu0 0
    %3071 = vmatprep.subr.bf16.mxu0 0
    %3072 = vmatpush1.bf16.xpose.msra.mxu0 0
    %3073 = vmatprep.subr.bf16.mxu0 0
    %3074 = vmatpush1.bf16.xpose.msra.mxu0 0
    %3075 = vmatprep.subr.bf16.mxu0 0
    %3076 = vmatpush1.bf16.xpose.msra.mxu0 0
    %3077 = vmatprep.subr.bf16.mxu0 0
    %3078 = vmatpush1.bf16.xpose.msra.mxu0 0
    %3079 = vmatprep.subr.bf16.mxu0 0
    %3080 = vmatpush1.bf16.xpose.msra.mxu0 0
    %3081 = vmatprep.subr.bf16.mxu0 0
    %3082 = vmatpush1.bf16.xpose.msra.mxu0 0
    %3083 = vmatprep.subr.bf16.mxu0 0
    %3084 = vmatpush1.bf16.xpose.msra.mxu0 0
    %3085 = vmatprep.subr.bf16.mxu0 0
    %3086 = vmatpush1.bf16.xpose.msra.mxu0 0
    %3087 = vmatprep.subr.bf16.mxu0 0
    %3088 = vmatpush1.bf16.xpose.msra.mxu0 0
    %3089 = vmatprep.mubr.bf16.mxu0 0
    %3090 = vmatmul.mubr.bf16.gmra.mrb[0].mxu0 %v3052
    %v3091 = vpop.f32.mrb[0].mxu0
    %v3092 = vadd.f32 0.0, %v3091
    %v3093 = vpop.f32.mrb[0].mxu0
    %v3094 = vpop.f32.mrb[0].mxu0
    %v3095 = vadd.f32 0.0, %v3094
    %v3096 = vpop.f32.mrb[0].mxu0
    %3097 = vdwg.mxu0
    %v3098 = vsel %vm1153, %v2735, -inf
    %3099 = vmax.xlane.f32.xlu0 %v3098
    %v3100 = vpop.xlane.xlu0 %3099
    %v3101 = vsel %vm1153, %v2738, -inf
    %3102 = vmax.xlane.f32.xlu0 %v3101
    %v3103 = vpop.xlane.xlu0 %3102
    %v3104 = vsel %vm1153, %v2786, -inf
    %3105 = vmax.xlane.f32.xlu0 %v3104
    %v3106 = vpop.xlane.xlu0 %3105
    %v3107 = vsel %vm1153, %v2789, -inf
    %3108 = vmax.xlane.f32.xlu0 %v3107
    %v3109 = vpop.xlane.xlu0 %3108
    %v3110 = vsel %vm1153, %v2837, -inf
    %3111 = vmax.xlane.f32.xlu0 %v3110
    %v3112 = vpop.xlane.xlu0 %3111
    %v3113 = vsel %vm1153, %v2840, -inf
    %3114 = vmax.xlane.f32.xlu0 %v3113
    %v3115 = vpop.xlane.xlu0 %3114
    %v3116 = vsel %vm1153, %v2888, -inf
    %3117 = vmax.xlane.f32.xlu0 %v3116
    %v3118 = vpop.xlane.xlu0 %3117
    %v3119 = vsel %vm1153, %v2891, -inf
    %3120 = vmax.xlane.f32.xlu0 %v3119
    %v3121 = vpop.xlane.xlu0 %3120
    %v3122 = vsel %vm1153, %v2939, -inf
    %3123 = vmax.xlane.f32.xlu0 %v3122
    %v3124 = vpop.xlane.xlu0 %3123
    %v3125 = vsel %vm1153, %v2942, -inf
    %3126 = vmax.xlane.f32.xlu0 %v3125
    %v3127 = vpop.xlane.xlu0 %3126
    %v3128 = vsel %vm1153, %v2990, -inf
    %3129 = vmax.xlane.f32.xlu0 %v3128
    %v3130 = vpop.xlane.xlu0 %3129
    %v3131 = vsel %vm1153, %v2993, -inf
    %3132 = vmax.xlane.f32.xlu0 %v3131
    %v3133 = vpop.xlane.xlu0 %3132
    %v3134 = vsel %vm1153, %v3041, -inf
    %3135 = vmax.xlane.f32.xlu0 %v3134
    %v3136 = vpop.xlane.xlu0 %3135
    %v3137 = vsel %vm1153, %v3044, -inf
    %3138 = vmax.xlane.f32.xlu0 %v3137
    %v3139 = vpop.xlane.xlu0 %3138
    %v3140 = vsel %vm1153, %v3092, -inf
    %3141 = vmax.xlane.f32.xlu0 %v3140
    %v3142 = vpop.xlane.xlu0 %3141
    %v3143 = vsel %vm1153, %v3095, -inf
    %3144 = vmax.xlane.f32.xlu0 %v3143
    %v3145 = vpop.xlane.xlu0 %3144
    %v3146 = vsub.f32 %v2735, %v3100
    %v3147 = vsub.f32 %v2738, %v3103
    %v3148 = vsub.f32 %v2786, %v3106
    %v3149 = vsub.f32 %v2789, %v3109
    %v3150 = vsub.f32 %v2837, %v3112
    %v3151 = vsub.f32 %v2840, %v3115
    %v3152 = vsub.f32 %v2888, %v3118
    %v3153 = vsub.f32 %v2891, %v3121
    %v3154 = vsub.f32 %v2939, %v3124
    %v3155 = vsub.f32 %v2942, %v3127
    %v3156 = vsub.f32 %v2990, %v3130
    %v3157 = vsub.f32 %v2993, %v3133
    %v3158 = vsub.f32 %v3041, %v3136
    %v3159 = vsub.f32 %v3044, %v3139
    %v3160 = vsub.f32 %v3092, %v3142
    %v3161 = vsub.f32 %v3095, %v3145
    %v3162 = vmul.f32 %v3146, 1.442695
    %v3163 = vpow.pop %v3162
    %v3164 = vmul.f32 %v3147, 1.442695
    %v3165 = vpow.pop %v3164
    %v3166 = vmul.f32 %v3148, 1.442695
    %v3167 = vpow.pop %v3166
    %v3168 = vmul.f32 %v3149, 1.442695
    %v3169 = vpow.pop %v3168
    %v3170 = vmul.f32 %v3150, 1.442695
    %v3171 = vpow.pop %v3170
    %v3172 = vmul.f32 %v3151, 1.442695
    %v3173 = vpow.pop %v3172
    %v3174 = vmul.f32 %v3152, 1.442695
    %v3175 = vpow.pop %v3174
    %v3176 = vmul.f32 %v3153, 1.442695
    %v3177 = vpow.pop %v3176
    %v3178 = vmul.f32 %v3154, 1.442695
    %v3179 = vpow.pop %v3178
    %v3180 = vmul.f32 %v3155, 1.442695
    %v3181 = vpow.pop %v3180
    %v3182 = vmul.f32 %v3156, 1.442695
    %v3183 = vpow.pop %v3182
    %v3184 = vmul.f32 %v3157, 1.442695
    %v3185 = vpow.pop %v3184
    %v3186 = vmul.f32 %v3158, 1.442695
    %v3187 = vpow.pop %v3186
    %v3188 = vmul.f32 %v3159, 1.442695
    %v3189 = vpow.pop %v3188
    %v3190 = vmul.f32 %v3160, 1.442695
    %v3191 = vpow.pop %v3190
    %v3192 = vmul.f32 %v3161, 1.442695
    %v3193 = vpow.pop %v3192
    %v3194 = vsel %vm1153, %v3163, 0.0
    %3195 = vadd.xlane.f32.xlu0 %v3194
    %v3196 = vpop.xlane.xlu0 %3195
    %v3197 = vsel %vm1153, %v3165, 0.0
    %3198 = vadd.xlane.f32.xlu0 %v3197
    %v3199 = vpop.xlane.xlu0 %3198
    %v3200 = vsel %vm1153, %v3167, 0.0
    %3201 = vadd.xlane.f32.xlu0 %v3200
    %v3202 = vpop.xlane.xlu0 %3201
    %v3203 = vsel %vm1153, %v3169, 0.0
    %3204 = vadd.xlane.f32.xlu0 %v3203
    %v3205 = vpop.xlane.xlu0 %3204
    %v3206 = vsel %vm1153, %v3171, 0.0
    %3207 = vadd.xlane.f32.xlu0 %v3206
    %v3208 = vpop.xlane.xlu0 %3207
    %v3209 = vsel %vm1153, %v3173, 0.0
    %3210 = vadd.xlane.f32.xlu0 %v3209
    %v3211 = vpop.xlane.xlu0 %3210
    %v3212 = vsel %vm1153, %v3175, 0.0
    %3213 = vadd.xlane.f32.xlu0 %v3212
    %v3214 = vpop.xlane.xlu0 %3213
    %v3215 = vsel %vm1153, %v3177, 0.0
    %3216 = vadd.xlane.f32.xlu0 %v3215
    %v3217 = vpop.xlane.xlu0 %3216
    %v3218 = vsel %vm1153, %v3179, 0.0
    %3219 = vadd.xlane.f32.xlu0 %v3218
    %v3220 = vpop.xlane.xlu0 %3219
    %v3221 = vsel %vm1153, %v3181, 0.0
    %3222 = vadd.xlane.f32.xlu0 %v3221
    %v3223 = vpop.xlane.xlu0 %3222
    %v3224 = vsel %vm1153, %v3183, 0.0
    %3225 = vadd.xlane.f32.xlu0 %v3224
    %v3226 = vpop.xlane.xlu0 %3225
    %v3227 = vsel %vm1153, %v3185, 0.0
    %3228 = vadd.xlane.f32.xlu0 %v3227
    %v3229 = vpop.xlane.xlu0 %3228
    %v3230 = vsel %vm1153, %v3187, 0.0
    %3231 = vadd.xlane.f32.xlu0 %v3230
    %v3232 = vpop.xlane.xlu0 %3231
    %v3233 = vsel %vm1153, %v3189, 0.0
    %3234 = vadd.xlane.f32.xlu0 %v3233
    %v3235 = vpop.xlane.xlu0 %3234
    %v3236 = vsel %vm1153, %v3191, 0.0
    %3237 = vadd.xlane.f32.xlu0 %v3236
    %v3238 = vpop.xlane.xlu0 %3237
    %v3239 = vsel %vm1153, %v3193, 0.0
    %3240 = vadd.xlane.f32.xlu0 %v3239
    %v3241 = vpop.xlane.xlu0 %3240
    %v3242 = vrcp.pop %v3196
    %v3243 = vrcp.pop %v3199
    %v3244 = vrcp.pop %v3202
    %v3245 = vrcp.pop %v3205
    %v3246 = vrcp.pop %v3208
    %v3247 = vrcp.pop %v3211
    %v3248 = vrcp.pop %v3214
    %v3249 = vrcp.pop %v3217
    %v3250 = vrcp.pop %v3220
    %v3251 = vrcp.pop %v3223
    %v3252 = vrcp.pop %v3226
    %v3253 = vrcp.pop %v3229
    %v3254 = vrcp.pop %v3232
    %v3255 = vrcp.pop %v3235
    %v3256 = vrcp.pop %v3238
    %v3257 = vrcp.pop %v3241
    %v3258 = vmul.f32 %v3163, %v3242
    %v3259 = vmul.f32 %v3165, %v3243
    %v3260 = vmul.f32 %v3167, %v3244
    %v3261 = vmul.f32 %v3169, %v3245
    %v3262 = vmul.f32 %v3171, %v3246
    %v3263 = vmul.f32 %v3173, %v3247
    %v3264 = vmul.f32 %v3175, %v3248
    %v3265 = vmul.f32 %v3177, %v3249
    %v3266 = vmul.f32 %v3179, %v3250
    %v3267 = vmul.f32 %v3181, %v3251
    %v3268 = vmul.f32 %v3183, %v3252
    %v3269 = vmul.f32 %v3185, %v3253
    %v3270 = vmul.f32 %v3187, %v3254
    %v3271 = vmul.f32 %v3189, %v3255
    %v3272 = vmul.f32 %v3191, %v3256
    %v3273 = vmul.f32 %v3193, %v3257
    %v3274 = vpack.c.bf16 %v3259, %v3258
    %v3275 = vpack.c.bf16 %v3261, %v3260
    %v3276 = vpack.c.bf16 %v3263, %v3262
    %v3277 = vpack.c.bf16 %v3265, %v3264
    %v3278 = vpack.c.bf16 %v3267, %v3266
    %v3279 = vpack.c.bf16 %v3269, %v3268
    %v3280 = vpack.c.bf16 %v3271, %v3270
    %v3281 = vpack.c.bf16 %v3273, %v3272
    %3282 = vrot.lane.b32.xlu0 %v1338, 64
    %v3283 = vpop.permute.xlu0 %3282
    %v3286 = vsel %vm1153, %v3274, 0
    %3288 = vmatprep.subr.bf16.mxu0 0
    %3289 = vmatpush1.bf16.msra.mxu0 %v3283
    %3290 = vmatprep.subr.bf16.mxu0 0
    %3291 = vmatpush1.bf16.msra.mxu0 0
    %3292 = vmatprep.subr.bf16.mxu0 0
    %3293 = vmatpush1.bf16.msra.mxu0 0
    %3294 = vmatprep.subr.bf16.mxu0 0
    %3295 = vmatpush1.bf16.msra.mxu0 0
    %3296 = vmatprep.subr.bf16.mxu0 0
    %3297 = vmatpush1.bf16.msra.mxu0 0
    %3298 = vmatprep.subr.bf16.mxu0 0
    %3299 = vmatpush1.bf16.msra.mxu0 0
    %3300 = vmatprep.subr.bf16.mxu0 0
    %3301 = vmatpush1.bf16.msra.mxu0 0
    %3302 = vmatprep.subr.bf16.mxu0 0
    %3303 = vmatpush1.bf16.msra.mxu0 0
    %3304 = vmatprep.subr.bf16.mxu0 0
    %3305 = vmatpush1.bf16.msra.mxu0 0
    %3306 = vmatprep.subr.bf16.mxu0 0
    %3307 = vmatpush1.bf16.msra.mxu0 0
    %3308 = vmatprep.subr.bf16.mxu0 0
    %3309 = vmatpush1.bf16.msra.mxu0 0
    %3310 = vmatprep.subr.bf16.mxu0 0
    %3311 = vmatpush1.bf16.msra.mxu0 0
    %3312 = vmatprep.subr.bf16.mxu0 0
    %3313 = vmatpush1.bf16.msra.mxu0 0
    %3314 = vmatprep.subr.bf16.mxu0 0
    %3315 = vmatpush1.bf16.msra.mxu0 0
    %3316 = vmatprep.subr.bf16.mxu0 0
    %3317 = vmatpush1.bf16.msra.mxu0 0
    %3318 = vmatprep.subr.bf16.mxu0 0
    %3319 = vmatpush1.bf16.msra.mxu0 0
    %3320 = vmatprep.mubr.bf16.mxu0 0
    %3321 = vmatmul.mubr.bf16.gmra.mrb[0].mxu0 %v3286
    %v3322 = vpop.f32.mrb[0].mxu0
    %v3323 = vadd.f32 0.0, %v3322
    %v3324 = vpop.f32.mrb[0].mxu0
    %v3325 = vpop.f32.mrb[0].mxu0
    %v3326 = vadd.f32 0.0, %v3325
    %v3327 = vpop.f32.mrb[0].mxu0
    %3328 = vdwg.mxu0
    %3329 = vrot.lane.b32.xlu0 %v1339, 64
    %v3330 = vpop.permute.xlu0 %3329
    %v3333 = vsel %vm1153, %v3275, 0
    %3335 = vmatprep.subr.bf16.mxu0 0
    %3336 = vmatpush1.bf16.msra.mxu0 %v3330
    %3337 = vmatprep.subr.bf16.mxu0 0
    %3338 = vmatpush1.bf16.msra.mxu0 0
    %3339 = vmatprep.subr.bf16.mxu0 0
    %3340 = vmatpush1.bf16.msra.mxu0 0
    %3341 = vmatprep.subr.bf16.mxu0 0
    %3342 = vmatpush1.bf16.msra.mxu0 0
    %3343 = vmatprep.subr.bf16.mxu0 0
    %3344 = vmatpush1.bf16.msra.mxu0 0
    %3345 = vmatprep.subr.bf16.mxu0 0
    %3346 = vmatpush1.bf16.msra.mxu0 0
    %3347 = vmatprep.subr.bf16.mxu0 0
    %3348 = vmatpush1.bf16.msra.mxu0 0
    %3349 = vmatprep.subr.bf16.mxu0 0
    %3350 = vmatpush1.bf16.msra.mxu0 0
    %3351 = vmatprep.subr.bf16.mxu0 0
    %3352 = vmatpush1.bf16.msra.mxu0 0
    %3353 = vmatprep.subr.bf16.mxu0 0
    %3354 = vmatpush1.bf16.msra.mxu0 0
    %3355 = vmatprep.subr.bf16.mxu0 0
    %3356 = vmatpush1.bf16.msra.mxu0 0
    %3357 = vmatprep.subr.bf16.mxu0 0
    %3358 = vmatpush1.bf16.msra.mxu0 0
    %3359 = vmatprep.subr.bf16.mxu0 0
    %3360 = vmatpush1.bf16.msra.mxu0 0
    %3361 = vmatprep.subr.bf16.mxu0 0
    %3362 = vmatpush1.bf16.msra.mxu0 0
    %3363 = vmatprep.subr.bf16.mxu0 0
    %3364 = vmatpush1.bf16.msra.mxu0 0
    %3365 = vmatprep.subr.bf16.mxu0 0
    %3366 = vmatpush1.bf16.msra.mxu0 0
    %3367 = vmatprep.mubr.bf16.mxu0 0
    %3368 = vmatmul.mubr.bf16.gmra.mrb[0].mxu0 %v3333
    %v3369 = vpop.f32.mrb[0].mxu0
    %v3370 = vadd.f32 0.0, %v3369
    %v3371 = vpop.f32.mrb[0].mxu0
    %v3372 = vpop.f32.mrb[0].mxu0
    %v3373 = vadd.f32 0.0, %v3372
    %v3374 = vpop.f32.mrb[0].mxu0
    %3375 = vdwg.mxu0
    %3376 = vrot.lane.b32.xlu0 %v1340, 64
    %v3377 = vpop.permute.xlu0 %3376
    %v3380 = vsel %vm1153, %v3276, 0
    %3382 = vmatprep.subr.bf16.mxu0 0
    %3383 = vmatpush1.bf16.msra.mxu0 %v3377
    %3384 = vmatprep.subr.bf16.mxu0 0
    %3385 = vmatpush1.bf16.msra.mxu0 0
    %3386 = vmatprep.subr.bf16.mxu0 0
    %3387 = vmatpush1.bf16.msra.mxu0 0
    %3388 = vmatprep.subr.bf16.mxu0 0
    %3389 = vmatpush1.bf16.msra.mxu0 0
    %3390 = vmatprep.subr.bf16.mxu0 0
    %3391 = vmatpush1.bf16.msra.mxu0 0
    %3392 = vmatprep.subr.bf16.mxu0 0
    %3393 = vmatpush1.bf16.msra.mxu0 0
    %3394 = vmatprep.subr.bf16.mxu0 0
    %3395 = vmatpush1.bf16.msra.mxu0 0
    %3396 = vmatprep.subr.bf16.mxu0 0
    %3397 = vmatpush1.bf16.msra.mxu0 0
    %3398 = vmatprep.subr.bf16.mxu0 0
    %3399 = vmatpush1.bf16.msra.mxu0 0
    %3400 = vmatprep.subr.bf16.mxu0 0
    %3401 = vmatpush1.bf16.msra.mxu0 0
    %3402 = vmatprep.subr.bf16.mxu0 0
    %3403 = vmatpush1.bf16.msra.mxu0 0
    %3404 = vmatprep.subr.bf16.mxu0 0
    %3405 = vmatpush1.bf16.msra.mxu0 0
    %3406 = vmatprep.subr.bf16.mxu0 0
    %3407 = vmatpush1.bf16.msra.mxu0 0
    %3408 = vmatprep.subr.bf16.mxu0 0
    %3409 = vmatpush1.bf16.msra.mxu0 0
    %3410 = vmatprep.subr.bf16.mxu0 0
    %3411 = vmatpush1.bf16.msra.mxu0 0
    %3412 = vmatprep.subr.bf16.mxu0 0
    %3413 = vmatpush1.bf16.msra.mxu0 0
    %3414 = vmatprep.mubr.bf16.mxu0 0
    %3415 = vmatmul.mubr.bf16.gmra.mrb[0].mxu0 %v3380
    %v3416 = vpop.f32.mrb[0].mxu0
    %v3417 = vadd.f32 0.0, %v3416
    %v3418 = vpop.f32.mrb[0].mxu0
    %v3419 = vpop.f32.mrb[0].mxu0
    %v3420 = vadd.f32 0.0, %v3419
    %v3421 = vpop.f32.mrb[0].mxu0
    %3422 = vdwg.mxu0
    %3423 = vrot.lane.b32.xlu0 %v1341, 64
    %v3424 = vpop.permute.xlu0 %3423
    %v3427 = vsel %vm1153, %v3277, 0
    %3429 = vmatprep.subr.bf16.mxu0 0
    %3430 = vmatpush1.bf16.msra.mxu0 %v3424
    %3431 = vmatprep.subr.bf16.mxu0 0
    %3432 = vmatpush1.bf16.msra.mxu0 0
    %3433 = vmatprep.subr.bf16.mxu0 0
    %3434 = vmatpush1.bf16.msra.mxu0 0
    %3435 = vmatprep.subr.bf16.mxu0 0
    %3436 = vmatpush1.bf16.msra.mxu0 0
    %3437 = vmatprep.subr.bf16.mxu0 0
    %3438 = vmatpush1.bf16.msra.mxu0 0
    %3439 = vmatprep.subr.bf16.mxu0 0
    %3440 = vmatpush1.bf16.msra.mxu0 0
    %3441 = vmatprep.subr.bf16.mxu0 0
    %3442 = vmatpush1.bf16.msra.mxu0 0
    %3443 = vmatprep.subr.bf16.mxu0 0
    %3444 = vmatpush1.bf16.msra.mxu0 0
    %3445 = vmatprep.subr.bf16.mxu0 0
    %3446 = vmatpush1.bf16.msra.mxu0 0
    %3447 = vmatprep.subr.bf16.mxu0 0
    %3448 = vmatpush1.bf16.msra.mxu0 0
    %3449 = vmatprep.subr.bf16.mxu0 0
    %3450 = vmatpush1.bf16.msra.mxu0 0
    %3451 = vmatprep.subr.bf16.mxu0 0
    %3452 = vmatpush1.bf16.msra.mxu0 0
    %3453 = vmatprep.subr.bf16.mxu0 0
    %3454 = vmatpush1.bf16.msra.mxu0 0
    %3455 = vmatprep.subr.bf16.mxu0 0
    %3456 = vmatpush1.bf16.msra.mxu0 0
    %3457 = vmatprep.subr.bf16.mxu0 0
    %3458 = vmatpush1.bf16.msra.mxu0 0
    %3459 = vmatprep.subr.bf16.mxu0 0
    %3460 = vmatpush1.bf16.msra.mxu0 0
    %3461 = vmatprep.mubr.bf16.mxu0 0
    %3462 = vmatmul.mubr.bf16.gmra.mrb[0].mxu0 %v3427
    %v3463 = vpop.f32.mrb[0].mxu0
    %v3464 = vadd.f32 0.0, %v3463
    %v3465 = vpop.f32.mrb[0].mxu0
    %v3466 = vpop.f32.mrb[0].mxu0
    %v3467 = vadd.f32 0.0, %v3466
    %v3468 = vpop.f32.mrb[0].mxu0
    %3469 = vdwg.mxu0
    %3470 = vrot.lane.b32.xlu0 %v1342, 64
    %v3471 = vpop.permute.xlu0 %3470
    %v3474 = vsel %vm1153, %v3278, 0
    %3476 = vmatprep.subr.bf16.mxu0 0
    %3477 = vmatpush1.bf16.msra.mxu0 %v3471
    %3478 = vmatprep.subr.bf16.mxu0 0
    %3479 = vmatpush1.bf16.msra.mxu0 0
    %3480 = vmatprep.subr.bf16.mxu0 0
    %3481 = vmatpush1.bf16.msra.mxu0 0
    %3482 = vmatprep.subr.bf16.mxu0 0
    %3483 = vmatpush1.bf16.msra.mxu0 0
    %3484 = vmatprep.subr.bf16.mxu0 0
    %3485 = vmatpush1.bf16.msra.mxu0 0
    %3486 = vmatprep.subr.bf16.mxu0 0
    %3487 = vmatpush1.bf16.msra.mxu0 0
    %3488 = vmatprep.subr.bf16.mxu0 0
    %3489 = vmatpush1.bf16.msra.mxu0 0
    %3490 = vmatprep.subr.bf16.mxu0 0
    %3491 = vmatpush1.bf16.msra.mxu0 0
    %3492 = vmatprep.subr.bf16.mxu0 0
    %3493 = vmatpush1.bf16.msra.mxu0 0
    %3494 = vmatprep.subr.bf16.mxu0 0
    %3495 = vmatpush1.bf16.msra.mxu0 0
    %3496 = vmatprep.subr.bf16.mxu0 0
    %3497 = vmatpush1.bf16.msra.mxu0 0
    %3498 = vmatprep.subr.bf16.mxu0 0
    %3499 = vmatpush1.bf16.msra.mxu0 0
    %3500 = vmatprep.subr.bf16.mxu0 0
    %3501 = vmatpush1.bf16.msra.mxu0 0
    %3502 = vmatprep.subr.bf16.mxu0 0
    %3503 = vmatpush1.bf16.msra.mxu0 0
    %3504 = vmatprep.subr.bf16.mxu0 0
    %3505 = vmatpush1.bf16.msra.mxu0 0
    %3506 = vmatprep.subr.bf16.mxu0 0
    %3507 = vmatpush1.bf16.msra.mxu0 0
    %3508 = vmatprep.mubr.bf16.mxu0 0
    %3509 = vmatmul.mubr.bf16.gmra.mrb[0].mxu0 %v3474
    %v3510 = vpop.f32.mrb[0].mxu0
    %v3511 = vadd.f32 0.0, %v3510
    %v3512 = vpop.f32.mrb[0].mxu0
    %v3513 = vpop.f32.mrb[0].mxu0
    %v3514 = vadd.f32 0.0, %v3513
    %v3515 = vpop.f32.mrb[0].mxu0
    %3516 = vdwg.mxu0
    %3517 = vrot.lane.b32.xlu0 %v1343, 64
    %v3518 = vpop.permute.xlu0 %3517
    %v3521 = vsel %vm1153, %v3279, 0
    %3523 = vmatprep.subr.bf16.mxu0 0
    %3524 = vmatpush1.bf16.msra.mxu0 %v3518
    %3525 = vmatprep.subr.bf16.mxu0 0
    %3526 = vmatpush1.bf16.msra.mxu0 0
    %3527 = vmatprep.subr.bf16.mxu0 0
    %3528 = vmatpush1.bf16.msra.mxu0 0
    %3529 = vmatprep.subr.bf16.mxu0 0
    %3530 = vmatpush1.bf16.msra.mxu0 0
    %3531 = vmatprep.subr.bf16.mxu0 0
    %3532 = vmatpush1.bf16.msra.mxu0 0
    %3533 = vmatprep.subr.bf16.mxu0 0
    %3534 = vmatpush1.bf16.msra.mxu0 0
    %3535 = vmatprep.subr.bf16.mxu0 0
    %3536 = vmatpush1.bf16.msra.mxu0 0
    %3537 = vmatprep.subr.bf16.mxu0 0
    %3538 = vmatpush1.bf16.msra.mxu0 0
    %3539 = vmatprep.subr.bf16.mxu0 0
    %3540 = vmatpush1.bf16.msra.mxu0 0
    %3541 = vmatprep.subr.bf16.mxu0 0
    %3542 = vmatpush1.bf16.msra.mxu0 0
    %3543 = vmatprep.subr.bf16.mxu0 0
    %3544 = vmatpush1.bf16.msra.mxu0 0
    %3545 = vmatprep.subr.bf16.mxu0 0
    %3546 = vmatpush1.bf16.msra.mxu0 0
    %3547 = vmatprep.subr.bf16.mxu0 0
    %3548 = vmatpush1.bf16.msra.mxu0 0
    %3549 = vmatprep.subr.bf16.mxu0 0
    %3550 = vmatpush1.bf16.msra.mxu0 0
    %3551 = vmatprep.subr.bf16.mxu0 0
    %3552 = vmatpush1.bf16.msra.mxu0 0
    %3553 = vmatprep.subr.bf16.mxu0 0
    %3554 = vmatpush1.bf16.msra.mxu0 0
    %3555 = vmatprep.mubr.bf16.mxu0 0
    %3556 = vmatmul.mubr.bf16.gmra.mrb[0].mxu0 %v3521
    %v3557 = vpop.f32.mrb[0].mxu0
    %v3558 = vadd.f32 0.0, %v3557
    %v3559 = vpop.f32.mrb[0].mxu0
    %v3560 = vpop.f32.mrb[0].mxu0
    %v3561 = vadd.f32 0.0, %v3560
    %v3562 = vpop.f32.mrb[0].mxu0
    %3563 = vdwg.mxu0
    %3564 = vrot.lane.b32.xlu0 %v1344, 64
    %v3565 = vpop.permute.xlu0 %3564
    %v3568 = vsel %vm1153, %v3280, 0
    %3570 = vmatprep.subr.bf16.mxu0 0
    %3571 = vmatpush1.bf16.msra.mxu0 %v3565
    %3572 = vmatprep.subr.bf16.mxu0 0
    %3573 = vmatpush1.bf16.msra.mxu0 0
    %3574 = vmatprep.subr.bf16.mxu0 0
    %3575 = vmatpush1.bf16.msra.mxu0 0
    %3576 = vmatprep.subr.bf16.mxu0 0
    %3577 = vmatpush1.bf16.msra.mxu0 0
    %3578 = vmatprep.subr.bf16.mxu0 0
    %3579 = vmatpush1.bf16.msra.mxu0 0
    %3580 = vmatprep.subr.bf16.mxu0 0
    %3581 = vmatpush1.bf16.msra.mxu0 0
    %3582 = vmatprep.subr.bf16.mxu0 0
    %3583 = vmatpush1.bf16.msra.mxu0 0
    %3584 = vmatprep.subr.bf16.mxu0 0
    %3585 = vmatpush1.bf16.msra.mxu0 0
    %3586 = vmatprep.subr.bf16.mxu0 0
    %3587 = vmatpush1.bf16.msra.mxu0 0
    %3588 = vmatprep.subr.bf16.mxu0 0
    %3589 = vmatpush1.bf16.msra.mxu0 0
    %3590 = vmatprep.subr.bf16.mxu0 0
    %3591 = vmatpush1.bf16.msra.mxu0 0
    %3592 = vmatprep.subr.bf16.mxu0 0
    %3593 = vmatpush1.bf16.msra.mxu0 0
    %3594 = vmatprep.subr.bf16.mxu0 0
    %3595 = vmatpush1.bf16.msra.mxu0 0
    %3596 = vmatprep.subr.bf16.mxu0 0
    %3597 = vmatpush1.bf16.msra.mxu0 0
    %3598 = vmatprep.subr.bf16.mxu0 0
    %3599 = vmatpush1.bf16.msra.mxu0 0
    %3600 = vmatprep.subr.bf16.mxu0 0
    %3601 = vmatpush1.bf16.msra.mxu0 0
    %3602 = vmatprep.mubr.bf16.mxu0 0
    %3603 = vmatmul.mubr.bf16.gmra.mrb[0].mxu0 %v3568
    %v3604 = vpop.f32.mrb[0].mxu0
    %v3605 = vadd.f32 0.0, %v3604
    %v3606 = vpop.f32.mrb[0].mxu0
    %v3607 = vpop.f32.mrb[0].mxu0
    %v3608 = vadd.f32 0.0, %v3607
    %v3609 = vpop.f32.mrb[0].mxu0
    %3610 = vdwg.mxu0
    %3611 = vrot.lane.b32.xlu0 %v1345, 64
    %v3612 = vpop.permute.xlu0 %3611
    %v3615 = vsel %vm1153, %v3281, 0
    %3617 = vmatprep.subr.bf16.mxu0 0
    %3618 = vmatpush1.bf16.msra.mxu0 %v3612
    %3619 = vmatprep.subr.bf16.mxu0 0
    %3620 = vmatpush1.bf16.msra.mxu0 0
    %3621 = vmatprep.subr.bf16.mxu0 0
    %3622 = vmatpush1.bf16.msra.mxu0 0
    %3623 = vmatprep.subr.bf16.mxu0 0
    %3624 = vmatpush1.bf16.msra.mxu0 0
    %3625 = vmatprep.subr.bf16.mxu0 0
    %3626 = vmatpush1.bf16.msra.mxu0 0
    %3627 = vmatprep.subr.bf16.mxu0 0
    %3628 = vmatpush1.bf16.msra.mxu0 0
    %3629 = vmatprep.subr.bf16.mxu0 0
    %3630 = vmatpush1.bf16.msra.mxu0 0
    %3631 = vmatprep.subr.bf16.mxu0 0
    %3632 = vmatpush1.bf16.msra.mxu0 0
    %3633 = vmatprep.subr.bf16.mxu0 0
    %3634 = vmatpush1.bf16.msra.mxu0 0
    %3635 = vmatprep.subr.bf16.mxu0 0
    %3636 = vmatpush1.bf16.msra.mxu0 0
    %3637 = vmatprep.subr.bf16.mxu0 0
    %3638 = vmatpush1.bf16.msra.mxu0 0
    %3639 = vmatprep.subr.bf16.mxu0 0
    %3640 = vmatpush1.bf16.msra.mxu0 0
    %3641 = vmatprep.subr.bf16.mxu0 0
    %3642 = vmatpush1.bf16.msra.mxu0 0
    %3643 = vmatprep.subr.bf16.mxu0 0
    %3644 = vmatpush1.bf16.msra.mxu0 0
    %3645 = vmatprep.subr.bf16.mxu0 0
    %3646 = vmatpush1.bf16.msra.mxu0 0
    %3647 = vmatprep.subr.bf16.mxu0 0
    %3648 = vmatpush1.bf16.msra.mxu0 0
    %3649 = vmatprep.mubr.bf16.mxu0 0
    %3650 = vmatmul.mubr.bf16.gmra.mrb[0].mxu0 %v3615
    %v3651 = vpop.f32.mrb[0].mxu0
    %v3652 = vadd.f32 0.0, %v3651
    %v3653 = vpop.f32.mrb[0].mxu0
    %v3654 = vpop.f32.mrb[0].mxu0
    %v3655 = vadd.f32 0.0, %v3654
    %v3656 = vpop.f32.mrb[0].mxu0
    %3657 = vdwg.mxu0
    %3658 = vrot.lane.b32.xlu0 %v760, 32
    %v3659 = vpop.permute.xlu0 %3658
    %3660 = vrot.lane.b32.xlu0 %v768, 32
    %v3661 = vpop.permute.xlu0 %3660
    %v3663 = vsel %vm776, %v3659, 0
    %v3666 = vsel %vm776, %v3661, 0
    %3668 = vmatprep.subr.bf16.mxu0 0
    %3669 = vmatpush1.bf16.xpose.msra.mxu0 %v3666
    %3670 = vmatprep.subr.bf16.mxu0 0
    %3671 = vmatpush1.bf16.xpose.msra.mxu0 0
    %3672 = vmatprep.subr.bf16.mxu0 0
    %3673 = vmatpush1.bf16.xpose.msra.mxu0 0
    %3674 = vmatprep.subr.bf16.mxu0 0
    %3675 = vmatpush1.bf16.xpose.msra.mxu0 0
    %3676 = vmatprep.subr.bf16.mxu0 0
    %3677 = vmatpush1.bf16.xpose.msra.mxu0 0
    %3678 = vmatprep.subr.bf16.mxu0 0
    %3679 = vmatpush1.bf16.xpose.msra.mxu0 0
    %3680 = vmatprep.subr.bf16.mxu0 0
    %3681 = vmatpush1.bf16.xpose.msra.mxu0 0
    %3682 = vmatprep.subr.bf16.mxu0 0
    %3683 = vmatpush1.bf16.xpose.msra.mxu0 0
    %3684 = vmatprep.subr.bf16.mxu0 0
    %3685 = vmatpush1.bf16.xpose.msra.mxu0 0
    %3686 = vmatprep.subr.bf16.mxu0 0
    %3687 = vmatpush1.bf16.xpose.msra.mxu0 0
    %3688 = vmatprep.subr.bf16.mxu0 0
    %3689 = vmatpush1.bf16.xpose.msra.mxu0 0
    %3690 = vmatprep.subr.bf16.mxu0 0
    %3691 = vmatpush1.bf16.xpose.msra.mxu0 0
    %3692 = vmatprep.subr.bf16.mxu0 0
    %3693 = vmatpush1.bf16.xpose.msra.mxu0 0
    %3694 = vmatprep.subr.bf16.mxu0 0
    %3695 = vmatpush1.bf16.xpose.msra.mxu0 0
    %3696 = vmatprep.subr.bf16.mxu0 0
    %3697 = vmatpush1.bf16.xpose.msra.mxu0 0
    %3698 = vmatprep.subr.bf16.mxu0 0
    %3699 = vmatpush1.bf16.xpose.msra.mxu0 0
    %3700 = vmatprep.mubr.bf16.mxu0 0
    %3701 = vmatmul.mubr.bf16.gmra.mrb[0].mxu0 %v3663
    %v3702 = vpop.f32.mrb[0].mxu0
    %v3703 = vadd.f32 0.0, %v3702
    %v3704 = vpop.f32.mrb[0].mxu0
    %v3705 = vpop.f32.mrb[0].mxu0
    %v3706 = vadd.f32 0.0, %v3705
    %v3707 = vpop.f32.mrb[0].mxu0
    %3708 = vdwg.mxu0
    %3709 = vrot.lane.b32.xlu0 %v761, 32
    %v3710 = vpop.permute.xlu0 %3709
    %3711 = vrot.lane.b32.xlu0 %v769, 32
    %v3712 = vpop.permute.xlu0 %3711
    %v3714 = vsel %vm776, %v3710, 0
    %v3717 = vsel %vm776, %v3712, 0
    %3719 = vmatprep.subr.bf16.mxu0 0
    %3720 = vmatpush1.bf16.xpose.msra.mxu0 %v3717
    %3721 = vmatprep.subr.bf16.mxu0 0
    %3722 = vmatpush1.bf16.xpose.msra.mxu0 0
    %3723 = vmatprep.subr.bf16.mxu0 0
    %3724 = vmatpush1.bf16.xpose.msra.mxu0 0
    %3725 = vmatprep.subr.bf16.mxu0 0
    %3726 = vmatpush1.bf16.xpose.msra.mxu0 0
    %3727 = vmatprep.subr.bf16.mxu0 0
    %3728 = vmatpush1.bf16.xpose.msra.mxu0 0
    %3729 = vmatprep.subr.bf16.mxu0 0
    %3730 = vmatpush1.bf16.xpose.msra.mxu0 0
    %3731 = vmatprep.subr.bf16.mxu0 0
    %3732 = vmatpush1.bf16.xpose.msra.mxu0 0
    %3733 = vmatprep.subr.bf16.mxu0 0
    %3734 = vmatpush1.bf16.xpose.msra.mxu0 0
    %3735 = vmatprep.subr.bf16.mxu0 0
    %3736 = vmatpush1.bf16.xpose.msra.mxu0 0
    %3737 = vmatprep.subr.bf16.mxu0 0
    %3738 = vmatpush1.bf16.xpose.msra.mxu0 0
    %3739 = vmatprep.subr.bf16.mxu0 0
    %3740 = vmatpush1.bf16.xpose.msra.mxu0 0
    %3741 = vmatprep.subr.bf16.mxu0 0
    %3742 = vmatpush1.bf16.xpose.msra.mxu0 0
    %3743 = vmatprep.subr.bf16.mxu0 0
    %3744 = vmatpush1.bf16.xpose.msra.mxu0 0
    %3745 = vmatprep.subr.bf16.mxu0 0
    %3746 = vmatpush1.bf16.xpose.msra.mxu0 0
    %3747 = vmatprep.subr.bf16.mxu0 0
    %3748 = vmatpush1.bf16.xpose.msra.mxu0 0
    %3749 = vmatprep.subr.bf16.mxu0 0
    %3750 = vmatpush1.bf16.xpose.msra.mxu0 0
    %3751 = vmatprep.mubr.bf16.mxu0 0
    %3752 = vmatmul.mubr.bf16.gmra.mrb[0].mxu0 %v3714
    %v3753 = vpop.f32.mrb[0].mxu0
    %v3754 = vadd.f32 0.0, %v3753
    %v3755 = vpop.f32.mrb[0].mxu0
    %v3756 = vpop.f32.mrb[0].mxu0
    %v3757 = vadd.f32 0.0, %v3756
    %v3758 = vpop.f32.mrb[0].mxu0
    %3759 = vdwg.mxu0
    %3760 = vrot.lane.b32.xlu0 %v762, 32
    %v3761 = vpop.permute.xlu0 %3760
    %3762 = vrot.lane.b32.xlu0 %v770, 32
    %v3763 = vpop.permute.xlu0 %3762
    %v3765 = vsel %vm776, %v3761, 0
    %v3768 = vsel %vm776, %v3763, 0
    %3770 = vmatprep.subr.bf16.mxu0 0
    %3771 = vmatpush1.bf16.xpose.msra.mxu0 %v3768
    %3772 = vmatprep.subr.bf16.mxu0 0
    %3773 = vmatpush1.bf16.xpose.msra.mxu0 0
    %3774 = vmatprep.subr.bf16.mxu0 0
    %3775 = vmatpush1.bf16.xpose.msra.mxu0 0
    %3776 = vmatprep.subr.bf16.mxu0 0
    %3777 = vmatpush1.bf16.xpose.msra.mxu0 0
    %3778 = vmatprep.subr.bf16.mxu0 0
    %3779 = vmatpush1.bf16.xpose.msra.mxu0 0
    %3780 = vmatprep.subr.bf16.mxu0 0
    %3781 = vmatpush1.bf16.xpose.msra.mxu0 0
    %3782 = vmatprep.subr.bf16.mxu0 0
    %3783 = vmatpush1.bf16.xpose.msra.mxu0 0
    %3784 = vmatprep.subr.bf16.mxu0 0
    %3785 = vmatpush1.bf16.xpose.msra.mxu0 0
    %3786 = vmatprep.subr.bf16.mxu0 0
    %3787 = vmatpush1.bf16.xpose.msra.mxu0 0
    %3788 = vmatprep.subr.bf16.mxu0 0
    %3789 = vmatpush1.bf16.xpose.msra.mxu0 0
    %3790 = vmatprep.subr.bf16.mxu0 0
    %3791 = vmatpush1.bf16.xpose.msra.mxu0 0
    %3792 = vmatprep.subr.bf16.mxu0 0
    %3793 = vmatpush1.bf16.xpose.msra.mxu0 0
    %3794 = vmatprep.subr.bf16.mxu0 0
    %3795 = vmatpush1.bf16.xpose.msra.mxu0 0
    %3796 = vmatprep.subr.bf16.mxu0 0
    %3797 = vmatpush1.bf16.xpose.msra.mxu0 0
    %3798 = vmatprep.subr.bf16.mxu0 0
    %3799 = vmatpush1.bf16.xpose.msra.mxu0 0
    %3800 = vmatprep.subr.bf16.mxu0 0
    %3801 = vmatpush1.bf16.xpose.msra.mxu0 0
    %3802 = vmatprep.mubr.bf16.mxu0 0
    %3803 = vmatmul.mubr.bf16.gmra.mrb[0].mxu0 %v3765
    %v3804 = vpop.f32.mrb[0].mxu0
    %v3805 = vadd.f32 0.0, %v3804
    %v3806 = vpop.f32.mrb[0].mxu0
    %v3807 = vpop.f32.mrb[0].mxu0
    %v3808 = vadd.f32 0.0, %v3807
    %v3809 = vpop.f32.mrb[0].mxu0
    %3810 = vdwg.mxu0
    %3811 = vrot.lane.b32.xlu0 %v763, 32
    %v3812 = vpop.permute.xlu0 %3811
    %3813 = vrot.lane.b32.xlu0 %v771, 32
    %v3814 = vpop.permute.xlu0 %3813
    %v3816 = vsel %vm776, %v3812, 0
    %v3819 = vsel %vm776, %v3814, 0
    %3821 = vmatprep.subr.bf16.mxu0 0
    %3822 = vmatpush1.bf16.xpose.msra.mxu0 %v3819
    %3823 = vmatprep.subr.bf16.mxu0 0
    %3824 = vmatpush1.bf16.xpose.msra.mxu0 0
    %3825 = vmatprep.subr.bf16.mxu0 0
    %3826 = vmatpush1.bf16.xpose.msra.mxu0 0
    %3827 = vmatprep.subr.bf16.mxu0 0
    %3828 = vmatpush1.bf16.xpose.msra.mxu0 0
    %3829 = vmatprep.subr.bf16.mxu0 0
    %3830 = vmatpush1.bf16.xpose.msra.mxu0 0
    %3831 = vmatprep.subr.bf16.mxu0 0
    %3832 = vmatpush1.bf16.xpose.msra.mxu0 0
    %3833 = vmatprep.subr.bf16.mxu0 0
    %3834 = vmatpush1.bf16.xpose.msra.mxu0 0
    %3835 = vmatprep.subr.bf16.mxu0 0
    %3836 = vmatpush1.bf16.xpose.msra.mxu0 0
    %3837 = vmatprep.subr.bf16.mxu0 0
    %3838 = vmatpush1.bf16.xpose.msra.mxu0 0
    %3839 = vmatprep.subr.bf16.mxu0 0
    %3840 = vmatpush1.bf16.xpose.msra.mxu0 0
    %3841 = vmatprep.subr.bf16.mxu0 0
    %3842 = vmatpush1.bf16.xpose.msra.mxu0 0
    %3843 = vmatprep.subr.bf16.mxu0 0
    %3844 = vmatpush1.bf16.xpose.msra.mxu0 0
    %3845 = vmatprep.subr.bf16.mxu0 0
    %3846 = vmatpush1.bf16.xpose.msra.mxu0 0
    %3847 = vmatprep.subr.bf16.mxu0 0
    %3848 = vmatpush1.bf16.xpose.msra.mxu0 0
    %3849 = vmatprep.subr.bf16.mxu0 0
    %3850 = vmatpush1.bf16.xpose.msra.mxu0 0
    %3851 = vmatprep.subr.bf16.mxu0 0
    %3852 = vmatpush1.bf16.xpose.msra.mxu0 0
    %3853 = vmatprep.mubr.bf16.mxu0 0
    %3854 = vmatmul.mubr.bf16.gmra.mrb[0].mxu0 %v3816
    %v3855 = vpop.f32.mrb[0].mxu0
    %v3856 = vadd.f32 0.0, %v3855
    %v3857 = vpop.f32.mrb[0].mxu0
    %v3858 = vpop.f32.mrb[0].mxu0
    %v3859 = vadd.f32 0.0, %v3858
    %v3860 = vpop.f32.mrb[0].mxu0
    %3861 = vdwg.mxu0
    %3862 = vrot.lane.b32.xlu0 %v764, 32
    %v3863 = vpop.permute.xlu0 %3862
    %3864 = vrot.lane.b32.xlu0 %v772, 32
    %v3865 = vpop.permute.xlu0 %3864
    %v3867 = vsel %vm776, %v3863, 0
    %v3870 = vsel %vm776, %v3865, 0
    %3872 = vmatprep.subr.bf16.mxu0 0
    %3873 = vmatpush1.bf16.xpose.msra.mxu0 %v3870
    %3874 = vmatprep.subr.bf16.mxu0 0
    %3875 = vmatpush1.bf16.xpose.msra.mxu0 0
    %3876 = vmatprep.subr.bf16.mxu0 0
    %3877 = vmatpush1.bf16.xpose.msra.mxu0 0
    %3878 = vmatprep.subr.bf16.mxu0 0
    %3879 = vmatpush1.bf16.xpose.msra.mxu0 0
    %3880 = vmatprep.subr.bf16.mxu0 0
    %3881 = vmatpush1.bf16.xpose.msra.mxu0 0
    %3882 = vmatprep.subr.bf16.mxu0 0
    %3883 = vmatpush1.bf16.xpose.msra.mxu0 0
    %3884 = vmatprep.subr.bf16.mxu0 0
    %3885 = vmatpush1.bf16.xpose.msra.mxu0 0
    %3886 = vmatprep.subr.bf16.mxu0 0
    %3887 = vmatpush1.bf16.xpose.msra.mxu0 0
    %3888 = vmatprep.subr.bf16.mxu0 0
    %3889 = vmatpush1.bf16.xpose.msra.mxu0 0
    %3890 = vmatprep.subr.bf16.mxu0 0
    %3891 = vmatpush1.bf16.xpose.msra.mxu0 0
    %3892 = vmatprep.subr.bf16.mxu0 0
    %3893 = vmatpush1.bf16.xpose.msra.mxu0 0
    %3894 = vmatprep.subr.bf16.mxu0 0
    %3895 = vmatpush1.bf16.xpose.msra.mxu0 0
    %3896 = vmatprep.subr.bf16.mxu0 0
    %3897 = vmatpush1.bf16.xpose.msra.mxu0 0
    %3898 = vmatprep.subr.bf16.mxu0 0
    %3899 = vmatpush1.bf16.xpose.msra.mxu0 0
    %3900 = vmatprep.subr.bf16.mxu0 0
    %3901 = vmatpush1.bf16.xpose.msra.mxu0 0
    %3902 = vmatprep.subr.bf16.mxu0 0
    %3903 = vmatpush1.bf16.xpose.msra.mxu0 0
    %3904 = vmatprep.mubr.bf16.mxu0 0
    %3905 = vmatmul.mubr.bf16.gmra.mrb[0].mxu0 %v3867
    %v3906 = vpop.f32.mrb[0].mxu0
    %v3907 = vadd.f32 0.0, %v3906
    %v3908 = vpop.f32.mrb[0].mxu0
    %v3909 = vpop.f32.mrb[0].mxu0
    %v3910 = vadd.f32 0.0, %v3909
    %v3911 = vpop.f32.mrb[0].mxu0
    %3912 = vdwg.mxu0
    %3913 = vrot.lane.b32.xlu0 %v765, 32
    %v3914 = vpop.permute.xlu0 %3913
    %3915 = vrot.lane.b32.xlu0 %v773, 32
    %v3916 = vpop.permute.xlu0 %3915
    %v3918 = vsel %vm776, %v3914, 0
    %v3921 = vsel %vm776, %v3916, 0
    %3923 = vmatprep.subr.bf16.mxu0 0
    %3924 = vmatpush1.bf16.xpose.msra.mxu0 %v3921
    %3925 = vmatprep.subr.bf16.mxu0 0
    %3926 = vmatpush1.bf16.xpose.msra.mxu0 0
    %3927 = vmatprep.subr.bf16.mxu0 0
    %3928 = vmatpush1.bf16.xpose.msra.mxu0 0
    %3929 = vmatprep.subr.bf16.mxu0 0
    %3930 = vmatpush1.bf16.xpose.msra.mxu0 0
    %3931 = vmatprep.subr.bf16.mxu0 0
    %3932 = vmatpush1.bf16.xpose.msra.mxu0 0
    %3933 = vmatprep.subr.bf16.mxu0 0
    %3934 = vmatpush1.bf16.xpose.msra.mxu0 0
    %3935 = vmatprep.subr.bf16.mxu0 0
    %3936 = vmatpush1.bf16.xpose.msra.mxu0 0
    %3937 = vmatprep.subr.bf16.mxu0 0
    %3938 = vmatpush1.bf16.xpose.msra.mxu0 0
    %3939 = vmatprep.subr.bf16.mxu0 0
    %3940 = vmatpush1.bf16.xpose.msra.mxu0 0
    %3941 = vmatprep.subr.bf16.mxu0 0
    %3942 = vmatpush1.bf16.xpose.msra.mxu0 0
    %3943 = vmatprep.subr.bf16.mxu0 0
    %3944 = vmatpush1.bf16.xpose.msra.mxu0 0
    %3945 = vmatprep.subr.bf16.mxu0 0
    %3946 = vmatpush1.bf16.xpose.msra.mxu0 0
    %3947 = vmatprep.subr.bf16.mxu0 0
    %3948 = vmatpush1.bf16.xpose.msra.mxu0 0
    %3949 = vmatprep.subr.bf16.mxu0 0
    %3950 = vmatpush1.bf16.xpose.msra.mxu0 0
    %3951 = vmatprep.subr.bf16.mxu0 0
    %3952 = vmatpush1.bf16.xpose.msra.mxu0 0
    %3953 = vmatprep.subr.bf16.mxu0 0
    %3954 = vmatpush1.bf16.xpose.msra.mxu0 0
    %3955 = vmatprep.mubr.bf16.mxu0 0
    %3956 = vmatmul.mubr.bf16.gmra.mrb[0].mxu0 %v3918
    %v3957 = vpop.f32.mrb[0].mxu0
    %v3958 = vadd.f32 0.0, %v3957
    %v3959 = vpop.f32.mrb[0].mxu0
    %v3960 = vpop.f32.mrb[0].mxu0
    %v3961 = vadd.f32 0.0, %v3960
    %v3962 = vpop.f32.mrb[0].mxu0
    %3963 = vdwg.mxu0
    %3964 = vrot.lane.b32.xlu0 %v766, 32
    %v3965 = vpop.permute.xlu0 %3964
    %3966 = vrot.lane.b32.xlu0 %v774, 32
    %v3967 = vpop.permute.xlu0 %3966
    %v3969 = vsel %vm776, %v3965, 0
    %v3972 = vsel %vm776, %v3967, 0
    %3974 = vmatprep.subr.bf16.mxu0 0
    %3975 = vmatpush1.bf16.xpose.msra.mxu0 %v3972
    %3976 = vmatprep.subr.bf16.mxu0 0
    %3977 = vmatpush1.bf16.xpose.msra.mxu0 0
    %3978 = vmatprep.subr.bf16.mxu0 0
    %3979 = vmatpush1.bf16.xpose.msra.mxu0 0
    %3980 = vmatprep.subr.bf16.mxu0 0
    %3981 = vmatpush1.bf16.xpose.msra.mxu0 0
    %3982 = vmatprep.subr.bf16.mxu0 0
    %3983 = vmatpush1.bf16.xpose.msra.mxu0 0
    %3984 = vmatprep.subr.bf16.mxu0 0
    %3985 = vmatpush1.bf16.xpose.msra.mxu0 0
    %3986 = vmatprep.subr.bf16.mxu0 0
    %3987 = vmatpush1.bf16.xpose.msra.mxu0 0
    %3988 = vmatprep.subr.bf16.mxu0 0
    %3989 = vmatpush1.bf16.xpose.msra.mxu0 0
    %3990 = vmatprep.subr.bf16.mxu0 0
    %3991 = vmatpush1.bf16.xpose.msra.mxu0 0
    %3992 = vmatprep.subr.bf16.mxu0 0
    %3993 = vmatpush1.bf16.xpose.msra.mxu0 0
    %3994 = vmatprep.subr.bf16.mxu0 0
    %3995 = vmatpush1.bf16.xpose.msra.mxu0 0
    %3996 = vmatprep.subr.bf16.mxu0 0
    %3997 = vmatpush1.bf16.xpose.msra.mxu0 0
    %3998 = vmatprep.subr.bf16.mxu0 0
    %3999 = vmatpush1.bf16.xpose.msra.mxu0 0
    %4000 = vmatprep.subr.bf16.mxu0 0
    %4001 = vmatpush1.bf16.xpose.msra.mxu0 0
    %4002 = vmatprep.subr.bf16.mxu0 0
    %4003 = vmatpush1.bf16.xpose.msra.mxu0 0
    %4004 = vmatprep.subr.bf16.mxu0 0
    %4005 = vmatpush1.bf16.xpose.msra.mxu0 0
    %4006 = vmatprep.mubr.bf16.mxu0 0
    %4007 = vmatmul.mubr.bf16.gmra.mrb[0].mxu0 %v3969
    %v4008 = vpop.f32.mrb[0].mxu0
    %v4009 = vadd.f32 0.0, %v4008
    %v4010 = vpop.f32.mrb[0].mxu0
    %v4011 = vpop.f32.mrb[0].mxu0
    %v4012 = vadd.f32 0.0, %v4011
    %v4013 = vpop.f32.mrb[0].mxu0
    %4014 = vdwg.mxu0
    %4015 = vrot.lane.b32.xlu0 %v767, 32
    %v4016 = vpop.permute.xlu0 %4015
    %4017 = vrot.lane.b32.xlu0 %v775, 32
    %v4018 = vpop.permute.xlu0 %4017
    %v4020 = vsel %vm776, %v4016, 0
    %v4023 = vsel %vm776, %v4018, 0
    %4025 = vmatprep.subr.bf16.mxu0 0
    %4026 = vmatpush1.bf16.xpose.msra.mxu0 %v4023
    %4027 = vmatprep.subr.bf16.mxu0 0
    %4028 = vmatpush1.bf16.xpose.msra.mxu0 0
    %4029 = vmatprep.subr.bf16.mxu0 0
    %4030 = vmatpush1.bf16.xpose.msra.mxu0 0
    %4031 = vmatprep.subr.bf16.mxu0 0
    %4032 = vmatpush1.bf16.xpose.msra.mxu0 0
    %4033 = vmatprep.subr.bf16.mxu0 0
    %4034 = vmatpush1.bf16.xpose.msra.mxu0 0
    %4035 = vmatprep.subr.bf16.mxu0 0
    %4036 = vmatpush1.bf16.xpose.msra.mxu0 0
    %4037 = vmatprep.subr.bf16.mxu0 0
    %4038 = vmatpush1.bf16.xpose.msra.mxu0 0
    %4039 = vmatprep.subr.bf16.mxu0 0
    %4040 = vmatpush1.bf16.xpose.msra.mxu0 0
    %4041 = vmatprep.subr.bf16.mxu0 0
    %4042 = vmatpush1.bf16.xpose.msra.mxu0 0
    %4043 = vmatprep.subr.bf16.mxu0 0
    %4044 = vmatpush1.bf16.xpose.msra.mxu0 0
    %4045 = vmatprep.subr.bf16.mxu0 0
    %4046 = vmatpush1.bf16.xpose.msra.mxu0 0
    %4047 = vmatprep.subr.bf16.mxu0 0
    %4048 = vmatpush1.bf16.xpose.msra.mxu0 0
    %4049 = vmatprep.subr.bf16.mxu0 0
    %4050 = vmatpush1.bf16.xpose.msra.mxu0 0
    %4051 = vmatprep.subr.bf16.mxu0 0
    %4052 = vmatpush1.bf16.xpose.msra.mxu0 0
    %4053 = vmatprep.subr.bf16.mxu0 0
    %4054 = vmatpush1.bf16.xpose.msra.mxu0 0
    %4055 = vmatprep.subr.bf16.mxu0 0
    %4056 = vmatpush1.bf16.xpose.msra.mxu0 0
    %4057 = vmatprep.mubr.bf16.mxu0 0
    %4058 = vmatmul.mubr.bf16.gmra.mrb[0].mxu0 %v4020
    %v4059 = vpop.f32.mrb[0].mxu0
    %v4060 = vadd.f32 0.0, %v4059
    %v4061 = vpop.f32.mrb[0].mxu0
    %v4062 = vpop.f32.mrb[0].mxu0
    %v4063 = vadd.f32 0.0, %v4062
    %v4064 = vpop.f32.mrb[0].mxu0
    %4065 = vdwg.mxu0
    %v4066 = vsel %vm1153, %v3703, -inf
    %4067 = vmax.xlane.f32.xlu0 %v4066
    %v4068 = vpop.xlane.xlu0 %4067
    %v4069 = vsel %vm1153, %v3706, -inf
    %4070 = vmax.xlane.f32.xlu0 %v4069
    %v4071 = vpop.xlane.xlu0 %4070
    %v4072 = vsel %vm1153, %v3754, -inf
    %4073 = vmax.xlane.f32.xlu0 %v4072
    %v4074 = vpop.xlane.xlu0 %4073
    %v4075 = vsel %vm1153, %v3757, -inf
    %4076 = vmax.xlane.f32.xlu0 %v4075
    %v4077 = vpop.xlane.xlu0 %4076
    %v4078 = vsel %vm1153, %v3805, -inf
    %4079 = vmax.xlane.f32.xlu0 %v4078
    %v4080 = vpop.xlane.xlu0 %4079
    %v4081 = vsel %vm1153, %v3808, -inf
    %4082 = vmax.xlane.f32.xlu0 %v4081
    %v4083 = vpop.xlane.xlu0 %4082
    %v4084 = vsel %vm1153, %v3856, -inf
    %4085 = vmax.xlane.f32.xlu0 %v4084
    %v4086 = vpop.xlane.xlu0 %4085
    %v4087 = vsel %vm1153, %v3859, -inf
    %4088 = vmax.xlane.f32.xlu0 %v4087
    %v4089 = vpop.xlane.xlu0 %4088
    %v4090 = vsel %vm1153, %v3907, -inf
    %4091 = vmax.xlane.f32.xlu0 %v4090
    %v4092 = vpop.xlane.xlu0 %4091
    %v4093 = vsel %vm1153, %v3910, -inf
    %4094 = vmax.xlane.f32.xlu0 %v4093
    %v4095 = vpop.xlane.xlu0 %4094
    %v4096 = vsel %vm1153, %v3958, -inf
    %4097 = vmax.xlane.f32.xlu0 %v4096
    %v4098 = vpop.xlane.xlu0 %4097
    %v4099 = vsel %vm1153, %v3961, -inf
    %4100 = vmax.xlane.f32.xlu0 %v4099
    %v4101 = vpop.xlane.xlu0 %4100
    %v4102 = vsel %vm1153, %v4009, -inf
    %4103 = vmax.xlane.f32.xlu0 %v4102
    %v4104 = vpop.xlane.xlu0 %4103
    %v4105 = vsel %vm1153, %v4012, -inf
    %4106 = vmax.xlane.f32.xlu0 %v4105
    %v4107 = vpop.xlane.xlu0 %4106
    %v4108 = vsel %vm1153, %v4060, -inf
    %4109 = vmax.xlane.f32.xlu0 %v4108
    %v4110 = vpop.xlane.xlu0 %4109
    %v4111 = vsel %vm1153, %v4063, -inf
    %4112 = vmax.xlane.f32.xlu0 %v4111
    %v4113 = vpop.xlane.xlu0 %4112
    %v4114 = vsub.f32 %v3703, %v4068
    %v4115 = vsub.f32 %v3706, %v4071
    %v4116 = vsub.f32 %v3754, %v4074
    %v4117 = vsub.f32 %v3757, %v4077
    %v4118 = vsub.f32 %v3805, %v4080
    %v4119 = vsub.f32 %v3808, %v4083
    %v4120 = vsub.f32 %v3856, %v4086
    %v4121 = vsub.f32 %v3859, %v4089
    %v4122 = vsub.f32 %v3907, %v4092
    %v4123 = vsub.f32 %v3910, %v4095
    %v4124 = vsub.f32 %v3958, %v4098
    %v4125 = vsub.f32 %v3961, %v4101
    %v4126 = vsub.f32 %v4009, %v4104
    %v4127 = vsub.f32 %v4012, %v4107
    %v4128 = vsub.f32 %v4060, %v4110
    %v4129 = vsub.f32 %v4063, %v4113
    %v4130 = vmul.f32 %v4114, 1.442695
    %v4131 = vpow.pop %v4130
    %v4132 = vmul.f32 %v4115, 1.442695
    %v4133 = vpow.pop %v4132
    %v4134 = vmul.f32 %v4116, 1.442695
    %v4135 = vpow.pop %v4134
    %v4136 = vmul.f32 %v4117, 1.442695
    %v4137 = vpow.pop %v4136
    %v4138 = vmul.f32 %v4118, 1.442695
    %v4139 = vpow.pop %v4138
    %v4140 = vmul.f32 %v4119, 1.442695
    %v4141 = vpow.pop %v4140
    %v4142 = vmul.f32 %v4120, 1.442695
    %v4143 = vpow.pop %v4142
    %v4144 = vmul.f32 %v4121, 1.442695
    %v4145 = vpow.pop %v4144
    %v4146 = vmul.f32 %v4122, 1.442695
    %v4147 = vpow.pop %v4146
    %v4148 = vmul.f32 %v4123, 1.442695
    %v4149 = vpow.pop %v4148
    %v4150 = vmul.f32 %v4124, 1.442695
    %v4151 = vpow.pop %v4150
    %v4152 = vmul.f32 %v4125, 1.442695
    %v4153 = vpow.pop %v4152
    %v4154 = vmul.f32 %v4126, 1.442695
    %v4155 = vpow.pop %v4154
    %v4156 = vmul.f32 %v4127, 1.442695
    %v4157 = vpow.pop %v4156
    %v4158 = vmul.f32 %v4128, 1.442695
    %v4159 = vpow.pop %v4158
    %v4160 = vmul.f32 %v4129, 1.442695
    %v4161 = vpow.pop %v4160
    %v4162 = vsel %vm1153, %v4131, 0.0
    %4163 = vadd.xlane.f32.xlu0 %v4162
    %v4164 = vpop.xlane.xlu0 %4163
    %v4165 = vsel %vm1153, %v4133, 0.0
    %4166 = vadd.xlane.f32.xlu0 %v4165
    %v4167 = vpop.xlane.xlu0 %4166
    %v4168 = vsel %vm1153, %v4135, 0.0
    %4169 = vadd.xlane.f32.xlu0 %v4168
    %v4170 = vpop.xlane.xlu0 %4169
    %v4171 = vsel %vm1153, %v4137, 0.0
    %4172 = vadd.xlane.f32.xlu0 %v4171
    %v4173 = vpop.xlane.xlu0 %4172
    %v4174 = vsel %vm1153, %v4139, 0.0
    %4175 = vadd.xlane.f32.xlu0 %v4174
    %v4176 = vpop.xlane.xlu0 %4175
    %v4177 = vsel %vm1153, %v4141, 0.0
    %4178 = vadd.xlane.f32.xlu0 %v4177
    %v4179 = vpop.xlane.xlu0 %4178
    %v4180 = vsel %vm1153, %v4143, 0.0
    %4181 = vadd.xlane.f32.xlu0 %v4180
    %v4182 = vpop.xlane.xlu0 %4181
    %v4183 = vsel %vm1153, %v4145, 0.0
    %4184 = vadd.xlane.f32.xlu0 %v4183
    %v4185 = vpop.xlane.xlu0 %4184
    %v4186 = vsel %vm1153, %v4147, 0.0
    %4187 = vadd.xlane.f32.xlu0 %v4186
    %v4188 = vpop.xlane.xlu0 %4187
    %v4189 = vsel %vm1153, %v4149, 0.0
    %4190 = vadd.xlane.f32.xlu0 %v4189
    %v4191 = vpop.xlane.xlu0 %4190
    %v4192 = vsel %vm1153, %v4151, 0.0
    %4193 = vadd.xlane.f32.xlu0 %v4192
    %v4194 = vpop.xlane.xlu0 %4193
    %v4195 = vsel %vm1153, %v4153, 0.0
    %4196 = vadd.xlane.f32.xlu0 %v4195
    %v4197 = vpop.xlane.xlu0 %4196
    %v4198 = vsel %vm1153, %v4155, 0.0
    %4199 = vadd.xlane.f32.xlu0 %v4198
    %v4200 = vpop.xlane.xlu0 %4199
    %v4201 = vsel %vm1153, %v4157, 0.0
    %4202 = vadd.xlane.f32.xlu0 %v4201
    %v4203 = vpop.xlane.xlu0 %4202
    %v4204 = vsel %vm1153, %v4159, 0.0
    %4205 = vadd.xlane.f32.xlu0 %v4204
    %v4206 = vpop.xlane.xlu0 %4205
    %v4207 = vsel %vm1153, %v4161, 0.0
    %4208 = vadd.xlane.f32.xlu0 %v4207
    %v4209 = vpop.xlane.xlu0 %4208
    %v4210 = vrcp.pop %v4164
    %v4211 = vrcp.pop %v4167
    %v4212 = vrcp.pop %v4170
    %v4213 = vrcp.pop %v4173
    %v4214 = vrcp.pop %v4176
    %v4215 = vrcp.pop %v4179
    %v4216 = vrcp.pop %v4182
    %v4217 = vrcp.pop %v4185
    %v4218 = vrcp.pop %v4188
    %v4219 = vrcp.pop %v4191
    %v4220 = vrcp.pop %v4194
    %v4221 = vrcp.pop %v4197
    %v4222 = vrcp.pop %v4200
    %v4223 = vrcp.pop %v4203
    %v4224 = vrcp.pop %v4206
    %v4225 = vrcp.pop %v4209
    %v4226 = vmul.f32 %v4131, %v4210
    %v4227 = vmul.f32 %v4133, %v4211
    %v4228 = vmul.f32 %v4135, %v4212
    %v4229 = vmul.f32 %v4137, %v4213
    %v4230 = vmul.f32 %v4139, %v4214
    %v4231 = vmul.f32 %v4141, %v4215
    %v4232 = vmul.f32 %v4143, %v4216
    %v4233 = vmul.f32 %v4145, %v4217
    %v4234 = vmul.f32 %v4147, %v4218
    %v4235 = vmul.f32 %v4149, %v4219
    %v4236 = vmul.f32 %v4151, %v4220
    %v4237 = vmul.f32 %v4153, %v4221
    %v4238 = vmul.f32 %v4155, %v4222
    %v4239 = vmul.f32 %v4157, %v4223
    %v4240 = vmul.f32 %v4159, %v4224
    %v4241 = vmul.f32 %v4161, %v4225
    %v4242 = vpack.c.bf16 %v4227, %v4226
    %v4243 = vpack.c.bf16 %v4229, %v4228
    %v4244 = vpack.c.bf16 %v4231, %v4230
    %v4245 = vpack.c.bf16 %v4233, %v4232
    %v4246 = vpack.c.bf16 %v4235, %v4234
    %v4247 = vpack.c.bf16 %v4237, %v4236
    %v4248 = vpack.c.bf16 %v4239, %v4238
    %v4249 = vpack.c.bf16 %v4241, %v4240
    %4250 = vrot.lane.b32.xlu0 %v1338, 32
    %v4251 = vpop.permute.xlu0 %4250
    %v4254 = vsel %vm1153, %v4242, 0
    %4256 = vmatprep.subr.bf16.mxu0 0
    %4257 = vmatpush1.bf16.msra.mxu0 %v4251
    %4258 = vmatprep.subr.bf16.mxu0 0
    %4259 = vmatpush1.bf16.msra.mxu0 0
    %4260 = vmatprep.subr.bf16.mxu0 0
    %4261 = vmatpush1.bf16.msra.mxu0 0
    %4262 = vmatprep.subr.bf16.mxu0 0
    %4263 = vmatpush1.bf16.msra.mxu0 0
    %4264 = vmatprep.subr.bf16.mxu0 0
    %4265 = vmatpush1.bf16.msra.mxu0 0
    %4266 = vmatprep.subr.bf16.mxu0 0
    %4267 = vmatpush1.bf16.msra.mxu0 0
    %4268 = vmatprep.subr.bf16.mxu0 0
    %4269 = vmatpush1.bf16.msra.mxu0 0
    %4270 = vmatprep.subr.bf16.mxu0 0
    %4271 = vmatpush1.bf16.msra.mxu0 0
    %4272 = vmatprep.subr.bf16.mxu0 0
    %4273 = vmatpush1.bf16.msra.mxu0 0
    %4274 = vmatprep.subr.bf16.mxu0 0
    %4275 = vmatpush1.bf16.msra.mxu0 0
    %4276 = vmatprep.subr.bf16.mxu0 0
    %4277 = vmatpush1.bf16.msra.mxu0 0
    %4278 = vmatprep.subr.bf16.mxu0 0
    %4279 = vmatpush1.bf16.msra.mxu0 0
    %4280 = vmatprep.subr.bf16.mxu0 0
    %4281 = vmatpush1.bf16.msra.mxu0 0
    %4282 = vmatprep.subr.bf16.mxu0 0
    %4283 = vmatpush1.bf16.msra.mxu0 0
    %4284 = vmatprep.subr.bf16.mxu0 0
    %4285 = vmatpush1.bf16.msra.mxu0 0
    %4286 = vmatprep.subr.bf16.mxu0 0
    %4287 = vmatpush1.bf16.msra.mxu0 0
    %4288 = vmatprep.mubr.bf16.mxu0 0
    %4289 = vmatmul.mubr.bf16.gmra.mrb[0].mxu0 %v4254
    %v4290 = vpop.f32.mrb[0].mxu0
    %v4291 = vadd.f32 0.0, %v4290
    %v4292 = vpop.f32.mrb[0].mxu0
    %v4293 = vpop.f32.mrb[0].mxu0
    %v4294 = vadd.f32 0.0, %v4293
    %v4295 = vpop.f32.mrb[0].mxu0
    %4296 = vdwg.mxu0
    %4297 = vrot.lane.b32.xlu0 %v1339, 32
    %v4298 = vpop.permute.xlu0 %4297
    %v4301 = vsel %vm1153, %v4243, 0
    %4303 = vmatprep.subr.bf16.mxu0 0
    %4304 = vmatpush1.bf16.msra.mxu0 %v4298
    %4305 = vmatprep.subr.bf16.mxu0 0
    %4306 = vmatpush1.bf16.msra.mxu0 0
    %4307 = vmatprep.subr.bf16.mxu0 0
    %4308 = vmatpush1.bf16.msra.mxu0 0
    %4309 = vmatprep.subr.bf16.mxu0 0
    %4310 = vmatpush1.bf16.msra.mxu0 0
    %4311 = vmatprep.subr.bf16.mxu0 0
    %4312 = vmatpush1.bf16.msra.mxu0 0
    %4313 = vmatprep.subr.bf16.mxu0 0
    %4314 = vmatpush1.bf16.msra.mxu0 0
    %4315 = vmatprep.subr.bf16.mxu0 0
    %4316 = vmatpush1.bf16.msra.mxu0 0
    %4317 = vmatprep.subr.bf16.mxu0 0
    %4318 = vmatpush1.bf16.msra.mxu0 0
    %4319 = vmatprep.subr.bf16.mxu0 0
    %4320 = vmatpush1.bf16.msra.mxu0 0
    %4321 = vmatprep.subr.bf16.mxu0 0
    %4322 = vmatpush1.bf16.msra.mxu0 0
    %4323 = vmatprep.subr.bf16.mxu0 0
    %4324 = vmatpush1.bf16.msra.mxu0 0
    %4325 = vmatprep.subr.bf16.mxu0 0
    %4326 = vmatpush1.bf16.msra.mxu0 0
    %4327 = vmatprep.subr.bf16.mxu0 0
    %4328 = vmatpush1.bf16.msra.mxu0 0
    %4329 = vmatprep.subr.bf16.mxu0 0
    %4330 = vmatpush1.bf16.msra.mxu0 0
    %4331 = vmatprep.subr.bf16.mxu0 0
    %4332 = vmatpush1.bf16.msra.mxu0 0
    %4333 = vmatprep.subr.bf16.mxu0 0
    %4334 = vmatpush1.bf16.msra.mxu0 0
    %4335 = vmatprep.mubr.bf16.mxu0 0
    %4336 = vmatmul.mubr.bf16.gmra.mrb[0].mxu0 %v4301
    %v4337 = vpop.f32.mrb[0].mxu0
    %v4338 = vadd.f32 0.0, %v4337
    %v4339 = vpop.f32.mrb[0].mxu0
    %v4340 = vpop.f32.mrb[0].mxu0
    %v4341 = vadd.f32 0.0, %v4340
    %v4342 = vpop.f32.mrb[0].mxu0
    %4343 = vdwg.mxu0
    %4344 = vrot.lane.b32.xlu0 %v1340, 32
    %v4345 = vpop.permute.xlu0 %4344
    %v4348 = vsel %vm1153, %v4244, 0
    %4350 = vmatprep.subr.bf16.mxu0 0
    %4351 = vmatpush1.bf16.msra.mxu0 %v4345
    %4352 = vmatprep.subr.bf16.mxu0 0
    %4353 = vmatpush1.bf16.msra.mxu0 0
    %4354 = vmatprep.subr.bf16.mxu0 0
    %4355 = vmatpush1.bf16.msra.mxu0 0
    %4356 = vmatprep.subr.bf16.mxu0 0
    %4357 = vmatpush1.bf16.msra.mxu0 0
    %4358 = vmatprep.subr.bf16.mxu0 0
    %4359 = vmatpush1.bf16.msra.mxu0 0
    %4360 = vmatprep.subr.bf16.mxu0 0
    %4361 = vmatpush1.bf16.msra.mxu0 0
    %4362 = vmatprep.subr.bf16.mxu0 0
    %4363 = vmatpush1.bf16.msra.mxu0 0
    %4364 = vmatprep.subr.bf16.mxu0 0
    %4365 = vmatpush1.bf16.msra.mxu0 0
    %4366 = vmatprep.subr.bf16.mxu0 0
    %4367 = vmatpush1.bf16.msra.mxu0 0
    %4368 = vmatprep.subr.bf16.mxu0 0
    %4369 = vmatpush1.bf16.msra.mxu0 0
    %4370 = vmatprep.subr.bf16.mxu0 0
    %4371 = vmatpush1.bf16.msra.mxu0 0
    %4372 = vmatprep.subr.bf16.mxu0 0
    %4373 = vmatpush1.bf16.msra.mxu0 0
    %4374 = vmatprep.subr.bf16.mxu0 0
    %4375 = vmatpush1.bf16.msra.mxu0 0
    %4376 = vmatprep.subr.bf16.mxu0 0
    %4377 = vmatpush1.bf16.msra.mxu0 0
    %4378 = vmatprep.subr.bf16.mxu0 0
    %4379 = vmatpush1.bf16.msra.mxu0 0
    %4380 = vmatprep.subr.bf16.mxu0 0
    %4381 = vmatpush1.bf16.msra.mxu0 0
    %4382 = vmatprep.mubr.bf16.mxu0 0
    %4383 = vmatmul.mubr.bf16.gmra.mrb[0].mxu0 %v4348
    %v4384 = vpop.f32.mrb[0].mxu0
    %v4385 = vadd.f32 0.0, %v4384
    %v4386 = vpop.f32.mrb[0].mxu0
    %v4387 = vpop.f32.mrb[0].mxu0
    %v4388 = vadd.f32 0.0, %v4387
    %v4389 = vpop.f32.mrb[0].mxu0
    %4390 = vdwg.mxu0
    %4391 = vrot.lane.b32.xlu0 %v1341, 32
    %v4392 = vpop.permute.xlu0 %4391
    %v4395 = vsel %vm1153, %v4245, 0
    %4397 = vmatprep.subr.bf16.mxu0 0
    %4398 = vmatpush1.bf16.msra.mxu0 %v4392
    %4399 = vmatprep.subr.bf16.mxu0 0
    %4400 = vmatpush1.bf16.msra.mxu0 0
    %4401 = vmatprep.subr.bf16.mxu0 0
    %4402 = vmatpush1.bf16.msra.mxu0 0
    %4403 = vmatprep.subr.bf16.mxu0 0
    %4404 = vmatpush1.bf16.msra.mxu0 0
    %4405 = vmatprep.subr.bf16.mxu0 0
    %4406 = vmatpush1.bf16.msra.mxu0 0
    %4407 = vmatprep.subr.bf16.mxu0 0
    %4408 = vmatpush1.bf16.msra.mxu0 0
    %4409 = vmatprep.subr.bf16.mxu0 0
    %4410 = vmatpush1.bf16.msra.mxu0 0
    %4411 = vmatprep.subr.bf16.mxu0 0
    %4412 = vmatpush1.bf16.msra.mxu0 0
    %4413 = vmatprep.subr.bf16.mxu0 0
    %4414 = vmatpush1.bf16.msra.mxu0 0
    %4415 = vmatprep.subr.bf16.mxu0 0
    %4416 = vmatpush1.bf16.msra.mxu0 0
    %4417 = vmatprep.subr.bf16.mxu0 0
    %4418 = vmatpush1.bf16.msra.mxu0 0
    %4419 = vmatprep.subr.bf16.mxu0 0
    %4420 = vmatpush1.bf16.msra.mxu0 0
    %4421 = vmatprep.subr.bf16.mxu0 0
    %4422 = vmatpush1.bf16.msra.mxu0 0
    %4423 = vmatprep.subr.bf16.mxu0 0
    %4424 = vmatpush1.bf16.msra.mxu0 0
    %4425 = vmatprep.subr.bf16.mxu0 0
    %4426 = vmatpush1.bf16.msra.mxu0 0
    %4427 = vmatprep.subr.bf16.mxu0 0
    %4428 = vmatpush1.bf16.msra.mxu0 0
    %4429 = vmatprep.mubr.bf16.mxu0 0
    %4430 = vmatmul.mubr.bf16.gmra.mrb[0].mxu0 %v4395
    %v4431 = vpop.f32.mrb[0].mxu0
    %v4432 = vadd.f32 0.0, %v4431
    %v4433 = vpop.f32.mrb[0].mxu0
    %v4434 = vpop.f32.mrb[0].mxu0
    %v4435 = vadd.f32 0.0, %v4434
    %v4436 = vpop.f32.mrb[0].mxu0
    %4437 = vdwg.mxu0
    %4438 = vrot.lane.b32.xlu0 %v1342, 32
    %v4439 = vpop.permute.xlu0 %4438
    %v4442 = vsel %vm1153, %v4246, 0
    %4444 = vmatprep.subr.bf16.mxu0 0
    %4445 = vmatpush1.bf16.msra.mxu0 %v4439
    %4446 = vmatprep.subr.bf16.mxu0 0
    %4447 = vmatpush1.bf16.msra.mxu0 0
    %4448 = vmatprep.subr.bf16.mxu0 0
    %4449 = vmatpush1.bf16.msra.mxu0 0
    %4450 = vmatprep.subr.bf16.mxu0 0
    %4451 = vmatpush1.bf16.msra.mxu0 0
    %4452 = vmatprep.subr.bf16.mxu0 0
    %4453 = vmatpush1.bf16.msra.mxu0 0
    %4454 = vmatprep.subr.bf16.mxu0 0
    %4455 = vmatpush1.bf16.msra.mxu0 0
    %4456 = vmatprep.subr.bf16.mxu0 0
    %4457 = vmatpush1.bf16.msra.mxu0 0
    %4458 = vmatprep.subr.bf16.mxu0 0
    %4459 = vmatpush1.bf16.msra.mxu0 0
    %4460 = vmatprep.subr.bf16.mxu0 0
    %4461 = vmatpush1.bf16.msra.mxu0 0
    %4462 = vmatprep.subr.bf16.mxu0 0
    %4463 = vmatpush1.bf16.msra.mxu0 0
    %4464 = vmatprep.subr.bf16.mxu0 0
    %4465 = vmatpush1.bf16.msra.mxu0 0
    %4466 = vmatprep.subr.bf16.mxu0 0
    %4467 = vmatpush1.bf16.msra.mxu0 0
    %4468 = vmatprep.subr.bf16.mxu0 0
    %4469 = vmatpush1.bf16.msra.mxu0 0
    %4470 = vmatprep.subr.bf16.mxu0 0
    %4471 = vmatpush1.bf16.msra.mxu0 0
    %4472 = vmatprep.subr.bf16.mxu0 0
    %4473 = vmatpush1.bf16.msra.mxu0 0
    %4474 = vmatprep.subr.bf16.mxu0 0
    %4475 = vmatpush1.bf16.msra.mxu0 0
    %4476 = vmatprep.mubr.bf16.mxu0 0
    %4477 = vmatmul.mubr.bf16.gmra.mrb[0].mxu0 %v4442
    %v4478 = vpop.f32.mrb[0].mxu0
    %v4479 = vadd.f32 0.0, %v4478
    %v4480 = vpop.f32.mrb[0].mxu0
    %v4481 = vpop.f32.mrb[0].mxu0
    %v4482 = vadd.f32 0.0, %v4481
    %v4483 = vpop.f32.mrb[0].mxu0
    %4484 = vdwg.mxu0
    %4485 = vrot.lane.b32.xlu0 %v1343, 32
    %v4486 = vpop.permute.xlu0 %4485
    %v4489 = vsel %vm1153, %v4247, 0
    %4491 = vmatprep.subr.bf16.mxu0 0
    %4492 = vmatpush1.bf16.msra.mxu0 %v4486
    %4493 = vmatprep.subr.bf16.mxu0 0
    %4494 = vmatpush1.bf16.msra.mxu0 0
    %4495 = vmatprep.subr.bf16.mxu0 0
    %4496 = vmatpush1.bf16.msra.mxu0 0
    %4497 = vmatprep.subr.bf16.mxu0 0
    %4498 = vmatpush1.bf16.msra.mxu0 0
    %4499 = vmatprep.subr.bf16.mxu0 0
    %4500 = vmatpush1.bf16.msra.mxu0 0
    %4501 = vmatprep.subr.bf16.mxu0 0
    %4502 = vmatpush1.bf16.msra.mxu0 0
    %4503 = vmatprep.subr.bf16.mxu0 0
    %4504 = vmatpush1.bf16.msra.mxu0 0
    %4505 = vmatprep.subr.bf16.mxu0 0
    %4506 = vmatpush1.bf16.msra.mxu0 0
    %4507 = vmatprep.subr.bf16.mxu0 0
    %4508 = vmatpush1.bf16.msra.mxu0 0
    %4509 = vmatprep.subr.bf16.mxu0 0
    %4510 = vmatpush1.bf16.msra.mxu0 0
    %4511 = vmatprep.subr.bf16.mxu0 0
    %4512 = vmatpush1.bf16.msra.mxu0 0
    %4513 = vmatprep.subr.bf16.mxu0 0
    %4514 = vmatpush1.bf16.msra.mxu0 0
    %4515 = vmatprep.subr.bf16.mxu0 0
    %4516 = vmatpush1.bf16.msra.mxu0 0
    %4517 = vmatprep.subr.bf16.mxu0 0
    %4518 = vmatpush1.bf16.msra.mxu0 0
    %4519 = vmatprep.subr.bf16.mxu0 0
    %4520 = vmatpush1.bf16.msra.mxu0 0
    %4521 = vmatprep.subr.bf16.mxu0 0
    %4522 = vmatpush1.bf16.msra.mxu0 0
    %4523 = vmatprep.mubr.bf16.mxu0 0
    %4524 = vmatmul.mubr.bf16.gmra.mrb[0].mxu0 %v4489
    %v4525 = vpop.f32.mrb[0].mxu0
    %v4526 = vadd.f32 0.0, %v4525
    %v4527 = vpop.f32.mrb[0].mxu0
    %v4528 = vpop.f32.mrb[0].mxu0
    %v4529 = vadd.f32 0.0, %v4528
    %v4530 = vpop.f32.mrb[0].mxu0
    %4531 = vdwg.mxu0
    %4532 = vrot.lane.b32.xlu0 %v1344, 32
    %v4533 = vpop.permute.xlu0 %4532
    %v4536 = vsel %vm1153, %v4248, 0
    %4538 = vmatprep.subr.bf16.mxu0 0
    %4539 = vmatpush1.bf16.msra.mxu0 %v4533
    %4540 = vmatprep.subr.bf16.mxu0 0
    %4541 = vmatpush1.bf16.msra.mxu0 0
    %4542 = vmatprep.subr.bf16.mxu0 0
    %4543 = vmatpush1.bf16.msra.mxu0 0
    %4544 = vmatprep.subr.bf16.mxu0 0
    %4545 = vmatpush1.bf16.msra.mxu0 0
    %4546 = vmatprep.subr.bf16.mxu0 0
    %4547 = vmatpush1.bf16.msra.mxu0 0
    %4548 = vmatprep.subr.bf16.mxu0 0
    %4549 = vmatpush1.bf16.msra.mxu0 0
    %4550 = vmatprep.subr.bf16.mxu0 0
    %4551 = vmatpush1.bf16.msra.mxu0 0
    %4552 = vmatprep.subr.bf16.mxu0 0
    %4553 = vmatpush1.bf16.msra.mxu0 0
    %4554 = vmatprep.subr.bf16.mxu0 0
    %4555 = vmatpush1.bf16.msra.mxu0 0
    %4556 = vmatprep.subr.bf16.mxu0 0
    %4557 = vmatpush1.bf16.msra.mxu0 0
    %4558 = vmatprep.subr.bf16.mxu0 0
    %4559 = vmatpush1.bf16.msra.mxu0 0
    %4560 = vmatprep.subr.bf16.mxu0 0
    %4561 = vmatpush1.bf16.msra.mxu0 0
    %4562 = vmatprep.subr.bf16.mxu0 0
    %4563 = vmatpush1.bf16.msra.mxu0 0
    %4564 = vmatprep.subr.bf16.mxu0 0
    %4565 = vmatpush1.bf16.msra.mxu0 0
    %4566 = vmatprep.subr.bf16.mxu0 0
    %4567 = vmatpush1.bf16.msra.mxu0 0
    %4568 = vmatprep.subr.bf16.mxu0 0
    %4569 = vmatpush1.bf16.msra.mxu0 0
    %4570 = vmatprep.mubr.bf16.mxu0 0
    %4571 = vmatmul.mubr.bf16.gmra.mrb[0].mxu0 %v4536
    %v4572 = vpop.f32.mrb[0].mxu0
    %v4573 = vadd.f32 0.0, %v4572
    %v4574 = vpop.f32.mrb[0].mxu0
    %v4575 = vpop.f32.mrb[0].mxu0
    %v4576 = vadd.f32 0.0, %v4575
    %v4577 = vpop.f32.mrb[0].mxu0
    %4578 = vdwg.mxu0
    %4579 = vrot.lane.b32.xlu0 %v1345, 32
    %v4580 = vpop.permute.xlu0 %4579
    %v4583 = vsel %vm1153, %v4249, 0
    %4585 = vmatprep.subr.bf16.mxu0 0
    %4586 = vmatpush1.bf16.msra.mxu0 %v4580
    %4587 = vmatprep.subr.bf16.mxu0 0
    %4588 = vmatpush1.bf16.msra.mxu0 0
    %4589 = vmatprep.subr.bf16.mxu0 0
    %4590 = vmatpush1.bf16.msra.mxu0 0
    %4591 = vmatprep.subr.bf16.mxu0 0
    %4592 = vmatpush1.bf16.msra.mxu0 0
    %4593 = vmatprep.subr.bf16.mxu0 0
    %4594 = vmatpush1.bf16.msra.mxu0 0
    %4595 = vmatprep.subr.bf16.mxu0 0
    %4596 = vmatpush1.bf16.msra.mxu0 0
    %4597 = vmatprep.subr.bf16.mxu0 0
    %4598 = vmatpush1.bf16.msra.mxu0 0
    %4599 = vmatprep.subr.bf16.mxu0 0
    %4600 = vmatpush1.bf16.msra.mxu0 0
    %4601 = vmatprep.subr.bf16.mxu0 0
    %4602 = vmatpush1.bf16.msra.mxu0 0
    %4603 = vmatprep.subr.bf16.mxu0 0
    %4604 = vmatpush1.bf16.msra.mxu0 0
    %4605 = vmatprep.subr.bf16.mxu0 0
    %4606 = vmatpush1.bf16.msra.mxu0 0
    %4607 = vmatprep.subr.bf16.mxu0 0
    %4608 = vmatpush1.bf16.msra.mxu0 0
    %4609 = vmatprep.subr.bf16.mxu0 0
    %4610 = vmatpush1.bf16.msra.mxu0 0
    %4611 = vmatprep.subr.bf16.mxu0 0
    %4612 = vmatpush1.bf16.msra.mxu0 0
    %4613 = vmatprep.subr.bf16.mxu0 0
    %4614 = vmatpush1.bf16.msra.mxu0 0
    %4615 = vmatprep.subr.bf16.mxu0 0
    %4616 = vmatpush1.bf16.msra.mxu0 0
    %4617 = vmatprep.mubr.bf16.mxu0 0
    %4618 = vmatmul.mubr.bf16.gmra.mrb[0].mxu0 %v4583
    %v4619 = vpop.f32.mrb[0].mxu0
    %v4620 = vadd.f32 0.0, %v4619
    %v4621 = vpop.f32.mrb[0].mxu0
    %v4622 = vpop.f32.mrb[0].mxu0
    %v4623 = vadd.f32 0.0, %v4622
    %v4624 = vpop.f32.mrb[0].mxu0
    %4625 = vdwg.mxu0
    %4642 = vrot.lane.b32.xlu0 %v2348, 32
    %v4643 = vpop.permute.xlu0 %4642
    %4644 = vrot.lane.b32.xlu0 %v2351, 32
    %v4645 = vpop.permute.xlu0 %4644
    %4646 = vrot.lane.b32.xlu0 %v2396, 32
    %v4647 = vpop.permute.xlu0 %4646
    %4648 = vrot.lane.b32.xlu0 %v2399, 32
    %v4649 = vpop.permute.xlu0 %4648
    %4650 = vrot.lane.b32.xlu0 %v2444, 32
    %v4651 = vpop.permute.xlu0 %4650
    %4652 = vrot.lane.b32.xlu0 %v2447, 32
    %v4653 = vpop.permute.xlu0 %4652
    %4654 = vrot.lane.b32.xlu0 %v2492, 32
    %v4655 = vpop.permute.xlu0 %4654
    %4656 = vrot.lane.b32.xlu0 %v2495, 32
    %v4657 = vpop.permute.xlu0 %4656
    %4658 = vrot.lane.b32.xlu0 %v2540, 32
    %v4659 = vpop.permute.xlu0 %4658
    %4660 = vrot.lane.b32.xlu0 %v2543, 32
    %v4661 = vpop.permute.xlu0 %4660
    %4662 = vrot.lane.b32.xlu0 %v2588, 32
    %v4663 = vpop.permute.xlu0 %4662
    %4664 = vrot.lane.b32.xlu0 %v2591, 32
    %v4665 = vpop.permute.xlu0 %4664
    %4666 = vrot.lane.b32.xlu0 %v2636, 32
    %v4667 = vpop.permute.xlu0 %4666
    %4668 = vrot.lane.b32.xlu0 %v2639, 32
    %v4669 = vpop.permute.xlu0 %4668
    %4670 = vrot.lane.b32.xlu0 %v2684, 32
    %v4671 = vpop.permute.xlu0 %4670
    %4672 = vrot.lane.b32.xlu0 %v2687, 32
    %v4673 = vpop.permute.xlu0 %4672
    %4706 = vrot.lane.b32.xlu0 %v3323, 64
    %v4707 = vpop.permute.xlu0 %4706
    %4708 = vrot.lane.b32.xlu0 %v3326, 64
    %v4709 = vpop.permute.xlu0 %4708
    %4710 = vrot.lane.b32.xlu0 %v3370, 64
    %v4711 = vpop.permute.xlu0 %4710
    %4712 = vrot.lane.b32.xlu0 %v3373, 64
    %v4713 = vpop.permute.xlu0 %4712
    %4714 = vrot.lane.b32.xlu0 %v3417, 64
    %v4715 = vpop.permute.xlu0 %4714
    %4716 = vrot.lane.b32.xlu0 %v3420, 64
    %v4717 = vpop.permute.xlu0 %4716
    %4718 = vrot.lane.b32.xlu0 %v3464, 64
    %v4719 = vpop.permute.xlu0 %4718
    %4720 = vrot.lane.b32.xlu0 %v3467, 64
    %v4721 = vpop.permute.xlu0 %4720
    %4722 = vrot.lane.b32.xlu0 %v3511, 64
    %v4723 = vpop.permute.xlu0 %4722
    %4724 = vrot.lane.b32.xlu0 %v3514, 64
    %v4725 = vpop.permute.xlu0 %4724
    %4726 = vrot.lane.b32.xlu0 %v3558, 64
    %v4727 = vpop.permute.xlu0 %4726
    %4728 = vrot.lane.b32.xlu0 %v3561, 64
    %v4729 = vpop.permute.xlu0 %4728
    %4730 = vrot.lane.b32.xlu0 %v3605, 64
    %v4731 = vpop.permute.xlu0 %4730
    %4732 = vrot.lane.b32.xlu0 %v3608, 64
    %v4733 = vpop.permute.xlu0 %4732
    %4734 = vrot.lane.b32.xlu0 %v3652, 64
    %v4735 = vpop.permute.xlu0 %4734
    %4736 = vrot.lane.b32.xlu0 %v3655, 64
    %v4737 = vpop.permute.xlu0 %4736
    %4770 = vrot.lane.b32.xlu0 %v4291, 96
    %v4771 = vpop.permute.xlu0 %4770
    %4772 = vrot.lane.b32.xlu0 %v4294, 96
    %v4773 = vpop.permute.xlu0 %4772
    %4774 = vrot.lane.b32.xlu0 %v4338, 96
    %v4775 = vpop.permute.xlu0 %4774
    %4776 = vrot.lane.b32.xlu0 %v4341, 96
    %v4777 = vpop.permute.xlu0 %4776
    %4778 = vrot.lane.b32.xlu0 %v4385, 96
    %v4779 = vpop.permute.xlu0 %4778
    %4780 = vrot.lane.b32.xlu0 %v4388, 96
    %v4781 = vpop.permute.xlu0 %4780
    %4782 = vrot.lane.b32.xlu0 %v4432, 96
    %v4783 = vpop.permute.xlu0 %4782
    %4784 = vrot.lane.b32.xlu0 %v4435, 96
    %v4785 = vpop.permute.xlu0 %4784
    %4786 = vrot.lane.b32.xlu0 %v4479, 96
    %v4787 = vpop.permute.xlu0 %4786
    %4788 = vrot.lane.b32.xlu0 %v4482, 96
    %v4789 = vpop.permute.xlu0 %4788
    %4790 = vrot.lane.b32.xlu0 %v4526, 96
    %v4791 = vpop.permute.xlu0 %4790
    %4792 = vrot.lane.b32.xlu0 %v4529, 96
    %v4793 = vpop.permute.xlu0 %4792
    %4794 = vrot.lane.b32.xlu0 %v4573, 96
    %v4795 = vpop.permute.xlu0 %4794
    %4796 = vrot.lane.b32.xlu0 %v4576, 96
    %v4797 = vpop.permute.xlu0 %4796
    %4798 = vrot.lane.b32.xlu0 %v4620, 96
    %v4799 = vpop.permute.xlu0 %4798
    %4800 = vrot.lane.b32.xlu0 %v4623, 96
    %v4801 = vpop.permute.xlu0 %4800
    %v4818 = vsel %vm776, %v1384, %v4643
    %v4819 = vsel %vm776, %v1387, %v4645
    %v4820 = vsel %vm776, %v1428, %v4647
    %v4821 = vsel %vm776, %v1431, %v4649
    %v4822 = vsel %vm776, %v1472, %v4651
    %v4823 = vsel %vm776, %v1475, %v4653
    %v4824 = vsel %vm776, %v1516, %v4655
    %v4825 = vsel %vm776, %v1519, %v4657
    %v4826 = vsel %vm776, %v1560, %v4659
    %v4827 = vsel %vm776, %v1563, %v4661
    %v4828 = vsel %vm776, %v1604, %v4663
    %v4829 = vsel %vm776, %v1607, %v4665
    %v4830 = vsel %vm776, %v1648, %v4667
    %v4831 = vsel %vm776, %v1651, %v4669
    %v4832 = vsel %vm776, %v1692, %v4671
    %v4833 = vsel %vm776, %v1695, %v4673
    %vm4834 = vcmask 523264
    %v4835 = vsel %vm4834, %v4818, %v4707
    %v4836 = vsel %vm4834, %v4819, %v4709
    %v4837 = vsel %vm4834, %v4820, %v4711
    %v4838 = vsel %vm4834, %v4821, %v4713
    %v4839 = vsel %vm4834, %v4822, %v4715
    %v4840 = vsel %vm4834, %v4823, %v4717
    %v4841 = vsel %vm4834, %v4824, %v4719
    %v4842 = vsel %vm4834, %v4825, %v4721
    %v4843 = vsel %vm4834, %v4826, %v4723
    %v4844 = vsel %vm4834, %v4827, %v4725
    %v4845 = vsel %vm4834, %v4828, %v4727
    %v4846 = vsel %vm4834, %v4829, %v4729
    %v4847 = vsel %vm4834, %v4830, %v4731
    %v4848 = vsel %vm4834, %v4831, %v4733
    %v4849 = vsel %vm4834, %v4832, %v4735
    %v4850 = vsel %vm4834, %v4833, %v4737
    %vm4851 = vcmask 785408
    %v4852 = vsel %vm4851, %v4835, %v4771
    %v4853 = vsel %vm4851, %v4836, %v4773
    %v4854 = vsel %vm4851, %v4837, %v4775
    %v4855 = vsel %vm4851, %v4838, %v4777
    %v4856 = vsel %vm4851, %v4839, %v4779
    %v4857 = vsel %vm4851, %v4840, %v4781
    %v4858 = vsel %vm4851, %v4841, %v4783
    %v4859 = vsel %vm4851, %v4842, %v4785
    %v4860 = vsel %vm4851, %v4843, %v4787
    %v4861 = vsel %vm4851, %v4844, %v4789
    %v4862 = vsel %vm4851, %v4845, %v4791
    %v4863 = vsel %vm4851, %v4846, %v4793
    %v4864 = vsel %vm4851, %v4847, %v4795
    %v4865 = vsel %vm4851, %v4848, %v4797
    %v4866 = vsel %vm4851, %v4849, %v4799
    %v4867 = vsel %vm4851, %v4850, %v4801
    %v4868 = vpack.c.bf16 %v4853, %v4852
    %v4869 = vpack.c.bf16 %v4855, %v4854
    %v4870 = vpack.c.bf16 %v4857, %v4856
    %v4871 = vpack.c.bf16 %v4859, %v4858
    %v4872 = vpack.c.bf16 %v4861, %v4860
    %v4873 = vpack.c.bf16 %v4863, %v4862
    %v4874 = vpack.c.bf16 %v4865, %v4864
    %v4875 = vpack.c.bf16 %v4867, %v4866
    %v4876 = vld [vmem:[#allocation7] sm:$0xf]
    %v4877 = vld [vmem:[#allocation7 + $0x4] sm:$0xf]
    %v4878 = vld [vmem:[#allocation7 + $0x8] sm:$0xf]
    %v4879 = vld [vmem:[#allocation7 + $0xc] sm:$0xf]
    %v4880 = vld [vmem:[#allocation7 + $0x10] sm:$0xf]
    %v4881 = vld [vmem:[#allocation7 + $0x14] sm:$0xf]
    %v4882 = vld [vmem:[#allocation7 + $0x18] sm:$0xf]
    %v4883 = vld [vmem:[#allocation7 + $0x1c] sm:$0xf]
    %v4884 = vld [vmem:[#allocation7 + $0x20] sm:$0xf]
    %v4885 = vld [vmem:[#allocation7 + $0x24] sm:$0xf]
    %v4886 = vld [vmem:[#allocation7 + $0x28] sm:$0xf]
    %v4887 = vld [vmem:[#allocation7 + $0x2c] sm:$0xf]
    %v4888 = vld [vmem:[#allocation7 + $0x30] sm:$0xf]
    %v4889 = vld [vmem:[#allocation7 + $0x34] sm:$0xf]
    %v4890 = vld [vmem:[#allocation7 + $0x38] sm:$0xf]
    %v4891 = vld [vmem:[#allocation7 + $0x3c] sm:$0xf]
    %v4892 = vlaneseq
    %v4893 = vshrl.u32 %v4892, 7
    %v4894 = vsub.s32 2, %v4893
    %v4895 = vrot.slane %v115, %v4894
    %v4912 = vunpack.c.l.b16 %v4876
    %v4913 = vunpack.c.l.b16 %v4877
    %v4914 = vunpack.c.l.b16 %v4878
    %v4915 = vunpack.c.l.b16 %v4879
    %v4916 = vunpack.c.l.b16 %v4880
    %v4917 = vunpack.c.l.b16 %v4881
    %v4918 = vunpack.c.l.b16 %v4882
    %v4919 = vunpack.c.l.b16 %v4883
    %v4920 = vunpack.c.l.b16 %v4884
    %v4921 = vunpack.c.l.b16 %v4885
    %v4922 = vunpack.c.l.b16 %v4886
    %v4923 = vunpack.c.l.b16 %v4887
    %v4924 = vunpack.c.l.b16 %v4888
    %v4925 = vunpack.c.l.b16 %v4889
    %v4926 = vunpack.c.l.b16 %v4890
    %v4927 = vunpack.c.l.b16 %v4891
    %v4928 = vpack.c.b16 %v4913, %v4912
    %v4929 = vpack.c.b16 %v4915, %v4914
    %v4930 = vpack.c.b16 %v4917, %v4916
    %v4931 = vpack.c.b16 %v4919, %v4918
    %v4932 = vpack.c.b16 %v4921, %v4920
    %v4933 = vpack.c.b16 %v4923, %v4922
    %v4934 = vpack.c.b16 %v4925, %v4924
    %v4935 = vpack.c.b16 %v4927, %v4926
    %4944 = vmatprep.subr.bf16.mxu0 0
    %4945 = vmatpush1.bf16.msra.mxu0 %v4928
    %4946 = vmatprep.subr.bf16.mxu0 0
    %4947 = vmatpush1.bf16.msra.mxu0 %v4929
    %4948 = vmatprep.subr.bf16.mxu0 0
    %4949 = vmatpush1.bf16.msra.mxu0 %v4930
    %4950 = vmatprep.subr.bf16.mxu0 0
    %4951 = vmatpush1.bf16.msra.mxu0 %v4931
    %4952 = vmatprep.subr.bf16.mxu0 0
    %4953 = vmatpush1.bf16.msra.mxu0 %v4932
    %4954 = vmatprep.subr.bf16.mxu0 0
    %4955 = vmatpush1.bf16.msra.mxu0 %v4933
    %4956 = vmatprep.subr.bf16.mxu0 0
    %4957 = vmatpush1.bf16.msra.mxu0 %v4934
    %4958 = vmatprep.subr.bf16.mxu0 0
    %4959 = vmatpush1.bf16.msra.mxu0 %v4935
    %4960 = vmatprep.subr.bf16.mxu0 0
    %4961 = vmatpush1.bf16.msra.mxu0 0
    %4962 = vmatprep.subr.bf16.mxu0 0
    %4963 = vmatpush1.bf16.msra.mxu0 0
    %4964 = vmatprep.subr.bf16.mxu0 0
    %4965 = vmatpush1.bf16.msra.mxu0 0
    %4966 = vmatprep.subr.bf16.mxu0 0
    %4967 = vmatpush1.bf16.msra.mxu0 0
    %4968 = vmatprep.subr.bf16.mxu0 0
    %4969 = vmatpush1.bf16.msra.mxu0 0
    %4970 = vmatprep.subr.bf16.mxu0 0
    %4971 = vmatpush1.bf16.msra.mxu0 0
    %4972 = vmatprep.subr.bf16.mxu0 0
    %4973 = vmatpush1.bf16.msra.mxu0 0
    %4974 = vmatprep.subr.bf16.mxu0 0
    %4975 = vmatpush1.bf16.msra.mxu0 0
    %4976 = vmatprep.mubr.bf16.mxu0 0
    %4977 = vmatmul.mubr.bf16.gmra.mrb[0].mxu0 %v4868
    %v4978 = vpop.f32.mrb[0].mxu0
    %v4979 = vadd.f32 %v4895, %v4978
    %v4980 = vpop.f32.mrb[0].mxu0
    %v4981 = vpop.f32.mrb[0].mxu0
    %v4982 = vadd.f32 %v4895, %v4981
    %v4983 = vpop.f32.mrb[0].mxu0
    %4984 = vmatprep.mubr.bf16.mxu0 0
    %4985 = vmatmul.mubr.bf16.gmra.mrb[0].mxu0 %v4869
    %v4986 = vpop.f32.mrb[0].mxu0
    %v4987 = vadd.f32 %v4895, %v4986
    %v4988 = vpop.f32.mrb[0].mxu0
    %v4989 = vpop.f32.mrb[0].mxu0
    %v4990 = vadd.f32 %v4895, %v4989
    %v4991 = vpop.f32.mrb[0].mxu0
    %4992 = vmatprep.mubr.bf16.mxu0 0
    %4993 = vmatmul.mubr.bf16.gmra.mrb[0].mxu0 %v4870
    %v4994 = vpop.f32.mrb[0].mxu0
    %v4995 = vadd.f32 %v4895, %v4994
    %v4996 = vpop.f32.mrb[0].mxu0
    %v4997 = vpop.f32.mrb[0].mxu0
    %v4998 = vadd.f32 %v4895, %v4997
    %v4999 = vpop.f32.mrb[0].mxu0
    %5000 = vmatprep.mubr.bf16.mxu0 0
    %5001 = vmatmul.mubr.bf16.gmra.mrb[0].mxu0 %v4871
    %v5002 = vpop.f32.mrb[0].mxu0
    %v5003 = vadd.f32 %v4895, %v5002
    %v5004 = vpop.f32.mrb[0].mxu0
    %v5005 = vpop.f32.mrb[0].mxu0
    %v5006 = vadd.f32 %v4895, %v5005
    %v5007 = vpop.f32.mrb[0].mxu0
    %5008 = vmatprep.mubr.bf16.mxu0 0
    %5009 = vmatmul.mubr.bf16.gmra.mrb[0].mxu0 %v4872
    %v5010 = vpop.f32.mrb[0].mxu0
    %v5011 = vadd.f32 %v4895, %v5010
    %v5012 = vpop.f32.mrb[0].mxu0
    %v5013 = vpop.f32.mrb[0].mxu0
    %v5014 = vadd.f32 %v4895, %v5013
    %v5015 = vpop.f32.mrb[0].mxu0
    %5016 = vmatprep.mubr.bf16.mxu0 0
    %5017 = vmatmul.mubr.bf16.gmra.mrb[0].mxu0 %v4873
    %v5018 = vpop.f32.mrb[0].mxu0
    %v5019 = vadd.f32 %v4895, %v5018
    %v5020 = vpop.f32.mrb[0].mxu0
    %v5021 = vpop.f32.mrb[0].mxu0
    %v5022 = vadd.f32 %v4895, %v5021
    %v5023 = vpop.f32.mrb[0].mxu0
    %5024 = vmatprep.mubr.bf16.mxu0 0
    %5025 = vmatmul.mubr.bf16.gmra.mrb[0].mxu0 %v4874
    %v5026 = vpop.f32.mrb[0].mxu0
    %v5027 = vadd.f32 %v4895, %v5026
    %v5028 = vpop.f32.mrb[0].mxu0
    %v5029 = vpop.f32.mrb[0].mxu0
    %v5030 = vadd.f32 %v4895, %v5029
    %v5031 = vpop.f32.mrb[0].mxu0
    %5032 = vmatprep.mubr.bf16.mxu0 0
    %5033 = vmatmul.mubr.bf16.gmra.mrb[0].mxu0 %v4875
    %v5034 = vpop.f32.mrb[0].mxu0
    %v5035 = vadd.f32 %v4895, %v5034
    %v5036 = vpop.f32.mrb[0].mxu0
    %v5037 = vpop.f32.mrb[0].mxu0
    %v5038 = vadd.f32 %v4895, %v5037
    %v5039 = vpop.f32.mrb[0].mxu0
    %5040 = vdwg.mxu0
    %v5041 = vadd.f32 %v99, %v4979
    %v5042 = vadd.f32 %v100, %v4982
    %v5043 = vadd.f32 %v101, %v4987
    %v5044 = vadd.f32 %v102, %v4990
    %v5045 = vadd.f32 %v103, %v4995
    %v5046 = vadd.f32 %v104, %v4998
    %v5047 = vadd.f32 %v105, %v5003
    %v5048 = vadd.f32 %v106, %v5006
    %v5049 = vadd.f32 %v107, %v5011
    %v5050 = vadd.f32 %v108, %v5014
    %v5051 = vadd.f32 %v109, %v5019
    %v5052 = vadd.f32 %v110, %v5022
    %v5053 = vadd.f32 %v111, %v5027
    %v5054 = vadd.f32 %v112, %v5030
    %v5055 = vadd.f32 %v113, %v5035
    %v5056 = vadd.f32 %v114, %v5038
    %5057 = vadd.xlane.f32.xlu0 %v5041
    %v5058 = vpop.xlane.xlu0 %5057
    %5059 = vadd.xlane.f32.xlu0 %v5042
    %v5060 = vpop.xlane.xlu0 %5059
    %5061 = vadd.xlane.f32.xlu0 %v5043
    %v5062 = vpop.xlane.xlu0 %5061
    %5063 = vadd.xlane.f32.xlu0 %v5044
    %v5064 = vpop.xlane.xlu0 %5063
    %5065 = vadd.xlane.f32.xlu0 %v5045
    %v5066 = vpop.xlane.xlu0 %5065
    %5067 = vadd.xlane.f32.xlu0 %v5046
    %v5068 = vpop.xlane.xlu0 %5067
    %5069 = vadd.xlane.f32.xlu0 %v5047
    %v5070 = vpop.xlane.xlu0 %5069
    %5071 = vadd.xlane.f32.xlu0 %v5048
    %v5072 = vpop.xlane.xlu0 %5071
    %5073 = vadd.xlane.f32.xlu0 %v5049
    %v5074 = vpop.xlane.xlu0 %5073
    %5075 = vadd.xlane.f32.xlu0 %v5050
    %v5076 = vpop.xlane.xlu0 %5075
    %5077 = vadd.xlane.f32.xlu0 %v5051
    %v5078 = vpop.xlane.xlu0 %5077
    %5079 = vadd.xlane.f32.xlu0 %v5052
    %v5080 = vpop.xlane.xlu0 %5079
    %5081 = vadd.xlane.f32.xlu0 %v5053
    %v5082 = vpop.xlane.xlu0 %5081
    %5083 = vadd.xlane.f32.xlu0 %v5054
    %v5084 = vpop.xlane.xlu0 %5083
    %5085 = vadd.xlane.f32.xlu0 %v5055
    %v5086 = vpop.xlane.xlu0 %5085
    %5087 = vadd.xlane.f32.xlu0 %v5056
    %v5088 = vpop.xlane.xlu0 %5087
    %v5089 = vmul.f32 %v5058, %v148
    %v5090 = vmul.f32 %v5060, %v148
    %v5091 = vmul.f32 %v5062, %v148
    %v5092 = vmul.f32 %v5064, %v148
    %v5093 = vmul.f32 %v5066, %v148
    %v5094 = vmul.f32 %v5068, %v148
    %v5095 = vmul.f32 %v5070, %v148
    %v5096 = vmul.f32 %v5072, %v148
    %v5097 = vmul.f32 %v5074, %v148
    %v5098 = vmul.f32 %v5076, %v148
    %v5099 = vmul.f32 %v5078, %v148
    %v5100 = vmul.f32 %v5080, %v148
    %v5101 = vmul.f32 %v5082, %v148
    %v5102 = vmul.f32 %v5084, %v148
    %v5103 = vmul.f32 %v5086, %v148
    %v5104 = vmul.f32 %v5088, %v148
    %v5105 = vmul.f32 %v5041, %v5041
    %v5106 = vmul.f32 %v5042, %v5042
    %v5107 = vmul.f32 %v5043, %v5043
    %v5108 = vmul.f32 %v5044, %v5044
    %v5109 = vmul.f32 %v5045, %v5045
    %v5110 = vmul.f32 %v5046, %v5046
    %v5111 = vmul.f32 %v5047, %v5047
    %v5112 = vmul.f32 %v5048, %v5048
    %v5113 = vmul.f32 %v5049, %v5049
    %v5114 = vmul.f32 %v5050, %v5050
    %v5115 = vmul.f32 %v5051, %v5051
    %v5116 = vmul.f32 %v5052, %v5052
    %v5117 = vmul.f32 %v5053, %v5053
    %v5118 = vmul.f32 %v5054, %v5054
    %v5119 = vmul.f32 %v5055, %v5055
    %v5120 = vmul.f32 %v5056, %v5056
    %5121 = vadd.xlane.f32.xlu0 %v5105
    %v5122 = vpop.xlane.xlu0 %5121
    %5123 = vadd.xlane.f32.xlu0 %v5106
    %v5124 = vpop.xlane.xlu0 %5123
    %5125 = vadd.xlane.f32.xlu0 %v5107
    %v5126 = vpop.xlane.xlu0 %5125
    %5127 = vadd.xlane.f32.xlu0 %v5108
    %v5128 = vpop.xlane.xlu0 %5127
    %5129 = vadd.xlane.f32.xlu0 %v5109
    %v5130 = vpop.xlane.xlu0 %5129
    %5131 = vadd.xlane.f32.xlu0 %v5110
    %v5132 = vpop.xlane.xlu0 %5131
    %5133 = vadd.xlane.f32.xlu0 %v5111
    %v5134 = vpop.xlane.xlu0 %5133
    %5135 = vadd.xlane.f32.xlu0 %v5112
    %v5136 = vpop.xlane.xlu0 %5135
    %5137 = vadd.xlane.f32.xlu0 %v5113
    %v5138 = vpop.xlane.xlu0 %5137
    %5139 = vadd.xlane.f32.xlu0 %v5114
    %v5140 = vpop.xlane.xlu0 %5139
    %5141 = vadd.xlane.f32.xlu0 %v5115
    %v5142 = vpop.xlane.xlu0 %5141
    %5143 = vadd.xlane.f32.xlu0 %v5116
    %v5144 = vpop.xlane.xlu0 %5143
    %5145 = vadd.xlane.f32.xlu0 %v5117
    %v5146 = vpop.xlane.xlu0 %5145
    %5147 = vadd.xlane.f32.xlu0 %v5118
    %v5148 = vpop.xlane.xlu0 %5147
    %5149 = vadd.xlane.f32.xlu0 %v5119
    %v5150 = vpop.xlane.xlu0 %5149
    %5151 = vadd.xlane.f32.xlu0 %v5120
    %v5152 = vpop.xlane.xlu0 %5151
    %v5153 = vmul.f32 %v5122, %v148
    %v5154 = vmul.f32 %v5124, %v148
    %v5155 = vmul.f32 %v5126, %v148
    %v5156 = vmul.f32 %v5128, %v148
    %v5157 = vmul.f32 %v5130, %v148
    %v5158 = vmul.f32 %v5132, %v148
    %v5159 = vmul.f32 %v5134, %v148
    %v5160 = vmul.f32 %v5136, %v148
    %v5161 = vmul.f32 %v5138, %v148
    %v5162 = vmul.f32 %v5140, %v148
    %v5163 = vmul.f32 %v5142, %v148
    %v5164 = vmul.f32 %v5144, %v148
    %v5165 = vmul.f32 %v5146, %v148
    %v5166 = vmul.f32 %v5148, %v148
    %v5167 = vmul.f32 %v5150, %v148
    %v5168 = vmul.f32 %v5152, %v148
    %v5169 = vmul.f32 %v5089, %v5089
    %v5170 = vmul.f32 %v5090, %v5090
    %v5171 = vmul.f32 %v5091, %v5091
    %v5172 = vmul.f32 %v5092, %v5092
    %v5173 = vmul.f32 %v5093, %v5093
    %v5174 = vmul.f32 %v5094, %v5094
    %v5175 = vmul.f32 %v5095, %v5095
    %v5176 = vmul.f32 %v5096, %v5096
    %v5177 = vmul.f32 %v5097, %v5097
    %v5178 = vmul.f32 %v5098, %v5098
    %v5179 = vmul.f32 %v5099, %v5099
    %v5180 = vmul.f32 %v5100, %v5100
    %v5181 = vmul.f32 %v5101, %v5101
    %v5182 = vmul.f32 %v5102, %v5102
    %v5183 = vmul.f32 %v5103, %v5103
    %v5184 = vmul.f32 %v5104, %v5104
    %v5185 = vsub.f32 %v5153, %v5169
    %v5186 = vsub.f32 %v5154, %v5170
    %v5187 = vsub.f32 %v5155, %v5171
    %v5188 = vsub.f32 %v5156, %v5172
    %v5189 = vsub.f32 %v5157, %v5173
    %v5190 = vsub.f32 %v5158, %v5174
    %v5191 = vsub.f32 %v5159, %v5175
    %v5192 = vsub.f32 %v5160, %v5176
    %v5193 = vsub.f32 %v5161, %v5177
    %v5194 = vsub.f32 %v5162, %v5178
    %v5195 = vsub.f32 %v5163, %v5179
    %v5196 = vsub.f32 %v5164, %v5180
    %v5197 = vsub.f32 %v5165, %v5181
    %v5198 = vsub.f32 %v5166, %v5182
    %v5199 = vsub.f32 %v5167, %v5183
    %v5200 = vsub.f32 %v5168, %v5184
    %v5201 = vsub.f32 %v5041, %v5089
    %v5202 = vsub.f32 %v5042, %v5090
    %v5203 = vsub.f32 %v5043, %v5091
    %v5204 = vsub.f32 %v5044, %v5092
    %v5205 = vsub.f32 %v5045, %v5093
    %v5206 = vsub.f32 %v5046, %v5094
    %v5207 = vsub.f32 %v5047, %v5095
    %v5208 = vsub.f32 %v5048, %v5096
    %v5209 = vsub.f32 %v5049, %v5097
    %v5210 = vsub.f32 %v5050, %v5098
    %v5211 = vsub.f32 %v5051, %v5099
    %v5212 = vsub.f32 %v5052, %v5100
    %v5213 = vsub.f32 %v5053, %v5101
    %v5214 = vsub.f32 %v5054, %v5102
    %v5215 = vsub.f32 %v5055, %v5103
    %v5216 = vsub.f32 %v5056, %v5104
    %v5217 = vadd.f32 %v5185, 1e-05
    %v5218 = vadd.f32 %v5186, 1e-05
    %v5219 = vadd.f32 %v5187, 1e-05
    %v5220 = vadd.f32 %v5188, 1e-05
    %v5221 = vadd.f32 %v5189, 1e-05
    %v5222 = vadd.f32 %v5190, 1e-05
    %v5223 = vadd.f32 %v5191, 1e-05
    %v5224 = vadd.f32 %v5192, 1e-05
    %v5225 = vadd.f32 %v5193, 1e-05
    %v5226 = vadd.f32 %v5194, 1e-05
    %v5227 = vadd.f32 %v5195, 1e-05
    %v5228 = vadd.f32 %v5196, 1e-05
    %v5229 = vadd.f32 %v5197, 1e-05
    %v5230 = vadd.f32 %v5198, 1e-05
    %v5231 = vadd.f32 %v5199, 1e-05
    %v5232 = vadd.f32 %v5200, 1e-05
    %v5233 = vrsqrt.pop %v5217
    %v5234 = vrsqrt.pop %v5218
    %v5235 = vrsqrt.pop %v5219
    %v5236 = vrsqrt.pop %v5220
    %v5237 = vrsqrt.pop %v5221
    %v5238 = vrsqrt.pop %v5222
    %v5239 = vrsqrt.pop %v5223
    %v5240 = vrsqrt.pop %v5224
    %v5241 = vrsqrt.pop %v5225
    %v5242 = vrsqrt.pop %v5226
    %v5243 = vrsqrt.pop %v5227
    %v5244 = vrsqrt.pop %v5228
    %v5245 = vrsqrt.pop %v5229
    %v5246 = vrsqrt.pop %v5230
    %v5247 = vrsqrt.pop %v5231
    %v5248 = vrsqrt.pop %v5232
    %v5249 = vmul.f32 %v5201, %v5233
    %v5250 = vmul.f32 %v5202, %v5234
    %v5251 = vmul.f32 %v5203, %v5235
    %v5252 = vmul.f32 %v5204, %v5236
    %v5253 = vmul.f32 %v5205, %v5237
    %v5254 = vmul.f32 %v5206, %v5238
    %v5255 = vmul.f32 %v5207, %v5239
    %v5256 = vmul.f32 %v5208, %v5240
    %v5257 = vmul.f32 %v5209, %v5241
    %v5258 = vmul.f32 %v5210, %v5242
    %v5259 = vmul.f32 %v5211, %v5243
    %v5260 = vmul.f32 %v5212, %v5244
    %v5261 = vmul.f32 %v5213, %v5245
    %v5262 = vmul.f32 %v5214, %v5246
    %v5263 = vmul.f32 %v5215, %v5247
    %v5264 = vmul.f32 %v5216, %v5248
    %v5265 = vlaneseq
    %v5266 = vshrl.u32 %v5265, 7
    %v5267 = vsub.s32 3, %v5266
    %v5268 = vrot.slane %v115, %v5267
    %v5269 = vmul.f32 %v5249, %v5268
    %v5270 = vmul.f32 %v5250, %v5268
    %v5271 = vmul.f32 %v5251, %v5268
    %v5272 = vmul.f32 %v5252, %v5268
    %v5273 = vmul.f32 %v5253, %v5268
    %v5274 = vmul.f32 %v5254, %v5268
    %v5275 = vmul.f32 %v5255, %v5268
    %v5276 = vmul.f32 %v5256, %v5268
    %v5277 = vmul.f32 %v5257, %v5268
    %v5278 = vmul.f32 %v5258, %v5268
    %v5279 = vmul.f32 %v5259, %v5268
    %v5280 = vmul.f32 %v5260, %v5268
    %v5281 = vmul.f32 %v5261, %v5268
    %v5282 = vmul.f32 %v5262, %v5268
    %v5283 = vmul.f32 %v5263, %v5268
    %v5284 = vmul.f32 %v5264, %v5268
    %v5285 = vlaneseq
    %v5286 = vshrl.u32 %v5285, 7
    %v5287 = vsub.s32 4, %v5286
    %v5288 = vrot.slane %v115, %v5287
    %v5289 = vadd.f32 %v5269, %v5288
    %v5290 = vadd.f32 %v5270, %v5288
    %v5291 = vadd.f32 %v5271, %v5288
    %v5292 = vadd.f32 %v5272, %v5288
    %v5293 = vadd.f32 %v5273, %v5288
    %v5294 = vadd.f32 %v5274, %v5288
    %v5295 = vadd.f32 %v5275, %v5288
    %v5296 = vadd.f32 %v5276, %v5288
    %v5297 = vadd.f32 %v5277, %v5288
    %v5298 = vadd.f32 %v5278, %v5288
    %v5299 = vadd.f32 %v5279, %v5288
    %v5300 = vadd.f32 %v5280, %v5288
    %v5301 = vadd.f32 %v5281, %v5288
    %v5302 = vadd.f32 %v5282, %v5288
    %v5303 = vadd.f32 %v5283, %v5288
    %v5304 = vadd.f32 %v5284, %v5288
    %v5305 = vpack.c.bf16 %v5290, %v5289
    %v5306 = vpack.c.bf16 %v5292, %v5291
    %v5307 = vpack.c.bf16 %v5294, %v5293
    %v5308 = vpack.c.bf16 %v5296, %v5295
    %v5309 = vpack.c.bf16 %v5298, %v5297
    %v5310 = vpack.c.bf16 %v5300, %v5299
    %v5311 = vpack.c.bf16 %v5302, %v5301
    %v5312 = vpack.c.bf16 %v5304, %v5303
    %v5313 = vld [vmem:[#allocation8] sm:$0xff]
    %v5314 = vld [vmem:[#allocation8 + $0x8] sm:$0xff]
    %v5315 = vld [vmem:[#allocation8 + $0x10] sm:$0xff]
    %v5316 = vld [vmem:[#allocation8 + $0x18] sm:$0xff]
    %v5317 = vld [vmem:[#allocation8 + $0x20] sm:$0xff]
    %v5318 = vld [vmem:[#allocation8 + $0x28] sm:$0xff]
    %v5319 = vld [vmem:[#allocation8 + $0x30] sm:$0xff]
    %v5320 = vld [vmem:[#allocation8 + $0x38] sm:$0xff]
    %v5321 = vld [vmem:[#allocation8 + $0x40] sm:$0xff]
    %v5322 = vld [vmem:[#allocation8 + $0x48] sm:$0xff]
    %v5323 = vld [vmem:[#allocation8 + $0x50] sm:$0xff]
    %v5324 = vld [vmem:[#allocation8 + $0x58] sm:$0xff]
    %v5325 = vld [vmem:[#allocation8 + $0x60] sm:$0xff]
    %v5326 = vld [vmem:[#allocation8 + $0x68] sm:$0xff]
    %v5327 = vld [vmem:[#allocation8 + $0x70] sm:$0xff]
    %v5328 = vld [vmem:[#allocation8 + $0x78] sm:$0xff]
    %v5329 = vld [vmem:[#allocation8 + $0x80] sm:$0xff]
    %v5330 = vld [vmem:[#allocation8 + $0x88] sm:$0xff]
    %v5331 = vld [vmem:[#allocation8 + $0x90] sm:$0xff]
    %v5332 = vld [vmem:[#allocation8 + $0x98] sm:$0xff]
    %v5333 = vld [vmem:[#allocation8 + $0xa0] sm:$0xff]
    %v5334 = vld [vmem:[#allocation8 + $0xa8] sm:$0xff]
    %v5335 = vld [vmem:[#allocation8 + $0xb0] sm:$0xff]
    %v5336 = vld [vmem:[#allocation8 + $0xb8] sm:$0xff]
    %v5337 = vld [vmem:[#allocation8 + $0xc0] sm:$0xff]
    %v5338 = vld [vmem:[#allocation8 + $0xc8] sm:$0xff]
    %v5339 = vld [vmem:[#allocation8 + $0xd0] sm:$0xff]
    %v5340 = vld [vmem:[#allocation8 + $0xd8] sm:$0xff]
    %v5341 = vld [vmem:[#allocation8 + $0xe0] sm:$0xff]
    %v5342 = vld [vmem:[#allocation8 + $0xe8] sm:$0xff]
    %v5343 = vld [vmem:[#allocation8 + $0xf0] sm:$0xff]
    %v5344 = vld [vmem:[#allocation8 + $0xf8] sm:$0xff]
    %v5345 = vld [vmem:[%s7] sm:$0xf]
    %v5347 = vlaneseq
    %v5348 = vshrl.u32 %v5347, 7
    %v5349 = vsub.s32 0, %v5348
    %v5350 = vrot.slane %v5345, %v5349
    %v5351 = vlaneseq
    %v5352 = vshrl.u32 %v5351, 7
    %v5353 = vsub.s32 1, %v5352
    %v5354 = vrot.slane %v5345, %v5353
    %v5355 = vlaneseq
    %v5356 = vshrl.u32 %v5355, 7
    %v5357 = vsub.s32 2, %v5356
    %v5358 = vrot.slane %v5345, %v5357
    %v5359 = vlaneseq
    %v5360 = vshrl.u32 %v5359, 7
    %v5361 = vsub.s32 3, %v5360
    %v5362 = vrot.slane %v5345, %v5361
    %v5399 = vunpack.c.l.b16 %v5313
    %v5400 = vunpack.c.h.b16 %v5313
    %v5401 = vunpack.c.l.b16 %v5314
    %v5402 = vunpack.c.h.b16 %v5314
    %v5403 = vunpack.c.l.b16 %v5315
    %v5404 = vunpack.c.h.b16 %v5315
    %v5405 = vunpack.c.l.b16 %v5316
    %v5406 = vunpack.c.h.b16 %v5316
    %v5407 = vunpack.c.l.b16 %v5317
    %v5408 = vunpack.c.h.b16 %v5317
    %v5409 = vunpack.c.l.b16 %v5318
    %v5410 = vunpack.c.h.b16 %v5318
    %v5411 = vunpack.c.l.b16 %v5319
    %v5412 = vunpack.c.h.b16 %v5319
    %v5413 = vunpack.c.l.b16 %v5320
    %v5414 = vunpack.c.h.b16 %v5320
    %v5415 = vunpack.c.l.b16 %v5321
    %v5416 = vunpack.c.h.b16 %v5321
    %v5417 = vunpack.c.l.b16 %v5322
    %v5418 = vunpack.c.h.b16 %v5322
    %v5419 = vunpack.c.l.b16 %v5323
    %v5420 = vunpack.c.h.b16 %v5323
    %v5421 = vunpack.c.l.b16 %v5324
    %v5422 = vunpack.c.h.b16 %v5324
    %v5423 = vunpack.c.l.b16 %v5325
    %v5424 = vunpack.c.h.b16 %v5325
    %v5425 = vunpack.c.l.b16 %v5326
    %v5426 = vunpack.c.h.b16 %v5326
    %v5427 = vunpack.c.l.b16 %v5327
    %v5428 = vunpack.c.h.b16 %v5327
    %v5429 = vunpack.c.l.b16 %v5328
    %v5430 = vunpack.c.h.b16 %v5328
    %v5431 = vunpack.c.l.b16 %v5329
    %v5432 = vunpack.c.h.b16 %v5329
    %v5433 = vunpack.c.l.b16 %v5330
    %v5434 = vunpack.c.h.b16 %v5330
    %v5435 = vunpack.c.l.b16 %v5331
    %v5436 = vunpack.c.h.b16 %v5331
    %v5437 = vunpack.c.l.b16 %v5332
    %v5438 = vunpack.c.h.b16 %v5332
    %v5439 = vunpack.c.l.b16 %v5333
    %v5440 = vunpack.c.h.b16 %v5333
    %v5441 = vunpack.c.l.b16 %v5334
    %v5442 = vunpack.c.h.b16 %v5334
    %v5443 = vunpack.c.l.b16 %v5335
    %v5444 = vunpack.c.h.b16 %v5335
    %v5445 = vunpack.c.l.b16 %v5336
    %v5446 = vunpack.c.h.b16 %v5336
    %v5447 = vunpack.c.l.b16 %v5337
    %v5448 = vunpack.c.h.b16 %v5337
    %v5449 = vunpack.c.l.b16 %v5338
    %v5450 = vunpack.c.h.b16 %v5338
    %v5451 = vunpack.c.l.b16 %v5339
    %v5452 = vunpack.c.h.b16 %v5339
    %v5453 = vunpack.c.l.b16 %v5340
    %v5454 = vunpack.c.h.b16 %v5340
    %v5455 = vunpack.c.l.b16 %v5341
    %v5456 = vunpack.c.h.b16 %v5341
    %v5457 = vunpack.c.l.b16 %v5342
    %v5458 = vunpack.c.h.b16 %v5342
    %v5459 = vunpack.c.l.b16 %v5343
    %v5460 = vunpack.c.h.b16 %v5343
    %v5461 = vunpack.c.l.b16 %v5344
    %v5462 = vunpack.c.h.b16 %v5344
    %v5463 = vpack.c.b16 %v5403, %v5399
    %v5464 = vpack.c.b16 %v5404, %v5400
    %v5465 = vpack.c.b16 %v5405, %v5401
    %v5466 = vpack.c.b16 %v5406, %v5402
    %v5467 = vpack.c.b16 %v5411, %v5407
    %v5468 = vpack.c.b16 %v5412, %v5408
    %v5469 = vpack.c.b16 %v5413, %v5409
    %v5470 = vpack.c.b16 %v5414, %v5410
    %v5471 = vpack.c.b16 %v5419, %v5415
    %v5472 = vpack.c.b16 %v5420, %v5416
    %v5473 = vpack.c.b16 %v5421, %v5417
    %v5474 = vpack.c.b16 %v5422, %v5418
    %v5475 = vpack.c.b16 %v5427, %v5423
    %v5476 = vpack.c.b16 %v5428, %v5424
    %v5477 = vpack.c.b16 %v5429, %v5425
    %v5478 = vpack.c.b16 %v5430, %v5426
    %v5479 = vpack.c.b16 %v5435, %v5431
    %v5480 = vpack.c.b16 %v5436, %v5432
    %v5481 = vpack.c.b16 %v5437, %v5433
    %v5482 = vpack.c.b16 %v5438, %v5434
    %v5483 = vpack.c.b16 %v5443, %v5439
    %v5484 = vpack.c.b16 %v5444, %v5440
    %v5485 = vpack.c.b16 %v5445, %v5441
    %v5486 = vpack.c.b16 %v5446, %v5442
    %v5487 = vpack.c.b16 %v5451, %v5447
    %v5488 = vpack.c.b16 %v5452, %v5448
    %v5489 = vpack.c.b16 %v5453, %v5449
    %v5490 = vpack.c.b16 %v5454, %v5450
    %v5491 = vpack.c.b16 %v5459, %v5455
    %v5492 = vpack.c.b16 %v5460, %v5456
    %v5493 = vpack.c.b16 %v5461, %v5457
    %v5494 = vpack.c.b16 %v5462, %v5458
    %5527 = vmatprep.subr.bf16.mxu0 %v5464
    %5528 = vmatpush1.bf16.msra.mxu0 %v5463
    %5529 = vmatprep.subr.bf16.mxu0 %v5468
    %5530 = vmatpush1.bf16.msra.mxu0 %v5467
    %5531 = vmatprep.subr.bf16.mxu0 %v5472
    %5532 = vmatpush1.bf16.msra.mxu0 %v5471
    %5533 = vmatprep.subr.bf16.mxu0 %v5476
    %5534 = vmatpush1.bf16.msra.mxu0 %v5475
    %5535 = vmatprep.subr.bf16.mxu0 %v5480
    %5536 = vmatpush1.bf16.msra.mxu0 %v5479
    %5537 = vmatprep.subr.bf16.mxu0 %v5484
    %5538 = vmatpush1.bf16.msra.mxu0 %v5483
    %5539 = vmatprep.subr.bf16.mxu0 %v5488
    %5540 = vmatpush1.bf16.msra.mxu0 %v5487
    %5541 = vmatprep.subr.bf16.mxu0 %v5492
    %5542 = vmatpush1.bf16.msra.mxu0 %v5491
    %5543 = vmatprep.subr.bf16.mxu0 0
    %5544 = vmatpush1.bf16.msra.mxu0 0
    %5545 = vmatprep.subr.bf16.mxu0 0
    %5546 = vmatpush1.bf16.msra.mxu0 0
    %5547 = vmatprep.subr.bf16.mxu0 0
    %5548 = vmatpush1.bf16.msra.mxu0 0
    %5549 = vmatprep.subr.bf16.mxu0 0
    %5550 = vmatpush1.bf16.msra.mxu0 0
    %5551 = vmatprep.subr.bf16.mxu0 0
    %5552 = vmatpush1.bf16.msra.mxu0 0
    %5553 = vmatprep.subr.bf16.mxu0 0
    %5554 = vmatpush1.bf16.msra.mxu0 0
    %5555 = vmatprep.subr.bf16.mxu0 0
    %5556 = vmatpush1.bf16.msra.mxu0 0
    %5557 = vmatprep.subr.bf16.mxu0 0
    %5558 = vmatpush1.bf16.msra.mxu0 0
    %5559 = vmatprep.mubr.bf16.mxu0 0
    %5560 = vmatmul.mubr.bf16.gmra.mrb[0].mxu0 %v5305
    %v5561 = vpop.f32.mrb[0].mxu0
    %v5562 = vadd.f32 %v5350, %v5561
    %v5563 = vpop.f32.mrb[0].mxu0
    %v5564 = vadd.f32 %v5354, %v5563
    %v5565 = vpop.f32.mrb[0].mxu0
    %v5566 = vadd.f32 %v5350, %v5565
    %v5567 = vpop.f32.mrb[0].mxu0
    %v5568 = vadd.f32 %v5354, %v5567
    %5569 = vmatprep.mubr.bf16.mxu0 0
    %5570 = vmatmul.mubr.bf16.gmra.mrb[0].mxu0 %v5306
    %v5571 = vpop.f32.mrb[0].mxu0
    %v5572 = vadd.f32 %v5350, %v5571
    %v5573 = vpop.f32.mrb[0].mxu0
    %v5574 = vadd.f32 %v5354, %v5573
    %v5575 = vpop.f32.mrb[0].mxu0
    %v5576 = vadd.f32 %v5350, %v5575
    %v5577 = vpop.f32.mrb[0].mxu0
    %v5578 = vadd.f32 %v5354, %v5577
    %5579 = vmatprep.mubr.bf16.mxu0 0
    %5580 = vmatmul.mubr.bf16.gmra.mrb[0].mxu0 %v5307
    %v5581 = vpop.f32.mrb[0].mxu0
    %v5582 = vadd.f32 %v5350, %v5581
    %v5583 = vpop.f32.mrb[0].mxu0
    %v5584 = vadd.f32 %v5354, %v5583
    %v5585 = vpop.f32.mrb[0].mxu0
    %v5586 = vadd.f32 %v5350, %v5585
    %v5587 = vpop.f32.mrb[0].mxu0
    %v5588 = vadd.f32 %v5354, %v5587
    %5589 = vmatprep.mubr.bf16.mxu0 0
    %5590 = vmatmul.mubr.bf16.gmra.mrb[0].mxu0 %v5308
    %v5591 = vpop.f32.mrb[0].mxu0
    %v5592 = vadd.f32 %v5350, %v5591
    %v5593 = vpop.f32.mrb[0].mxu0
    %v5594 = vadd.f32 %v5354, %v5593
    %v5595 = vpop.f32.mrb[0].mxu0
    %v5596 = vadd.f32 %v5350, %v5595
    %v5597 = vpop.f32.mrb[0].mxu0
    %v5598 = vadd.f32 %v5354, %v5597
    %5599 = vmatprep.mubr.bf16.mxu0 0
    %5600 = vmatmul.mubr.bf16.gmra.mrb[0].mxu0 %v5309
    %v5601 = vpop.f32.mrb[0].mxu0
    %v5602 = vadd.f32 %v5350, %v5601
    %v5603 = vpop.f32.mrb[0].mxu0
    %v5604 = vadd.f32 %v5354, %v5603
    %v5605 = vpop.f32.mrb[0].mxu0
    %v5606 = vadd.f32 %v5350, %v5605
    %v5607 = vpop.f32.mrb[0].mxu0
    %v5608 = vadd.f32 %v5354, %v5607
    %5609 = vmatprep.mubr.bf16.mxu0 0
    %5610 = vmatmul.mubr.bf16.gmra.mrb[0].mxu0 %v5310
    %v5611 = vpop.f32.mrb[0].mxu0
    %v5612 = vadd.f32 %v5350, %v5611
    %v5613 = vpop.f32.mrb[0].mxu0
    %v5614 = vadd.f32 %v5354, %v5613
    %v5615 = vpop.f32.mrb[0].mxu0
    %v5616 = vadd.f32 %v5350, %v5615
    %v5617 = vpop.f32.mrb[0].mxu0
    %v5618 = vadd.f32 %v5354, %v5617
    %5619 = vmatprep.mubr.bf16.mxu0 0
    %5620 = vmatmul.mubr.bf16.gmra.mrb[0].mxu0 %v5311
    %v5621 = vpop.f32.mrb[0].mxu0
    %v5622 = vadd.f32 %v5350, %v5621
    %v5623 = vpop.f32.mrb[0].mxu0
    %v5624 = vadd.f32 %v5354, %v5623
    %v5625 = vpop.f32.mrb[0].mxu0
    %v5626 = vadd.f32 %v5350, %v5625
    %v5627 = vpop.f32.mrb[0].mxu0
    %v5628 = vadd.f32 %v5354, %v5627
    %5629 = vmatprep.mubr.bf16.mxu0 0
    %5630 = vmatmul.mubr.bf16.gmra.mrb[0].mxu0 %v5312
    %v5631 = vpop.f32.mrb[0].mxu0
    %v5632 = vadd.f32 %v5350, %v5631
    %v5633 = vpop.f32.mrb[0].mxu0
    %v5634 = vadd.f32 %v5354, %v5633
    %v5635 = vpop.f32.mrb[0].mxu0
    %v5636 = vadd.f32 %v5350, %v5635
    %v5637 = vpop.f32.mrb[0].mxu0
    %v5638 = vadd.f32 %v5354, %v5637
    %5639 = vdwg.mxu0
    %5640 = vmatprep.subr.bf16.mxu0 %v5466
    %5641 = vmatpush1.bf16.msra.mxu0 %v5465
    %5642 = vmatprep.subr.bf16.mxu0 %v5470
    %5643 = vmatpush1.bf16.msra.mxu0 %v5469
    %5644 = vmatprep.subr.bf16.mxu0 %v5474
    %5645 = vmatpush1.bf16.msra.mxu0 %v5473
    %5646 = vmatprep.subr.bf16.mxu0 %v5478
    %5647 = vmatpush1.bf16.msra.mxu0 %v5477
    %5648 = vmatprep.subr.bf16.mxu0 %v5482
    %5649 = vmatpush1.bf16.msra.mxu0 %v5481
    %5650 = vmatprep.subr.bf16.mxu0 %v5486
    %5651 = vmatpush1.bf16.msra.mxu0 %v5485
    %5652 = vmatprep.subr.bf16.mxu0 %v5490
    %5653 = vmatpush1.bf16.msra.mxu0 %v5489
    %5654 = vmatprep.subr.bf16.mxu0 %v5494
    %5655 = vmatpush1.bf16.msra.mxu0 %v5493
    %5656 = vmatprep.subr.bf16.mxu0 0
    %5657 = vmatpush1.bf16.msra.mxu0 0
    %5658 = vmatprep.subr.bf16.mxu0 0
    %5659 = vmatpush1.bf16.msra.mxu0 0
    %5660 = vmatprep.subr.bf16.mxu0 0
    %5661 = vmatpush1.bf16.msra.mxu0 0
    %5662 = vmatprep.subr.bf16.mxu0 0
    %5663 = vmatpush1.bf16.msra.mxu0 0
    %5664 = vmatprep.subr.bf16.mxu0 0
    %5665 = vmatpush1.bf16.msra.mxu0 0
    %5666 = vmatprep.subr.bf16.mxu0 0
    %5667 = vmatpush1.bf16.msra.mxu0 0
    %5668 = vmatprep.subr.bf16.mxu0 0
    %5669 = vmatpush1.bf16.msra.mxu0 0
    %5670 = vmatprep.subr.bf16.mxu0 0
    %5671 = vmatpush1.bf16.msra.mxu0 0
    %5672 = vmatprep.mubr.bf16.mxu0 0
    %5673 = vmatmul.mubr.bf16.gmra.mrb[0].mxu0 %v5305
    %v5674 = vpop.f32.mrb[0].mxu0
    %v5675 = vadd.f32 %v5358, %v5674
    %v5676 = vpop.f32.mrb[0].mxu0
    %v5677 = vadd.f32 %v5362, %v5676
    %v5678 = vpop.f32.mrb[0].mxu0
    %v5679 = vadd.f32 %v5358, %v5678
    %v5680 = vpop.f32.mrb[0].mxu0
    %v5681 = vadd.f32 %v5362, %v5680
    %5682 = vmatprep.mubr.bf16.mxu0 0
    %5683 = vmatmul.mubr.bf16.gmra.mrb[0].mxu0 %v5306
    %v5684 = vpop.f32.mrb[0].mxu0
    %v5685 = vadd.f32 %v5358, %v5684
    %v5686 = vpop.f32.mrb[0].mxu0
    %v5687 = vadd.f32 %v5362, %v5686
    %v5688 = vpop.f32.mrb[0].mxu0
    %v5689 = vadd.f32 %v5358, %v5688
    %v5690 = vpop.f32.mrb[0].mxu0
    %v5691 = vadd.f32 %v5362, %v5690
    %5692 = vmatprep.mubr.bf16.mxu0 0
    %5693 = vmatmul.mubr.bf16.gmra.mrb[0].mxu0 %v5307
    %v5694 = vpop.f32.mrb[0].mxu0
    %v5695 = vadd.f32 %v5358, %v5694
    %v5696 = vpop.f32.mrb[0].mxu0
    %v5697 = vadd.f32 %v5362, %v5696
    %v5698 = vpop.f32.mrb[0].mxu0
    %v5699 = vadd.f32 %v5358, %v5698
    %v5700 = vpop.f32.mrb[0].mxu0
    %v5701 = vadd.f32 %v5362, %v5700
    %5702 = vmatprep.mubr.bf16.mxu0 0
    %5703 = vmatmul.mubr.bf16.gmra.mrb[0].mxu0 %v5308
    %v5704 = vpop.f32.mrb[0].mxu0
    %v5705 = vadd.f32 %v5358, %v5704
    %v5706 = vpop.f32.mrb[0].mxu0
    %v5707 = vadd.f32 %v5362, %v5706
    %v5708 = vpop.f32.mrb[0].mxu0
    %v5709 = vadd.f32 %v5358, %v5708
    %v5710 = vpop.f32.mrb[0].mxu0
    %v5711 = vadd.f32 %v5362, %v5710
    %5712 = vmatprep.mubr.bf16.mxu0 0
    %5713 = vmatmul.mubr.bf16.gmra.mrb[0].mxu0 %v5309
    %v5714 = vpop.f32.mrb[0].mxu0
    %v5715 = vadd.f32 %v5358, %v5714
    %v5716 = vpop.f32.mrb[0].mxu0
    %v5717 = vadd.f32 %v5362, %v5716
    %v5718 = vpop.f32.mrb[0].mxu0
    %v5719 = vadd.f32 %v5358, %v5718
    %v5720 = vpop.f32.mrb[0].mxu0
    %v5721 = vadd.f32 %v5362, %v5720
    %5722 = vmatprep.mubr.bf16.mxu0 0
    %5723 = vmatmul.mubr.bf16.gmra.mrb[0].mxu0 %v5310
    %v5724 = vpop.f32.mrb[0].mxu0
    %v5725 = vadd.f32 %v5358, %v5724
    %v5726 = vpop.f32.mrb[0].mxu0
    %v5727 = vadd.f32 %v5362, %v5726
    %v5728 = vpop.f32.mrb[0].mxu0
    %v5729 = vadd.f32 %v5358, %v5728
    %v5730 = vpop.f32.mrb[0].mxu0
    %v5731 = vadd.f32 %v5362, %v5730
    %5732 = vmatprep.mubr.bf16.mxu0 0
    %5733 = vmatmul.mubr.bf16.gmra.mrb[0].mxu0 %v5311
    %v5734 = vpop.f32.mrb[0].mxu0
    %v5735 = vadd.f32 %v5358, %v5734
    %v5736 = vpop.f32.mrb[0].mxu0
    %v5737 = vadd.f32 %v5362, %v5736
    %v5738 = vpop.f32.mrb[0].mxu0
    %v5739 = vadd.f32 %v5358, %v5738
    %v5740 = vpop.f32.mrb[0].mxu0
    %v5741 = vadd.f32 %v5362, %v5740
    %5742 = vmatprep.mubr.bf16.mxu0 0
    %5743 = vmatmul.mubr.bf16.gmra.mrb[0].mxu0 %v5312
    %v5744 = vpop.f32.mrb[0].mxu0
    %v5745 = vadd.f32 %v5358, %v5744
    %v5746 = vpop.f32.mrb[0].mxu0
    %v5747 = vadd.f32 %v5362, %v5746
    %v5748 = vpop.f32.mrb[0].mxu0
    %v5749 = vadd.f32 %v5358, %v5748
    %v5750 = vpop.f32.mrb[0].mxu0
    %v5751 = vadd.f32 %v5362, %v5750
    %5752 = vdwg.mxu0
    %v5753 = vxor.u32 %v5562, 2147483648
    %v5754 = vxor.u32 %v5564, 2147483648
    %v5755 = vxor.u32 %v5675, 2147483648
    %v5756 = vxor.u32 %v5677, 2147483648
    %v5757 = vxor.u32 %v5566, 2147483648
    %v5758 = vxor.u32 %v5568, 2147483648
    %v5759 = vxor.u32 %v5679, 2147483648
    %v5760 = vxor.u32 %v5681, 2147483648
    %v5761 = vxor.u32 %v5572, 2147483648
    %v5762 = vxor.u32 %v5574, 2147483648
    %v5763 = vxor.u32 %v5685, 2147483648
    %v5764 = vxor.u32 %v5687, 2147483648
    %v5765 = vxor.u32 %v5576, 2147483648
    %v5766 = vxor.u32 %v5578, 2147483648
    %v5767 = vxor.u32 %v5689, 2147483648
    %v5768 = vxor.u32 %v5691, 2147483648
    %v5769 = vxor.u32 %v5582, 2147483648
    %v5770 = vxor.u32 %v5584, 2147483648
    %v5771 = vxor.u32 %v5695, 2147483648
    %v5772 = vxor.u32 %v5697, 2147483648
    %v5773 = vxor.u32 %v5586, 2147483648
    %v5774 = vxor.u32 %v5588, 2147483648
    %v5775 = vxor.u32 %v5699, 2147483648
    %v5776 = vxor.u32 %v5701, 2147483648
    %v5777 = vxor.u32 %v5592, 2147483648
    %v5778 = vxor.u32 %v5594, 2147483648
    %v5779 = vxor.u32 %v5705, 2147483648
    %v5780 = vxor.u32 %v5707, 2147483648
    %v5781 = vxor.u32 %v5596, 2147483648
    %v5782 = vxor.u32 %v5598, 2147483648
    %v5783 = vxor.u32 %v5709, 2147483648
    %v5784 = vxor.u32 %v5711, 2147483648
    %v5785 = vxor.u32 %v5602, 2147483648
    %v5786 = vxor.u32 %v5604, 2147483648
    %v5787 = vxor.u32 %v5715, 2147483648
    %v5788 = vxor.u32 %v5717, 2147483648
    %v5789 = vxor.u32 %v5606, 2147483648
    %v5790 = vxor.u32 %v5608, 2147483648
    %v5791 = vxor.u32 %v5719, 2147483648
    %v5792 = vxor.u32 %v5721, 2147483648
    %v5793 = vxor.u32 %v5612, 2147483648
    %v5794 = vxor.u32 %v5614, 2147483648
    %v5795 = vxor.u32 %v5725, 2147483648
    %v5796 = vxor.u32 %v5727, 2147483648
    %v5797 = vxor.u32 %v5616, 2147483648
    %v5798 = vxor.u32 %v5618, 2147483648
    %v5799 = vxor.u32 %v5729, 2147483648
    %v5800 = vxor.u32 %v5731, 2147483648
    %v5801 = vxor.u32 %v5622, 2147483648
    %v5802 = vxor.u32 %v5624, 2147483648
    %v5803 = vxor.u32 %v5735, 2147483648
    %v5804 = vxor.u32 %v5737, 2147483648
    %v5805 = vxor.u32 %v5626, 2147483648
    %v5806 = vxor.u32 %v5628, 2147483648
    %v5807 = vxor.u32 %v5739, 2147483648
    %v5808 = vxor.u32 %v5741, 2147483648
    %v5809 = vxor.u32 %v5632, 2147483648
    %v5810 = vxor.u32 %v5634, 2147483648
    %v5811 = vxor.u32 %v5745, 2147483648
    %v5812 = vxor.u32 %v5747, 2147483648
    %v5813 = vxor.u32 %v5636, 2147483648
    %v5814 = vxor.u32 %v5638, 2147483648
    %v5815 = vxor.u32 %v5749, 2147483648
    %v5816 = vxor.u32 %v5751, 2147483648
    %v5817 = vmul.f32 %v5753, 1.442695
    %v5818 = vpow.pop %v5817
    %v5819 = vmul.f32 %v5754, 1.442695
    %v5820 = vpow.pop %v5819
    %v5821 = vmul.f32 %v5755, 1.442695
    %v5822 = vpow.pop %v5821
    %v5823 = vmul.f32 %v5756, 1.442695
    %v5824 = vpow.pop %v5823
    %v5825 = vmul.f32 %v5757, 1.442695
    %v5826 = vpow.pop %v5825
    %v5827 = vmul.f32 %v5758, 1.442695
    %v5828 = vpow.pop %v5827
    %v5829 = vmul.f32 %v5759, 1.442695
    %v5830 = vpow.pop %v5829
    %v5831 = vmul.f32 %v5760, 1.442695
    %v5832 = vpow.pop %v5831
    %v5833 = vmul.f32 %v5761, 1.442695
    %v5834 = vpow.pop %v5833
    %v5835 = vmul.f32 %v5762, 1.442695
    %v5836 = vpow.pop %v5835
    %v5837 = vmul.f32 %v5763, 1.442695
    %v5838 = vpow.pop %v5837
    %v5839 = vmul.f32 %v5764, 1.442695
    %v5840 = vpow.pop %v5839
    %v5841 = vmul.f32 %v5765, 1.442695
    %v5842 = vpow.pop %v5841
    %v5843 = vmul.f32 %v5766, 1.442695
    %v5844 = vpow.pop %v5843
    %v5845 = vmul.f32 %v5767, 1.442695
    %v5846 = vpow.pop %v5845
    %v5847 = vmul.f32 %v5768, 1.442695
    %v5848 = vpow.pop %v5847
    %v5849 = vmul.f32 %v5769, 1.442695
    %v5850 = vpow.pop %v5849
    %v5851 = vmul.f32 %v5770, 1.442695
    %v5852 = vpow.pop %v5851
    %v5853 = vmul.f32 %v5771, 1.442695
    %v5854 = vpow.pop %v5853
    %v5855 = vmul.f32 %v5772, 1.442695
    %v5856 = vpow.pop %v5855
    %v5857 = vmul.f32 %v5773, 1.442695
    %v5858 = vpow.pop %v5857
    %v5859 = vmul.f32 %v5774, 1.442695
    %v5860 = vpow.pop %v5859
    %v5861 = vmul.f32 %v5775, 1.442695
    %v5862 = vpow.pop %v5861
    %v5863 = vmul.f32 %v5776, 1.442695
    %v5864 = vpow.pop %v5863
    %v5865 = vmul.f32 %v5777, 1.442695
    %v5866 = vpow.pop %v5865
    %v5867 = vmul.f32 %v5778, 1.442695
    %v5868 = vpow.pop %v5867
    %v5869 = vmul.f32 %v5779, 1.442695
    %v5870 = vpow.pop %v5869
    %v5871 = vmul.f32 %v5780, 1.442695
    %v5872 = vpow.pop %v5871
    %v5873 = vmul.f32 %v5781, 1.442695
    %v5874 = vpow.pop %v5873
    %v5875 = vmul.f32 %v5782, 1.442695
    %v5876 = vpow.pop %v5875
    %v5877 = vmul.f32 %v5783, 1.442695
    %v5878 = vpow.pop %v5877
    %v5879 = vmul.f32 %v5784, 1.442695
    %v5880 = vpow.pop %v5879
    %v5881 = vmul.f32 %v5785, 1.442695
    %v5882 = vpow.pop %v5881
    %v5883 = vmul.f32 %v5786, 1.442695
    %v5884 = vpow.pop %v5883
    %v5885 = vmul.f32 %v5787, 1.442695
    %v5886 = vpow.pop %v5885
    %v5887 = vmul.f32 %v5788, 1.442695
    %v5888 = vpow.pop %v5887
    %v5889 = vmul.f32 %v5789, 1.442695
    %v5890 = vpow.pop %v5889
    %v5891 = vmul.f32 %v5790, 1.442695
    %v5892 = vpow.pop %v5891
    %v5893 = vmul.f32 %v5791, 1.442695
    %v5894 = vpow.pop %v5893
    %v5895 = vmul.f32 %v5792, 1.442695
    %v5896 = vpow.pop %v5895
    %v5897 = vmul.f32 %v5793, 1.442695
    %v5898 = vpow.pop %v5897
    %v5899 = vmul.f32 %v5794, 1.442695
    %v5900 = vpow.pop %v5899
    %v5901 = vmul.f32 %v5795, 1.442695
    %v5902 = vpow.pop %v5901
    %v5903 = vmul.f32 %v5796, 1.442695
    %v5904 = vpow.pop %v5903
    %v5905 = vmul.f32 %v5797, 1.442695
    %v5906 = vpow.pop %v5905
    %v5907 = vmul.f32 %v5798, 1.442695
    %v5908 = vpow.pop %v5907
    %v5909 = vmul.f32 %v5799, 1.442695
    %v5910 = vpow.pop %v5909
    %v5911 = vmul.f32 %v5800, 1.442695
    %v5912 = vpow.pop %v5911
    %v5913 = vmul.f32 %v5801, 1.442695
    %v5914 = vpow.pop %v5913
    %v5915 = vmul.f32 %v5802, 1.442695
    %v5916 = vpow.pop %v5915
    %v5917 = vmul.f32 %v5803, 1.442695
    %v5918 = vpow.pop %v5917
    %v5919 = vmul.f32 %v5804, 1.442695
    %v5920 = vpow.pop %v5919
    %v5921 = vmul.f32 %v5805, 1.442695
    %v5922 = vpow.pop %v5921
    %v5923 = vmul.f32 %v5806, 1.442695
    %v5924 = vpow.pop %v5923
    %v5925 = vmul.f32 %v5807, 1.442695
    %v5926 = vpow.pop %v5925
    %v5927 = vmul.f32 %v5808, 1.442695
    %v5928 = vpow.pop %v5927
    %v5929 = vmul.f32 %v5809, 1.442695
    %v5930 = vpow.pop %v5929
    %v5931 = vmul.f32 %v5810, 1.442695
    %v5932 = vpow.pop %v5931
    %v5933 = vmul.f32 %v5811, 1.442695
    %v5934 = vpow.pop %v5933
    %v5935 = vmul.f32 %v5812, 1.442695
    %v5936 = vpow.pop %v5935
    %v5937 = vmul.f32 %v5813, 1.442695
    %v5938 = vpow.pop %v5937
    %v5939 = vmul.f32 %v5814, 1.442695
    %v5940 = vpow.pop %v5939
    %v5941 = vmul.f32 %v5815, 1.442695
    %v5942 = vpow.pop %v5941
    %v5943 = vmul.f32 %v5816, 1.442695
    %v5944 = vpow.pop %v5943
    %v5945 = vadd.f32 %v5818, 1.0
    %v5946 = vadd.f32 %v5820, 1.0
    %v5947 = vadd.f32 %v5822, 1.0
    %v5948 = vadd.f32 %v5824, 1.0
    %v5949 = vadd.f32 %v5826, 1.0
    %v5950 = vadd.f32 %v5828, 1.0
    %v5951 = vadd.f32 %v5830, 1.0
    %v5952 = vadd.f32 %v5832, 1.0
    %v5953 = vadd.f32 %v5834, 1.0
    %v5954 = vadd.f32 %v5836, 1.0
    %v5955 = vadd.f32 %v5838, 1.0
    %v5956 = vadd.f32 %v5840, 1.0
    %v5957 = vadd.f32 %v5842, 1.0
    %v5958 = vadd.f32 %v5844, 1.0
    %v5959 = vadd.f32 %v5846, 1.0
    %v5960 = vadd.f32 %v5848, 1.0
    %v5961 = vadd.f32 %v5850, 1.0
    %v5962 = vadd.f32 %v5852, 1.0
    %v5963 = vadd.f32 %v5854, 1.0
    %v5964 = vadd.f32 %v5856, 1.0
    %v5965 = vadd.f32 %v5858, 1.0
    %v5966 = vadd.f32 %v5860, 1.0
    %v5967 = vadd.f32 %v5862, 1.0
    %v5968 = vadd.f32 %v5864, 1.0
    %v5969 = vadd.f32 %v5866, 1.0
    %v5970 = vadd.f32 %v5868, 1.0
    %v5971 = vadd.f32 %v5870, 1.0
    %v5972 = vadd.f32 %v5872, 1.0
    %v5973 = vadd.f32 %v5874, 1.0
    %v5974 = vadd.f32 %v5876, 1.0
    %v5975 = vadd.f32 %v5878, 1.0
    %v5976 = vadd.f32 %v5880, 1.0
    %v5977 = vadd.f32 %v5882, 1.0
    %v5978 = vadd.f32 %v5884, 1.0
    %v5979 = vadd.f32 %v5886, 1.0
    %v5980 = vadd.f32 %v5888, 1.0
    %v5981 = vadd.f32 %v5890, 1.0
    %v5982 = vadd.f32 %v5892, 1.0
    %v5983 = vadd.f32 %v5894, 1.0
    %v5984 = vadd.f32 %v5896, 1.0
    %v5985 = vadd.f32 %v5898, 1.0
    %v5986 = vadd.f32 %v5900, 1.0
    %v5987 = vadd.f32 %v5902, 1.0
    %v5988 = vadd.f32 %v5904, 1.0
    %v5989 = vadd.f32 %v5906, 1.0
    %v5990 = vadd.f32 %v5908, 1.0
    %v5991 = vadd.f32 %v5910, 1.0
    %v5992 = vadd.f32 %v5912, 1.0
    %v5993 = vadd.f32 %v5914, 1.0
    %v5994 = vadd.f32 %v5916, 1.0
    %v5995 = vadd.f32 %v5918, 1.0
    %v5996 = vadd.f32 %v5920, 1.0
    %v5997 = vadd.f32 %v5922, 1.0
    %v5998 = vadd.f32 %v5924, 1.0
    %v5999 = vadd.f32 %v5926, 1.0
    %v6000 = vadd.f32 %v5928, 1.0
    %v6001 = vadd.f32 %v5930, 1.0
    %v6002 = vadd.f32 %v5932, 1.0
    %v6003 = vadd.f32 %v5934, 1.0
    %v6004 = vadd.f32 %v5936, 1.0
    %v6005 = vadd.f32 %v5938, 1.0
    %v6006 = vadd.f32 %v5940, 1.0
    %v6007 = vadd.f32 %v5942, 1.0
    %v6008 = vadd.f32 %v5944, 1.0
    %v6009 = vrcp.pop %v5945
    %v6010 = vmul.f32 1.0, %v6009
    %v6011 = vrcp.pop %v5946
    %v6012 = vmul.f32 1.0, %v6011
    %v6013 = vrcp.pop %v5947
    %v6014 = vmul.f32 1.0, %v6013
    %v6015 = vrcp.pop %v5948
    %v6016 = vmul.f32 1.0, %v6015
    %v6017 = vrcp.pop %v5949
    %v6018 = vmul.f32 1.0, %v6017
    %v6019 = vrcp.pop %v5950
    %v6020 = vmul.f32 1.0, %v6019
    %v6021 = vrcp.pop %v5951
    %v6022 = vmul.f32 1.0, %v6021
    %v6023 = vrcp.pop %v5952
    %v6024 = vmul.f32 1.0, %v6023
    %v6025 = vrcp.pop %v5953
    %v6026 = vmul.f32 1.0, %v6025
    %v6027 = vrcp.pop %v5954
    %v6028 = vmul.f32 1.0, %v6027
    %v6029 = vrcp.pop %v5955
    %v6030 = vmul.f32 1.0, %v6029
    %v6031 = vrcp.pop %v5956
    %v6032 = vmul.f32 1.0, %v6031
    %v6033 = vrcp.pop %v5957
    %v6034 = vmul.f32 1.0, %v6033
    %v6035 = vrcp.pop %v5958
    %v6036 = vmul.f32 1.0, %v6035
    %v6037 = vrcp.pop %v5959
    %v6038 = vmul.f32 1.0, %v6037
    %v6039 = vrcp.pop %v5960
    %v6040 = vmul.f32 1.0, %v6039
    %v6041 = vrcp.pop %v5961
    %v6042 = vmul.f32 1.0, %v6041
    %v6043 = vrcp.pop %v5962
    %v6044 = vmul.f32 1.0, %v6043
    %v6045 = vrcp.pop %v5963
    %v6046 = vmul.f32 1.0, %v6045
    %v6047 = vrcp.pop %v5964
    %v6048 = vmul.f32 1.0, %v6047
    %v6049 = vrcp.pop %v5965
    %v6050 = vmul.f32 1.0, %v6049
    %v6051 = vrcp.pop %v5966
    %v6052 = vmul.f32 1.0, %v6051
    %v6053 = vrcp.pop %v5967
    %v6054 = vmul.f32 1.0, %v6053
    %v6055 = vrcp.pop %v5968
    %v6056 = vmul.f32 1.0, %v6055
    %v6057 = vrcp.pop %v5969
    %v6058 = vmul.f32 1.0, %v6057
    %v6059 = vrcp.pop %v5970
    %v6060 = vmul.f32 1.0, %v6059
    %v6061 = vrcp.pop %v5971
    %v6062 = vmul.f32 1.0, %v6061
    %v6063 = vrcp.pop %v5972
    %v6064 = vmul.f32 1.0, %v6063
    %v6065 = vrcp.pop %v5973
    %v6066 = vmul.f32 1.0, %v6065
    %v6067 = vrcp.pop %v5974
    %v6068 = vmul.f32 1.0, %v6067
    %v6069 = vrcp.pop %v5975
    %v6070 = vmul.f32 1.0, %v6069
    %v6071 = vrcp.pop %v5976
    %v6072 = vmul.f32 1.0, %v6071
    %v6073 = vrcp.pop %v5977
    %v6074 = vmul.f32 1.0, %v6073
    %v6075 = vrcp.pop %v5978
    %v6076 = vmul.f32 1.0, %v6075
    %v6077 = vrcp.pop %v5979
    %v6078 = vmul.f32 1.0, %v6077
    %v6079 = vrcp.pop %v5980
    %v6080 = vmul.f32 1.0, %v6079
    %v6081 = vrcp.pop %v5981
    %v6082 = vmul.f32 1.0, %v6081
    %v6083 = vrcp.pop %v5982
    %v6084 = vmul.f32 1.0, %v6083
    %v6085 = vrcp.pop %v5983
    %v6086 = vmul.f32 1.0, %v6085
    %v6087 = vrcp.pop %v5984
    %v6088 = vmul.f32 1.0, %v6087
    %v6089 = vrcp.pop %v5985
    %v6090 = vmul.f32 1.0, %v6089
    %v6091 = vrcp.pop %v5986
    %v6092 = vmul.f32 1.0, %v6091
    %v6093 = vrcp.pop %v5987
    %v6094 = vmul.f32 1.0, %v6093
    %v6095 = vrcp.pop %v5988
    %v6096 = vmul.f32 1.0, %v6095
    %v6097 = vrcp.pop %v5989
    %v6098 = vmul.f32 1.0, %v6097
    %v6099 = vrcp.pop %v5990
    %v6100 = vmul.f32 1.0, %v6099
    %v6101 = vrcp.pop %v5991
    %v6102 = vmul.f32 1.0, %v6101
    %v6103 = vrcp.pop %v5992
    %v6104 = vmul.f32 1.0, %v6103
    %v6105 = vrcp.pop %v5993
    %v6106 = vmul.f32 1.0, %v6105
    %v6107 = vrcp.pop %v5994
    %v6108 = vmul.f32 1.0, %v6107
    %v6109 = vrcp.pop %v5995
    %v6110 = vmul.f32 1.0, %v6109
    %v6111 = vrcp.pop %v5996
    %v6112 = vmul.f32 1.0, %v6111
    %v6113 = vrcp.pop %v5997
    %v6114 = vmul.f32 1.0, %v6113
    %v6115 = vrcp.pop %v5998
    %v6116 = vmul.f32 1.0, %v6115
    %v6117 = vrcp.pop %v5999
    %v6118 = vmul.f32 1.0, %v6117
    %v6119 = vrcp.pop %v6000
    %v6120 = vmul.f32 1.0, %v6119
    %v6121 = vrcp.pop %v6001
    %v6122 = vmul.f32 1.0, %v6121
    %v6123 = vrcp.pop %v6002
    %v6124 = vmul.f32 1.0, %v6123
    %v6125 = vrcp.pop %v6003
    %v6126 = vmul.f32 1.0, %v6125
    %v6127 = vrcp.pop %v6004
    %v6128 = vmul.f32 1.0, %v6127
    %v6129 = vrcp.pop %v6005
    %v6130 = vmul.f32 1.0, %v6129
    %v6131 = vrcp.pop %v6006
    %v6132 = vmul.f32 1.0, %v6131
    %v6133 = vrcp.pop %v6007
    %v6134 = vmul.f32 1.0, %v6133
    %v6135 = vrcp.pop %v6008
    %v6136 = vmul.f32 1.0, %v6135
    %v6137 = vmul.f32 %v5562, %v6010
    %v6138 = vmul.f32 %v5564, %v6012
    %v6139 = vmul.f32 %v5675, %v6014
    %v6140 = vmul.f32 %v5677, %v6016
    %v6141 = vmul.f32 %v5566, %v6018
    %v6142 = vmul.f32 %v5568, %v6020
    %v6143 = vmul.f32 %v5679, %v6022
    %v6144 = vmul.f32 %v5681, %v6024
    %v6145 = vmul.f32 %v5572, %v6026
    %v6146 = vmul.f32 %v5574, %v6028
    %v6147 = vmul.f32 %v5685, %v6030
    %v6148 = vmul.f32 %v5687, %v6032
    %v6149 = vmul.f32 %v5576, %v6034
    %v6150 = vmul.f32 %v5578, %v6036
    %v6151 = vmul.f32 %v5689, %v6038
    %v6152 = vmul.f32 %v5691, %v6040
    %v6153 = vmul.f32 %v5582, %v6042
    %v6154 = vmul.f32 %v5584, %v6044
    %v6155 = vmul.f32 %v5695, %v6046
    %v6156 = vmul.f32 %v5697, %v6048
    %v6157 = vmul.f32 %v5586, %v6050
    %v6158 = vmul.f32 %v5588, %v6052
    %v6159 = vmul.f32 %v5699, %v6054
    %v6160 = vmul.f32 %v5701, %v6056
    %v6161 = vmul.f32 %v5592, %v6058
    %v6162 = vmul.f32 %v5594, %v6060
    %v6163 = vmul.f32 %v5705, %v6062
    %v6164 = vmul.f32 %v5707, %v6064
    %v6165 = vmul.f32 %v5596, %v6066
    %v6166 = vmul.f32 %v5598, %v6068
    %v6167 = vmul.f32 %v5709, %v6070
    %v6168 = vmul.f32 %v5711, %v6072
    %v6169 = vmul.f32 %v5602, %v6074
    %v6170 = vmul.f32 %v5604, %v6076
    %v6171 = vmul.f32 %v5715, %v6078
    %v6172 = vmul.f32 %v5717, %v6080
    %v6173 = vmul.f32 %v5606, %v6082
    %v6174 = vmul.f32 %v5608, %v6084
    %v6175 = vmul.f32 %v5719, %v6086
    %v6176 = vmul.f32 %v5721, %v6088
    %v6177 = vmul.f32 %v5612, %v6090
    %v6178 = vmul.f32 %v5614, %v6092
    %v6179 = vmul.f32 %v5725, %v6094
    %v6180 = vmul.f32 %v5727, %v6096
    %v6181 = vmul.f32 %v5616, %v6098
    %v6182 = vmul.f32 %v5618, %v6100
    %v6183 = vmul.f32 %v5729, %v6102
    %v6184 = vmul.f32 %v5731, %v6104
    %v6185 = vmul.f32 %v5622, %v6106
    %v6186 = vmul.f32 %v5624, %v6108
    %v6187 = vmul.f32 %v5735, %v6110
    %v6188 = vmul.f32 %v5737, %v6112
    %v6189 = vmul.f32 %v5626, %v6114
    %v6190 = vmul.f32 %v5628, %v6116
    %v6191 = vmul.f32 %v5739, %v6118
    %v6192 = vmul.f32 %v5741, %v6120
    %v6193 = vmul.f32 %v5632, %v6122
    %v6194 = vmul.f32 %v5634, %v6124
    %v6195 = vmul.f32 %v5745, %v6126
    %v6196 = vmul.f32 %v5747, %v6128
    %v6197 = vmul.f32 %v5636, %v6130
    %v6198 = vmul.f32 %v5638, %v6132
    %v6199 = vmul.f32 %v5749, %v6134
    %v6200 = vmul.f32 %v5751, %v6136
    %v6201 = vpack.c.bf16 %v6141, %v6137
    %v6202 = vpack.c.bf16 %v6142, %v6138
    %v6203 = vpack.c.bf16 %v6143, %v6139
    %v6204 = vpack.c.bf16 %v6144, %v6140
    %v6205 = vpack.c.bf16 %v6149, %v6145
    %v6206 = vpack.c.bf16 %v6150, %v6146
    %v6207 = vpack.c.bf16 %v6151, %v6147
    %v6208 = vpack.c.bf16 %v6152, %v6148
    %v6209 = vpack.c.bf16 %v6157, %v6153
    %v6210 = vpack.c.bf16 %v6158, %v6154
    %v6211 = vpack.c.bf16 %v6159, %v6155
    %v6212 = vpack.c.bf16 %v6160, %v6156
    %v6213 = vpack.c.bf16 %v6165, %v6161
    %v6214 = vpack.c.bf16 %v6166, %v6162
    %v6215 = vpack.c.bf16 %v6167, %v6163
    %v6216 = vpack.c.bf16 %v6168, %v6164
    %v6217 = vpack.c.bf16 %v6173, %v6169
    %v6218 = vpack.c.bf16 %v6174, %v6170
    %v6219 = vpack.c.bf16 %v6175, %v6171
    %v6220 = vpack.c.bf16 %v6176, %v6172
    %v6221 = vpack.c.bf16 %v6181, %v6177
    %v6222 = vpack.c.bf16 %v6182, %v6178
    %v6223 = vpack.c.bf16 %v6183, %v6179
    %v6224 = vpack.c.bf16 %v6184, %v6180
    %v6225 = vpack.c.bf16 %v6189, %v6185
    %v6226 = vpack.c.bf16 %v6190, %v6186
    %v6227 = vpack.c.bf16 %v6191, %v6187
    %v6228 = vpack.c.bf16 %v6192, %v6188
    %v6229 = vpack.c.bf16 %v6197, %v6193
    %v6230 = vpack.c.bf16 %v6198, %v6194
    %v6231 = vpack.c.bf16 %v6199, %v6195
    %v6232 = vpack.c.bf16 %v6200, %v6196
    %v6233 = vld [vmem:[#allocation10] sm:$0xf]
    %v6234 = vld [vmem:[#allocation10 + $0x4] sm:$0xf]
    %v6235 = vld [vmem:[#allocation10 + $0x8] sm:$0xf]
    %v6236 = vld [vmem:[#allocation10 + $0xc] sm:$0xf]
    %v6237 = vld [vmem:[#allocation10 + $0x10] sm:$0xf]
    %v6238 = vld [vmem:[#allocation10 + $0x14] sm:$0xf]
    %v6239 = vld [vmem:[#allocation10 + $0x18] sm:$0xf]
    %v6240 = vld [vmem:[#allocation10 + $0x1c] sm:$0xf]
    %v6241 = vld [vmem:[#allocation10 + $0x20] sm:$0xf]
    %v6242 = vld [vmem:[#allocation10 + $0x24] sm:$0xf]
    %v6243 = vld [vmem:[#allocation10 + $0x28] sm:$0xf]
    %v6244 = vld [vmem:[#allocation10 + $0x2c] sm:$0xf]
    %v6245 = vld [vmem:[#allocation10 + $0x30] sm:$0xf]
    %v6246 = vld [vmem:[#allocation10 + $0x34] sm:$0xf]
    %v6247 = vld [vmem:[#allocation10 + $0x38] sm:$0xf]
    %v6248 = vld [vmem:[#allocation10 + $0x3c] sm:$0xf]
    %v6249 = vld [vmem:[#allocation10 + $0x40] sm:$0xf]
    %v6250 = vld [vmem:[#allocation10 + $0x44] sm:$0xf]
    %v6251 = vld [vmem:[#allocation10 + $0x48] sm:$0xf]
    %v6252 = vld [vmem:[#allocation10 + $0x4c] sm:$0xf]
    %v6253 = vld [vmem:[#allocation10 + $0x50] sm:$0xf]
    %v6254 = vld [vmem:[#allocation10 + $0x54] sm:$0xf]
    %v6255 = vld [vmem:[#allocation10 + $0x58] sm:$0xf]
    %v6256 = vld [vmem:[#allocation10 + $0x5c] sm:$0xf]
    %v6257 = vld [vmem:[#allocation10 + $0x60] sm:$0xf]
    %v6258 = vld [vmem:[#allocation10 + $0x64] sm:$0xf]
    %v6259 = vld [vmem:[#allocation10 + $0x68] sm:$0xf]
    %v6260 = vld [vmem:[#allocation10 + $0x6c] sm:$0xf]
    %v6261 = vld [vmem:[#allocation10 + $0x70] sm:$0xf]
    %v6262 = vld [vmem:[#allocation10 + $0x74] sm:$0xf]
    %v6263 = vld [vmem:[#allocation10 + $0x78] sm:$0xf]
    %v6264 = vld [vmem:[#allocation10 + $0x7c] sm:$0xf]
    %v6265 = vld [vmem:[#allocation10 + $0x80] sm:$0xf]
    %v6266 = vld [vmem:[#allocation10 + $0x84] sm:$0xf]
    %v6267 = vld [vmem:[#allocation10 + $0x88] sm:$0xf]
    %v6268 = vld [vmem:[#allocation10 + $0x8c] sm:$0xf]
    %v6269 = vld [vmem:[#allocation10 + $0x90] sm:$0xf]
    %v6270 = vld [vmem:[#allocation10 + $0x94] sm:$0xf]
    %v6271 = vld [vmem:[#allocation10 + $0x98] sm:$0xf]
    %v6272 = vld [vmem:[#allocation10 + $0x9c] sm:$0xf]
    %v6273 = vld [vmem:[#allocation10 + $0xa0] sm:$0xf]
    %v6274 = vld [vmem:[#allocation10 + $0xa4] sm:$0xf]
    %v6275 = vld [vmem:[#allocation10 + $0xa8] sm:$0xf]
    %v6276 = vld [vmem:[#allocation10 + $0xac] sm:$0xf]
    %v6277 = vld [vmem:[#allocation10 + $0xb0] sm:$0xf]
    %v6278 = vld [vmem:[#allocation10 + $0xb4] sm:$0xf]
    %v6279 = vld [vmem:[#allocation10 + $0xb8] sm:$0xf]
    %v6280 = vld [vmem:[#allocation10 + $0xbc] sm:$0xf]
    %v6281 = vld [vmem:[#allocation10 + $0xc0] sm:$0xf]
    %v6282 = vld [vmem:[#allocation10 + $0xc4] sm:$0xf]
    %v6283 = vld [vmem:[#allocation10 + $0xc8] sm:$0xf]
    %v6284 = vld [vmem:[#allocation10 + $0xcc] sm:$0xf]
    %v6285 = vld [vmem:[#allocation10 + $0xd0] sm:$0xf]
    %v6286 = vld [vmem:[#allocation10 + $0xd4] sm:$0xf]
    %v6287 = vld [vmem:[#allocation10 + $0xd8] sm:$0xf]
    %v6288 = vld [vmem:[#allocation10 + $0xdc] sm:$0xf]
    %v6289 = vld [vmem:[#allocation10 + $0xe0] sm:$0xf]
    %v6290 = vld [vmem:[#allocation10 + $0xe4] sm:$0xf]
    %v6291 = vld [vmem:[#allocation10 + $0xe8] sm:$0xf]
    %v6292 = vld [vmem:[#allocation10 + $0xec] sm:$0xf]
    %v6293 = vld [vmem:[#allocation10 + $0xf0] sm:$0xf]
    %v6294 = vld [vmem:[#allocation10 + $0xf4] sm:$0xf]
    %v6295 = vld [vmem:[#allocation10 + $0xf8] sm:$0xf]
    %v6296 = vld [vmem:[#allocation10 + $0xfc] sm:$0xf]
    %v6297 = vlaneseq
    %v6298 = vshrl.u32 %v6297, 7
    %v6299 = vsub.s32 5, %v6298
    %v6300 = vrot.slane %v115, %v6299
    %v6365 = vunpack.c.l.b16 %v6233
    %v6366 = vunpack.c.l.b16 %v6234
    %v6367 = vunpack.c.l.b16 %v6235
    %v6368 = vunpack.c.l.b16 %v6236
    %v6369 = vunpack.c.l.b16 %v6237
    %v6370 = vunpack.c.l.b16 %v6238
    %v6371 = vunpack.c.l.b16 %v6239
    %v6372 = vunpack.c.l.b16 %v6240
    %v6373 = vunpack.c.l.b16 %v6241
    %v6374 = vunpack.c.l.b16 %v6242
    %v6375 = vunpack.c.l.b16 %v6243
    %v6376 = vunpack.c.l.b16 %v6244
    %v6377 = vunpack.c.l.b16 %v6245
    %v6378 = vunpack.c.l.b16 %v6246
    %v6379 = vunpack.c.l.b16 %v6247
    %v6380 = vunpack.c.l.b16 %v6248
    %v6381 = vunpack.c.l.b16 %v6249
    %v6382 = vunpack.c.l.b16 %v6250
    %v6383 = vunpack.c.l.b16 %v6251
    %v6384 = vunpack.c.l.b16 %v6252
    %v6385 = vunpack.c.l.b16 %v6253
    %v6386 = vunpack.c.l.b16 %v6254
    %v6387 = vunpack.c.l.b16 %v6255
    %v6388 = vunpack.c.l.b16 %v6256
    %v6389 = vunpack.c.l.b16 %v6257
    %v6390 = vunpack.c.l.b16 %v6258
    %v6391 = vunpack.c.l.b16 %v6259
    %v6392 = vunpack.c.l.b16 %v6260
    %v6393 = vunpack.c.l.b16 %v6261
    %v6394 = vunpack.c.l.b16 %v6262
    %v6395 = vunpack.c.l.b16 %v6263
    %v6396 = vunpack.c.l.b16 %v6264
    %v6397 = vunpack.c.l.b16 %v6265
    %v6398 = vunpack.c.l.b16 %v6266
    %v6399 = vunpack.c.l.b16 %v6267
    %v6400 = vunpack.c.l.b16 %v6268
    %v6401 = vunpack.c.l.b16 %v6269
    %v6402 = vunpack.c.l.b16 %v6270
    %v6403 = vunpack.c.l.b16 %v6271
    %v6404 = vunpack.c.l.b16 %v6272
    %v6405 = vunpack.c.l.b16 %v6273
    %v6406 = vunpack.c.l.b16 %v6274
    %v6407 = vunpack.c.l.b16 %v6275
    %v6408 = vunpack.c.l.b16 %v6276
    %v6409 = vunpack.c.l.b16 %v6277
    %v6410 = vunpack.c.l.b16 %v6278
    %v6411 = vunpack.c.l.b16 %v6279
    %v6412 = vunpack.c.l.b16 %v6280
    %v6413 = vunpack.c.l.b16 %v6281
    %v6414 = vunpack.c.l.b16 %v6282
    %v6415 = vunpack.c.l.b16 %v6283
    %v6416 = vunpack.c.l.b16 %v6284
    %v6417 = vunpack.c.l.b16 %v6285
    %v6418 = vunpack.c.l.b16 %v6286
    %v6419 = vunpack.c.l.b16 %v6287
    %v6420 = vunpack.c.l.b16 %v6288
    %v6421 = vunpack.c.l.b16 %v6289
    %v6422 = vunpack.c.l.b16 %v6290
    %v6423 = vunpack.c.l.b16 %v6291
    %v6424 = vunpack.c.l.b16 %v6292
    %v6425 = vunpack.c.l.b16 %v6293
    %v6426 = vunpack.c.l.b16 %v6294
    %v6427 = vunpack.c.l.b16 %v6295
    %v6428 = vunpack.c.l.b16 %v6296
    %v6429 = vpack.c.b16 %v6366, %v6365
    %v6430 = vpack.c.b16 %v6368, %v6367
    %v6431 = vpack.c.b16 %v6370, %v6369
    %v6432 = vpack.c.b16 %v6372, %v6371
    %v6433 = vpack.c.b16 %v6374, %v6373
    %v6434 = vpack.c.b16 %v6376, %v6375
    %v6435 = vpack.c.b16 %v6378, %v6377
    %v6436 = vpack.c.b16 %v6380, %v6379
    %v6437 = vpack.c.b16 %v6382, %v6381
    %v6438 = vpack.c.b16 %v6384, %v6383
    %v6439 = vpack.c.b16 %v6386, %v6385
    %v6440 = vpack.c.b16 %v6388, %v6387
    %v6441 = vpack.c.b16 %v6390, %v6389
    %v6442 = vpack.c.b16 %v6392, %v6391
    %v6443 = vpack.c.b16 %v6394, %v6393
    %v6444 = vpack.c.b16 %v6396, %v6395
    %v6445 = vpack.c.b16 %v6398, %v6397
    %v6446 = vpack.c.b16 %v6400, %v6399
    %v6447 = vpack.c.b16 %v6402, %v6401
    %v6448 = vpack.c.b16 %v6404, %v6403
    %v6449 = vpack.c.b16 %v6406, %v6405
    %v6450 = vpack.c.b16 %v6408, %v6407
    %v6451 = vpack.c.b16 %v6410, %v6409
    %v6452 = vpack.c.b16 %v6412, %v6411
    %v6453 = vpack.c.b16 %v6414, %v6413
    %v6454 = vpack.c.b16 %v6416, %v6415
    %v6455 = vpack.c.b16 %v6418, %v6417
    %v6456 = vpack.c.b16 %v6420, %v6419
    %v6457 = vpack.c.b16 %v6422, %v6421
    %v6458 = vpack.c.b16 %v6424, %v6423
    %v6459 = vpack.c.b16 %v6426, %v6425
    %v6460 = vpack.c.b16 %v6428, %v6427
    %6493 = vmatprep.subr.bf16.mxu0 0
    %6494 = vmatpush1.bf16.msra.mxu0 %v6429
    %6495 = vmatprep.subr.bf16.mxu0 0
    %6496 = vmatpush1.bf16.msra.mxu0 %v6430
    %6497 = vmatprep.subr.bf16.mxu0 0
    %6498 = vmatpush1.bf16.msra.mxu0 %v6431
    %6499 = vmatprep.subr.bf16.mxu0 0
    %6500 = vmatpush1.bf16.msra.mxu0 %v6432
    %6501 = vmatprep.subr.bf16.mxu0 0
    %6502 = vmatpush1.bf16.msra.mxu0 %v6433
    %6503 = vmatprep.subr.bf16.mxu0 0
    %6504 = vmatpush1.bf16.msra.mxu0 %v6434
    %6505 = vmatprep.subr.bf16.mxu0 0
    %6506 = vmatpush1.bf16.msra.mxu0 %v6435
    %6507 = vmatprep.subr.bf16.mxu0 0
    %6508 = vmatpush1.bf16.msra.mxu0 %v6436
    %6509 = vmatprep.subr.bf16.mxu0 0
    %6510 = vmatpush1.bf16.msra.mxu0 %v6437
    %6511 = vmatprep.subr.bf16.mxu0 0
    %6512 = vmatpush1.bf16.msra.mxu0 %v6438
    %6513 = vmatprep.subr.bf16.mxu0 0
    %6514 = vmatpush1.bf16.msra.mxu0 %v6439
    %6515 = vmatprep.subr.bf16.mxu0 0
    %6516 = vmatpush1.bf16.msra.mxu0 %v6440
    %6517 = vmatprep.subr.bf16.mxu0 0
    %6518 = vmatpush1.bf16.msra.mxu0 %v6441
    %6519 = vmatprep.subr.bf16.mxu0 0
    %6520 = vmatpush1.bf16.msra.mxu0 %v6442
    %6521 = vmatprep.subr.bf16.mxu0 0
    %6522 = vmatpush1.bf16.msra.mxu0 %v6443
    %6523 = vmatprep.subr.bf16.mxu0 0
    %6524 = vmatpush1.bf16.msra.mxu0 %v6444
    %6525 = vmatprep.mubr.bf16.mxu0 %v6202
    %6526 = vmatmul.mubr.bf16.gmra.mrb[0].mxu0 %v6201
    %v6527 = vpop.f32.mrb[0].mxu0
    %v6528 = vadd.f32 %v6300, %v6527
    %v6529 = vpop.f32.mrb[0].mxu0
    %v6530 = vpop.f32.mrb[0].mxu0
    %v6531 = vadd.f32 %v6300, %v6530
    %v6532 = vpop.f32.mrb[0].mxu0
    %6533 = vmatprep.mubr.bf16.mxu0 %v6206
    %6534 = vmatmul.mubr.bf16.gmra.mrb[0].mxu0 %v6205
    %v6535 = vpop.f32.mrb[0].mxu0
    %v6536 = vadd.f32 %v6300, %v6535
    %v6537 = vpop.f32.mrb[0].mxu0
    %v6538 = vpop.f32.mrb[0].mxu0
    %v6539 = vadd.f32 %v6300, %v6538
    %v6540 = vpop.f32.mrb[0].mxu0
    %6541 = vmatprep.mubr.bf16.mxu0 %v6210
    %6542 = vmatmul.mubr.bf16.gmra.mrb[0].mxu0 %v6209
    %v6543 = vpop.f32.mrb[0].mxu0
    %v6544 = vadd.f32 %v6300, %v6543
    %v6545 = vpop.f32.mrb[0].mxu0
    %v6546 = vpop.f32.mrb[0].mxu0
    %v6547 = vadd.f32 %v6300, %v6546
    %v6548 = vpop.f32.mrb[0].mxu0
    %6549 = vmatprep.mubr.bf16.mxu0 %v6214
    %6550 = vmatmul.mubr.bf16.gmra.mrb[0].mxu0 %v6213
    %v6551 = vpop.f32.mrb[0].mxu0
    %v6552 = vadd.f32 %v6300, %v6551
    %v6553 = vpop.f32.mrb[0].mxu0
    %v6554 = vpop.f32.mrb[0].mxu0
    %v6555 = vadd.f32 %v6300, %v6554
    %v6556 = vpop.f32.mrb[0].mxu0
    %6557 = vmatprep.mubr.bf16.mxu0 %v6218
    %6558 = vmatmul.mubr.bf16.gmra.mrb[0].mxu0 %v6217
    %v6559 = vpop.f32.mrb[0].mxu0
    %v6560 = vadd.f32 %v6300, %v6559
    %v6561 = vpop.f32.mrb[0].mxu0
    %v6562 = vpop.f32.mrb[0].mxu0
    %v6563 = vadd.f32 %v6300, %v6562
    %v6564 = vpop.f32.mrb[0].mxu0
    %6565 = vmatprep.mubr.bf16.mxu0 %v6222
    %6566 = vmatmul.mubr.bf16.gmra.mrb[0].mxu0 %v6221
    %v6567 = vpop.f32.mrb[0].mxu0
    %v6568 = vadd.f32 %v6300, %v6567
    %v6569 = vpop.f32.mrb[0].mxu0
    %v6570 = vpop.f32.mrb[0].mxu0
    %v6571 = vadd.f32 %v6300, %v6570
    %v6572 = vpop.f32.mrb[0].mxu0
    %6573 = vmatprep.mubr.bf16.mxu0 %v6226
    %6574 = vmatmul.mubr.bf16.gmra.mrb[0].mxu0 %v6225
    %v6575 = vpop.f32.mrb[0].mxu0
    %v6576 = vadd.f32 %v6300, %v6575
    %v6577 = vpop.f32.mrb[0].mxu0
    %v6578 = vpop.f32.mrb[0].mxu0
    %v6579 = vadd.f32 %v6300, %v6578
    %v6580 = vpop.f32.mrb[0].mxu0
    %6581 = vmatprep.mubr.bf16.mxu0 %v6230
    %6582 = vmatmul.mubr.bf16.gmra.mrb[0].mxu0 %v6229
    %v6583 = vpop.f32.mrb[0].mxu0
    %v6584 = vadd.f32 %v6300, %v6583
    %v6585 = vpop.f32.mrb[0].mxu0
    %v6586 = vpop.f32.mrb[0].mxu0
    %v6587 = vadd.f32 %v6300, %v6586
    %v6588 = vpop.f32.mrb[0].mxu0
    %6589 = vdwg.mxu0
    %6590 = vmatprep.subr.bf16.mxu0 0
    %6591 = vmatpush1.bf16.msra.mxu0 %v6445
    %6592 = vmatprep.subr.bf16.mxu0 0
    %6593 = vmatpush1.bf16.msra.mxu0 %v6446
    %6594 = vmatprep.subr.bf16.mxu0 0
    %6595 = vmatpush1.bf16.msra.mxu0 %v6447
    %6596 = vmatprep.subr.bf16.mxu0 0
    %6597 = vmatpush1.bf16.msra.mxu0 %v6448
    %6598 = vmatprep.subr.bf16.mxu0 0
    %6599 = vmatpush1.bf16.msra.mxu0 %v6449
    %6600 = vmatprep.subr.bf16.mxu0 0
    %6601 = vmatpush1.bf16.msra.mxu0 %v6450
    %6602 = vmatprep.subr.bf16.mxu0 0
    %6603 = vmatpush1.bf16.msra.mxu0 %v6451
    %6604 = vmatprep.subr.bf16.mxu0 0
    %6605 = vmatpush1.bf16.msra.mxu0 %v6452
    %6606 = vmatprep.subr.bf16.mxu0 0
    %6607 = vmatpush1.bf16.msra.mxu0 %v6453
    %6608 = vmatprep.subr.bf16.mxu0 0
    %6609 = vmatpush1.bf16.msra.mxu0 %v6454
    %6610 = vmatprep.subr.bf16.mxu0 0
    %6611 = vmatpush1.bf16.msra.mxu0 %v6455
    %6612 = vmatprep.subr.bf16.mxu0 0
    %6613 = vmatpush1.bf16.msra.mxu0 %v6456
    %6614 = vmatprep.subr.bf16.mxu0 0
    %6615 = vmatpush1.bf16.msra.mxu0 %v6457
    %6616 = vmatprep.subr.bf16.mxu0 0
    %6617 = vmatpush1.bf16.msra.mxu0 %v6458
    %6618 = vmatprep.subr.bf16.mxu0 0
    %6619 = vmatpush1.bf16.msra.mxu0 %v6459
    %6620 = vmatprep.subr.bf16.mxu0 0
    %6621 = vmatpush1.bf16.msra.mxu0 %v6460
    %6622 = vmatprep.mubr.bf16.mxu0 %v6204
    %6623 = vmatmul.mubr.bf16.gmra.mrb[0].mxu0 %v6203
    %v6624 = vpop.f32.mrb[0].mxu0
    %v6625 = vadd.f32 %v6528, %v6624
    %v6626 = vpop.f32.mrb[0].mxu0
    %v6627 = vpop.f32.mrb[0].mxu0
    %v6628 = vadd.f32 %v6531, %v6627
    %v6629 = vpop.f32.mrb[0].mxu0
    %6630 = vmatprep.mubr.bf16.mxu0 %v6208
    %6631 = vmatmul.mubr.bf16.gmra.mrb[0].mxu0 %v6207
    %v6632 = vpop.f32.mrb[0].mxu0
    %v6633 = vadd.f32 %v6536, %v6632
    %v6634 = vpop.f32.mrb[0].mxu0
    %v6635 = vpop.f32.mrb[0].mxu0
    %v6636 = vadd.f32 %v6539, %v6635
    %v6637 = vpop.f32.mrb[0].mxu0
    %6638 = vmatprep.mubr.bf16.mxu0 %v6212
    %6639 = vmatmul.mubr.bf16.gmra.mrb[0].mxu0 %v6211
    %v6640 = vpop.f32.mrb[0].mxu0
    %v6641 = vadd.f32 %v6544, %v6640
    %v6642 = vpop.f32.mrb[0].mxu0
    %v6643 = vpop.f32.mrb[0].mxu0
    %v6644 = vadd.f32 %v6547, %v6643
    %v6645 = vpop.f32.mrb[0].mxu0
    %6646 = vmatprep.mubr.bf16.mxu0 %v6216
    %6647 = vmatmul.mubr.bf16.gmra.mrb[0].mxu0 %v6215
    %v6648 = vpop.f32.mrb[0].mxu0
    %v6649 = vadd.f32 %v6552, %v6648
    %v6650 = vpop.f32.mrb[0].mxu0
    %v6651 = vpop.f32.mrb[0].mxu0
    %v6652 = vadd.f32 %v6555, %v6651
    %v6653 = vpop.f32.mrb[0].mxu0
    %6654 = vmatprep.mubr.bf16.mxu0 %v6220
    %6655 = vmatmul.mubr.bf16.gmra.mrb[0].mxu0 %v6219
    %v6656 = vpop.f32.mrb[0].mxu0
    %v6657 = vadd.f32 %v6560, %v6656
    %v6658 = vpop.f32.mrb[0].mxu0
    %v6659 = vpop.f32.mrb[0].mxu0
    %v6660 = vadd.f32 %v6563, %v6659
    %v6661 = vpop.f32.mrb[0].mxu0
    %6662 = vmatprep.mubr.bf16.mxu0 %v6224
    %6663 = vmatmul.mubr.bf16.gmra.mrb[0].mxu0 %v6223
    %v6664 = vpop.f32.mrb[0].mxu0
    %v6665 = vadd.f32 %v6568, %v6664
    %v6666 = vpop.f32.mrb[0].mxu0
    %v6667 = vpop.f32.mrb[0].mxu0
    %v6668 = vadd.f32 %v6571, %v6667
    %v6669 = vpop.f32.mrb[0].mxu0
    %6670 = vmatprep.mubr.bf16.mxu0 %v6228
    %6671 = vmatmul.mubr.bf16.gmra.mrb[0].mxu0 %v6227
    %v6672 = vpop.f32.mrb[0].mxu0
    %v6673 = vadd.f32 %v6576, %v6672
    %v6674 = vpop.f32.mrb[0].mxu0
    %v6675 = vpop.f32.mrb[0].mxu0
    %v6676 = vadd.f32 %v6579, %v6675
    %v6677 = vpop.f32.mrb[0].mxu0
    %6678 = vmatprep.mubr.bf16.mxu0 %v6232
    %6679 = vmatmul.mubr.bf16.gmra.mrb[0].mxu0 %v6231
    %v6680 = vpop.f32.mrb[0].mxu0
    %v6681 = vadd.f32 %v6584, %v6680
    %v6682 = vpop.f32.mrb[0].mxu0
    %v6683 = vpop.f32.mrb[0].mxu0
    %v6684 = vadd.f32 %v6587, %v6683
    %v6685 = vpop.f32.mrb[0].mxu0
    %6686 = vdwg.mxu0
    %v6687 = vadd.f32 %v5041, %v6625
    %v6688 = vadd.f32 %v5042, %v6628
    %v6689 = vadd.f32 %v5043, %v6633
    %v6690 = vadd.f32 %v5044, %v6636
    %v6691 = vadd.f32 %v5045, %v6641
    %v6692 = vadd.f32 %v5046, %v6644
    %v6693 = vadd.f32 %v5047, %v6649
    %v6694 = vadd.f32 %v5048, %v6652
    %v6695 = vadd.f32 %v5049, %v6657
    %v6696 = vadd.f32 %v5050, %v6660
    %v6697 = vadd.f32 %v5051, %v6665
    %v6698 = vadd.f32 %v5052, %v6668
    %v6699 = vadd.f32 %v5053, %v6673
    %v6700 = vadd.f32 %v5054, %v6676
    %v6701 = vadd.f32 %v5055, %v6681
    %v6702 = vadd.f32 %v5056, %v6684
    %6703 = vst [vmem:[#allocation11] sm:$0xff] %v6687
    %6704 = vst [vmem:[#allocation11 + $0x8] sm:$0xff] %v6688
    %6705 = vst [vmem:[#allocation11 + $0x10] sm:$0xff] %v6689
    %6706 = vst [vmem:[#allocation11 + $0x18] sm:$0xff] %v6690
    %6707 = vst [vmem:[#allocation11 + $0x20] sm:$0xff] %v6691
    %6708 = vst [vmem:[#allocation11 + $0x28] sm:$0xff] %v6692
    %6709 = vst [vmem:[#allocation11 + $0x30] sm:$0xff] %v6693
    %6710 = vst [vmem:[#allocation11 + $0x38] sm:$0xff] %v6694
    %6711 = vst [vmem:[#allocation11 + $0x40] sm:$0xff] %v6695
    %6712 = vst [vmem:[#allocation11 + $0x48] sm:$0xff] %v6696
    %6713 = vst [vmem:[#allocation11 + $0x50] sm:$0xff] %v6697
    %6714 = vst [vmem:[#allocation11 + $0x58] sm:$0xff] %v6698
    %6715 = vst [vmem:[#allocation11 + $0x60] sm:$0xff] %v6699
    %6716 = vst [vmem:[#allocation11 + $0x68] sm:$0xff] %v6700
    %6717 = vst [vmem:[#allocation11 + $0x70] sm:$0xff] %v6701
    %6718 = vst [vmem:[#allocation11 + $0x78] sm:$0xff] %v6702
    // Predicated region
    $region54: #{tpu_custom_call.1} parent=1 // pred_check
      _
    $region55: #{tpu_custom_call.1} parent=1 // pred_check_branch
      %6720 = sbr.rel (0) target = $region57
    $region56: #{tpu_custom_call.1} parent=1 // pred_region
      %s6722 = ssub.s32 2048, 2048
      %6723 = vsyncadd [#allocation4], %s6722
      %s6724 = sshll.u32 [#allocation11], 4
      %s6725 = int_to_ptr.vmem [resolvable:$true] %s6724
      %6730 = dma.vmem_to_hbm [thread:$0]  %s6725, 2048, %s8, [#allocation4], 128, 128, 8
    $region57: #{tpu_custom_call.1} parent=1 // pred_fallthru
      _
    // Predicated region
    $region58: #{tpu_custom_call.1} parent=1 // pred_check
      _
    $region59: #{tpu_custom_call.1} parent=1 // pred_check_branch
      %6732 = sbr.rel (0) target = $region61
    $region60: #{tpu_custom_call.1} parent=1 // pred_region
      %6733 = dma.done [#allocation4], 2048
    $region61: #{tpu_custom_call.1} parent=1 // pred_fallthru
      _
    %6734 = vsyncpa [#allocation3], 1
    %6735 = vsyncpa [#allocation6], 1
    %6736 = vsyncpa [#allocation9], 1
    %6737 = vsyncpa [#allocation4], 1

</llo_original>
